<compile_context>
chip_gen: v7x
topology: tpu7x:2x2x1
jax: 0.10.0
libtpu: 0.0.40
codegen_flags: <defaults>
</compile_context>

<pallas_src>
import jax
import jax.numpy as jnp
from jax.experimental import pallas as pl
from jax.experimental.pallas import tpu as pltpu


# ----------------------------------------------------------------------------
# Tiling helpers
# ----------------------------------------------------------------------------
_MAX_TM = 256   # output-row tile (second-minor)
_MAX_TN = 512   # output-col tile (lane)
_MAX_TK = 512   # reduction tile


def _round_up(x, m):
    return ((x + m - 1) // m) * m


def _lane_pad(n):
    """Padded lane (last) dimension for matmul outputs / weights."""
    if n % 128 == 0:
        return n
    if n % 8 == 0 and 8 <= n < 128:
        return n                       # narrow-but-aligned (e.g. 64): keep unpadded
    return _round_up(n, 128)           # tiny/odd N (e.g. OC=1): pad to one lane tile


def _kn_pad(K, N):
    """Padded (K, N) shape for a pre-packed weight matrix."""
    Np = _lane_pad(N)
    if K <= _MAX_TK:
        Kp = _round_up(K, 128)         # single reduction step, MXU-aligned contraction
    else:
        Kp = _round_up(K, _MAX_TK)
    return Kp, Np


def _m_tiles(M):
    """Row tiling: tm is bf16-sublane friendly (multiple of 16) and divides Mp."""
    tm = min(_round_up(M, 16), _MAX_TM)
    Mp = _round_up(M, tm)
    return Mp, tm


# ----------------------------------------------------------------------------
# Pallas kernels
# ----------------------------------------------------------------------------
def _make_mm_kernel(has_bias, multi_k):
    """Tiled matmul kernel: bf16 A/B, f32 accumulate, epilogue only on last k step."""

    def kernel(*refs):
        if has_bias:
            a_ref, b_ref, bias_ref, o_ref = refs[:4]
            rest = refs[4:]
        else:
            a_ref, b_ref, o_ref = refs[:3]
            rest = refs[3:]

        part = jnp.dot(a_ref[...], b_ref[...], preferred_element_type=jnp.float32)

        if multi_k:
            acc_ref = rest[0]

            @pl.when(pl.program_id(2) == 0)
            def _zero():
                acc_ref[...] = jnp.zeros_like(acc_ref)

            acc_ref[...] += part

            @pl.when(pl.program_id(2) == pl.num_programs(2) - 1)
            def _epilogue():
                r = acc_ref[...]
                if has_bias:
                    r = r + bias_ref[...]
                o_ref[...] = r.astype(o_ref.dtype)
        else:
            r = part
            if has_bias:
                r = r + bias_ref[...]
            o_ref[...] = r.astype(o_ref.dtype)

    return kernel


def _bn_stats_kernel(x_ref, sum_ref, sq_ref):
    """Accumulate per-channel sum and sum-of-squares over the M axis."""
    @pl.when(pl.program_id(0) == 0)
    def _zero():
        sum_ref[...] = jnp.zeros_like(sum_ref)
        sq_ref[...] = jnp.zeros_like(sq_ref)

    x = x_ref[...]
    sum_ref[...] += jnp.sum(x, axis=0, keepdims=True)
    sq_ref[...] += jnp.sum(x * x, axis=0, keepdims=True)


def _bn_apply_kernel(x_ref, scale_ref, shift_ref, o_ref):
    """Per-channel affine (scale/shift already fold mean, var, gamma, beta). Emits bf16."""
    o_ref[...] = (x_ref[...] * scale_ref[...] + shift_ref[...]).astype(o_ref.dtype)


# ----------------------------------------------------------------------------
# Pallas wrappers
# ----------------------------------------------------------------------------
def matmul_pallas(a, b, bias=None):
    """a: (Mp, Kp) bf16, b: (Kp, Np) bf16 pre-packed, bias: (1, Np) f32 or None.
    Returns (Mp, Np) f32."""
    Mp, Kp = a.shape
    Kp2, Np = b.shape
    assert Kp == Kp2
    _, tm = _m_tiles(Mp)
    tn = min(Np, _MAX_TN)
    while Np % tn:
        tn -= 128
    if Kp <= _MAX_TK:
        tk, ksteps = Kp, 1
    else:
        tk = _MAX_TK
        assert Kp % tk == 0
        ksteps = Kp // tk

    has_bias = bias is not None
    multi_k = ksteps > 1
    kernel = _make_mm_kernel(has_bias, multi_k)

    if multi_k:
        in_specs = [pl.BlockSpec((tm, tk), lambda i, j, k: (i, k)),
                    pl.BlockSpec((tk, tn), lambda i, j, k: (k, j))]
        if has_bias:
            in_specs.append(pl.BlockSpec((1, tn), lambda i, j, k: (0, j)))
        out_spec = pl.BlockSpec((tm, tn), lambda i, j, k: (i, j))
        grid = (Mp // tm, Np // tn, ksteps)
        scratch = [pltpu.VMEM((tm, tn), jnp.float32)]
        dims = ("parallel", "parallel", "arbitrary")
    else:
        in_specs = [pl.BlockSpec((tm, tk), lambda i, j: (i, 0)),
                    pl.BlockSpec((tk, tn), lambda i, j: (0, j))]
        if has_bias:
            in_specs.append(pl.BlockSpec((1, tn), lambda i, j: (0, j)))
        out_spec = pl.BlockSpec((tm, tn), lambda i, j: (i, j))
        grid = (Mp // tm, Np // tn)
        scratch = []
        dims = ("parallel", "parallel")

    args = [a, b] + ([bias] if has_bias else [])
    return pl.pallas_call(
        kernel,
        out_shape=jax.ShapeDtypeStruct((Mp, Np), jnp.float32),
        grid_spec=pltpu.PrefetchScalarGridSpec(
            num_scalar_prefetch=0,
            grid=grid,
            in_specs=in_specs,
            out_specs=out_spec,
            scratch_shapes=scratch,
        ),
        compiler_params=pltpu.CompilerParams(dimension_semantics=dims),
    )(*args)


def batchnorm_pallas(x2d, gamma, beta, eps=1e-5):
    """Training-mode BatchNorm over axis 0 of a (M, C) slab. Returns bf16 (M, C)."""
    M, C = x2d.shape
    tm = min(_round_up(M, 8), 512)
    Mp = _round_up(M, tm)
    if Mp != M:
        # Zero-padded rows contribute nothing to sum/sumsq; we divide by the true M below.
        x2d = jnp.zeros((Mp, C), x2d.dtype).at[:M].set(x2d)
    grid_m = Mp // tm

    s, sq = pl.pallas_call(
        _bn_stats_kernel,
        out_shape=(jax.ShapeDtypeStruct((1, C), jnp.float32),
                   jax.ShapeDtypeStruct((1, C), jnp.float32)),
        grid_spec=pltpu.PrefetchScalarGridSpec(
            num_scalar_prefetch=0,
            grid=(grid_m,),
            in_specs=[pl.BlockSpec((tm, C), lambda i: (i, 0))],
            out_specs=[pl.BlockSpec((1, C), lambda i: (0, 0)),
                       pl.BlockSpec((1, C), lambda i: (0, 0))],
        ),
        compiler_params=pltpu.CompilerParams(dimension_semantics=("arbitrary",)),
    )(x2d)

    mean = s / M
    var = jnp.maximum(sq / M - mean * mean, 0.0)   # biased variance (PyTorch training-mode)
    scale = gamma * jax.lax.rsqrt(var + eps)
    shift = beta - mean * scale

    out = pl.pallas_call(
        _bn_apply_kernel,
        out_shape=jax.ShapeDtypeStruct((Mp, C), jnp.bfloat16),
        grid_spec=pltpu.PrefetchScalarGridSpec(
            num_scalar_prefetch=0,
            grid=(grid_m,),
            in_specs=[pl.BlockSpec((tm, C), lambda i: (i, 0)),
                      pl.BlockSpec((1, C), lambda i: (0, 0)),
                      pl.BlockSpec((1, C), lambda i: (0, 0))],
            out_specs=pl.BlockSpec((tm, C), lambda i: (i, 0)),
        ),
        compiler_params=pltpu.CompilerParams(dimension_semantics=("parallel",)),
    )(x2d, scale, shift)
    return out[:M]


# ----------------------------------------------------------------------------
# Conv glue: im2col (pure reshuffling) + Pallas matmul
# ----------------------------------------------------------------------------
def _im2col(x_nhwc, k, stride, pad):
    """Returns patches (N*OH*OW, k*k*C) with (kh, kw, c) minor ordering."""
    # TODO(synk): replace materialized im2col with an implicit-GEMM conv (kh/kw as extra
    #             'arbitrary' grid axes indexing the NHWC tensor) to avoid the extra HBM
    #             round trip of the expanded patch tensor at large batch sizes.
    if pad > 0:
        x_nhwc = jnp.pad(x_nhwc, ((0, 0), (pad, pad), (pad, pad), (0, 0)))
    N, H, W, C = x_nhwc.shape
    OH = (H - k) // stride + 1
    OW = (W - k) // stride + 1
    cols = []
    for i in range(k):
        for j in range(k):
            cols.append(x_nhwc[:, i:i + stride * (OH - 1) + 1:stride,
                               j:j + stride * (OW - 1) + 1:stride, :])
    patches = jnp.stack(cols, axis=3)                    # (N, OH, OW, k*k, C)
    return patches.reshape(N * OH * OW, k * k * C), (N, OH, OW)


# ----------------------------------------------------------------------------
# DCGAN discriminator forward
# ----------------------------------------------------------------------------
# (in_ch, out_ch, kernel, stride, pad, has_bias)
_CONV_CFGS = [
    (3, 64, 4, 2, 1, False),
    (64, 128, 4, 2, 1, False),
    (128, 256, 4, 2, 1, False),
    (256, 512, 4, 2, 1, False),
    (512, 1, 4, 1, 0, True),
]


def init_params(key):
    """Weights pre-packed once: (Kp, Np) bf16 matmul matrices + padded (1, Np) f32 bias."""
    params = {}
    for idx, (ic, oc, k, s, p, has_bias) in enumerate(_CONV_CFGS):
        key, wk, bk = jax.random.split(key, 3)
        w_oihw = 0.02 * jax.random.normal(wk, (oc, ic, k, k), jnp.float32)
        K = k * k * ic
        Kp, Np = _kn_pad(K, oc)
        # (oc, ic, kh, kw) -> (kh, kw, ic, oc) to match patch minor ordering, pad, bf16.
        w_mat = jnp.transpose(w_oihw, (2, 3, 1, 0)).reshape(K, oc).astype(jnp.bfloat16)
        layer = {"w": jnp.zeros((Kp, Np), jnp.bfloat16).at[:K, :oc].set(w_mat)}
        if has_bias:
            b = 0.02 * jax.random.normal(bk, (oc,), jnp.float32)
            layer["b"] = jnp.zeros((1, Np), jnp.float32).at[0, :oc].set(b)
        params[f"conv{idx}"] = layer
        if idx < 4:  # BatchNorm2d after the first four convs
            params[f"bn{idx}_g"] = jnp.ones((1, oc), jnp.float32)
            params[f"bn{idx}_b"] = jnp.zeros((1, oc), jnp.float32)
    return params


@jax.jit
def dcgan_forward(x_nchw, params):
    """DCGAN.forward in default GANMode.DISCRIMINATOR mode. x: NCHW float32."""
    h = jnp.transpose(x_nchw, (0, 2, 3, 1)).astype(jnp.bfloat16)   # NCHW -> NHWC, bf16
    logits = None
    for idx, (ic, oc, k, s, p, has_bias) in enumerate(_CONV_CFGS):
        layer = params[f"conv{idx}"]
        patches, (n, oh, ow) = _im2col(h, k, s, p)                 # (M, K) bf16
        M, K = patches.shape
        Kp, Np = layer["w"].shape
        Mp, _ = _m_tiles(M)
        if (Mp, Kp) != (M, K):
            patches = jnp.zeros((Mp, Kp), jnp.bfloat16).at[:M, :K].set(patches)
        out2d = matmul_pallas(patches, layer["w"], layer.get("b"))  # (Mp, Np) f32
        out2d = out2d[:M, :oc]                                      # strip padding (no-op mostly)
        if idx < len(_CONV_CFGS) - 1:
            out2d = batchnorm_pallas(out2d, params[f"bn{idx}_g"], params[f"bn{idx}_b"])
            h = out2d.reshape(n, oh, ow, oc)                        # bf16 for next conv
        else:
            logits = out2d                                          # (batch, 1) f32, OH=OW=1

    # nn.Softmax(dim=1) over a single output channel is the constant 1.0 for finite
    # logits; per perf review it is computed inline (no kernel launch) keeping the formula.
    m = jnp.max(logits, axis=1, keepdims=True)
    e = jnp.exp(logits - m)
    probs = e / jnp.sum(e, axis=1, keepdims=True)
    return probs.reshape(-1, 1, 1, 1)                               # NCHW (H=W=C=1)


if __name__ == "__main__":
    key = jax.random.PRNGKey(0)
    pkey, xkey = jax.random.split(key)
    params = init_params(pkey)
    # Smallest spatial size the discriminator architecture admits is 64x64.
    x = jax.random.normal(xkey, (2, 3, 64, 64), jnp.float32)
    out = dcgan_forward(x, params)
    jax.block_until_ready(out)
    assert out.shape == (2, 1, 1, 1), out.shape
    assert bool(jnp.all(jnp.isfinite(out)))
    print("KERNEL_OK")
</pallas_src>

<mosaic_0001>
module attributes {stable_mosaic.version = 11 : i64} {
  func.func @kernel(%arg0: i32, %arg1: i32, %arg2: memref<256x128xbf16, #tpu.memory_space<vmem>>, %arg3: memref<128x64xbf16, #tpu.memory_space<vmem>>, %arg4: memref<256x64xf32, #tpu.memory_space<vmem>>) attributes {dimension_semantics = [#tpu.dimension_semantics<parallel>, #tpu.dimension_semantics<parallel>], iteration_bounds = array<i64: 8, 1>, scalar_prefetch = 0 : i64, scratch_operands = 0 : i64, tpu.core_type = #tpu.core_type<tc>, window_params = [{transform_indices = @transform_0, window_bounds = array<i64: 256, 128>}, {transform_indices = @transform_1, window_bounds = array<i64: 128, 64>}, {transform_indices = @transform_2, window_bounds = array<i64: 256, 64>}]} {
    %c0 = arith.constant 0 : index
    %c0_0 = arith.constant 0 : index
    %0 = vector.load %arg2[%c0, %c0_0] : memref<256x128xbf16, #tpu.memory_space<vmem>>, vector<256x128xbf16>
    %c0_1 = arith.constant 0 : index
    %c0_2 = arith.constant 0 : index
    %1 = vector.load %arg3[%c0_1, %c0_2] : memref<128x64xbf16, #tpu.memory_space<vmem>>, vector<128x64xbf16>
    %cst = arith.constant dense<0.000000e+00> : vector<256x64xf32>
    %2 = tpu.matmul %0, %1, %cst {dimension_numbers = #tpu.dot_dimension_numbers<[1], [0], [0], [1], [0, 0, 1, 1], [], []>} : vector<256x128xbf16>, vector<128x64xbf16>, vector<256x64xf32> -> vector<256x64xf32>
    %c0_3 = arith.constant 0 : index
    %c0_4 = arith.constant 0 : index
    %3 = vector.load %arg4[%c0_3, %c0_4] : memref<256x64xf32, #tpu.memory_space<vmem>>, vector<256x64xf32>
    tpu.vector_store %arg4[%c0_3, %c0_4], %2 {strides = array<i32>} : memref<256x64xf32, #tpu.memory_space<vmem>>, vector<256x64xf32>,
    return
  }
  func.func @transform_0(%arg0: i32, %arg1: i32) -> (i32, i32) {
    %c0_i32 = arith.constant 0 : i32
    %c0_i32_0 = arith.constant 0 : i32
    return %arg0, %c0_i32 : i32, i32
  }
  func.func @transform_1(%arg0: i32, %arg1: i32) -> (i32, i32) {
    %c0_i32 = arith.constant 0 : i32
    %c0_i32_0 = arith.constant 0 : i32
    return %c0_i32, %arg1 : i32, i32
  }
  func.func @transform_2(%arg0: i32, %arg1: i32) -> (i32, i32) {
    %c0_i32 = arith.constant 0 : i32
    return %arg0, %arg1 : i32, i32
  }
}

module attributes {stable_mosaic.version = 11 : i64} {
  func.func @_bn_stats_kernel(%arg0: i32, %arg1: memref<512x64xf32, #tpu.memory_space<vmem>>, %arg2: memref<1x64xf32, #tpu.memory_space<vmem>>, %arg3: memref<1x64xf32, #tpu.memory_space<vmem>>) attributes {dimension_semantics = [#tpu.dimension_semantics<arbitrary>], iteration_bounds = array<i64: 4>, scalar_prefetch = 0 : i64, scratch_operands = 0 : i64, tpu.core_type = #tpu.core_type<tc>, window_params = [{transform_indices = @transform_0, window_bounds = array<i64: 512, 64>}, {pipeline_mode = #tpu.pipeline_mode<synchronous>, transform_indices = @transform_1, window_bounds = array<i64: 1, 64>}, {pipeline_mode = #tpu.pipeline_mode<synchronous>, transform_indices = @transform_2, window_bounds = array<i64: 1, 64>}]} {
    %c0_i32 = arith.constant 0 : i32
    %0 = arith.cmpi eq, %arg0, %c0_i32 : i32
    %1 = arith.extui %0 : i1 to i32
    %c0_i32_0 = arith.constant 0 : i32
    %2 = arith.cmpi ne, %1, %c0_i32_0 : i32
    scf.if %2 {
      %cst_11 = arith.constant 0.000000e+00 : f32
      %15 = vector.broadcast %cst_11 : f32 to vector<1x64xf32>
      %c0_12 = arith.constant 0 : index
      %c0_13 = arith.constant 0 : index
      %16 = vector.load %arg2[%c0_12, %c0_13] : memref<1x64xf32, #tpu.memory_space<vmem>>, vector<1x64xf32>
      tpu.vector_store %arg2[%c0_12, %c0_13], %15 {strides = array<i32>} : memref<1x64xf32, #tpu.memory_space<vmem>>, vector<1x64xf32>,
      %cst_14 = arith.constant 0.000000e+00 : f32
      %17 = vector.broadcast %cst_14 : f32 to vector<1x64xf32>
      %c0_15 = arith.constant 0 : index
      %c0_16 = arith.constant 0 : index
      %18 = vector.load %arg3[%c0_15, %c0_16] : memref<1x64xf32, #tpu.memory_space<vmem>>, vector<1x64xf32>
      tpu.vector_store %arg3[%c0_15, %c0_16], %17 {strides = array<i32>} : memref<1x64xf32, #tpu.memory_space<vmem>>, vector<1x64xf32>,
    } else {
    }
    %c0 = arith.constant 0 : index
    %c0_1 = arith.constant 0 : index
    %3 = vector.load %arg1[%c0, %c0_1] : memref<512x64xf32, #tpu.memory_space<vmem>>, vector<512x64xf32>
    %c0_2 = arith.constant 0 : index
    %c0_3 = arith.constant 0 : index
    %4 = vector.load %arg2[%c0_2, %c0_3] : memref<1x64xf32, #tpu.memory_space<vmem>>, vector<1x64xf32>
    %cst = arith.constant dense<0.000000e+00> : vector<64xf32>
    %5 = vector.multi_reduction <add>, %3, %cst [0] : vector<512x64xf32> to vector<64xf32>
    %6 = vector.shape_cast %5 : vector<64xf32> to vector<1x64xf32>
    %7 = arith.addf %4, %6 : vector<1x64xf32>
    %c0_4 = arith.constant 0 : index
    %c0_5 = arith.constant 0 : index
    %8 = vector.load %arg2[%c0_4, %c0_5] : memref<1x64xf32, #tpu.memory_space<vmem>>, vector<1x64xf32>
    tpu.vector_store %arg2[%c0_4, %c0_5], %7 {strides = array<i32>} : memref<1x64xf32, #tpu.memory_space<vmem>>, vector<1x64xf32>,
    %c0_6 = arith.constant 0 : index
    %c0_7 = arith.constant 0 : index
    %9 = vector.load %arg3[%c0_6, %c0_7] : memref<1x64xf32, #tpu.memory_space<vmem>>, vector<1x64xf32>
    %10 = arith.mulf %3, %3 : vector<512x64xf32>
    %cst_8 = arith.constant dense<0.000000e+00> : vector<64xf32>
    %11 = vector.multi_reduction <add>, %10, %cst_8 [0] : vector<512x64xf32> to vector<64xf32>
    %12 = vector.shape_cast %11 : vector<64xf32> to vector<1x64xf32>
    %13 = arith.addf %9, %12 : vector<1x64xf32>
    %c0_9 = arith.constant 0 : index
    %c0_10 = arith.constant 0 : index
    %14 = vector.load %arg3[%c0_9, %c0_10] : memref<1x64xf32, #tpu.memory_space<vmem>>, vector<1x64xf32>
    tpu.vector_store %arg3[%c0_9, %c0_10], %13 {strides = array<i32>} : memref<1x64xf32, #tpu.memory_space<vmem>>, vector<1x64xf32>,
    return
  }
  func.func @transform_0(%arg0: i32) -> (i32, i32) {
    %c0_i32 = arith.constant 0 : i32
    %c0_i32_0 = arith.constant 0 : i32
    return %arg0, %c0_i32 : i32, i32
  }
  func.func @transform_1(%arg0: i32) -> (i32, i32) {
    %c0_i32 = arith.constant 0 : i32
    %c0_i32_0 = arith.constant 0 : i32
    %c0_i32_1 = arith.constant 0 : i32
    return %c0_i32, %c0_i32_0 : i32, i32
  }
  func.func @transform_2(%arg0: i32) -> (i32, i32) {
    %c0_i32 = arith.constant 0 : i32
    %c0_i32_0 = arith.constant 0 : i32
    %c0_i32_1 = arith.constant 0 : i32
    return %c0_i32, %c0_i32_0 : i32, i32
  }
}

module attributes {stable_mosaic.version = 11 : i64} {
  func.func @_bn_apply_kernel(%arg0: i32, %arg1: memref<512x64xf32, #tpu.memory_space<vmem>>, %arg2: memref<1x64xf32, #tpu.memory_space<vmem>>, %arg3: memref<1x64xf32, #tpu.memory_space<vmem>>, %arg4: memref<512x64xbf16, #tpu.memory_space<vmem>>) attributes {dimension_semantics = [#tpu.dimension_semantics<parallel>], iteration_bounds = array<i64: 4>, scalar_prefetch = 0 : i64, scratch_operands = 0 : i64, tpu.core_type = #tpu.core_type<tc>, window_params = [{transform_indices = @transform_0, window_bounds = array<i64: 512, 64>}, {pipeline_mode = #tpu.pipeline_mode<synchronous>, transform_indices = @transform_1, window_bounds = array<i64: 1, 64>}, {pipeline_mode = #tpu.pipeline_mode<synchronous>, transform_indices = @transform_2, window_bounds = array<i64: 1, 64>}, {transform_indices = @transform_3, window_bounds = array<i64: 512, 64>}]} {
    %c0 = arith.constant 0 : index
    %c0_0 = arith.constant 0 : index
    %0 = vector.load %arg1[%c0, %c0_0] : memref<512x64xf32, #tpu.memory_space<vmem>>, vector<512x64xf32>
    %c0_1 = arith.constant 0 : index
    %c0_2 = arith.constant 0 : index
    %1 = vector.load %arg2[%c0_1, %c0_2] : memref<1x64xf32, #tpu.memory_space<vmem>>, vector<1x64xf32>
    %2 = vector.broadcast %1 : vector<1x64xf32> to vector<512x64xf32>
    %3 = arith.mulf %0, %2 : vector<512x64xf32>
    %c0_3 = arith.constant 0 : index
    %c0_4 = arith.constant 0 : index
    %4 = vector.load %arg3[%c0_3, %c0_4] : memref<1x64xf32, #tpu.memory_space<vmem>>, vector<1x64xf32>
    %5 = vector.broadcast %4 : vector<1x64xf32> to vector<512x64xf32>
    %6 = arith.addf %3, %5 : vector<512x64xf32>
    %7 = arith.truncf %6 : vector<512x64xf32> to vector<512x64xbf16>
    %c0_5 = arith.constant 0 : index
    %c0_6 = arith.constant 0 : index
    %8 = vector.load %arg4[%c0_5, %c0_6] : memref<512x64xbf16, #tpu.memory_space<vmem>>, vector<512x64xbf16>
    tpu.vector_store %arg4[%c0_5, %c0_6], %7 {strides = array<i32>} : memref<512x64xbf16, #tpu.memory_space<vmem>>, vector<512x64xbf16>,
    return
  }
  func.func @transform_0(%arg0: i32) -> (i32, i32) {
    %c0_i32 = arith.constant 0 : i32
    %c0_i32_0 = arith.constant 0 : i32
    return %arg0, %c0_i32 : i32, i32
  }
  func.func @transform_1(%arg0: i32) -> (i32, i32) {
    %c0_i32 = arith.constant 0 : i32
    %c0_i32_0 = arith.constant 0 : i32
    %c0_i32_1 = arith.constant 0 : i32
    return %c0_i32, %c0_i32_0 : i32, i32
  }
  func.func @transform_2(%arg0: i32) -> (i32, i32) {
    %c0_i32 = arith.constant 0 : i32
    %c0_i32_0 = arith.constant 0 : i32
    %c0_i32_1 = arith.constant 0 : i32
    return %c0_i32, %c0_i32_0 : i32, i32
  }
  func.func @transform_3(%arg0: i32) -> (i32, i32) {
    %c0_i32 = arith.constant 0 : i32
    %c0_i32_0 = arith.constant 0 : i32
    return %arg0, %c0_i32 : i32, i32
  }
}

module attributes {stable_mosaic.version = 11 : i64} {
  func.func @kernel(%arg0: i32, %arg1: i32, %arg2: i32, %arg3: memref<256x512xbf16, #tpu.memory_space<vmem>>, %arg4: memref<512x128xbf16, #tpu.memory_space<vmem>>, %arg5: memref<256x128xf32, #tpu.memory_space<vmem>>, %arg6: memref<256x128xf32, #tpu.memory_space<vmem>>) attributes {dimension_semantics = [#tpu.dimension_semantics<parallel>, #tpu.dimension_semantics<parallel>, #tpu.dimension_semantics<arbitrary>], iteration_bounds = array<i64: 2, 1, 2>, scalar_prefetch = 0 : i64, scratch_operands = 1 : i64, tpu.core_type = #tpu.core_type<tc>, window_params = [{transform_indices = @transform_0, window_bounds = array<i64: 256, 512>}, {transform_indices = @transform_1, window_bounds = array<i64: 512, 128>}, {transform_indices = @transform_2, window_bounds = array<i64: 256, 128>}]} {
    %c0 = arith.constant 0 : index
    %c0_0 = arith.constant 0 : index
    %0 = vector.load %arg3[%c0, %c0_0] : memref<256x512xbf16, #tpu.memory_space<vmem>>, vector<256x512xbf16>
    %c0_1 = arith.constant 0 : index
    %c0_2 = arith.constant 0 : index
    %1 = vector.load %arg4[%c0_1, %c0_2] : memref<512x128xbf16, #tpu.memory_space<vmem>>, vector<512x128xbf16>
    %cst = arith.constant dense<0.000000e+00> : vector<256x128xf32>
    %2 = tpu.matmul %0, %1, %cst {dimension_numbers = #tpu.dot_dimension_numbers<[1], [0], [0], [1], [0, 0, 1, 1], [], []>} : vector<256x512xbf16>, vector<512x128xbf16>, vector<256x128xf32> -> vector<256x128xf32>
    %c0_i32 = arith.constant 0 : i32
    %3 = arith.cmpi eq, %arg2, %c0_i32 : i32
    %4 = arith.extui %3 : i1 to i32
    %c0_i32_3 = arith.constant 0 : i32
    %5 = arith.cmpi ne, %4, %c0_i32_3 : i32
    scf.if %5 {
      %cst_9 = arith.constant 0.000000e+00 : f32
      %12 = vector.broadcast %cst_9 : f32 to vector<256x128xf32>
      %c0_10 = arith.constant 0 : index
      %c0_11 = arith.constant 0 : index
      %13 = vector.load %arg6[%c0_10, %c0_11] : memref<256x128xf32, #tpu.memory_space<vmem>>, vector<256x128xf32>
      tpu.vector_store %arg6[%c0_10, %c0_11], %12 {strides = array<i32>} : memref<256x128xf32, #tpu.memory_space<vmem>>, vector<256x128xf32>,
    } else {
    }
    %c0_4 = arith.constant 0 : index
    %c0_5 = arith.constant 0 : index
    %6 = vector.load %arg6[%c0_4, %c0_5] : memref<256x128xf32, #tpu.memory_space<vmem>>, vector<256x128xf32>
    %7 = arith.addf %6, %2 : vector<256x128xf32>
    %c0_6 = arith.constant 0 : index
    %c0_7 = arith.constant 0 : index
    %8 = vector.load %arg6[%c0_6, %c0_7] : memref<256x128xf32, #tpu.memory_space<vmem>>, vector<256x128xf32>
    tpu.vector_store %arg6[%c0_6, %c0_7], %7 {strides = array<i32>} : memref<256x128xf32, #tpu.memory_space<vmem>>, vector<256x128xf32>,
    %c1_i32 = arith.constant 1 : i32
    %9 = arith.cmpi eq, %arg2, %c1_i32 : i32
    %10 = arith.extui %9 : i1 to i32
    %c0_i32_8 = arith.constant 0 : i32
    %11 = arith.cmpi ne, %10, %c0_i32_8 : i32
    scf.if %11 {
      %c0_9 = arith.constant 0 : index
      %c0_10 = arith.constant 0 : index
      %12 = vector.load %arg6[%c0_9, %c0_10] : memref<256x128xf32, #tpu.memory_space<vmem>>, vector<256x128xf32>
      %c0_11 = arith.constant 0 : index
      %c0_12 = arith.constant 0 : index
      %13 = vector.load %arg5[%c0_11, %c0_12] : memref<256x128xf32, #tpu.memory_space<vmem>>, vector<256x128xf32>
      tpu.vector_store %arg5[%c0_11, %c0_12], %12 {strides = array<i32>} : memref<256x128xf32, #tpu.memory_space<vmem>>, vector<256x128xf32>,
    } else {
    }
    return
  }
  func.func @transform_0(%arg0: i32, %arg1: i32, %arg2: i32) -> (i32, i32) {
    %c0_i32 = arith.constant 0 : i32
    return %arg0, %arg2 : i32, i32
  }
  func.func @transform_1(%arg0: i32, %arg1: i32, %arg2: i32) -> (i32, i32) {
    %c0_i32 = arith.constant 0 : i32
    return %arg2, %arg1 : i32, i32
  }
  func.func @transform_2(%arg0: i32, %arg1: i32, %arg2: i32) -> (i32, i32) {
    %c0_i32 = arith.constant 0 : i32
    return %arg0, %arg1 : i32, i32
  }
}

module attributes {stable_mosaic.version = 11 : i64} {
  func.func @_bn_stats_kernel(%arg0: i32, %arg1: memref<512x128xf32, #tpu.memory_space<vmem>>, %arg2: memref<1x128xf32, #tpu.memory_space<vmem>>, %arg3: memref<1x128xf32, #tpu.memory_space<vmem>>) attributes {dimension_semantics = [#tpu.dimension_semantics<arbitrary>], iteration_bounds = array<i64: 1>, scalar_prefetch = 0 : i64, scratch_operands = 0 : i64, tpu.core_type = #tpu.core_type<tc>, window_params = [{transform_indices = @transform_0, window_bounds = array<i64: 512, 128>}, {pipeline_mode = #tpu.pipeline_mode<synchronous>, transform_indices = @transform_1, window_bounds = array<i64: 1, 128>}, {pipeline_mode = #tpu.pipeline_mode<synchronous>, transform_indices = @transform_2, window_bounds = array<i64: 1, 128>}]} {
    %c0_i32 = arith.constant 0 : i32
    %0 = arith.cmpi eq, %arg0, %c0_i32 : i32
    %1 = arith.extui %0 : i1 to i32
    %c0_i32_0 = arith.constant 0 : i32
    %2 = arith.cmpi ne, %1, %c0_i32_0 : i32
    scf.if %2 {
      %cst_11 = arith.constant 0.000000e+00 : f32
      %15 = vector.broadcast %cst_11 : f32 to vector<1x128xf32>
      %c0_12 = arith.constant 0 : index
      %c0_13 = arith.constant 0 : index
      %16 = vector.load %arg2[%c0_12, %c0_13] : memref<1x128xf32, #tpu.memory_space<vmem>>, vector<1x128xf32>
      tpu.vector_store %arg2[%c0_12, %c0_13], %15 {strides = array<i32>} : memref<1x128xf32, #tpu.memory_space<vmem>>, vector<1x128xf32>,
      %cst_14 = arith.constant 0.000000e+00 : f32
      %17 = vector.broadcast %cst_14 : f32 to vector<1x128xf32>
      %c0_15 = arith.constant 0 : index
      %c0_16 = arith.constant 0 : index
      %18 = vector.load %arg3[%c0_15, %c0_16] : memref<1x128xf32, #tpu.memory_space<vmem>>, vector<1x128xf32>
      tpu.vector_store %arg3[%c0_15, %c0_16], %17 {strides = array<i32>} : memref<1x128xf32, #tpu.memory_space<vmem>>, vector<1x128xf32>,
    } else {
    }
    %c0 = arith.constant 0 : index
    %c0_1 = arith.constant 0 : index
    %3 = vector.load %arg1[%c0, %c0_1] : memref<512x128xf32, #tpu.memory_space<vmem>>, vector<512x128xf32>
    %c0_2 = arith.constant 0 : index
    %c0_3 = arith.constant 0 : index
    %4 = vector.load %arg2[%c0_2, %c0_3] : memref<1x128xf32, #tpu.memory_space<vmem>>, vector<1x128xf32>
    %cst = arith.constant dense<0.000000e+00> : vector<128xf32>
    %5 = vector.multi_reduction <add>, %3, %cst [0] : vector<512x128xf32> to vector<128xf32>
    %6 = vector.shape_cast %5 : vector<128xf32> to vector<1x128xf32>
    %7 = arith.addf %4, %6 : vector<1x128xf32>
    %c0_4 = arith.constant 0 : index
    %c0_5 = arith.constant 0 : index
    %8 = vector.load %arg2[%c0_4, %c0_5] : memref<1x128xf32, #tpu.memory_space<vmem>>, vector<1x128xf32>
    tpu.vector_store %arg2[%c0_4, %c0_5], %7 {strides = array<i32>} : memref<1x128xf32, #tpu.memory_space<vmem>>, vector<1x128xf32>,
    %c0_6 = arith.constant 0 : index
    %c0_7 = arith.constant 0 : index
    %9 = vector.load %arg3[%c0_6, %c0_7] : memref<1x128xf32, #tpu.memory_space<vmem>>, vector<1x128xf32>
    %10 = arith.mulf %3, %3 : vector<512x128xf32>
    %cst_8 = arith.constant dense<0.000000e+00> : vector<128xf32>
    %11 = vector.multi_reduction <add>, %10, %cst_8 [0] : vector<512x128xf32> to vector<128xf32>
    %12 = vector.shape_cast %11 : vector<128xf32> to vector<1x128xf32>
    %13 = arith.addf %9, %12 : vector<1x128xf32>
    %c0_9 = arith.constant 0 : index
    %c0_10 = arith.constant 0 : index
    %14 = vector.load %arg3[%c0_9, %c0_10] : memref<1x128xf32, #tpu.memory_space<vmem>>, vector<1x128xf32>
    tpu.vector_store %arg3[%c0_9, %c0_10], %13 {strides = array<i32>} : memref<1x128xf32, #tpu.memory_space<vmem>>, vector<1x128xf32>,
    return
  }
  func.func @transform_0(%arg0: i32) -> (i32, i32) {
    %c0_i32 = arith.constant 0 : i32
    %c0_i32_0 = arith.constant 0 : i32
    return %arg0, %c0_i32 : i32, i32
  }
  func.func @transform_1(%arg0: i32) -> (i32, i32) {
    %c0_i32 = arith.constant 0 : i32
    %c0_i32_0 = arith.constant 0 : i32
    %c0_i32_1 = arith.constant 0 : i32
    return %c0_i32, %c0_i32_0 : i32, i32
  }
  func.func @transform_2(%arg0: i32) -> (i32, i32) {
    %c0_i32 = arith.constant 0 : i32
    %c0_i32_0 = arith.constant 0 : i32
    %c0_i32_1 = arith.constant 0 : i32
    return %c0_i32, %c0_i32_0 : i32, i32
  }
}

module attributes {stable_mosaic.version = 11 : i64} {
  func.func @_bn_apply_kernel(%arg0: i32, %arg1: memref<512x128xf32, #tpu.memory_space<vmem>>, %arg2: memref<1x128xf32, #tpu.memory_space<vmem>>, %arg3: memref<1x128xf32, #tpu.memory_space<vmem>>, %arg4: memref<512x128xbf16, #tpu.memory_space<vmem>>) attributes {dimension_semantics = [#tpu.dimension_semantics<parallel>], iteration_bounds = array<i64: 1>, scalar_prefetch = 0 : i64, scratch_operands = 0 : i64, tpu.core_type = #tpu.core_type<tc>, window_params = [{transform_indices = @transform_0, window_bounds = array<i64: 512, 128>}, {pipeline_mode = #tpu.pipeline_mode<synchronous>, transform_indices = @transform_1, window_bounds = array<i64: 1, 128>}, {pipeline_mode = #tpu.pipeline_mode<synchronous>, transform_indices = @transform_2, window_bounds = array<i64: 1, 128>}, {transform_indices = @transform_3, window_bounds = array<i64: 512, 128>}]} {
    %c0 = arith.constant 0 : index
    %c0_0 = arith.constant 0 : index
    %0 = vector.load %arg1[%c0, %c0_0] : memref<512x128xf32, #tpu.memory_space<vmem>>, vector<512x128xf32>
    %c0_1 = arith.constant 0 : index
    %c0_2 = arith.constant 0 : index
    %1 = vector.load %arg2[%c0_1, %c0_2] : memref<1x128xf32, #tpu.memory_space<vmem>>, vector<1x128xf32>
    %2 = vector.broadcast %1 : vector<1x128xf32> to vector<512x128xf32>
    %3 = arith.mulf %0, %2 : vector<512x128xf32>
    %c0_3 = arith.constant 0 : index
    %c0_4 = arith.constant 0 : index
    %4 = vector.load %arg3[%c0_3, %c0_4] : memref<1x128xf32, #tpu.memory_space<vmem>>, vector<1x128xf32>
    %5 = vector.broadcast %4 : vector<1x128xf32> to vector<512x128xf32>
    %6 = arith.addf %3, %5 : vector<512x128xf32>
    %7 = arith.truncf %6 : vector<512x128xf32> to vector<512x128xbf16>
    %c0_5 = arith.constant 0 : index
    %c0_6 = arith.constant 0 : index
    %8 = vector.load %arg4[%c0_5, %c0_6] : memref<512x128xbf16, #tpu.memory_space<vmem>>, vector<512x128xbf16>
    tpu.vector_store %arg4[%c0_5, %c0_6], %7 {strides = array<i32>} : memref<512x128xbf16, #tpu.memory_space<vmem>>, vector<512x128xbf16>,
    return
  }
  func.func @transform_0(%arg0: i32) -> (i32, i32) {
    %c0_i32 = arith.constant 0 : i32
    %c0_i32_0 = arith.constant 0 : i32
    return %arg0, %c0_i32 : i32, i32
  }
  func.func @transform_1(%arg0: i32) -> (i32, i32) {
    %c0_i32 = arith.constant 0 : i32
    %c0_i32_0 = arith.constant 0 : i32
    %c0_i32_1 = arith.constant 0 : i32
    return %c0_i32, %c0_i32_0 : i32, i32
  }
  func.func @transform_2(%arg0: i32) -> (i32, i32) {
    %c0_i32 = arith.constant 0 : i32
    %c0_i32_0 = arith.constant 0 : i32
    %c0_i32_1 = arith.constant 0 : i32
    return %c0_i32, %c0_i32_0 : i32, i32
  }
  func.func @transform_3(%arg0: i32) -> (i32, i32) {
    %c0_i32 = arith.constant 0 : i32
    %c0_i32_0 = arith.constant 0 : i32
    return %arg0, %c0_i32 : i32, i32
  }
}

module attributes {stable_mosaic.version = 11 : i64} {
  func.func @kernel(%arg0: i32, %arg1: i32, %arg2: i32, %arg3: memref<128x512xbf16, #tpu.memory_space<vmem>>, %arg4: memref<512x256xbf16, #tpu.memory_space<vmem>>, %arg5: memref<128x256xf32, #tpu.memory_space<vmem>>, %arg6: memref<128x256xf32, #tpu.memory_space<vmem>>) attributes {dimension_semantics = [#tpu.dimension_semantics<parallel>, #tpu.dimension_semantics<parallel>, #tpu.dimension_semantics<arbitrary>], iteration_bounds = array<i64: 1, 1, 4>, scalar_prefetch = 0 : i64, scratch_operands = 1 : i64, tpu.core_type = #tpu.core_type<tc>, window_params = [{transform_indices = @transform_0, window_bounds = array<i64: 128, 512>}, {transform_indices = @transform_1, window_bounds = array<i64: 512, 256>}, {transform_indices = @transform_2, window_bounds = array<i64: 128, 256>}]} {
    %c0 = arith.constant 0 : index
    %c0_0 = arith.constant 0 : index
    %0 = vector.load %arg3[%c0, %c0_0] : memref<128x512xbf16, #tpu.memory_space<vmem>>, vector<128x512xbf16>
    %c0_1 = arith.constant 0 : index
    %c0_2 = arith.constant 0 : index
    %1 = vector.load %arg4[%c0_1, %c0_2] : memref<512x256xbf16, #tpu.memory_space<vmem>>, vector<512x256xbf16>
    %cst = arith.constant dense<0.000000e+00> : vector<128x256xf32>
    %2 = tpu.matmul %0, %1, %cst {dimension_numbers = #tpu.dot_dimension_numbers<[1], [0], [0], [1], [0, 0, 1, 1], [], []>} : vector<128x512xbf16>, vector<512x256xbf16>, vector<128x256xf32> -> vector<128x256xf32>
    %c0_i32 = arith.constant 0 : i32
    %3 = arith.cmpi eq, %arg2, %c0_i32 : i32
    %4 = arith.extui %3 : i1 to i32
    %c0_i32_3 = arith.constant 0 : i32
    %5 = arith.cmpi ne, %4, %c0_i32_3 : i32
    scf.if %5 {
      %cst_9 = arith.constant 0.000000e+00 : f32
      %12 = vector.broadcast %cst_9 : f32 to vector<128x256xf32>
      %c0_10 = arith.constant 0 : index
      %c0_11 = arith.constant 0 : index
      %13 = vector.load %arg6[%c0_10, %c0_11] : memref<128x256xf32, #tpu.memory_space<vmem>>, vector<128x256xf32>
      tpu.vector_store %arg6[%c0_10, %c0_11], %12 {strides = array<i32>} : memref<128x256xf32, #tpu.memory_space<vmem>>, vector<128x256xf32>,
    } else {
    }
    %c0_4 = arith.constant 0 : index
    %c0_5 = arith.constant 0 : index
    %6 = vector.load %arg6[%c0_4, %c0_5] : memref<128x256xf32, #tpu.memory_space<vmem>>, vector<128x256xf32>
    %7 = arith.addf %6, %2 : vector<128x256xf32>
    %c0_6 = arith.constant 0 : index
    %c0_7 = arith.constant 0 : index
    %8 = vector.load %arg6[%c0_6, %c0_7] : memref<128x256xf32, #tpu.memory_space<vmem>>, vector<128x256xf32>
    tpu.vector_store %arg6[%c0_6, %c0_7], %7 {strides = array<i32>} : memref<128x256xf32, #tpu.memory_space<vmem>>, vector<128x256xf32>,
    %c3_i32 = arith.constant 3 : i32
    %9 = arith.cmpi eq, %arg2, %c3_i32 : i32
    %10 = arith.extui %9 : i1 to i32
    %c0_i32_8 = arith.constant 0 : i32
    %11 = arith.cmpi ne, %10, %c0_i32_8 : i32
    scf.if %11 {
      %c0_9 = arith.constant 0 : index
      %c0_10 = arith.constant 0 : index
      %12 = vector.load %arg6[%c0_9, %c0_10] : memref<128x256xf32, #tpu.memory_space<vmem>>, vector<128x256xf32>
      %c0_11 = arith.constant 0 : index
      %c0_12 = arith.constant 0 : index
      %13 = vector.load %arg5[%c0_11, %c0_12] : memref<128x256xf32, #tpu.memory_space<vmem>>, vector<128x256xf32>
      tpu.vector_store %arg5[%c0_11, %c0_12], %12 {strides = array<i32>} : memref<128x256xf32, #tpu.memory_space<vmem>>, vector<128x256xf32>,
    } else {
    }
    return
  }
  func.func @transform_0(%arg0: i32, %arg1: i32, %arg2: i32) -> (i32, i32) {
    %c0_i32 = arith.constant 0 : i32
    return %arg0, %arg2 : i32, i32
  }
  func.func @transform_1(%arg0: i32, %arg1: i32, %arg2: i32) -> (i32, i32) {
    %c0_i32 = arith.constant 0 : i32
    return %arg2, %arg1 : i32, i32
  }
  func.func @transform_2(%arg0: i32, %arg1: i32, %arg2: i32) -> (i32, i32) {
    %c0_i32 = arith.constant 0 : i32
    return %arg0, %arg1 : i32, i32
  }
}

module attributes {stable_mosaic.version = 11 : i64} {
  func.func @_bn_stats_kernel(%arg0: i32, %arg1: memref<128x256xf32, #tpu.memory_space<vmem>>, %arg2: memref<1x256xf32, #tpu.memory_space<vmem>>, %arg3: memref<1x256xf32, #tpu.memory_space<vmem>>) attributes {dimension_semantics = [#tpu.dimension_semantics<arbitrary>], iteration_bounds = array<i64: 1>, scalar_prefetch = 0 : i64, scratch_operands = 0 : i64, tpu.core_type = #tpu.core_type<tc>, window_params = [{transform_indices = @transform_0, window_bounds = array<i64: 128, 256>}, {pipeline_mode = #tpu.pipeline_mode<synchronous>, transform_indices = @transform_1, window_bounds = array<i64: 1, 256>}, {pipeline_mode = #tpu.pipeline_mode<synchronous>, transform_indices = @transform_2, window_bounds = array<i64: 1, 256>}]} {
    %c0_i32 = arith.constant 0 : i32
    %0 = arith.cmpi eq, %arg0, %c0_i32 : i32
    %1 = arith.extui %0 : i1 to i32
    %c0_i32_0 = arith.constant 0 : i32
    %2 = arith.cmpi ne, %1, %c0_i32_0 : i32
    scf.if %2 {
      %cst_11 = arith.constant 0.000000e+00 : f32
      %15 = vector.broadcast %cst_11 : f32 to vector<1x256xf32>
      %c0_12 = arith.constant 0 : index
      %c0_13 = arith.constant 0 : index
      %16 = vector.load %arg2[%c0_12, %c0_13] : memref<1x256xf32, #tpu.memory_space<vmem>>, vector<1x256xf32>
      tpu.vector_store %arg2[%c0_12, %c0_13], %15 {strides = array<i32>} : memref<1x256xf32, #tpu.memory_space<vmem>>, vector<1x256xf32>,
      %cst_14 = arith.constant 0.000000e+00 : f32
      %17 = vector.broadcast %cst_14 : f32 to vector<1x256xf32>
      %c0_15 = arith.constant 0 : index
      %c0_16 = arith.constant 0 : index
      %18 = vector.load %arg3[%c0_15, %c0_16] : memref<1x256xf32, #tpu.memory_space<vmem>>, vector<1x256xf32>
      tpu.vector_store %arg3[%c0_15, %c0_16], %17 {strides = array<i32>} : memref<1x256xf32, #tpu.memory_space<vmem>>, vector<1x256xf32>,
    } else {
    }
    %c0 = arith.constant 0 : index
    %c0_1 = arith.constant 0 : index
    %3 = vector.load %arg1[%c0, %c0_1] : memref<128x256xf32, #tpu.memory_space<vmem>>, vector<128x256xf32>
    %c0_2 = arith.constant 0 : index
    %c0_3 = arith.constant 0 : index
    %4 = vector.load %arg2[%c0_2, %c0_3] : memref<1x256xf32, #tpu.memory_space<vmem>>, vector<1x256xf32>
    %cst = arith.constant dense<0.000000e+00> : vector<256xf32>
    %5 = vector.multi_reduction <add>, %3, %cst [0] : vector<128x256xf32> to vector<256xf32>
    %6 = vector.shape_cast %5 : vector<256xf32> to vector<1x256xf32>
    %7 = arith.addf %4, %6 : vector<1x256xf32>
    %c0_4 = arith.constant 0 : index
    %c0_5 = arith.constant 0 : index
    %8 = vector.load %arg2[%c0_4, %c0_5] : memref<1x256xf32, #tpu.memory_space<vmem>>, vector<1x256xf32>
    tpu.vector_store %arg2[%c0_4, %c0_5], %7 {strides = array<i32>} : memref<1x256xf32, #tpu.memory_space<vmem>>, vector<1x256xf32>,
    %c0_6 = arith.constant 0 : index
    %c0_7 = arith.constant 0 : index
    %9 = vector.load %arg3[%c0_6, %c0_7] : memref<1x256xf32, #tpu.memory_space<vmem>>, vector<1x256xf32>
    %10 = arith.mulf %3, %3 : vector<128x256xf32>
    %cst_8 = arith.constant dense<0.000000e+00> : vector<256xf32>
    %11 = vector.multi_reduction <add>, %10, %cst_8 [0] : vector<128x256xf32> to vector<256xf32>
    %12 = vector.shape_cast %11 : vector<256xf32> to vector<1x256xf32>
    %13 = arith.addf %9, %12 : vector<1x256xf32>
    %c0_9 = arith.constant 0 : index
    %c0_10 = arith.constant 0 : index
    %14 = vector.load %arg3[%c0_9, %c0_10] : memref<1x256xf32, #tpu.memory_space<vmem>>, vector<1x256xf32>
    tpu.vector_store %arg3[%c0_9, %c0_10], %13 {strides = array<i32>} : memref<1x256xf32, #tpu.memory_space<vmem>>, vector<1x256xf32>,
    return
  }
  func.func @transform_0(%arg0: i32) -> (i32, i32) {
    %c0_i32 = arith.constant 0 : i32
    %c0_i32_0 = arith.constant 0 : i32
    return %arg0, %c0_i32 : i32, i32
  }
  func.func @transform_1(%arg0: i32) -> (i32, i32) {
    %c0_i32 = arith.constant 0 : i32
    %c0_i32_0 = arith.constant 0 : i32
    %c0_i32_1 = arith.constant 0 : i32
    return %c0_i32, %c0_i32_0 : i32, i32
  }
  func.func @transform_2(%arg0: i32) -> (i32, i32) {
    %c0_i32 = arith.constant 0 : i32
    %c0_i32_0 = arith.constant 0 : i32
    %c0_i32_1 = arith.constant 0 : i32
    return %c0_i32, %c0_i32_0 : i32, i32
  }
}

module attributes {stable_mosaic.version = 11 : i64} {
  func.func @_bn_apply_kernel(%arg0: i32, %arg1: memref<128x256xf32, #tpu.memory_space<vmem>>, %arg2: memref<1x256xf32, #tpu.memory_space<vmem>>, %arg3: memref<1x256xf32, #tpu.memory_space<vmem>>, %arg4: memref<128x256xbf16, #tpu.memory_space<vmem>>) attributes {dimension_semantics = [#tpu.dimension_semantics<parallel>], iteration_bounds = array<i64: 1>, scalar_prefetch = 0 : i64, scratch_operands = 0 : i64, tpu.core_type = #tpu.core_type<tc>, window_params = [{transform_indices = @transform_0, window_bounds = array<i64: 128, 256>}, {pipeline_mode = #tpu.pipeline_mode<synchronous>, transform_indices = @transform_1, window_bounds = array<i64: 1, 256>}, {pipeline_mode = #tpu.pipeline_mode<synchronous>, transform_indices = @transform_2, window_bounds = array<i64: 1, 256>}, {transform_indices = @transform_3, window_bounds = array<i64: 128, 256>}]} {
    %c0 = arith.constant 0 : index
    %c0_0 = arith.constant 0 : index
    %0 = vector.load %arg1[%c0, %c0_0] : memref<128x256xf32, #tpu.memory_space<vmem>>, vector<128x256xf32>
    %c0_1 = arith.constant 0 : index
    %c0_2 = arith.constant 0 : index
    %1 = vector.load %arg2[%c0_1, %c0_2] : memref<1x256xf32, #tpu.memory_space<vmem>>, vector<1x256xf32>
    %2 = vector.broadcast %1 : vector<1x256xf32> to vector<128x256xf32>
    %3 = arith.mulf %0, %2 : vector<128x256xf32>
    %c0_3 = arith.constant 0 : index
    %c0_4 = arith.constant 0 : index
    %4 = vector.load %arg3[%c0_3, %c0_4] : memref<1x256xf32, #tpu.memory_space<vmem>>, vector<1x256xf32>
    %5 = vector.broadcast %4 : vector<1x256xf32> to vector<128x256xf32>
    %6 = arith.addf %3, %5 : vector<128x256xf32>
    %7 = arith.truncf %6 : vector<128x256xf32> to vector<128x256xbf16>
    %c0_5 = arith.constant 0 : index
    %c0_6 = arith.constant 0 : index
    %8 = vector.load %arg4[%c0_5, %c0_6] : memref<128x256xbf16, #tpu.memory_space<vmem>>, vector<128x256xbf16>
    tpu.vector_store %arg4[%c0_5, %c0_6], %7 {strides = array<i32>} : memref<128x256xbf16, #tpu.memory_space<vmem>>, vector<128x256xbf16>,
    return
  }
  func.func @transform_0(%arg0: i32) -> (i32, i32) {
    %c0_i32 = arith.constant 0 : i32
    %c0_i32_0 = arith.constant 0 : i32
    return %arg0, %c0_i32 : i32, i32
  }
  func.func @transform_1(%arg0: i32) -> (i32, i32) {
    %c0_i32 = arith.constant 0 : i32
    %c0_i32_0 = arith.constant 0 : i32
    %c0_i32_1 = arith.constant 0 : i32
    return %c0_i32, %c0_i32_0 : i32, i32
  }
  func.func @transform_2(%arg0: i32) -> (i32, i32) {
    %c0_i32 = arith.constant 0 : i32
    %c0_i32_0 = arith.constant 0 : i32
    %c0_i32_1 = arith.constant 0 : i32
    return %c0_i32, %c0_i32_0 : i32, i32
  }
  func.func @transform_3(%arg0: i32) -> (i32, i32) {
    %c0_i32 = arith.constant 0 : i32
    %c0_i32_0 = arith.constant 0 : i32
    return %arg0, %c0_i32 : i32, i32
  }
}

module attributes {stable_mosaic.version = 11 : i64} {
  func.func @kernel(%arg0: i32, %arg1: i32, %arg2: i32, %arg3: memref<32x512xbf16, #tpu.memory_space<vmem>>, %arg4: memref<512x512xbf16, #tpu.memory_space<vmem>>, %arg5: memref<32x512xf32, #tpu.memory_space<vmem>>, %arg6: memref<32x512xf32, #tpu.memory_space<vmem>>) attributes {dimension_semantics = [#tpu.dimension_semantics<parallel>, #tpu.dimension_semantics<parallel>, #tpu.dimension_semantics<arbitrary>], iteration_bounds = array<i64: 1, 1, 8>, scalar_prefetch = 0 : i64, scratch_operands = 1 : i64, tpu.core_type = #tpu.core_type<tc>, window_params = [{transform_indices = @transform_0, window_bounds = array<i64: 32, 512>}, {transform_indices = @transform_1, window_bounds = array<i64: 512, 512>}, {transform_indices = @transform_2, window_bounds = array<i64: 32, 512>}]} {
    %c0 = arith.constant 0 : index
    %c0_0 = arith.constant 0 : index
    %0 = vector.load %arg3[%c0, %c0_0] : memref<32x512xbf16, #tpu.memory_space<vmem>>, vector<32x512xbf16>
    %c0_1 = arith.constant 0 : index
    %c0_2 = arith.constant 0 : index
    %1 = vector.load %arg4[%c0_1, %c0_2] : memref<512x512xbf16, #tpu.memory_space<vmem>>, vector<512x512xbf16>
    %cst = arith.constant dense<0.000000e+00> : vector<32x512xf32>
    %2 = tpu.matmul %0, %1, %cst {dimension_numbers = #tpu.dot_dimension_numbers<[1], [0], [0], [1], [0, 0, 1, 1], [], []>} : vector<32x512xbf16>, vector<512x512xbf16>, vector<32x512xf32> -> vector<32x512xf32>
    %c0_i32 = arith.constant 0 : i32
    %3 = arith.cmpi eq, %arg2, %c0_i32 : i32
    %4 = arith.extui %3 : i1 to i32
    %c0_i32_3 = arith.constant 0 : i32
    %5 = arith.cmpi ne, %4, %c0_i32_3 : i32
    scf.if %5 {
      %cst_9 = arith.constant 0.000000e+00 : f32
      %12 = vector.broadcast %cst_9 : f32 to vector<32x512xf32>
      %c0_10 = arith.constant 0 : index
      %c0_11 = arith.constant 0 : index
      %13 = vector.load %arg6[%c0_10, %c0_11] : memref<32x512xf32, #tpu.memory_space<vmem>>, vector<32x512xf32>
      tpu.vector_store %arg6[%c0_10, %c0_11], %12 {strides = array<i32>} : memref<32x512xf32, #tpu.memory_space<vmem>>, vector<32x512xf32>,
    } else {
    }
    %c0_4 = arith.constant 0 : index
    %c0_5 = arith.constant 0 : index
    %6 = vector.load %arg6[%c0_4, %c0_5] : memref<32x512xf32, #tpu.memory_space<vmem>>, vector<32x512xf32>
    %7 = arith.addf %6, %2 : vector<32x512xf32>
    %c0_6 = arith.constant 0 : index
    %c0_7 = arith.constant 0 : index
    %8 = vector.load %arg6[%c0_6, %c0_7] : memref<32x512xf32, #tpu.memory_space<vmem>>, vector<32x512xf32>
    tpu.vector_store %arg6[%c0_6, %c0_7], %7 {strides = array<i32>} : memref<32x512xf32, #tpu.memory_space<vmem>>, vector<32x512xf32>,
    %c7_i32 = arith.constant 7 : i32
    %9 = arith.cmpi eq, %arg2, %c7_i32 : i32
    %10 = arith.extui %9 : i1 to i32
    %c0_i32_8 = arith.constant 0 : i32
    %11 = arith.cmpi ne, %10, %c0_i32_8 : i32
    scf.if %11 {
      %c0_9 = arith.constant 0 : index
      %c0_10 = arith.constant 0 : index
      %12 = vector.load %arg6[%c0_9, %c0_10] : memref<32x512xf32, #tpu.memory_space<vmem>>, vector<32x512xf32>
      %c0_11 = arith.constant 0 : index
      %c0_12 = arith.constant 0 : index
      %13 = vector.load %arg5[%c0_11, %c0_12] : memref<32x512xf32, #tpu.memory_space<vmem>>, vector<32x512xf32>
      tpu.vector_store %arg5[%c0_11, %c0_12], %12 {strides = array<i32>} : memref<32x512xf32, #tpu.memory_space<vmem>>, vector<32x512xf32>,
    } else {
    }
    return
  }
  func.func @transform_0(%arg0: i32, %arg1: i32, %arg2: i32) -> (i32, i32) {
    %c0_i32 = arith.constant 0 : i32
    return %arg0, %arg2 : i32, i32
  }
  func.func @transform_1(%arg0: i32, %arg1: i32, %arg2: i32) -> (i32, i32) {
    %c0_i32 = arith.constant 0 : i32
    return %arg2, %arg1 : i32, i32
  }
  func.func @transform_2(%arg0: i32, %arg1: i32, %arg2: i32) -> (i32, i32) {
    %c0_i32 = arith.constant 0 : i32
    return %arg0, %arg1 : i32, i32
  }
}

module attributes {stable_mosaic.version = 11 : i64} {
  func.func @_bn_stats_kernel(%arg0: i32, %arg1: memref<32x512xf32, #tpu.memory_space<vmem>>, %arg2: memref<1x512xf32, #tpu.memory_space<vmem>>, %arg3: memref<1x512xf32, #tpu.memory_space<vmem>>) attributes {dimension_semantics = [#tpu.dimension_semantics<arbitrary>], iteration_bounds = array<i64: 1>, scalar_prefetch = 0 : i64, scratch_operands = 0 : i64, tpu.core_type = #tpu.core_type<tc>, window_params = [{transform_indices = @transform_0, window_bounds = array<i64: 32, 512>}, {pipeline_mode = #tpu.pipeline_mode<synchronous>, transform_indices = @transform_1, window_bounds = array<i64: 1, 512>}, {pipeline_mode = #tpu.pipeline_mode<synchronous>, transform_indices = @transform_2, window_bounds = array<i64: 1, 512>}]} {
    %c0_i32 = arith.constant 0 : i32
    %0 = arith.cmpi eq, %arg0, %c0_i32 : i32
    %1 = arith.extui %0 : i1 to i32
    %c0_i32_0 = arith.constant 0 : i32
    %2 = arith.cmpi ne, %1, %c0_i32_0 : i32
    scf.if %2 {
      %cst_11 = arith.constant 0.000000e+00 : f32
      %15 = vector.broadcast %cst_11 : f32 to vector<1x512xf32>
      %c0_12 = arith.constant 0 : index
      %c0_13 = arith.constant 0 : index
      %16 = vector.load %arg2[%c0_12, %c0_13] : memref<1x512xf32, #tpu.memory_space<vmem>>, vector<1x512xf32>
      tpu.vector_store %arg2[%c0_12, %c0_13], %15 {strides = array<i32>} : memref<1x512xf32, #tpu.memory_space<vmem>>, vector<1x512xf32>,
      %cst_14 = arith.constant 0.000000e+00 : f32
      %17 = vector.broadcast %cst_14 : f32 to vector<1x512xf32>
      %c0_15 = arith.constant 0 : index
      %c0_16 = arith.constant 0 : index
      %18 = vector.load %arg3[%c0_15, %c0_16] : memref<1x512xf32, #tpu.memory_space<vmem>>, vector<1x512xf32>
      tpu.vector_store %arg3[%c0_15, %c0_16], %17 {strides = array<i32>} : memref<1x512xf32, #tpu.memory_space<vmem>>, vector<1x512xf32>,
    } else {
    }
    %c0 = arith.constant 0 : index
    %c0_1 = arith.constant 0 : index
    %3 = vector.load %arg1[%c0, %c0_1] : memref<32x512xf32, #tpu.memory_space<vmem>>, vector<32x512xf32>
    %c0_2 = arith.constant 0 : index
    %c0_3 = arith.constant 0 : index
    %4 = vector.load %arg2[%c0_2, %c0_3] : memref<1x512xf32, #tpu.memory_space<vmem>>, vector<1x512xf32>
    %cst = arith.constant dense<0.000000e+00> : vector<512xf32>
    %5 = vector.multi_reduction <add>, %3, %cst [0] : vector<32x512xf32> to vector<512xf32>
    %6 = vector.shape_cast %5 : vector<512xf32> to vector<1x512xf32>
    %7 = arith.addf %4, %6 : vector<1x512xf32>
    %c0_4 = arith.constant 0 : index
    %c0_5 = arith.constant 0 : index
    %8 = vector.load %arg2[%c0_4, %c0_5] : memref<1x512xf32, #tpu.memory_space<vmem>>, vector<1x512xf32>
    tpu.vector_store %arg2[%c0_4, %c0_5], %7 {strides = array<i32>} : memref<1x512xf32, #tpu.memory_space<vmem>>, vector<1x512xf32>,
    %c0_6 = arith.constant 0 : index
    %c0_7 = arith.constant 0 : index
    %9 = vector.load %arg3[%c0_6, %c0_7] : memref<1x512xf32, #tpu.memory_space<vmem>>, vector<1x512xf32>
    %10 = arith.mulf %3, %3 : vector<32x512xf32>
    %cst_8 = arith.constant dense<0.000000e+00> : vector<512xf32>
    %11 = vector.multi_reduction <add>, %10, %cst_8 [0] : vector<32x512xf32> to vector<512xf32>
    %12 = vector.shape_cast %11 : vector<512xf32> to vector<1x512xf32>
    %13 = arith.addf %9, %12 : vector<1x512xf32>
    %c0_9 = arith.constant 0 : index
    %c0_10 = arith.constant 0 : index
    %14 = vector.load %arg3[%c0_9, %c0_10] : memref<1x512xf32, #tpu.memory_space<vmem>>, vector<1x512xf32>
    tpu.vector_store %arg3[%c0_9, %c0_10], %13 {strides = array<i32>} : memref<1x512xf32, #tpu.memory_space<vmem>>, vector<1x512xf32>,
    return
  }
  func.func @transform_0(%arg0: i32) -> (i32, i32) {
    %c0_i32 = arith.constant 0 : i32
    %c0_i32_0 = arith.constant 0 : i32
    return %arg0, %c0_i32 : i32, i32
  }
  func.func @transform_1(%arg0: i32) -> (i32, i32) {
    %c0_i32 = arith.constant 0 : i32
    %c0_i32_0 = arith.constant 0 : i32
    %c0_i32_1 = arith.constant 0 : i32
    return %c0_i32, %c0_i32_0 : i32, i32
  }
  func.func @transform_2(%arg0: i32) -> (i32, i32) {
    %c0_i32 = arith.constant 0 : i32
    %c0_i32_0 = arith.constant 0 : i32
    %c0_i32_1 = arith.constant 0 : i32
    return %c0_i32, %c0_i32_0 : i32, i32
  }
}

module attributes {stable_mosaic.version = 11 : i64} {
  func.func @_bn_apply_kernel(%arg0: i32, %arg1: memref<32x512xf32, #tpu.memory_space<vmem>>, %arg2: memref<1x512xf32, #tpu.memory_space<vmem>>, %arg3: memref<1x512xf32, #tpu.memory_space<vmem>>, %arg4: memref<32x512xbf16, #tpu.memory_space<vmem>>) attributes {dimension_semantics = [#tpu.dimension_semantics<parallel>], iteration_bounds = array<i64: 1>, scalar_prefetch = 0 : i64, scratch_operands = 0 : i64, tpu.core_type = #tpu.core_type<tc>, window_params = [{transform_indices = @transform_0, window_bounds = array<i64: 32, 512>}, {pipeline_mode = #tpu.pipeline_mode<synchronous>, transform_indices = @transform_1, window_bounds = array<i64: 1, 512>}, {pipeline_mode = #tpu.pipeline_mode<synchronous>, transform_indices = @transform_2, window_bounds = array<i64: 1, 512>}, {transform_indices = @transform_3, window_bounds = array<i64: 32, 512>}]} {
    %c0 = arith.constant 0 : index
    %c0_0 = arith.constant 0 : index
    %0 = vector.load %arg1[%c0, %c0_0] : memref<32x512xf32, #tpu.memory_space<vmem>>, vector<32x512xf32>
    %c0_1 = arith.constant 0 : index
    %c0_2 = arith.constant 0 : index
    %1 = vector.load %arg2[%c0_1, %c0_2] : memref<1x512xf32, #tpu.memory_space<vmem>>, vector<1x512xf32>
    %2 = vector.broadcast %1 : vector<1x512xf32> to vector<32x512xf32>
    %3 = arith.mulf %0, %2 : vector<32x512xf32>
    %c0_3 = arith.constant 0 : index
    %c0_4 = arith.constant 0 : index
    %4 = vector.load %arg3[%c0_3, %c0_4] : memref<1x512xf32, #tpu.memory_space<vmem>>, vector<1x512xf32>
    %5 = vector.broadcast %4 : vector<1x512xf32> to vector<32x512xf32>
    %6 = arith.addf %3, %5 : vector<32x512xf32>
    %7 = arith.truncf %6 : vector<32x512xf32> to vector<32x512xbf16>
    %c0_5 = arith.constant 0 : index
    %c0_6 = arith.constant 0 : index
    %8 = vector.load %arg4[%c0_5, %c0_6] : memref<32x512xbf16, #tpu.memory_space<vmem>>, vector<32x512xbf16>
    tpu.vector_store %arg4[%c0_5, %c0_6], %7 {strides = array<i32>} : memref<32x512xbf16, #tpu.memory_space<vmem>>, vector<32x512xbf16>,
    return
  }
  func.func @transform_0(%arg0: i32) -> (i32, i32) {
    %c0_i32 = arith.constant 0 : i32
    %c0_i32_0 = arith.constant 0 : i32
    return %arg0, %c0_i32 : i32, i32
  }
  func.func @transform_1(%arg0: i32) -> (i32, i32) {
    %c0_i32 = arith.constant 0 : i32
    %c0_i32_0 = arith.constant 0 : i32
    %c0_i32_1 = arith.constant 0 : i32
    return %c0_i32, %c0_i32_0 : i32, i32
  }
  func.func @transform_2(%arg0: i32) -> (i32, i32) {
    %c0_i32 = arith.constant 0 : i32
    %c0_i32_0 = arith.constant 0 : i32
    %c0_i32_1 = arith.constant 0 : i32
    return %c0_i32, %c0_i32_0 : i32, i32
  }
  func.func @transform_3(%arg0: i32) -> (i32, i32) {
    %c0_i32 = arith.constant 0 : i32
    %c0_i32_0 = arith.constant 0 : i32
    return %arg0, %c0_i32 : i32, i32
  }
}

module attributes {stable_mosaic.version = 11 : i64} {
  func.func @kernel(%arg0: i32, %arg1: i32, %arg2: i32, %arg3: memref<16x512xbf16, #tpu.memory_space<vmem>>, %arg4: memref<512x128xbf16, #tpu.memory_space<vmem>>, %arg5: memref<1x128xf32, #tpu.memory_space<vmem>>, %arg6: memref<16x128xf32, #tpu.memory_space<vmem>>, %arg7: memref<16x128xf32, #tpu.memory_space<vmem>>) attributes {dimension_semantics = [#tpu.dimension_semantics<parallel>, #tpu.dimension_semantics<parallel>, #tpu.dimension_semantics<arbitrary>], iteration_bounds = array<i64: 1, 1, 16>, scalar_prefetch = 0 : i64, scratch_operands = 1 : i64, tpu.core_type = #tpu.core_type<tc>, window_params = [{transform_indices = @transform_0, window_bounds = array<i64: 16, 512>}, {transform_indices = @transform_1, window_bounds = array<i64: 512, 128>}, {transform_indices = @transform_2, window_bounds = array<i64: 1, 128>}, {transform_indices = @transform_3, window_bounds = array<i64: 16, 128>}]} {
    %c0 = arith.constant 0 : index
    %c0_0 = arith.constant 0 : index
    %0 = vector.load %arg3[%c0, %c0_0] : memref<16x512xbf16, #tpu.memory_space<vmem>>, vector<16x512xbf16>
    %c0_1 = arith.constant 0 : index
    %c0_2 = arith.constant 0 : index
    %1 = vector.load %arg4[%c0_1, %c0_2] : memref<512x128xbf16, #tpu.memory_space<vmem>>, vector<512x128xbf16>
    %cst = arith.constant dense<0.000000e+00> : vector<16x128xf32>
    %2 = tpu.matmul %0, %1, %cst {dimension_numbers = #tpu.dot_dimension_numbers<[1], [0], [0], [1], [0, 0, 1, 1], [], []>} : vector<16x512xbf16>, vector<512x128xbf16>, vector<16x128xf32> -> vector<16x128xf32>
    %c0_i32 = arith.constant 0 : i32
    %3 = arith.cmpi eq, %arg2, %c0_i32 : i32
    %4 = arith.extui %3 : i1 to i32
    %c0_i32_3 = arith.constant 0 : i32
    %5 = arith.cmpi ne, %4, %c0_i32_3 : i32
    scf.if %5 {
      %cst_9 = arith.constant 0.000000e+00 : f32
      %12 = vector.broadcast %cst_9 : f32 to vector<16x128xf32>
      %c0_10 = arith.constant 0 : index
      %c0_11 = arith.constant 0 : index
      %13 = vector.load %arg7[%c0_10, %c0_11] : memref<16x128xf32, #tpu.memory_space<vmem>>, vector<16x128xf32>
      tpu.vector_store %arg7[%c0_10, %c0_11], %12 {strides = array<i32>} : memref<16x128xf32, #tpu.memory_space<vmem>>, vector<16x128xf32>,
    } else {
    }
    %c0_4 = arith.constant 0 : index
    %c0_5 = arith.constant 0 : index
    %6 = vector.load %arg7[%c0_4, %c0_5] : memref<16x128xf32, #tpu.memory_space<vmem>>, vector<16x128xf32>
    %7 = arith.addf %6, %2 : vector<16x128xf32>
    %c0_6 = arith.constant 0 : index
    %c0_7 = arith.constant 0 : index
    %8 = vector.load %arg7[%c0_6, %c0_7] : memref<16x128xf32, #tpu.memory_space<vmem>>, vector<16x128xf32>
    tpu.vector_store %arg7[%c0_6, %c0_7], %7 {strides = array<i32>} : memref<16x128xf32, #tpu.memory_space<vmem>>, vector<16x128xf32>,
    %c15_i32 = arith.constant 15 : i32
    %9 = arith.cmpi eq, %arg2, %c15_i32 : i32
    %10 = arith.extui %9 : i1 to i32
    %c0_i32_8 = arith.constant 0 : i32
    %11 = arith.cmpi ne, %10, %c0_i32_8 : i32
    scf.if %11 {
      %c0_9 = arith.constant 0 : index
      %c0_10 = arith.constant 0 : index
      %12 = vector.load %arg7[%c0_9, %c0_10] : memref<16x128xf32, #tpu.memory_space<vmem>>, vector<16x128xf32>
      %c0_11 = arith.constant 0 : index
      %c0_12 = arith.constant 0 : index
      %13 = vector.load %arg5[%c0_11, %c0_12] : memref<1x128xf32, #tpu.memory_space<vmem>>, vector<1x128xf32>
      %14 = vector.broadcast %13 : vector<1x128xf32> to vector<16x128xf32>
      %15 = arith.addf %12, %14 : vector<16x128xf32>
      %c0_13 = arith.constant 0 : index
      %c0_14 = arith.constant 0 : index
      %16 = vector.load %arg6[%c0_13, %c0_14] : memref<16x128xf32, #tpu.memory_space<vmem>>, vector<16x128xf32>
      tpu.vector_store %arg6[%c0_13, %c0_14], %15 {strides = array<i32>} : memref<16x128xf32, #tpu.memory_space<vmem>>, vector<16x128xf32>,
    } else {
    }
    return
  }
  func.func @transform_0(%arg0: i32, %arg1: i32, %arg2: i32) -> (i32, i32) {
    %c0_i32 = arith.constant 0 : i32
    return %arg0, %arg2 : i32, i32
  }
  func.func @transform_1(%arg0: i32, %arg1: i32, %arg2: i32) -> (i32, i32) {
    %c0_i32 = arith.constant 0 : i32
    return %arg2, %arg1 : i32, i32
  }
  func.func @transform_2(%arg0: i32, %arg1: i32, %arg2: i32) -> (i32, i32) {
    %c0_i32 = arith.constant 0 : i32
    %c0_i32_0 = arith.constant 0 : i32
    return %c0_i32, %arg1 : i32, i32
  }
  func.func @transform_3(%arg0: i32, %arg1: i32, %arg2: i32) -> (i32, i32) {
    %c0_i32 = arith.constant 0 : i32
    return %arg0, %arg1 : i32, i32
  }
}

</mosaic_0001>

<llo_original>
// kernel: dcgan_forward.13
$region0: #{dcgan_forward.13}
  #allocation0 [shape = 'u32[]', space=smem, size = 0x4, offset = 0x4, fixed_abs, tag = 'smem constant byte address 0x4 - core index']
  #allocation1 [shape = 'u32[144,128]{1,0:T(1,128)}', space=vmem, size = 0x12000, scoped, tag = 'internal scratch']
  %s0 = inlined_call_operand.vmem [shape: bf16[2048,128], index: 0, kind: input, shape index: {}]
  %s1 = inlined_call_operand.vmem [shape: bf16[128,64], index: 1, kind: input, shape index: {}]
  %s2 = inlined_call_operand.vmem [shape: f32[2048,64], index: 2, kind: output, shape index: {}]
  %s3 = sld [smem:[#allocation0]]
  $region41: #{dcgan_forward.13} parent=0
    _
  %s5 = ssub.s32 1, %s3
  %s6 = scalar_select 0, %s5, %s3
  loop: start=0, step=1, limit=10
  $region2: #{dcgan_forward.13} parent=0 // loop_pre_header
    _
  $region3: #{dcgan_forward.13} parent=0 // loop_header
    %s8 = sphi 0, %s12
    %p9 = scmp.ge.s32.totalorder %s8, 10
    %s15 = sphi 0, %s27
    %s16 = sphi 0, %s23
    %s17 = sphi 0, %s15
    %s18 = sphi 0, %s16
    %s19 = sphi 0, %s17
    %s20 = sphi 0, %s18
    %s30 = sphi 0, %s32
    %s33 = sphi 0, %s30
    %s34 = sphi 0, %s33
    %s50 = sphi 0, %s34
    %s56 = sphi 0, %s58
    %s59 = sphi 0, %s56
    %s60 = sphi 0, %s59
    %s76 = sphi 0, %s60
    %s84 = sphi 0, %s86
    %s87 = sphi 0, %s84
    %s88 = sphi 0, %s87
    %s104 = sphi 0, %s88
  $region4: #{dcgan_forward.13} parent=0 // loop_header_branch
    %11 = sbr.rel (%p9) target = $region8
  $region5: #{dcgan_forward.13} parent=0 // loop_body
    %s13 = ssub.s32 %s8, 1
    %s14 = ssub.s32 %s8, 2
    %s21 = sadd.s32 1, %s16
    %p22 = scmp.ge.s32.totalorder %s21, 1
    %s23 = scalar_select %p22, 0, %s21
    %s24 = sadd.s32 1, %s15
    %s25 = scalar_select %p22, %s24, %s15
    %p26 = scmp.ge.s32.totalorder %s25, 8
    %s27 = scalar_select %p26, 0, %s25
    %s28 = ssub.s32 %s15, %s27
    %p29 = scmp.eq.s32.totalorder %s28, 0
    %s31 = sadd.s32 %s30, 1
    %s32 = scalar_select %p29, %s30, %s31
    %p35 = pneg %p29
    %p36 = scmp.eq.s32.totalorder %s8, 7
    %p37 = por %p35, %p36
    %p38 = scmp.ne.s32.totalorder %s30, %s33
    %p39 = scmp.eq.s32.totalorder %s8, 0
    %p40 = por %p38, %p39
    %p41 = scmp.ne.s32.totalorder %s30, %s33
    %p42 = scmp.eq.s32.totalorder %s13, 7
    %p43 = por %p41, %p42
    %p44 = scmp.ne.s32.totalorder %s33, %s34
    %p45 = scmp.eq.s32.totalorder %s13, 0
    %p46 = por %p44, %p45
    %p47 = scmp.ne.s32.totalorder %s33, %s34
    %p48 = scmp.eq.s32.totalorder %s14, 7
    %p49 = por %p47, %p48
    %p51 = scmp.ne.s32.totalorder %s34, %s50
    %p52 = scmp.eq.s32.totalorder %s14, 0
    %p53 = por %p51, %p52
    %s54 = ssub.s32 %s16, %s23
    %p55 = scmp.eq.s32.totalorder %s54, 0
    %s57 = sadd.s32 %s56, 1
    %s58 = scalar_select %p55, %s56, %s57
    %p61 = pneg %p55
    %p62 = scmp.eq.s32.totalorder %s8, 7
    %p63 = por %p61, %p62
    %p64 = scmp.ne.s32.totalorder %s56, %s59
    %p65 = scmp.eq.s32.totalorder %s8, 0
    %p66 = por %p64, %p65
    %p67 = scmp.ne.s32.totalorder %s56, %s59
    %p68 = scmp.eq.s32.totalorder %s13, 7
    %p69 = por %p67, %p68
    %p70 = scmp.ne.s32.totalorder %s59, %s60
    %p71 = scmp.eq.s32.totalorder %s13, 0
    %p72 = por %p70, %p71
    %p73 = scmp.ne.s32.totalorder %s59, %s60
    %p74 = scmp.eq.s32.totalorder %s14, 7
    %p75 = por %p73, %p74
    %p77 = scmp.ne.s32.totalorder %s60, %s76
    %p78 = scmp.eq.s32.totalorder %s14, 0
    %p79 = por %p77, %p78
    %s80 = ssub.s32 %s15, %s27
    %s81 = ssub.s32 %s16, %s23
    %s82 = sor.u32 %s80, %s81
    %p83 = scmp.eq.s32.totalorder %s82, 0
    %s85 = sadd.s32 %s84, 1
    %s86 = scalar_select %p83, %s84, %s85
    %p89 = pneg %p83
    %p90 = scmp.eq.s32.totalorder %s8, 7
    %p91 = por %p89, %p90
    %p92 = scmp.ne.s32.totalorder %s84, %s87
    %p93 = scmp.eq.s32.totalorder %s8, 0
    %p94 = por %p92, %p93
    %p95 = scmp.ne.s32.totalorder %s84, %s87
    %p96 = scmp.eq.s32.totalorder %s13, 7
    %p97 = por %p95, %p96
    %p98 = scmp.ne.s32.totalorder %s87, %s88
    %p99 = scmp.eq.s32.totalorder %s13, 0
    %p100 = por %p98, %p99
    %p101 = scmp.ne.s32.totalorder %s87, %s88
    %p102 = scmp.eq.s32.totalorder %s14, 7
    %p103 = por %p101, %p102
    %p105 = scmp.ne.s32.totalorder %s88, %s104
    %p106 = scmp.eq.s32.totalorder %s14, 0
    %p107 = por %p105, %p106
    %p108 = scmp.le.s32.totalorder 1, %s8
    %p109 = scmp.lt.s32.totalorder %s8, 9
    %p110 = pnand %p108, %p109
    %p111 = pneg %p110
    // Predicated region
    $region9: #{dcgan_forward.13} parent=5 // pred_check
      _
    $region10: #{dcgan_forward.13} parent=5 // pred_check_branch
      %113 = sbr.rel (%p110) target = $region12
    $region11: #{dcgan_forward.13} parent=5 // pred_region
      %s114 = ssub.s32 %s8, 1
      // Predicated region
      $region13: #{dcgan_forward.13} parent=11 // pred_check
        %p115 = pneg %p72
      $region14: #{dcgan_forward.13} parent=11 // pred_check_branch
        %117 = sbr.rel (%p115) target = $region16
      $region15: #{dcgan_forward.13} parent=11 // pred_region
        %p118 = scmp.lt.s32.totalorder %s18, 0
        %s119 = scalar_select %p118, %s18, 0
        %s120 = smul.addr %s119, 4
        %s121 = scalar_lea.vmem %s1, %s120
      $region16: #{dcgan_forward.13} parent=11 // pred_fallthru
        _
    $region12: #{dcgan_forward.13} parent=5 // pred_fallthru
      _
    %p122 = scmp.lt.s32.totalorder %s8, 8
    // Predicated region
    $region17: #{dcgan_forward.13} parent=5 // pred_check
      %p123 = pneg %p122
    $region18: #{dcgan_forward.13} parent=5 // pred_check_branch
      %125 = sbr.rel (%p123) target = $region20
    $region19: #{dcgan_forward.13} parent=5 // pred_region
      // Predicated region
      $region21: #{dcgan_forward.13} parent=19 // pred_check
        %p126 = pneg %p40
      $region22: #{dcgan_forward.13} parent=19 // pred_check_branch
        %128 = sbr.rel (%p126) target = $region24
      $region23: #{dcgan_forward.13} parent=19 // pred_region
        %s129 = smul.u32 32, %s15
        %p130 = scmp.lt.s32.totalorder %s129, 255
        %s131 = scalar_select %p130, %s129, 255
        %s132 = smul.addr %s131, 4
        %s133 = scalar_lea.vmem %s0, %s132
        %s134 = smul.u32 32, %s15
      $region24: #{dcgan_forward.13} parent=19 // pred_fallthru
        _
    $region20: #{dcgan_forward.13} parent=5 // pred_fallthru
      _
    %p135 = scmp.le.s32.totalorder 1, %s8
    %p136 = scmp.lt.s32.totalorder %s8, 9
    %p137 = pnand %p135, %p136
    %p138 = pneg %p137
    // Predicated region
    $region25: #{dcgan_forward.13} parent=5 // pred_check
      _
    $region26: #{dcgan_forward.13} parent=5 // pred_check_branch
      %140 = sbr.rel (%p137) target = $region28
    $region27: #{dcgan_forward.13} parent=5 // pred_region
      %s141 = ssub.s32 %s8, 1
      %s142 = smul.u32 32, %s17
      %p143 = scmp.lt.s32.totalorder %s142, 255
      %s144 = scalar_select %p143, %s142, 255
      %s145 = smul.addr %s144, 4
      %s146 = scalar_lea.vmem %s0, %s145
      %p147 = pneg %p46
      %p148 = pneg %p43
      %p149 = scmp.lt.s32.totalorder %s18, 0
      %s150 = scalar_select %p149, %s18, 0
      %s151 = smul.addr %s150, 4
      %s152 = scalar_lea.vmem %s1, %s151
      %p153 = pneg %p72
      %p154 = pneg %p69
      %p155 = pneg %p100
      %p156 = pneg %p97
      %s157 = smul.u32 32, %s17
      %p158 = scmp.lt.s32.totalorder %s157, 255
      %s159 = scalar_select %p158, %s157, 255
      %p160 = scmp.lt.s32.totalorder %s18, 0
      %s161 = scalar_select %p160, %s18, 0
      %s162 = sadd.s32 %s161, %s159
      %s163 = smul.addr %s162, 8
      %s164 = scalar_lea.vmem %s2, %s163
      %s165 = smul.u32 32, %s17
      %p166 = scmp.lt.s32.totalorder %s165, 255
      %s167 = scalar_select %p166, %s165, 255
      %s168 = smul.addr %s167, 4
      %s169 = scalar_lea.vmem %s0, %s168
      %s170 = smul.u32 32, %s17
      %p171 = scmp.lt.s32.totalorder %s18, 0
      %s172 = scalar_select %p171, %s18, 0
      %s173 = smul.addr %s172, 4
      %s174 = scalar_lea.vmem %s1, %s173
      %s175 = smul.u32 32, %s17
      %p176 = scmp.lt.s32.totalorder %s175, 255
      %s177 = scalar_select %p176, %s175, 255
      %p178 = scmp.lt.s32.totalorder %s18, 0
      %s179 = scalar_select %p178, %s18, 0
      %s180 = sadd.s32 %s179, %s177
      %s181 = smul.addr %s180, 8
      %s182 = scalar_lea.vmem %s2, %s181
      %s183 = smul.u32 32, %s17
      %v185 = vld [vmem:[%s169] sm:$0xf]
      %v186 = vld [vmem:[%s169 + $0x4] sm:$0xf]
      %v187 = vld [vmem:[%s169 + $0x8] sm:$0xf]
      %v188 = vld [vmem:[%s169 + $0xc] sm:$0xf]
      %v189 = vld [vmem:[%s169 + $0x10] sm:$0xf]
      %v190 = vld [vmem:[%s169 + $0x14] sm:$0xf]
      %v191 = vld [vmem:[%s169 + $0x18] sm:$0xf]
      %v192 = vld [vmem:[%s169 + $0x1c] sm:$0xf]
      %v193 = vld [vmem:[%s169 + $0x20] sm:$0xf]
      %v194 = vld [vmem:[%s169 + $0x24] sm:$0xf]
      %v195 = vld [vmem:[%s169 + $0x28] sm:$0xf]
      %v196 = vld [vmem:[%s169 + $0x2c] sm:$0xf]
      %v197 = vld [vmem:[%s169 + $0x30] sm:$0xf]
      %v198 = vld [vmem:[%s169 + $0x34] sm:$0xf]
      %v199 = vld [vmem:[%s169 + $0x38] sm:$0xf]
      %v200 = vld [vmem:[%s169 + $0x3c] sm:$0xf]
      %v201 = vld [vmem:[%s169 + $0x40] sm:$0xf]
      %v202 = vld [vmem:[%s169 + $0x44] sm:$0xf]
      %v203 = vld [vmem:[%s169 + $0x48] sm:$0xf]
      %v204 = vld [vmem:[%s169 + $0x4c] sm:$0xf]
      %v205 = vld [vmem:[%s169 + $0x50] sm:$0xf]
      %v206 = vld [vmem:[%s169 + $0x54] sm:$0xf]
      %v207 = vld [vmem:[%s169 + $0x58] sm:$0xf]
      %v208 = vld [vmem:[%s169 + $0x5c] sm:$0xf]
      %v209 = vld [vmem:[%s169 + $0x60] sm:$0xf]
      %v210 = vld [vmem:[%s169 + $0x64] sm:$0xf]
      %v211 = vld [vmem:[%s169 + $0x68] sm:$0xf]
      %v212 = vld [vmem:[%s169 + $0x6c] sm:$0xf]
      %v213 = vld [vmem:[%s169 + $0x70] sm:$0xf]
      %v214 = vld [vmem:[%s169 + $0x74] sm:$0xf]
      %v215 = vld [vmem:[%s169 + $0x78] sm:$0xf]
      %v216 = vld [vmem:[%s169 + $0x7c] sm:$0xf]
      %v217 = vld [vmem:[%s174] sm:$0xf]
      %v218 = vld [vmem:[%s174 + $0x4] sm:$0xf]
      %v219 = vld [vmem:[%s174 + $0x8] sm:$0xf]
      %v220 = vld [vmem:[%s174 + $0xc] sm:$0xf]
      %v221 = vld [vmem:[%s174 + $0x10] sm:$0xf]
      %v222 = vld [vmem:[%s174 + $0x14] sm:$0xf]
      %v223 = vld [vmem:[%s174 + $0x18] sm:$0xf]
      %v224 = vld [vmem:[%s174 + $0x1c] sm:$0xf]
      %v225 = vld [vmem:[%s174 + $0x20] sm:$0xf]
      %v226 = vld [vmem:[%s174 + $0x24] sm:$0xf]
      %v227 = vld [vmem:[%s174 + $0x28] sm:$0xf]
      %v228 = vld [vmem:[%s174 + $0x2c] sm:$0xf]
      %v229 = vld [vmem:[%s174 + $0x30] sm:$0xf]
      %v230 = vld [vmem:[%s174 + $0x34] sm:$0xf]
      %v231 = vld [vmem:[%s174 + $0x38] sm:$0xf]
      %v232 = vld [vmem:[%s174 + $0x3c] sm:$0xf]
      %v265 = vunpack.c.l.b16 %v185
      %v266 = vunpack.c.l.b16 %v186
      %v267 = vunpack.c.l.b16 %v187
      %v268 = vunpack.c.l.b16 %v188
      %v269 = vunpack.c.l.b16 %v189
      %v270 = vunpack.c.l.b16 %v190
      %v271 = vunpack.c.l.b16 %v191
      %v272 = vunpack.c.l.b16 %v192
      %v273 = vunpack.c.l.b16 %v193
      %v274 = vunpack.c.l.b16 %v194
      %v275 = vunpack.c.l.b16 %v195
      %v276 = vunpack.c.l.b16 %v196
      %v277 = vunpack.c.l.b16 %v197
      %v278 = vunpack.c.l.b16 %v198
      %v279 = vunpack.c.l.b16 %v199
      %v280 = vunpack.c.l.b16 %v200
      %v281 = vunpack.c.l.b16 %v201
      %v282 = vunpack.c.l.b16 %v202
      %v283 = vunpack.c.l.b16 %v203
      %v284 = vunpack.c.l.b16 %v204
      %v285 = vunpack.c.l.b16 %v205
      %v286 = vunpack.c.l.b16 %v206
      %v287 = vunpack.c.l.b16 %v207
      %v288 = vunpack.c.l.b16 %v208
      %v289 = vunpack.c.l.b16 %v209
      %v290 = vunpack.c.l.b16 %v210
      %v291 = vunpack.c.l.b16 %v211
      %v292 = vunpack.c.l.b16 %v212
      %v293 = vunpack.c.l.b16 %v213
      %v294 = vunpack.c.l.b16 %v214
      %v295 = vunpack.c.l.b16 %v215
      %v296 = vunpack.c.l.b16 %v216
      %v297 = vpack.c.b16 %v266, %v265
      %v298 = vpack.c.b16 %v268, %v267
      %v299 = vpack.c.b16 %v270, %v269
      %v300 = vpack.c.b16 %v272, %v271
      %v301 = vpack.c.b16 %v274, %v273
      %v302 = vpack.c.b16 %v276, %v275
      %v303 = vpack.c.b16 %v278, %v277
      %v304 = vpack.c.b16 %v280, %v279
      %v305 = vpack.c.b16 %v282, %v281
      %v306 = vpack.c.b16 %v284, %v283
      %v307 = vpack.c.b16 %v286, %v285
      %v308 = vpack.c.b16 %v288, %v287
      %v309 = vpack.c.b16 %v290, %v289
      %v310 = vpack.c.b16 %v292, %v291
      %v311 = vpack.c.b16 %v294, %v293
      %v312 = vpack.c.b16 %v296, %v295
      %v345 = vunpack.c.l.b16 %v217
      %v346 = vunpack.c.l.b16 %v218
      %v347 = vunpack.c.l.b16 %v219
      %v348 = vunpack.c.l.b16 %v220
      %v349 = vunpack.c.l.b16 %v221
      %v350 = vunpack.c.l.b16 %v222
      %v351 = vunpack.c.l.b16 %v223
      %v352 = vunpack.c.l.b16 %v224
      %v353 = vunpack.c.l.b16 %v225
      %v354 = vunpack.c.l.b16 %v226
      %v355 = vunpack.c.l.b16 %v227
      %v356 = vunpack.c.l.b16 %v228
      %v357 = vunpack.c.l.b16 %v229
      %v358 = vunpack.c.l.b16 %v230
      %v359 = vunpack.c.l.b16 %v231
      %v360 = vunpack.c.l.b16 %v232
      %v361 = vpack.c.b16 %v346, %v345
      %v362 = vpack.c.b16 %v348, %v347
      %v363 = vpack.c.b16 %v350, %v349
      %v364 = vpack.c.b16 %v352, %v351
      %v365 = vpack.c.b16 %v354, %v353
      %v366 = vpack.c.b16 %v356, %v355
      %v367 = vpack.c.b16 %v358, %v357
      %v368 = vpack.c.b16 %v360, %v359
      %377 = vmatprep.subr.bf16.mxu0 0
      %378 = vmatpush1.bf16.msra.mxu0 %v361
      %379 = vmatprep.subr.bf16.mxu0 0
      %380 = vmatpush1.bf16.msra.mxu0 %v362
      %381 = vmatprep.subr.bf16.mxu0 0
      %382 = vmatpush1.bf16.msra.mxu0 %v363
      %383 = vmatprep.subr.bf16.mxu0 0
      %384 = vmatpush1.bf16.msra.mxu0 %v364
      %385 = vmatprep.subr.bf16.mxu0 0
      %386 = vmatpush1.bf16.msra.mxu0 %v365
      %387 = vmatprep.subr.bf16.mxu0 0
      %388 = vmatpush1.bf16.msra.mxu0 %v366
      %389 = vmatprep.subr.bf16.mxu0 0
      %390 = vmatpush1.bf16.msra.mxu0 %v367
      %391 = vmatprep.subr.bf16.mxu0 0
      %392 = vmatpush1.bf16.msra.mxu0 %v368
      %393 = vmatprep.subr.bf16.mxu0 0
      %394 = vmatpush1.bf16.msra.mxu0 0
      %395 = vmatprep.subr.bf16.mxu0 0
      %396 = vmatpush1.bf16.msra.mxu0 0
      %397 = vmatprep.subr.bf16.mxu0 0
      %398 = vmatpush1.bf16.msra.mxu0 0
      %399 = vmatprep.subr.bf16.mxu0 0
      %400 = vmatpush1.bf16.msra.mxu0 0
      %401 = vmatprep.subr.bf16.mxu0 0
      %402 = vmatpush1.bf16.msra.mxu0 0
      %403 = vmatprep.subr.bf16.mxu0 0
      %404 = vmatpush1.bf16.msra.mxu0 0
      %405 = vmatprep.subr.bf16.mxu0 0
      %406 = vmatpush1.bf16.msra.mxu0 0
      %407 = vmatprep.subr.bf16.mxu0 0
      %408 = vmatpush1.bf16.msra.mxu0 0
      %409 = vmatprep.mubr.bf16.mxu0 0
      %410 = vmatmul.mubr.bf16.gmra.mrb[0].mxu0 %v297
      %v411 = vpop.f32.mrb[0].mxu0
      %v412 = vadd.f32 0.0, %v411
      %v413 = vpop.f32.mrb[0].mxu0
      %v414 = vpop.f32.mrb[0].mxu0
      %v415 = vadd.f32 0.0, %v414
      %v416 = vpop.f32.mrb[0].mxu0
      %417 = vmatprep.mubr.bf16.mxu0 0
      %418 = vmatmul.mubr.bf16.gmra.mrb[0].mxu0 %v298
      %v419 = vpop.f32.mrb[0].mxu0
      %v420 = vadd.f32 0.0, %v419
      %v421 = vpop.f32.mrb[0].mxu0
      %v422 = vpop.f32.mrb[0].mxu0
      %v423 = vadd.f32 0.0, %v422
      %v424 = vpop.f32.mrb[0].mxu0
      %425 = vmatprep.mubr.bf16.mxu0 0
      %426 = vmatmul.mubr.bf16.gmra.mrb[0].mxu0 %v299
      %v427 = vpop.f32.mrb[0].mxu0
      %v428 = vadd.f32 0.0, %v427
      %v429 = vpop.f32.mrb[0].mxu0
      %v430 = vpop.f32.mrb[0].mxu0
      %v431 = vadd.f32 0.0, %v430
      %v432 = vpop.f32.mrb[0].mxu0
      %433 = vmatprep.mubr.bf16.mxu0 0
      %434 = vmatmul.mubr.bf16.gmra.mrb[0].mxu0 %v300
      %v435 = vpop.f32.mrb[0].mxu0
      %v436 = vadd.f32 0.0, %v435
      %v437 = vpop.f32.mrb[0].mxu0
      %v438 = vpop.f32.mrb[0].mxu0
      %v439 = vadd.f32 0.0, %v438
      %v440 = vpop.f32.mrb[0].mxu0
      %441 = vmatprep.mubr.bf16.mxu0 0
      %442 = vmatmul.mubr.bf16.gmra.mrb[0].mxu0 %v301
      %v443 = vpop.f32.mrb[0].mxu0
      %v444 = vadd.f32 0.0, %v443
      %v445 = vpop.f32.mrb[0].mxu0
      %v446 = vpop.f32.mrb[0].mxu0
      %v447 = vadd.f32 0.0, %v446
      %v448 = vpop.f32.mrb[0].mxu0
      %449 = vmatprep.mubr.bf16.mxu0 0
      %450 = vmatmul.mubr.bf16.gmra.mrb[0].mxu0 %v302
      %v451 = vpop.f32.mrb[0].mxu0
      %v452 = vadd.f32 0.0, %v451
      %v453 = vpop.f32.mrb[0].mxu0
      %v454 = vpop.f32.mrb[0].mxu0
      %v455 = vadd.f32 0.0, %v454
      %v456 = vpop.f32.mrb[0].mxu0
      %457 = vmatprep.mubr.bf16.mxu0 0
      %458 = vmatmul.mubr.bf16.gmra.mrb[0].mxu0 %v303
      %v459 = vpop.f32.mrb[0].mxu0
      %v460 = vadd.f32 0.0, %v459
      %v461 = vpop.f32.mrb[0].mxu0
      %v462 = vpop.f32.mrb[0].mxu0
      %v463 = vadd.f32 0.0, %v462
      %v464 = vpop.f32.mrb[0].mxu0
      %465 = vmatprep.mubr.bf16.mxu0 0
      %466 = vmatmul.mubr.bf16.gmra.mrb[0].mxu0 %v304
      %v467 = vpop.f32.mrb[0].mxu0
      %v468 = vadd.f32 0.0, %v467
      %v469 = vpop.f32.mrb[0].mxu0
      %v470 = vpop.f32.mrb[0].mxu0
      %v471 = vadd.f32 0.0, %v470
      %v472 = vpop.f32.mrb[0].mxu0
      %473 = vmatprep.mubr.bf16.mxu0 0
      %474 = vmatmul.mubr.bf16.gmra.mrb[0].mxu0 %v305
      %v475 = vpop.f32.mrb[0].mxu0
      %v476 = vadd.f32 0.0, %v475
      %v477 = vpop.f32.mrb[0].mxu0
      %v478 = vpop.f32.mrb[0].mxu0
      %v479 = vadd.f32 0.0, %v478
      %v480 = vpop.f32.mrb[0].mxu0
      %481 = vmatprep.mubr.bf16.mxu0 0
      %482 = vmatmul.mubr.bf16.gmra.mrb[0].mxu0 %v306
      %v483 = vpop.f32.mrb[0].mxu0
      %v484 = vadd.f32 0.0, %v483
      %v485 = vpop.f32.mrb[0].mxu0
      %v486 = vpop.f32.mrb[0].mxu0
      %v487 = vadd.f32 0.0, %v486
      %v488 = vpop.f32.mrb[0].mxu0
      %489 = vmatprep.mubr.bf16.mxu0 0
      %490 = vmatmul.mubr.bf16.gmra.mrb[0].mxu0 %v307
      %v491 = vpop.f32.mrb[0].mxu0
      %v492 = vadd.f32 0.0, %v491
      %v493 = vpop.f32.mrb[0].mxu0
      %v494 = vpop.f32.mrb[0].mxu0
      %v495 = vadd.f32 0.0, %v494
      %v496 = vpop.f32.mrb[0].mxu0
      %497 = vmatprep.mubr.bf16.mxu0 0
      %498 = vmatmul.mubr.bf16.gmra.mrb[0].mxu0 %v308
      %v499 = vpop.f32.mrb[0].mxu0
      %v500 = vadd.f32 0.0, %v499
      %v501 = vpop.f32.mrb[0].mxu0
      %v502 = vpop.f32.mrb[0].mxu0
      %v503 = vadd.f32 0.0, %v502
      %v504 = vpop.f32.mrb[0].mxu0
      %505 = vmatprep.mubr.bf16.mxu0 0
      %506 = vmatmul.mubr.bf16.gmra.mrb[0].mxu0 %v309
      %v507 = vpop.f32.mrb[0].mxu0
      %v508 = vadd.f32 0.0, %v507
      %v509 = vpop.f32.mrb[0].mxu0
      %v510 = vpop.f32.mrb[0].mxu0
      %v511 = vadd.f32 0.0, %v510
      %v512 = vpop.f32.mrb[0].mxu0
      %513 = vmatprep.mubr.bf16.mxu0 0
      %514 = vmatmul.mubr.bf16.gmra.mrb[0].mxu0 %v310
      %v515 = vpop.f32.mrb[0].mxu0
      %v516 = vadd.f32 0.0, %v515
      %v517 = vpop.f32.mrb[0].mxu0
      %v518 = vpop.f32.mrb[0].mxu0
      %v519 = vadd.f32 0.0, %v518
      %v520 = vpop.f32.mrb[0].mxu0
      %521 = vmatprep.mubr.bf16.mxu0 0
      %522 = vmatmul.mubr.bf16.gmra.mrb[0].mxu0 %v311
      %v523 = vpop.f32.mrb[0].mxu0
      %v524 = vadd.f32 0.0, %v523
      %v525 = vpop.f32.mrb[0].mxu0
      %v526 = vpop.f32.mrb[0].mxu0
      %v527 = vadd.f32 0.0, %v526
      %v528 = vpop.f32.mrb[0].mxu0
      %529 = vmatprep.mubr.bf16.mxu0 0
      %530 = vmatmul.mubr.bf16.gmra.mrb[0].mxu0 %v312
      %v531 = vpop.f32.mrb[0].mxu0
      %v532 = vadd.f32 0.0, %v531
      %v533 = vpop.f32.mrb[0].mxu0
      %v534 = vpop.f32.mrb[0].mxu0
      %v535 = vadd.f32 0.0, %v534
      %v536 = vpop.f32.mrb[0].mxu0
      %537 = vdwg.mxu0
      %vm538 = vcmask 523264
      %539 = vst.msk [vmem:[%s182] sm:$0xff] %vm538, %v412
      %540 = vst.msk [vmem:[%s182 + $0x8] sm:$0xff] %vm538, %v415
      %541 = vst.msk [vmem:[%s182 + $0x10] sm:$0xff] %vm538, %v420
      %542 = vst.msk [vmem:[%s182 + $0x18] sm:$0xff] %vm538, %v423
      %543 = vst.msk [vmem:[%s182 + $0x20] sm:$0xff] %vm538, %v428
      %544 = vst.msk [vmem:[%s182 + $0x28] sm:$0xff] %vm538, %v431
      %545 = vst.msk [vmem:[%s182 + $0x30] sm:$0xff] %vm538, %v436
      %546 = vst.msk [vmem:[%s182 + $0x38] sm:$0xff] %vm538, %v439
      %547 = vst.msk [vmem:[%s182 + $0x40] sm:$0xff] %vm538, %v444
      %548 = vst.msk [vmem:[%s182 + $0x48] sm:$0xff] %vm538, %v447
      %549 = vst.msk [vmem:[%s182 + $0x50] sm:$0xff] %vm538, %v452
      %550 = vst.msk [vmem:[%s182 + $0x58] sm:$0xff] %vm538, %v455
      %551 = vst.msk [vmem:[%s182 + $0x60] sm:$0xff] %vm538, %v460
      %552 = vst.msk [vmem:[%s182 + $0x68] sm:$0xff] %vm538, %v463
      %553 = vst.msk [vmem:[%s182 + $0x70] sm:$0xff] %vm538, %v468
      %554 = vst.msk [vmem:[%s182 + $0x78] sm:$0xff] %vm538, %v471
      %555 = vst.msk [vmem:[%s182 + $0x80] sm:$0xff] %vm538, %v476
      %556 = vst.msk [vmem:[%s182 + $0x88] sm:$0xff] %vm538, %v479
      %557 = vst.msk [vmem:[%s182 + $0x90] sm:$0xff] %vm538, %v484
      %558 = vst.msk [vmem:[%s182 + $0x98] sm:$0xff] %vm538, %v487
      %559 = vst.msk [vmem:[%s182 + $0xa0] sm:$0xff] %vm538, %v492
      %560 = vst.msk [vmem:[%s182 + $0xa8] sm:$0xff] %vm538, %v495
      %561 = vst.msk [vmem:[%s182 + $0xb0] sm:$0xff] %vm538, %v500
      %562 = vst.msk [vmem:[%s182 + $0xb8] sm:$0xff] %vm538, %v503
      %563 = vst.msk [vmem:[%s182 + $0xc0] sm:$0xff] %vm538, %v508
      %564 = vst.msk [vmem:[%s182 + $0xc8] sm:$0xff] %vm538, %v511
      %565 = vst.msk [vmem:[%s182 + $0xd0] sm:$0xff] %vm538, %v516
      %566 = vst.msk [vmem:[%s182 + $0xd8] sm:$0xff] %vm538, %v519
      %567 = vst.msk [vmem:[%s182 + $0xe0] sm:$0xff] %vm538, %v524
      %568 = vst.msk [vmem:[%s182 + $0xe8] sm:$0xff] %vm538, %v527
      %569 = vst.msk [vmem:[%s182 + $0xf0] sm:$0xff] %vm538, %v532
      %570 = vst.msk [vmem:[%s182 + $0xf8] sm:$0xff] %vm538, %v535
      %s571 = smul.u32 32, %s17
      %p572 = scmp.lt.s32.totalorder %s571, 255
      %s573 = scalar_select %p572, %s571, 255
      %p574 = scmp.lt.s32.totalorder %s18, 0
      %s575 = scalar_select %p574, %s18, 0
      %s576 = sadd.s32 %s575, %s573
      %s577 = smul.addr %s576, 8
      %s578 = scalar_lea.vmem %s2, %s577
      // Predicated region
      $region29: #{dcgan_forward.13} parent=27 // pred_check
        %p579 = pneg %p97
      $region30: #{dcgan_forward.13} parent=27 // pred_check_branch
        %581 = sbr.rel (%p579) target = $region32
      $region31: #{dcgan_forward.13} parent=27 // pred_region
        %s582 = smul.u32 32, %s17
      $region32: #{dcgan_forward.13} parent=27 // pred_fallthru
        _
    $region28: #{dcgan_forward.13} parent=5 // pred_fallthru
      _
    %p583 = scmp.le.s32.totalorder 2, %s8
    // Predicated region
    $region33: #{dcgan_forward.13} parent=5 // pred_check
      %p584 = pneg %p583
    $region34: #{dcgan_forward.13} parent=5 // pred_check_branch
      %586 = sbr.rel (%p584) target = $region36
    $region35: #{dcgan_forward.13} parent=5 // pred_region
      %s587 = ssub.s32 %s8, 2
      // Predicated region
      $region37: #{dcgan_forward.13} parent=35 // pred_check
        %p588 = pneg %p103
      $region38: #{dcgan_forward.13} parent=35 // pred_check_branch
        %590 = sbr.rel (%p588) target = $region40
      $region39: #{dcgan_forward.13} parent=35 // pred_region
        %s591 = smul.u32 32, %s19
        %p592 = scmp.lt.s32.totalorder %s591, 255
        %s593 = scalar_select %p592, %s591, 255
        %p594 = scmp.lt.s32.totalorder %s20, 0
        %s595 = scalar_select %p594, %s20, 0
        %s596 = sadd.s32 %s595, %s593
        %s597 = smul.addr %s596, 8
        %s598 = scalar_lea.vmem %s2, %s597
      $region40: #{dcgan_forward.13} parent=35 // pred_fallthru
        _
    $region36: #{dcgan_forward.13} parent=5 // pred_fallthru
      _
  $region6: #{dcgan_forward.13} parent=0 // loop_footer
    %s12 = sadd.s32 1, %s8
  $region7: #{dcgan_forward.13} parent=0 // loop_footer_branch
    %7 = sbr.rel target = $region3
  $region8: #{dcgan_forward.13} parent=0 // loop_exit
    _

// kernel: dcgan_forward.14
$region0: #{dcgan_forward.14}
  #allocation0 [shape = 'u32[]', space=smem, size = 0x4, offset = 0x4, fixed_abs, tag = 'smem constant byte address 0x4 - core index']
  #allocation1 [shape = 'u32[144,128]{1,0:T(1,128)}', space=vmem, size = 0x12000, scoped, tag = 'internal scratch']
  %s0 = inlined_call_operand.vmem [shape: f32[2048,64], index: 0, kind: input, shape index: {}]
  %s1 = inlined_call_operand.vmem [shape: f32[1,64], index: 1, kind: output, shape index: {0}]
  %s2 = inlined_call_operand.vmem [shape: f32[1,64], index: 2, kind: output, shape index: {1}]
  %3 = xla_tuple %s1, %s2
  %s4 = sld [smem:[#allocation0]]
  $region49: #{dcgan_forward.14} parent=0
    _
  %s6 = ssub.s32 1, %s4
  %s7 = scalar_select 0, %s6, %s4
  loop: start=0, step=1, limit=6
  $region2: #{dcgan_forward.14} parent=0 // loop_pre_header
    _
  $region3: #{dcgan_forward.14} parent=0 // loop_header
    %s9 = sphi 0, %s13
    %p10 = scmp.ge.s32.totalorder %s9, 6
    %s19 = sphi 0, %s21
    %s22 = sphi 0, %s19
    %s23 = sphi 0, %s22
    %s39 = sphi 0, %s23
    %s43 = sphi 0, %s43
    %s45 = sphi 0, %s43
    %s46 = sphi 0, %s45
    %s60 = sphi 0, %s46
    %s64 = sphi 0, %s64
    %s66 = sphi 0, %s64
    %s67 = sphi 0, %s66
    %s81 = sphi 0, %s67
  $region4: #{dcgan_forward.14} parent=0 // loop_header_branch
    %12 = sbr.rel (%p10) target = $region8
  $region5: #{dcgan_forward.14} parent=0 // loop_body
    %s14 = ssub.s32 %s9, 1
    %s15 = ssub.s32 %s9, 2
    %s16 = sadd.s32 %s9, 1
    %s17 = ssub.s32 %s9, %s16
    %p18 = scmp.eq.s32.totalorder %s17, 0
    %s20 = sadd.s32 %s19, 1
    %s21 = scalar_select %p18, %s19, %s20
    %p24 = pneg %p18
    %p25 = scmp.eq.s32.totalorder %s9, 3
    %p26 = por %p24, %p25
    %p27 = scmp.ne.s32.totalorder %s19, %s22
    %p28 = scmp.eq.s32.totalorder %s9, 0
    %p29 = por %p27, %p28
    %p30 = scmp.ne.s32.totalorder %s19, %s22
    %p31 = scmp.eq.s32.totalorder %s14, 3
    %p32 = por %p30, %p31
    %p33 = scmp.ne.s32.totalorder %s22, %s23
    %p34 = scmp.eq.s32.totalorder %s14, 0
    %p35 = por %p33, %p34
    %p36 = scmp.ne.s32.totalorder %s22, %s23
    %p37 = scmp.eq.s32.totalorder %s15, 3
    %p38 = por %p36, %p37
    %p40 = scmp.ne.s32.totalorder %s23, %s39
    %p41 = scmp.eq.s32.totalorder %s15, 0
    %p42 = por %p40, %p41
    %s44 = sadd.s32 %s43, 1
    %p47 = scmp.eq.s32.totalorder %s9, 3
    %p48 = scmp.ne.s32.totalorder %s43, %s45
    %p49 = scmp.eq.s32.totalorder %s9, 0
    %p50 = por %p48, %p49
    %p51 = scmp.ne.s32.totalorder %s43, %s45
    %p52 = scmp.eq.s32.totalorder %s14, 3
    %p53 = por %p51, %p52
    %p54 = scmp.ne.s32.totalorder %s45, %s46
    %p55 = scmp.eq.s32.totalorder %s14, 0
    %p56 = por %p54, %p55
    %p57 = scmp.ne.s32.totalorder %s45, %s46
    %p58 = scmp.eq.s32.totalorder %s15, 3
    %p59 = por %p57, %p58
    %p61 = scmp.ne.s32.totalorder %s46, %s60
    %p62 = scmp.eq.s32.totalorder %s15, 0
    %p63 = por %p61, %p62
    %s65 = sadd.s32 %s64, 1
    %p68 = scmp.eq.s32.totalorder %s9, 3
    %p69 = scmp.ne.s32.totalorder %s64, %s66
    %p70 = scmp.eq.s32.totalorder %s9, 0
    %p71 = por %p69, %p70
    %p72 = scmp.ne.s32.totalorder %s64, %s66
    %p73 = scmp.eq.s32.totalorder %s14, 3
    %p74 = por %p72, %p73
    %p75 = scmp.ne.s32.totalorder %s66, %s67
    %p76 = scmp.eq.s32.totalorder %s14, 0
    %p77 = por %p75, %p76
    %p78 = scmp.ne.s32.totalorder %s66, %s67
    %p79 = scmp.eq.s32.totalorder %s15, 3
    %p80 = por %p78, %p79
    %p82 = scmp.ne.s32.totalorder %s67, %s81
    %p83 = scmp.eq.s32.totalorder %s15, 0
    %p84 = por %p82, %p83
    %p85 = scmp.le.s32.totalorder 1, %s9
    %p86 = scmp.lt.s32.totalorder %s9, 5
    %p87 = pnand %p85, %p86
    %p88 = pneg %p87
    // Predicated region
    $region9: #{dcgan_forward.14} parent=5 // pred_check
      _
    $region10: #{dcgan_forward.14} parent=5 // pred_check_branch
      %90 = sbr.rel (%p87) target = $region12
    $region11: #{dcgan_forward.14} parent=5 // pred_region
      %s91 = ssub.s32 %s9, 1
    $region12: #{dcgan_forward.14} parent=5 // pred_fallthru
      _
    %p92 = scmp.lt.s32.totalorder %s9, 4
    // Predicated region
    $region13: #{dcgan_forward.14} parent=5 // pred_check
      %p93 = pneg %p92
    $region14: #{dcgan_forward.14} parent=5 // pred_check_branch
      %95 = sbr.rel (%p93) target = $region16
    $region15: #{dcgan_forward.14} parent=5 // pred_region
      // Predicated region
      $region17: #{dcgan_forward.14} parent=15 // pred_check
        %p96 = pneg %p29
      $region18: #{dcgan_forward.14} parent=15 // pred_check_branch
        %98 = sbr.rel (%p96) target = $region20
      $region19: #{dcgan_forward.14} parent=15 // pred_region
        %s99 = smul.u32 64, %s9
        %p100 = scmp.lt.s32.totalorder %s99, 255
        %s101 = scalar_select %p100, %s99, 255
        %s102 = smul.addr %s101, 8
        %s103 = scalar_lea.vmem %s0, %s102
        %s104 = smul.u32 64, %s9
      $region20: #{dcgan_forward.14} parent=15 // pred_fallthru
        _
    $region16: #{dcgan_forward.14} parent=5 // pred_fallthru
      _
    %p105 = scmp.le.s32.totalorder 1, %s9
    %p106 = scmp.lt.s32.totalorder %s9, 5
    %p107 = pnand %p105, %p106
    %p108 = pneg %p107
    // Predicated region
    $region21: #{dcgan_forward.14} parent=5 // pred_check
      _
    $region22: #{dcgan_forward.14} parent=5 // pred_check_branch
      %110 = sbr.rel (%p107) target = $region24
    $region23: #{dcgan_forward.14} parent=5 // pred_region
      %s111 = ssub.s32 %s9, 1
      %s112 = smul.u32 64, %s14
      %p113 = scmp.lt.s32.totalorder %s112, 255
      %s114 = scalar_select %p113, %s112, 255
      %s115 = smul.addr %s114, 8
      %s116 = scalar_lea.vmem %s0, %s115
      %p117 = pneg %p35
      %p118 = pneg %p32
      %p119 = pneg %p56
      %p120 = pneg %p53
      %p121 = pneg %p77
      %p122 = pneg %p74
      %s123 = smul.u32 64, %s14
      %p124 = scmp.lt.s32.totalorder %s123, 255
      %s125 = scalar_select %p124, %s123, 255
      %s126 = smul.addr %s125, 8
      %s127 = scalar_lea.vmem %s0, %s126
      %s128 = smul.u32 64, %s14
      %p129 = scmp.eq.s32.totalorder %s14, 0
      // Predicated region
      $region25: #{dcgan_forward.14} parent=23 // pred_check
        %p130 = pneg %p129
      $region26: #{dcgan_forward.14} parent=23 // pred_check_branch
        %132 = sbr.rel (%p130) target = $region28
      $region27: #{dcgan_forward.14} parent=23 // pred_region
        %vm133 = vcmask 516096
        %134 = vst.msk [vmem:[%s1] sm:$0x1] %vm133, 0.0
        %135 = vst.msk [vmem:[%s2] sm:$0x1] %vm133, 0.0
      $region28: #{dcgan_forward.14} parent=23 // pred_fallthru
        _
      %v136 = vld [vmem:[%s127] sm:$0xff]
      %v137 = vld [vmem:[%s127 + $0x8] sm:$0xff]
      %v138 = vld [vmem:[%s127 + $0x10] sm:$0xff]
      %v139 = vld [vmem:[%s127 + $0x18] sm:$0xff]
      %v140 = vld [vmem:[%s127 + $0x20] sm:$0xff]
      %v141 = vld [vmem:[%s127 + $0x28] sm:$0xff]
      %v142 = vld [vmem:[%s127 + $0x30] sm:$0xff]
      %v143 = vld [vmem:[%s127 + $0x38] sm:$0xff]
      %v144 = vld [vmem:[%s127 + $0x40] sm:$0xff]
      %v145 = vld [vmem:[%s127 + $0x48] sm:$0xff]
      %v146 = vld [vmem:[%s127 + $0x50] sm:$0xff]
      %v147 = vld [vmem:[%s127 + $0x58] sm:$0xff]
      %v148 = vld [vmem:[%s127 + $0x60] sm:$0xff]
      %v149 = vld [vmem:[%s127 + $0x68] sm:$0xff]
      %v150 = vld [vmem:[%s127 + $0x70] sm:$0xff]
      %v151 = vld [vmem:[%s127 + $0x78] sm:$0xff]
      %v152 = vld [vmem:[%s127 + $0x80] sm:$0xff]
      %v153 = vld [vmem:[%s127 + $0x88] sm:$0xff]
      %v154 = vld [vmem:[%s127 + $0x90] sm:$0xff]
      %v155 = vld [vmem:[%s127 + $0x98] sm:$0xff]
      %v156 = vld [vmem:[%s127 + $0xa0] sm:$0xff]
      %v157 = vld [vmem:[%s127 + $0xa8] sm:$0xff]
      %v158 = vld [vmem:[%s127 + $0xb0] sm:$0xff]
      %v159 = vld [vmem:[%s127 + $0xb8] sm:$0xff]
      %v160 = vld [vmem:[%s127 + $0xc0] sm:$0xff]
      %v161 = vld [vmem:[%s127 + $0xc8] sm:$0xff]
      %v162 = vld [vmem:[%s127 + $0xd0] sm:$0xff]
      %v163 = vld [vmem:[%s127 + $0xd8] sm:$0xff]
      %v164 = vld [vmem:[%s127 + $0xe0] sm:$0xff]
      %v165 = vld [vmem:[%s127 + $0xe8] sm:$0xff]
      %v166 = vld [vmem:[%s127 + $0xf0] sm:$0xff]
      %v167 = vld [vmem:[%s127 + $0xf8] sm:$0xff]
      %v168 = vld [vmem:[%s127 + $0x100] sm:$0xff]
      %v169 = vld [vmem:[%s127 + $0x108] sm:$0xff]
      %v170 = vld [vmem:[%s127 + $0x110] sm:$0xff]
      %v171 = vld [vmem:[%s127 + $0x118] sm:$0xff]
      %v172 = vld [vmem:[%s127 + $0x120] sm:$0xff]
      %v173 = vld [vmem:[%s127 + $0x128] sm:$0xff]
      %v174 = vld [vmem:[%s127 + $0x130] sm:$0xff]
      %v175 = vld [vmem:[%s127 + $0x138] sm:$0xff]
      %v176 = vld [vmem:[%s127 + $0x140] sm:$0xff]
      %v177 = vld [vmem:[%s127 + $0x148] sm:$0xff]
      %v178 = vld [vmem:[%s127 + $0x150] sm:$0xff]
      %v179 = vld [vmem:[%s127 + $0x158] sm:$0xff]
      %v180 = vld [vmem:[%s127 + $0x160] sm:$0xff]
      %v181 = vld [vmem:[%s127 + $0x168] sm:$0xff]
      %v182 = vld [vmem:[%s127 + $0x170] sm:$0xff]
      %v183 = vld [vmem:[%s127 + $0x178] sm:$0xff]
      %v184 = vld [vmem:[%s127 + $0x180] sm:$0xff]
      %v185 = vld [vmem:[%s127 + $0x188] sm:$0xff]
      %v186 = vld [vmem:[%s127 + $0x190] sm:$0xff]
      %v187 = vld [vmem:[%s127 + $0x198] sm:$0xff]
      %v188 = vld [vmem:[%s127 + $0x1a0] sm:$0xff]
      %v189 = vld [vmem:[%s127 + $0x1a8] sm:$0xff]
      %v190 = vld [vmem:[%s127 + $0x1b0] sm:$0xff]
      %v191 = vld [vmem:[%s127 + $0x1b8] sm:$0xff]
      %v192 = vld [vmem:[%s127 + $0x1c0] sm:$0xff]
      %v193 = vld [vmem:[%s127 + $0x1c8] sm:$0xff]
      %v194 = vld [vmem:[%s127 + $0x1d0] sm:$0xff]
      %v195 = vld [vmem:[%s127 + $0x1d8] sm:$0xff]
      %v196 = vld [vmem:[%s127 + $0x1e0] sm:$0xff]
      %v197 = vld [vmem:[%s127 + $0x1e8] sm:$0xff]
      %v198 = vld [vmem:[%s127 + $0x1f0] sm:$0xff]
      %v199 = vld [vmem:[%s127 + $0x1f8] sm:$0xff]
      %v200 = vld [vmem:[%s1] sm:$0x1]
      %vm201 = vcmask 523264
      %v202 = vsel %vm201, %v136, 0.0
      %v203 = vsel %vm201, %v137, 0.0
      %v204 = vadd.f32 %v202, %v203
      %v205 = vsel %vm201, %v138, 0.0
      %v206 = vadd.f32 %v204, %v205
      %v207 = vsel %vm201, %v139, 0.0
      %v208 = vadd.f32 %v206, %v207
      %v209 = vsel %vm201, %v140, 0.0
      %v210 = vadd.f32 %v208, %v209
      %v211 = vsel %vm201, %v141, 0.0
      %v212 = vadd.f32 %v210, %v211
      %v213 = vsel %vm201, %v142, 0.0
      %v214 = vadd.f32 %v212, %v213
      %v215 = vsel %vm201, %v143, 0.0
      %v216 = vadd.f32 %v214, %v215
      %v217 = vsel %vm201, %v144, 0.0
      %v218 = vadd.f32 %v216, %v217
      %v219 = vsel %vm201, %v145, 0.0
      %v220 = vadd.f32 %v218, %v219
      %v221 = vsel %vm201, %v146, 0.0
      %v222 = vadd.f32 %v220, %v221
      %v223 = vsel %vm201, %v147, 0.0
      %v224 = vadd.f32 %v222, %v223
      %v225 = vsel %vm201, %v148, 0.0
      %v226 = vadd.f32 %v224, %v225
      %v227 = vsel %vm201, %v149, 0.0
      %v228 = vadd.f32 %v226, %v227
      %v229 = vsel %vm201, %v150, 0.0
      %v230 = vadd.f32 %v228, %v229
      %v231 = vsel %vm201, %v151, 0.0
      %v232 = vadd.f32 %v230, %v231
      %v233 = vsel %vm201, %v152, 0.0
      %v234 = vadd.f32 %v232, %v233
      %v235 = vsel %vm201, %v153, 0.0
      %v236 = vadd.f32 %v234, %v235
      %v237 = vsel %vm201, %v154, 0.0
      %v238 = vadd.f32 %v236, %v237
      %v239 = vsel %vm201, %v155, 0.0
      %v240 = vadd.f32 %v238, %v239
      %v241 = vsel %vm201, %v156, 0.0
      %v242 = vadd.f32 %v240, %v241
      %v243 = vsel %vm201, %v157, 0.0
      %v244 = vadd.f32 %v242, %v243
      %v245 = vsel %vm201, %v158, 0.0
      %v246 = vadd.f32 %v244, %v245
      %v247 = vsel %vm201, %v159, 0.0
      %v248 = vadd.f32 %v246, %v247
      %v249 = vsel %vm201, %v160, 0.0
      %v250 = vadd.f32 %v248, %v249
      %v251 = vsel %vm201, %v161, 0.0
      %v252 = vadd.f32 %v250, %v251
      %v253 = vsel %vm201, %v162, 0.0
      %v254 = vadd.f32 %v252, %v253
      %v255 = vsel %vm201, %v163, 0.0
      %v256 = vadd.f32 %v254, %v255
      %v257 = vsel %vm201, %v164, 0.0
      %v258 = vadd.f32 %v256, %v257
      %v259 = vsel %vm201, %v165, 0.0
      %v260 = vadd.f32 %v258, %v259
      %v261 = vsel %vm201, %v166, 0.0
      %v262 = vadd.f32 %v260, %v261
      %v263 = vsel %vm201, %v167, 0.0
      %v264 = vadd.f32 %v262, %v263
      %v265 = vsel %vm201, %v168, 0.0
      %v266 = vadd.f32 %v264, %v265
      %v267 = vsel %vm201, %v169, 0.0
      %v268 = vadd.f32 %v266, %v267
      %v269 = vsel %vm201, %v170, 0.0
      %v270 = vadd.f32 %v268, %v269
      %v271 = vsel %vm201, %v171, 0.0
      %v272 = vadd.f32 %v270, %v271
      %v273 = vsel %vm201, %v172, 0.0
      %v274 = vadd.f32 %v272, %v273
      %v275 = vsel %vm201, %v173, 0.0
      %v276 = vadd.f32 %v274, %v275
      %v277 = vsel %vm201, %v174, 0.0
      %v278 = vadd.f32 %v276, %v277
      %v279 = vsel %vm201, %v175, 0.0
      %v280 = vadd.f32 %v278, %v279
      %v281 = vsel %vm201, %v176, 0.0
      %v282 = vadd.f32 %v280, %v281
      %v283 = vsel %vm201, %v177, 0.0
      %v284 = vadd.f32 %v282, %v283
      %v285 = vsel %vm201, %v178, 0.0
      %v286 = vadd.f32 %v284, %v285
      %v287 = vsel %vm201, %v179, 0.0
      %v288 = vadd.f32 %v286, %v287
      %v289 = vsel %vm201, %v180, 0.0
      %v290 = vadd.f32 %v288, %v289
      %v291 = vsel %vm201, %v181, 0.0
      %v292 = vadd.f32 %v290, %v291
      %v293 = vsel %vm201, %v182, 0.0
      %v294 = vadd.f32 %v292, %v293
      %v295 = vsel %vm201, %v183, 0.0
      %v296 = vadd.f32 %v294, %v295
      %v297 = vsel %vm201, %v184, 0.0
      %v298 = vadd.f32 %v296, %v297
      %v299 = vsel %vm201, %v185, 0.0
      %v300 = vadd.f32 %v298, %v299
      %v301 = vsel %vm201, %v186, 0.0
      %v302 = vadd.f32 %v300, %v301
      %v303 = vsel %vm201, %v187, 0.0
      %v304 = vadd.f32 %v302, %v303
      %v305 = vsel %vm201, %v188, 0.0
      %v306 = vadd.f32 %v304, %v305
      %v307 = vsel %vm201, %v189, 0.0
      %v308 = vadd.f32 %v306, %v307
      %v309 = vsel %vm201, %v190, 0.0
      %v310 = vadd.f32 %v308, %v309
      %v311 = vsel %vm201, %v191, 0.0
      %v312 = vadd.f32 %v310, %v311
      %v313 = vsel %vm201, %v192, 0.0
      %v314 = vadd.f32 %v312, %v313
      %v315 = vsel %vm201, %v193, 0.0
      %v316 = vadd.f32 %v314, %v315
      %v317 = vsel %vm201, %v194, 0.0
      %v318 = vadd.f32 %v316, %v317
      %v319 = vsel %vm201, %v195, 0.0
      %v320 = vadd.f32 %v318, %v319
      %v321 = vsel %vm201, %v196, 0.0
      %v322 = vadd.f32 %v320, %v321
      %v323 = vsel %vm201, %v197, 0.0
      %v324 = vadd.f32 %v322, %v323
      %v325 = vsel %vm201, %v198, 0.0
      %v326 = vadd.f32 %v324, %v325
      %v327 = vsel %vm201, %v199, 0.0
      %v328 = vadd.f32 %v326, %v327
      %v329 = vrot.slane %v328, 4
      %v330 = vadd.f32 %v328, %v329
      %v331 = vrot.slane %v330, 2
      %v332 = vadd.f32 %v330, %v331
      %v333 = vrot.slane %v332, 1
      %v334 = vadd.f32 %v332, %v333
      %v335 = vadd.f32 %v200, %v334
      %vm336 = vcmask 516096
      %337 = vst.msk [vmem:[%s1] sm:$0x1] %vm336, %v335
      %v338 = vld [vmem:[%s2] sm:$0x1]
      %v339 = vmul.f32 %v136, %v136
      %v340 = vmul.f32 %v137, %v137
      %v341 = vmul.f32 %v138, %v138
      %v342 = vmul.f32 %v139, %v139
      %v343 = vmul.f32 %v140, %v140
      %v344 = vmul.f32 %v141, %v141
      %v345 = vmul.f32 %v142, %v142
      %v346 = vmul.f32 %v143, %v143
      %v347 = vmul.f32 %v144, %v144
      %v348 = vmul.f32 %v145, %v145
      %v349 = vmul.f32 %v146, %v146
      %v350 = vmul.f32 %v147, %v147
      %v351 = vmul.f32 %v148, %v148
      %v352 = vmul.f32 %v149, %v149
      %v353 = vmul.f32 %v150, %v150
      %v354 = vmul.f32 %v151, %v151
      %v355 = vmul.f32 %v152, %v152
      %v356 = vmul.f32 %v153, %v153
      %v357 = vmul.f32 %v154, %v154
      %v358 = vmul.f32 %v155, %v155
      %v359 = vmul.f32 %v156, %v156
      %v360 = vmul.f32 %v157, %v157
      %v361 = vmul.f32 %v158, %v158
      %v362 = vmul.f32 %v159, %v159
      %v363 = vmul.f32 %v160, %v160
      %v364 = vmul.f32 %v161, %v161
      %v365 = vmul.f32 %v162, %v162
      %v366 = vmul.f32 %v163, %v163
      %v367 = vmul.f32 %v164, %v164
      %v368 = vmul.f32 %v165, %v165
      %v369 = vmul.f32 %v166, %v166
      %v370 = vmul.f32 %v167, %v167
      %v371 = vmul.f32 %v168, %v168
      %v372 = vmul.f32 %v169, %v169
      %v373 = vmul.f32 %v170, %v170
      %v374 = vmul.f32 %v171, %v171
      %v375 = vmul.f32 %v172, %v172
      %v376 = vmul.f32 %v173, %v173
      %v377 = vmul.f32 %v174, %v174
      %v378 = vmul.f32 %v175, %v175
      %v379 = vmul.f32 %v176, %v176
      %v380 = vmul.f32 %v177, %v177
      %v381 = vmul.f32 %v178, %v178
      %v382 = vmul.f32 %v179, %v179
      %v383 = vmul.f32 %v180, %v180
      %v384 = vmul.f32 %v181, %v181
      %v385 = vmul.f32 %v182, %v182
      %v386 = vmul.f32 %v183, %v183
      %v387 = vmul.f32 %v184, %v184
      %v388 = vmul.f32 %v185, %v185
      %v389 = vmul.f32 %v186, %v186
      %v390 = vmul.f32 %v187, %v187
      %v391 = vmul.f32 %v188, %v188
      %v392 = vmul.f32 %v189, %v189
      %v393 = vmul.f32 %v190, %v190
      %v394 = vmul.f32 %v191, %v191
      %v395 = vmul.f32 %v192, %v192
      %v396 = vmul.f32 %v193, %v193
      %v397 = vmul.f32 %v194, %v194
      %v398 = vmul.f32 %v195, %v195
      %v399 = vmul.f32 %v196, %v196
      %v400 = vmul.f32 %v197, %v197
      %v401 = vmul.f32 %v198, %v198
      %v402 = vmul.f32 %v199, %v199
      %v403 = vsel %vm201, %v339, 0.0
      %v404 = vsel %vm201, %v340, 0.0
      %v405 = vadd.f32 %v403, %v404
      %v406 = vsel %vm201, %v341, 0.0
      %v407 = vadd.f32 %v405, %v406
      %v408 = vsel %vm201, %v342, 0.0
      %v409 = vadd.f32 %v407, %v408
      %v410 = vsel %vm201, %v343, 0.0
      %v411 = vadd.f32 %v409, %v410
      %v412 = vsel %vm201, %v344, 0.0
      %v413 = vadd.f32 %v411, %v412
      %v414 = vsel %vm201, %v345, 0.0
      %v415 = vadd.f32 %v413, %v414
      %v416 = vsel %vm201, %v346, 0.0
      %v417 = vadd.f32 %v415, %v416
      %v418 = vsel %vm201, %v347, 0.0
      %v419 = vadd.f32 %v417, %v418
      %v420 = vsel %vm201, %v348, 0.0
      %v421 = vadd.f32 %v419, %v420
      %v422 = vsel %vm201, %v349, 0.0
      %v423 = vadd.f32 %v421, %v422
      %v424 = vsel %vm201, %v350, 0.0
      %v425 = vadd.f32 %v423, %v424
      %v426 = vsel %vm201, %v351, 0.0
      %v427 = vadd.f32 %v425, %v426
      %v428 = vsel %vm201, %v352, 0.0
      %v429 = vadd.f32 %v427, %v428
      %v430 = vsel %vm201, %v353, 0.0
      %v431 = vadd.f32 %v429, %v430
      %v432 = vsel %vm201, %v354, 0.0
      %v433 = vadd.f32 %v431, %v432
      %v434 = vsel %vm201, %v355, 0.0
      %v435 = vadd.f32 %v433, %v434
      %v436 = vsel %vm201, %v356, 0.0
      %v437 = vadd.f32 %v435, %v436
      %v438 = vsel %vm201, %v357, 0.0
      %v439 = vadd.f32 %v437, %v438
      %v440 = vsel %vm201, %v358, 0.0
      %v441 = vadd.f32 %v439, %v440
      %v442 = vsel %vm201, %v359, 0.0
      %v443 = vadd.f32 %v441, %v442
      %v444 = vsel %vm201, %v360, 0.0
      %v445 = vadd.f32 %v443, %v444
      %v446 = vsel %vm201, %v361, 0.0
      %v447 = vadd.f32 %v445, %v446
      %v448 = vsel %vm201, %v362, 0.0
      %v449 = vadd.f32 %v447, %v448
      %v450 = vsel %vm201, %v363, 0.0
      %v451 = vadd.f32 %v449, %v450
      %v452 = vsel %vm201, %v364, 0.0
      %v453 = vadd.f32 %v451, %v452
      %v454 = vsel %vm201, %v365, 0.0
      %v455 = vadd.f32 %v453, %v454
      %v456 = vsel %vm201, %v366, 0.0
      %v457 = vadd.f32 %v455, %v456
      %v458 = vsel %vm201, %v367, 0.0
      %v459 = vadd.f32 %v457, %v458
      %v460 = vsel %vm201, %v368, 0.0
      %v461 = vadd.f32 %v459, %v460
      %v462 = vsel %vm201, %v369, 0.0
      %v463 = vadd.f32 %v461, %v462
      %v464 = vsel %vm201, %v370, 0.0
      %v465 = vadd.f32 %v463, %v464
      %v466 = vsel %vm201, %v371, 0.0
      %v467 = vadd.f32 %v465, %v466
      %v468 = vsel %vm201, %v372, 0.0
      %v469 = vadd.f32 %v467, %v468
      %v470 = vsel %vm201, %v373, 0.0
      %v471 = vadd.f32 %v469, %v470
      %v472 = vsel %vm201, %v374, 0.0
      %v473 = vadd.f32 %v471, %v472
      %v474 = vsel %vm201, %v375, 0.0
      %v475 = vadd.f32 %v473, %v474
      %v476 = vsel %vm201, %v376, 0.0
      %v477 = vadd.f32 %v475, %v476
      %v478 = vsel %vm201, %v377, 0.0
      %v479 = vadd.f32 %v477, %v478
      %v480 = vsel %vm201, %v378, 0.0
      %v481 = vadd.f32 %v479, %v480
      %v482 = vsel %vm201, %v379, 0.0
      %v483 = vadd.f32 %v481, %v482
      %v484 = vsel %vm201, %v380, 0.0
      %v485 = vadd.f32 %v483, %v484
      %v486 = vsel %vm201, %v381, 0.0
      %v487 = vadd.f32 %v485, %v486
      %v488 = vsel %vm201, %v382, 0.0
      %v489 = vadd.f32 %v487, %v488
      %v490 = vsel %vm201, %v383, 0.0
      %v491 = vadd.f32 %v489, %v490
      %v492 = vsel %vm201, %v384, 0.0
      %v493 = vadd.f32 %v491, %v492
      %v494 = vsel %vm201, %v385, 0.0
      %v495 = vadd.f32 %v493, %v494
      %v496 = vsel %vm201, %v386, 0.0
      %v497 = vadd.f32 %v495, %v496
      %v498 = vsel %vm201, %v387, 0.0
      %v499 = vadd.f32 %v497, %v498
      %v500 = vsel %vm201, %v388, 0.0
      %v501 = vadd.f32 %v499, %v500
      %v502 = vsel %vm201, %v389, 0.0
      %v503 = vadd.f32 %v501, %v502
      %v504 = vsel %vm201, %v390, 0.0
      %v505 = vadd.f32 %v503, %v504
      %v506 = vsel %vm201, %v391, 0.0
      %v507 = vadd.f32 %v505, %v506
      %v508 = vsel %vm201, %v392, 0.0
      %v509 = vadd.f32 %v507, %v508
      %v510 = vsel %vm201, %v393, 0.0
      %v511 = vadd.f32 %v509, %v510
      %v512 = vsel %vm201, %v394, 0.0
      %v513 = vadd.f32 %v511, %v512
      %v514 = vsel %vm201, %v395, 0.0
      %v515 = vadd.f32 %v513, %v514
      %v516 = vsel %vm201, %v396, 0.0
      %v517 = vadd.f32 %v515, %v516
      %v518 = vsel %vm201, %v397, 0.0
      %v519 = vadd.f32 %v517, %v518
      %v520 = vsel %vm201, %v398, 0.0
      %v521 = vadd.f32 %v519, %v520
      %v522 = vsel %vm201, %v399, 0.0
      %v523 = vadd.f32 %v521, %v522
      %v524 = vsel %vm201, %v400, 0.0
      %v525 = vadd.f32 %v523, %v524
      %v526 = vsel %vm201, %v401, 0.0
      %v527 = vadd.f32 %v525, %v526
      %v528 = vsel %vm201, %v402, 0.0
      %v529 = vadd.f32 %v527, %v528
      %v530 = vrot.slane %v529, 4
      %v531 = vadd.f32 %v529, %v530
      %v532 = vrot.slane %v531, 2
      %v533 = vadd.f32 %v531, %v532
      %v534 = vrot.slane %v533, 1
      %v535 = vadd.f32 %v533, %v534
      %v536 = vadd.f32 %v338, %v535
      %537 = vst.msk [vmem:[%s2] sm:$0x1] %vm336, %v536
      // Predicated region
      $region29: #{dcgan_forward.14} parent=23 // pred_check
        %p538 = pneg %p53
      $region30: #{dcgan_forward.14} parent=23 // pred_check_branch
        %540 = sbr.rel (%p538) target = $region32
      $region31: #{dcgan_forward.14} parent=23 // pred_region
        _
      $region32: #{dcgan_forward.14} parent=23 // pred_fallthru
        _
      // Predicated region
      $region33: #{dcgan_forward.14} parent=23 // pred_check
        %p541 = pneg %p74
      $region34: #{dcgan_forward.14} parent=23 // pred_check_branch
        %543 = sbr.rel (%p541) target = $region36
      $region35: #{dcgan_forward.14} parent=23 // pred_region
        _
      $region36: #{dcgan_forward.14} parent=23 // pred_fallthru
        _
      // Predicated region
      $region37: #{dcgan_forward.14} parent=23 // pred_check
        %p544 = pneg %p53
      $region38: #{dcgan_forward.14} parent=23 // pred_check_branch
        %546 = sbr.rel (%p544) target = $region40
      $region39: #{dcgan_forward.14} parent=23 // pred_region
        _
      $region40: #{dcgan_forward.14} parent=23 // pred_fallthru
        _
      // Predicated region
      $region41: #{dcgan_forward.14} parent=23 // pred_check
        %p547 = pneg %p74
      $region42: #{dcgan_forward.14} parent=23 // pred_check_branch
        %549 = sbr.rel (%p547) target = $region44
      $region43: #{dcgan_forward.14} parent=23 // pred_region
        _
      $region44: #{dcgan_forward.14} parent=23 // pred_fallthru
        _
    $region24: #{dcgan_forward.14} parent=5 // pred_fallthru
      _
    %p550 = scmp.le.s32.totalorder 2, %s9
    // Predicated region
    $region45: #{dcgan_forward.14} parent=5 // pred_check
      %p551 = pneg %p550
    $region46: #{dcgan_forward.14} parent=5 // pred_check_branch
      %553 = sbr.rel (%p551) target = $region48
    $region47: #{dcgan_forward.14} parent=5 // pred_region
      %s554 = ssub.s32 %s9, 2
    $region48: #{dcgan_forward.14} parent=5 // pred_fallthru
      _
  $region6: #{dcgan_forward.14} parent=0 // loop_footer
    %s13 = sadd.s32 1, %s9
  $region7: #{dcgan_forward.14} parent=0 // loop_footer_branch
    %8 = sbr.rel target = $region3
  $region8: #{dcgan_forward.14} parent=0 // loop_exit
    _

// kernel: dcgan_forward.15
$region0: #{dcgan_forward.15}
  #allocation0 [shape = 'u32[]', space=smem, size = 0x4, offset = 0x4, fixed_abs, tag = 'smem constant byte address 0x4 - core index']
  #allocation1 [shape = 'u32[144,128]{1,0:T(1,128)}', space=vmem, size = 0x12000, scoped, tag = 'internal scratch']
  %s0 = inlined_call_operand.vmem [shape: f32[2048,64], index: 0, kind: input, shape index: {}]
  %s1 = inlined_call_operand.vmem [shape: f32[1,64], index: 1, kind: input, shape index: {}]
  %s2 = inlined_call_operand.vmem [shape: f32[1,64], index: 2, kind: input, shape index: {}]
  %s3 = inlined_call_operand.vmem [shape: bf16[2048,64], index: 3, kind: output, shape index: {}]
  %s4 = sld [smem:[#allocation0]]
  $region45: #{dcgan_forward.15} parent=0
    _
  %s6 = ssub.s32 1, %s4
  %s7 = scalar_select 0, %s6, %s4
  loop: start=0, step=1, limit=6
  $region2: #{dcgan_forward.15} parent=0 // loop_pre_header
    _
  $region3: #{dcgan_forward.15} parent=0 // loop_header
    %s9 = sphi 0, %s13
    %p10 = scmp.ge.s32.totalorder %s9, 6
    %s19 = sphi 0, %s21
    %s22 = sphi 0, %s19
    %s23 = sphi 0, %s22
    %s39 = sphi 0, %s23
    %s43 = sphi 0, %s43
    %s45 = sphi 0, %s43
    %s46 = sphi 0, %s45
    %s60 = sphi 0, %s46
    %s64 = sphi 0, %s64
    %s66 = sphi 0, %s64
    %s67 = sphi 0, %s66
    %s81 = sphi 0, %s67
    %s87 = sphi 0, %s89
    %s90 = sphi 0, %s87
    %s91 = sphi 0, %s90
    %s107 = sphi 0, %s91
  $region4: #{dcgan_forward.15} parent=0 // loop_header_branch
    %12 = sbr.rel (%p10) target = $region8
  $region5: #{dcgan_forward.15} parent=0 // loop_body
    %s14 = ssub.s32 %s9, 1
    %s15 = ssub.s32 %s9, 2
    %s16 = sadd.s32 %s9, 1
    %s17 = ssub.s32 %s9, %s16
    %p18 = scmp.eq.s32.totalorder %s17, 0
    %s20 = sadd.s32 %s19, 1
    %s21 = scalar_select %p18, %s19, %s20
    %p24 = pneg %p18
    %p25 = scmp.eq.s32.totalorder %s9, 3
    %p26 = por %p24, %p25
    %p27 = scmp.ne.s32.totalorder %s19, %s22
    %p28 = scmp.eq.s32.totalorder %s9, 0
    %p29 = por %p27, %p28
    %p30 = scmp.ne.s32.totalorder %s19, %s22
    %p31 = scmp.eq.s32.totalorder %s14, 3
    %p32 = por %p30, %p31
    %p33 = scmp.ne.s32.totalorder %s22, %s23
    %p34 = scmp.eq.s32.totalorder %s14, 0
    %p35 = por %p33, %p34
    %p36 = scmp.ne.s32.totalorder %s22, %s23
    %p37 = scmp.eq.s32.totalorder %s15, 3
    %p38 = por %p36, %p37
    %p40 = scmp.ne.s32.totalorder %s23, %s39
    %p41 = scmp.eq.s32.totalorder %s15, 0
    %p42 = por %p40, %p41
    %s44 = sadd.s32 %s43, 1
    %p47 = scmp.eq.s32.totalorder %s9, 3
    %p48 = scmp.ne.s32.totalorder %s43, %s45
    %p49 = scmp.eq.s32.totalorder %s9, 0
    %p50 = por %p48, %p49
    %p51 = scmp.ne.s32.totalorder %s43, %s45
    %p52 = scmp.eq.s32.totalorder %s14, 3
    %p53 = por %p51, %p52
    %p54 = scmp.ne.s32.totalorder %s45, %s46
    %p55 = scmp.eq.s32.totalorder %s14, 0
    %p56 = por %p54, %p55
    %p57 = scmp.ne.s32.totalorder %s45, %s46
    %p58 = scmp.eq.s32.totalorder %s15, 3
    %p59 = por %p57, %p58
    %p61 = scmp.ne.s32.totalorder %s46, %s60
    %p62 = scmp.eq.s32.totalorder %s15, 0
    %p63 = por %p61, %p62
    %s65 = sadd.s32 %s64, 1
    %p68 = scmp.eq.s32.totalorder %s9, 3
    %p69 = scmp.ne.s32.totalorder %s64, %s66
    %p70 = scmp.eq.s32.totalorder %s9, 0
    %p71 = por %p69, %p70
    %p72 = scmp.ne.s32.totalorder %s64, %s66
    %p73 = scmp.eq.s32.totalorder %s14, 3
    %p74 = por %p72, %p73
    %p75 = scmp.ne.s32.totalorder %s66, %s67
    %p76 = scmp.eq.s32.totalorder %s14, 0
    %p77 = por %p75, %p76
    %p78 = scmp.ne.s32.totalorder %s66, %s67
    %p79 = scmp.eq.s32.totalorder %s15, 3
    %p80 = por %p78, %p79
    %p82 = scmp.ne.s32.totalorder %s67, %s81
    %p83 = scmp.eq.s32.totalorder %s15, 0
    %p84 = por %p82, %p83
    %s85 = ssub.s32 %s9, %s16
    %p86 = scmp.eq.s32.totalorder %s85, 0
    %s88 = sadd.s32 %s87, 1
    %s89 = scalar_select %p86, %s87, %s88
    %p92 = pneg %p86
    %p93 = scmp.eq.s32.totalorder %s9, 3
    %p94 = por %p92, %p93
    %p95 = scmp.ne.s32.totalorder %s87, %s90
    %p96 = scmp.eq.s32.totalorder %s9, 0
    %p97 = por %p95, %p96
    %p98 = scmp.ne.s32.totalorder %s87, %s90
    %p99 = scmp.eq.s32.totalorder %s14, 3
    %p100 = por %p98, %p99
    %p101 = scmp.ne.s32.totalorder %s90, %s91
    %p102 = scmp.eq.s32.totalorder %s14, 0
    %p103 = por %p101, %p102
    %p104 = scmp.ne.s32.totalorder %s90, %s91
    %p105 = scmp.eq.s32.totalorder %s15, 3
    %p106 = por %p104, %p105
    %p108 = scmp.ne.s32.totalorder %s91, %s107
    %p109 = scmp.eq.s32.totalorder %s15, 0
    %p110 = por %p108, %p109
    %p111 = scmp.le.s32.totalorder 1, %s9
    %p112 = scmp.lt.s32.totalorder %s9, 5
    %p113 = pnand %p111, %p112
    %p114 = pneg %p113
    // Predicated region
    $region9: #{dcgan_forward.15} parent=5 // pred_check
      _
    $region10: #{dcgan_forward.15} parent=5 // pred_check_branch
      %116 = sbr.rel (%p113) target = $region12
    $region11: #{dcgan_forward.15} parent=5 // pred_region
      %s117 = ssub.s32 %s9, 1
      // Predicated region
      $region13: #{dcgan_forward.15} parent=11 // pred_check
        %p118 = pneg %p56
      $region14: #{dcgan_forward.15} parent=11 // pred_check_branch
        %120 = sbr.rel (%p118) target = $region16
      $region15: #{dcgan_forward.15} parent=11 // pred_region
        _
      $region16: #{dcgan_forward.15} parent=11 // pred_fallthru
        _
      // Predicated region
      $region17: #{dcgan_forward.15} parent=11 // pred_check
        %p121 = pneg %p77
      $region18: #{dcgan_forward.15} parent=11 // pred_check_branch
        %123 = sbr.rel (%p121) target = $region20
      $region19: #{dcgan_forward.15} parent=11 // pred_region
        _
      $region20: #{dcgan_forward.15} parent=11 // pred_fallthru
        _
    $region12: #{dcgan_forward.15} parent=5 // pred_fallthru
      _
    %p124 = scmp.lt.s32.totalorder %s9, 4
    // Predicated region
    $region21: #{dcgan_forward.15} parent=5 // pred_check
      %p125 = pneg %p124
    $region22: #{dcgan_forward.15} parent=5 // pred_check_branch
      %127 = sbr.rel (%p125) target = $region24
    $region23: #{dcgan_forward.15} parent=5 // pred_region
      // Predicated region
      $region25: #{dcgan_forward.15} parent=23 // pred_check
        %p128 = pneg %p29
      $region26: #{dcgan_forward.15} parent=23 // pred_check_branch
        %130 = sbr.rel (%p128) target = $region28
      $region27: #{dcgan_forward.15} parent=23 // pred_region
        %s131 = smul.u32 64, %s9
        %p132 = scmp.lt.s32.totalorder %s131, 255
        %s133 = scalar_select %p132, %s131, 255
        %s134 = smul.addr %s133, 8
        %s135 = scalar_lea.vmem %s0, %s134
        %s136 = smul.u32 64, %s9
      $region28: #{dcgan_forward.15} parent=23 // pred_fallthru
        _
    $region24: #{dcgan_forward.15} parent=5 // pred_fallthru
      _
    %p137 = scmp.le.s32.totalorder 1, %s9
    %p138 = scmp.lt.s32.totalorder %s9, 5
    %p139 = pnand %p137, %p138
    %p140 = pneg %p139
    // Predicated region
    $region29: #{dcgan_forward.15} parent=5 // pred_check
      _
    $region30: #{dcgan_forward.15} parent=5 // pred_check_branch
      %142 = sbr.rel (%p139) target = $region32
    $region31: #{dcgan_forward.15} parent=5 // pred_region
      %s143 = ssub.s32 %s9, 1
      %s144 = smul.u32 64, %s14
      %p145 = scmp.lt.s32.totalorder %s144, 255
      %s146 = scalar_select %p145, %s144, 255
      %s147 = smul.addr %s146, 8
      %s148 = scalar_lea.vmem %s0, %s147
      %p149 = pneg %p35
      %p150 = pneg %p32
      %p151 = pneg %p56
      %p152 = pneg %p53
      %p153 = pneg %p77
      %p154 = pneg %p74
      %p155 = pneg %p103
      %p156 = pneg %p100
      %s157 = smul.u32 64, %s14
      %p158 = scmp.lt.s32.totalorder %s157, 255
      %s159 = scalar_select %p158, %s157, 255
      %s160 = smul.addr %s159, 4
      %s161 = scalar_lea.vmem %s3, %s160
      %s162 = smul.u32 64, %s14
      %p163 = scmp.lt.s32.totalorder %s162, 255
      %s164 = scalar_select %p163, %s162, 255
      %s165 = smul.addr %s164, 8
      %s166 = scalar_lea.vmem %s0, %s165
      %s167 = smul.u32 64, %s14
      %s168 = smul.u32 64, %s14
      %p169 = scmp.lt.s32.totalorder %s168, 255
      %s170 = scalar_select %p169, %s168, 255
      %s171 = smul.addr %s170, 4
      %s172 = scalar_lea.vmem %s3, %s171
      %s173 = smul.u32 64, %s14
      %v174 = vld [vmem:[%s166] sm:$0xff]
      %v175 = vld [vmem:[%s166 + $0x8] sm:$0xff]
      %v176 = vld [vmem:[%s166 + $0x10] sm:$0xff]
      %v177 = vld [vmem:[%s166 + $0x18] sm:$0xff]
      %v178 = vld [vmem:[%s166 + $0x20] sm:$0xff]
      %v179 = vld [vmem:[%s166 + $0x28] sm:$0xff]
      %v180 = vld [vmem:[%s166 + $0x30] sm:$0xff]
      %v181 = vld [vmem:[%s166 + $0x38] sm:$0xff]
      %v182 = vld [vmem:[%s166 + $0x40] sm:$0xff]
      %v183 = vld [vmem:[%s166 + $0x48] sm:$0xff]
      %v184 = vld [vmem:[%s166 + $0x50] sm:$0xff]
      %v185 = vld [vmem:[%s166 + $0x58] sm:$0xff]
      %v186 = vld [vmem:[%s166 + $0x60] sm:$0xff]
      %v187 = vld [vmem:[%s166 + $0x68] sm:$0xff]
      %v188 = vld [vmem:[%s166 + $0x70] sm:$0xff]
      %v189 = vld [vmem:[%s166 + $0x78] sm:$0xff]
      %v190 = vld [vmem:[%s166 + $0x80] sm:$0xff]
      %v191 = vld [vmem:[%s166 + $0x88] sm:$0xff]
      %v192 = vld [vmem:[%s166 + $0x90] sm:$0xff]
      %v193 = vld [vmem:[%s166 + $0x98] sm:$0xff]
      %v194 = vld [vmem:[%s166 + $0xa0] sm:$0xff]
      %v195 = vld [vmem:[%s166 + $0xa8] sm:$0xff]
      %v196 = vld [vmem:[%s166 + $0xb0] sm:$0xff]
      %v197 = vld [vmem:[%s166 + $0xb8] sm:$0xff]
      %v198 = vld [vmem:[%s166 + $0xc0] sm:$0xff]
      %v199 = vld [vmem:[%s166 + $0xc8] sm:$0xff]
      %v200 = vld [vmem:[%s166 + $0xd0] sm:$0xff]
      %v201 = vld [vmem:[%s166 + $0xd8] sm:$0xff]
      %v202 = vld [vmem:[%s166 + $0xe0] sm:$0xff]
      %v203 = vld [vmem:[%s166 + $0xe8] sm:$0xff]
      %v204 = vld [vmem:[%s166 + $0xf0] sm:$0xff]
      %v205 = vld [vmem:[%s166 + $0xf8] sm:$0xff]
      %v206 = vld [vmem:[%s166 + $0x100] sm:$0xff]
      %v207 = vld [vmem:[%s166 + $0x108] sm:$0xff]
      %v208 = vld [vmem:[%s166 + $0x110] sm:$0xff]
      %v209 = vld [vmem:[%s166 + $0x118] sm:$0xff]
      %v210 = vld [vmem:[%s166 + $0x120] sm:$0xff]
      %v211 = vld [vmem:[%s166 + $0x128] sm:$0xff]
      %v212 = vld [vmem:[%s166 + $0x130] sm:$0xff]
      %v213 = vld [vmem:[%s166 + $0x138] sm:$0xff]
      %v214 = vld [vmem:[%s166 + $0x140] sm:$0xff]
      %v215 = vld [vmem:[%s166 + $0x148] sm:$0xff]
      %v216 = vld [vmem:[%s166 + $0x150] sm:$0xff]
      %v217 = vld [vmem:[%s166 + $0x158] sm:$0xff]
      %v218 = vld [vmem:[%s166 + $0x160] sm:$0xff]
      %v219 = vld [vmem:[%s166 + $0x168] sm:$0xff]
      %v220 = vld [vmem:[%s166 + $0x170] sm:$0xff]
      %v221 = vld [vmem:[%s166 + $0x178] sm:$0xff]
      %v222 = vld [vmem:[%s166 + $0x180] sm:$0xff]
      %v223 = vld [vmem:[%s166 + $0x188] sm:$0xff]
      %v224 = vld [vmem:[%s166 + $0x190] sm:$0xff]
      %v225 = vld [vmem:[%s166 + $0x198] sm:$0xff]
      %v226 = vld [vmem:[%s166 + $0x1a0] sm:$0xff]
      %v227 = vld [vmem:[%s166 + $0x1a8] sm:$0xff]
      %v228 = vld [vmem:[%s166 + $0x1b0] sm:$0xff]
      %v229 = vld [vmem:[%s166 + $0x1b8] sm:$0xff]
      %v230 = vld [vmem:[%s166 + $0x1c0] sm:$0xff]
      %v231 = vld [vmem:[%s166 + $0x1c8] sm:$0xff]
      %v232 = vld [vmem:[%s166 + $0x1d0] sm:$0xff]
      %v233 = vld [vmem:[%s166 + $0x1d8] sm:$0xff]
      %v234 = vld [vmem:[%s166 + $0x1e0] sm:$0xff]
      %v235 = vld [vmem:[%s166 + $0x1e8] sm:$0xff]
      %v236 = vld [vmem:[%s166 + $0x1f0] sm:$0xff]
      %v237 = vld [vmem:[%s166 + $0x1f8] sm:$0xff]
      %v238 = vld [vmem:[%s1] sm:$0x1]
      %v240 = vlaneseq
      %v241 = vshrl.u32 %v240, 7
      %v242 = vsub.s32 0, %v241
      %v243 = vrot.slane %v238, %v242
      %v245 = vmul.f32 %v174, %v243
      %v246 = vmul.f32 %v175, %v243
      %v247 = vmul.f32 %v176, %v243
      %v248 = vmul.f32 %v177, %v243
      %v249 = vmul.f32 %v178, %v243
      %v250 = vmul.f32 %v179, %v243
      %v251 = vmul.f32 %v180, %v243
      %v252 = vmul.f32 %v181, %v243
      %v253 = vmul.f32 %v182, %v243
      %v254 = vmul.f32 %v183, %v243
      %v255 = vmul.f32 %v184, %v243
      %v256 = vmul.f32 %v185, %v243
      %v257 = vmul.f32 %v186, %v243
      %v258 = vmul.f32 %v187, %v243
      %v259 = vmul.f32 %v188, %v243
      %v260 = vmul.f32 %v189, %v243
      %v261 = vmul.f32 %v190, %v243
      %v262 = vmul.f32 %v191, %v243
      %v263 = vmul.f32 %v192, %v243
      %v264 = vmul.f32 %v193, %v243
      %v265 = vmul.f32 %v194, %v243
      %v266 = vmul.f32 %v195, %v243
      %v267 = vmul.f32 %v196, %v243
      %v268 = vmul.f32 %v197, %v243
      %v269 = vmul.f32 %v198, %v243
      %v270 = vmul.f32 %v199, %v243
      %v271 = vmul.f32 %v200, %v243
      %v272 = vmul.f32 %v201, %v243
      %v273 = vmul.f32 %v202, %v243
      %v274 = vmul.f32 %v203, %v243
      %v275 = vmul.f32 %v204, %v243
      %v276 = vmul.f32 %v205, %v243
      %v277 = vmul.f32 %v206, %v243
      %v278 = vmul.f32 %v207, %v243
      %v279 = vmul.f32 %v208, %v243
      %v280 = vmul.f32 %v209, %v243
      %v281 = vmul.f32 %v210, %v243
      %v282 = vmul.f32 %v211, %v243
      %v283 = vmul.f32 %v212, %v243
      %v284 = vmul.f32 %v213, %v243
      %v285 = vmul.f32 %v214, %v243
      %v286 = vmul.f32 %v215, %v243
      %v287 = vmul.f32 %v216, %v243
      %v288 = vmul.f32 %v217, %v243
      %v289 = vmul.f32 %v218, %v243
      %v290 = vmul.f32 %v219, %v243
      %v291 = vmul.f32 %v220, %v243
      %v292 = vmul.f32 %v221, %v243
      %v293 = vmul.f32 %v222, %v243
      %v294 = vmul.f32 %v223, %v243
      %v295 = vmul.f32 %v224, %v243
      %v296 = vmul.f32 %v225, %v243
      %v297 = vmul.f32 %v226, %v243
      %v298 = vmul.f32 %v227, %v243
      %v299 = vmul.f32 %v228, %v243
      %v300 = vmul.f32 %v229, %v243
      %v301 = vmul.f32 %v230, %v243
      %v302 = vmul.f32 %v231, %v243
      %v303 = vmul.f32 %v232, %v243
      %v304 = vmul.f32 %v233, %v243
      %v305 = vmul.f32 %v234, %v243
      %v306 = vmul.f32 %v235, %v243
      %v307 = vmul.f32 %v236, %v243
      %v308 = vmul.f32 %v237, %v243
      %v309 = vld [vmem:[%s2] sm:$0x1]
      %v311 = vlaneseq
      %v312 = vshrl.u32 %v311, 7
      %v313 = vsub.s32 0, %v312
      %v314 = vrot.slane %v309, %v313
      %v316 = vadd.f32 %v245, %v314
      %v317 = vadd.f32 %v246, %v314
      %v318 = vadd.f32 %v247, %v314
      %v319 = vadd.f32 %v248, %v314
      %v320 = vadd.f32 %v249, %v314
      %v321 = vadd.f32 %v250, %v314
      %v322 = vadd.f32 %v251, %v314
      %v323 = vadd.f32 %v252, %v314
      %v324 = vadd.f32 %v253, %v314
      %v325 = vadd.f32 %v254, %v314
      %v326 = vadd.f32 %v255, %v314
      %v327 = vadd.f32 %v256, %v314
      %v328 = vadd.f32 %v257, %v314
      %v329 = vadd.f32 %v258, %v314
      %v330 = vadd.f32 %v259, %v314
      %v331 = vadd.f32 %v260, %v314
      %v332 = vadd.f32 %v261, %v314
      %v333 = vadd.f32 %v262, %v314
      %v334 = vadd.f32 %v263, %v314
      %v335 = vadd.f32 %v264, %v314
      %v336 = vadd.f32 %v265, %v314
      %v337 = vadd.f32 %v266, %v314
      %v338 = vadd.f32 %v267, %v314
      %v339 = vadd.f32 %v268, %v314
      %v340 = vadd.f32 %v269, %v314
      %v341 = vadd.f32 %v270, %v314
      %v342 = vadd.f32 %v271, %v314
      %v343 = vadd.f32 %v272, %v314
      %v344 = vadd.f32 %v273, %v314
      %v345 = vadd.f32 %v274, %v314
      %v346 = vadd.f32 %v275, %v314
      %v347 = vadd.f32 %v276, %v314
      %v348 = vadd.f32 %v277, %v314
      %v349 = vadd.f32 %v278, %v314
      %v350 = vadd.f32 %v279, %v314
      %v351 = vadd.f32 %v280, %v314
      %v352 = vadd.f32 %v281, %v314
      %v353 = vadd.f32 %v282, %v314
      %v354 = vadd.f32 %v283, %v314
      %v355 = vadd.f32 %v284, %v314
      %v356 = vadd.f32 %v285, %v314
      %v357 = vadd.f32 %v286, %v314
      %v358 = vadd.f32 %v287, %v314
      %v359 = vadd.f32 %v288, %v314
      %v360 = vadd.f32 %v289, %v314
      %v361 = vadd.f32 %v290, %v314
      %v362 = vadd.f32 %v291, %v314
      %v363 = vadd.f32 %v292, %v314
      %v364 = vadd.f32 %v293, %v314
      %v365 = vadd.f32 %v294, %v314
      %v366 = vadd.f32 %v295, %v314
      %v367 = vadd.f32 %v296, %v314
      %v368 = vadd.f32 %v297, %v314
      %v369 = vadd.f32 %v298, %v314
      %v370 = vadd.f32 %v299, %v314
      %v371 = vadd.f32 %v300, %v314
      %v372 = vadd.f32 %v301, %v314
      %v373 = vadd.f32 %v302, %v314
      %v374 = vadd.f32 %v303, %v314
      %v375 = vadd.f32 %v304, %v314
      %v376 = vadd.f32 %v305, %v314
      %v377 = vadd.f32 %v306, %v314
      %v378 = vadd.f32 %v307, %v314
      %v379 = vadd.f32 %v308, %v314
      %v380 = vpack.c.bf16 %v317, %v316
      %v381 = vpack.c.bf16 %v319, %v318
      %v382 = vpack.c.bf16 %v321, %v320
      %v383 = vpack.c.bf16 %v323, %v322
      %v384 = vpack.c.bf16 %v325, %v324
      %v385 = vpack.c.bf16 %v327, %v326
      %v386 = vpack.c.bf16 %v329, %v328
      %v387 = vpack.c.bf16 %v331, %v330
      %v388 = vpack.c.bf16 %v333, %v332
      %v389 = vpack.c.bf16 %v335, %v334
      %v390 = vpack.c.bf16 %v337, %v336
      %v391 = vpack.c.bf16 %v339, %v338
      %v392 = vpack.c.bf16 %v341, %v340
      %v393 = vpack.c.bf16 %v343, %v342
      %v394 = vpack.c.bf16 %v345, %v344
      %v395 = vpack.c.bf16 %v347, %v346
      %v396 = vpack.c.bf16 %v349, %v348
      %v397 = vpack.c.bf16 %v351, %v350
      %v398 = vpack.c.bf16 %v353, %v352
      %v399 = vpack.c.bf16 %v355, %v354
      %v400 = vpack.c.bf16 %v357, %v356
      %v401 = vpack.c.bf16 %v359, %v358
      %v402 = vpack.c.bf16 %v361, %v360
      %v403 = vpack.c.bf16 %v363, %v362
      %v404 = vpack.c.bf16 %v365, %v364
      %v405 = vpack.c.bf16 %v367, %v366
      %v406 = vpack.c.bf16 %v369, %v368
      %v407 = vpack.c.bf16 %v371, %v370
      %v408 = vpack.c.bf16 %v373, %v372
      %v409 = vpack.c.bf16 %v375, %v374
      %v410 = vpack.c.bf16 %v377, %v376
      %v411 = vpack.c.bf16 %v379, %v378
      %v444 = vunpack.c.l.b16 %v380
      %v445 = vunpack.c.h.b16 %v380
      %v446 = vunpack.c.l.b16 %v381
      %v447 = vunpack.c.h.b16 %v381
      %v448 = vunpack.c.l.b16 %v382
      %v449 = vunpack.c.h.b16 %v382
      %v450 = vunpack.c.l.b16 %v383
      %v451 = vunpack.c.h.b16 %v383
      %v452 = vunpack.c.l.b16 %v384
      %v453 = vunpack.c.h.b16 %v384
      %v454 = vunpack.c.l.b16 %v385
      %v455 = vunpack.c.h.b16 %v385
      %v456 = vunpack.c.l.b16 %v386
      %v457 = vunpack.c.h.b16 %v386
      %v458 = vunpack.c.l.b16 %v387
      %v459 = vunpack.c.h.b16 %v387
      %v460 = vunpack.c.l.b16 %v388
      %v461 = vunpack.c.h.b16 %v388
      %v462 = vunpack.c.l.b16 %v389
      %v463 = vunpack.c.h.b16 %v389
      %v464 = vunpack.c.l.b16 %v390
      %v465 = vunpack.c.h.b16 %v390
      %v466 = vunpack.c.l.b16 %v391
      %v467 = vunpack.c.h.b16 %v391
      %v468 = vunpack.c.l.b16 %v392
      %v469 = vunpack.c.h.b16 %v392
      %v470 = vunpack.c.l.b16 %v393
      %v471 = vunpack.c.h.b16 %v393
      %v472 = vunpack.c.l.b16 %v394
      %v473 = vunpack.c.h.b16 %v394
      %v474 = vunpack.c.l.b16 %v395
      %v475 = vunpack.c.h.b16 %v395
      %v476 = vunpack.c.l.b16 %v396
      %v477 = vunpack.c.h.b16 %v396
      %v478 = vunpack.c.l.b16 %v397
      %v479 = vunpack.c.h.b16 %v397
      %v480 = vunpack.c.l.b16 %v398
      %v481 = vunpack.c.h.b16 %v398
      %v482 = vunpack.c.l.b16 %v399
      %v483 = vunpack.c.h.b16 %v399
      %v484 = vunpack.c.l.b16 %v400
      %v485 = vunpack.c.h.b16 %v400
      %v486 = vunpack.c.l.b16 %v401
      %v487 = vunpack.c.h.b16 %v401
      %v488 = vunpack.c.l.b16 %v402
      %v489 = vunpack.c.h.b16 %v402
      %v490 = vunpack.c.l.b16 %v403
      %v491 = vunpack.c.h.b16 %v403
      %v492 = vunpack.c.l.b16 %v404
      %v493 = vunpack.c.h.b16 %v404
      %v494 = vunpack.c.l.b16 %v405
      %v495 = vunpack.c.h.b16 %v405
      %v496 = vunpack.c.l.b16 %v406
      %v497 = vunpack.c.h.b16 %v406
      %v498 = vunpack.c.l.b16 %v407
      %v499 = vunpack.c.h.b16 %v407
      %v500 = vunpack.c.l.b16 %v408
      %v501 = vunpack.c.h.b16 %v408
      %v502 = vunpack.c.l.b16 %v409
      %v503 = vunpack.c.h.b16 %v409
      %v504 = vunpack.c.l.b16 %v410
      %v505 = vunpack.c.h.b16 %v410
      %v506 = vunpack.c.l.b16 %v411
      %v507 = vunpack.c.h.b16 %v411
      %v508 = vpack.c.b16 %v444, %v444
      %v509 = vpack.c.b16 %v445, %v445
      %v510 = vpack.c.b16 %v446, %v446
      %v511 = vpack.c.b16 %v447, %v447
      %v512 = vpack.c.b16 %v448, %v448
      %v513 = vpack.c.b16 %v449, %v449
      %v514 = vpack.c.b16 %v450, %v450
      %v515 = vpack.c.b16 %v451, %v451
      %v516 = vpack.c.b16 %v452, %v452
      %v517 = vpack.c.b16 %v453, %v453
      %v518 = vpack.c.b16 %v454, %v454
      %v519 = vpack.c.b16 %v455, %v455
      %v520 = vpack.c.b16 %v456, %v456
      %v521 = vpack.c.b16 %v457, %v457
      %v522 = vpack.c.b16 %v458, %v458
      %v523 = vpack.c.b16 %v459, %v459
      %v524 = vpack.c.b16 %v460, %v460
      %v525 = vpack.c.b16 %v461, %v461
      %v526 = vpack.c.b16 %v462, %v462
      %v527 = vpack.c.b16 %v463, %v463
      %v528 = vpack.c.b16 %v464, %v464
      %v529 = vpack.c.b16 %v465, %v465
      %v530 = vpack.c.b16 %v466, %v466
      %v531 = vpack.c.b16 %v467, %v467
      %v532 = vpack.c.b16 %v468, %v468
      %v533 = vpack.c.b16 %v469, %v469
      %v534 = vpack.c.b16 %v470, %v470
      %v535 = vpack.c.b16 %v471, %v471
      %v536 = vpack.c.b16 %v472, %v472
      %v537 = vpack.c.b16 %v473, %v473
      %v538 = vpack.c.b16 %v474, %v474
      %v539 = vpack.c.b16 %v475, %v475
      %v540 = vpack.c.b16 %v476, %v476
      %v541 = vpack.c.b16 %v477, %v477
      %v542 = vpack.c.b16 %v478, %v478
      %v543 = vpack.c.b16 %v479, %v479
      %v544 = vpack.c.b16 %v480, %v480
      %v545 = vpack.c.b16 %v481, %v481
      %v546 = vpack.c.b16 %v482, %v482
      %v547 = vpack.c.b16 %v483, %v483
      %v548 = vpack.c.b16 %v484, %v484
      %v549 = vpack.c.b16 %v485, %v485
      %v550 = vpack.c.b16 %v486, %v486
      %v551 = vpack.c.b16 %v487, %v487
      %v552 = vpack.c.b16 %v488, %v488
      %v553 = vpack.c.b16 %v489, %v489
      %v554 = vpack.c.b16 %v490, %v490
      %v555 = vpack.c.b16 %v491, %v491
      %v556 = vpack.c.b16 %v492, %v492
      %v557 = vpack.c.b16 %v493, %v493
      %v558 = vpack.c.b16 %v494, %v494
      %v559 = vpack.c.b16 %v495, %v495
      %v560 = vpack.c.b16 %v496, %v496
      %v561 = vpack.c.b16 %v497, %v497
      %v562 = vpack.c.b16 %v498, %v498
      %v563 = vpack.c.b16 %v499, %v499
      %v564 = vpack.c.b16 %v500, %v500
      %v565 = vpack.c.b16 %v501, %v501
      %v566 = vpack.c.b16 %v502, %v502
      %v567 = vpack.c.b16 %v503, %v503
      %v568 = vpack.c.b16 %v504, %v504
      %v569 = vpack.c.b16 %v505, %v505
      %v570 = vpack.c.b16 %v506, %v506
      %v571 = vpack.c.b16 %v507, %v507
      %vm636 = vcmask 519168
      %637 = vst.msk [vmem:[%s172] sm:$0xf] %vm636, %v508
      %638 = vst.msk [vmem:[%s172 + $0x4] sm:$0xf] %vm636, %v509
      %639 = vst.msk [vmem:[%s172 + $0x8] sm:$0xf] %vm636, %v510
      %640 = vst.msk [vmem:[%s172 + $0xc] sm:$0xf] %vm636, %v511
      %641 = vst.msk [vmem:[%s172 + $0x10] sm:$0xf] %vm636, %v512
      %642 = vst.msk [vmem:[%s172 + $0x14] sm:$0xf] %vm636, %v513
      %643 = vst.msk [vmem:[%s172 + $0x18] sm:$0xf] %vm636, %v514
      %644 = vst.msk [vmem:[%s172 + $0x1c] sm:$0xf] %vm636, %v515
      %645 = vst.msk [vmem:[%s172 + $0x20] sm:$0xf] %vm636, %v516
      %646 = vst.msk [vmem:[%s172 + $0x24] sm:$0xf] %vm636, %v517
      %647 = vst.msk [vmem:[%s172 + $0x28] sm:$0xf] %vm636, %v518
      %648 = vst.msk [vmem:[%s172 + $0x2c] sm:$0xf] %vm636, %v519
      %649 = vst.msk [vmem:[%s172 + $0x30] sm:$0xf] %vm636, %v520
      %650 = vst.msk [vmem:[%s172 + $0x34] sm:$0xf] %vm636, %v521
      %651 = vst.msk [vmem:[%s172 + $0x38] sm:$0xf] %vm636, %v522
      %652 = vst.msk [vmem:[%s172 + $0x3c] sm:$0xf] %vm636, %v523
      %653 = vst.msk [vmem:[%s172 + $0x40] sm:$0xf] %vm636, %v524
      %654 = vst.msk [vmem:[%s172 + $0x44] sm:$0xf] %vm636, %v525
      %655 = vst.msk [vmem:[%s172 + $0x48] sm:$0xf] %vm636, %v526
      %656 = vst.msk [vmem:[%s172 + $0x4c] sm:$0xf] %vm636, %v527
      %657 = vst.msk [vmem:[%s172 + $0x50] sm:$0xf] %vm636, %v528
      %658 = vst.msk [vmem:[%s172 + $0x54] sm:$0xf] %vm636, %v529
      %659 = vst.msk [vmem:[%s172 + $0x58] sm:$0xf] %vm636, %v530
      %660 = vst.msk [vmem:[%s172 + $0x5c] sm:$0xf] %vm636, %v531
      %661 = vst.msk [vmem:[%s172 + $0x60] sm:$0xf] %vm636, %v532
      %662 = vst.msk [vmem:[%s172 + $0x64] sm:$0xf] %vm636, %v533
      %663 = vst.msk [vmem:[%s172 + $0x68] sm:$0xf] %vm636, %v534
      %664 = vst.msk [vmem:[%s172 + $0x6c] sm:$0xf] %vm636, %v535
      %665 = vst.msk [vmem:[%s172 + $0x70] sm:$0xf] %vm636, %v536
      %666 = vst.msk [vmem:[%s172 + $0x74] sm:$0xf] %vm636, %v537
      %667 = vst.msk [vmem:[%s172 + $0x78] sm:$0xf] %vm636, %v538
      %668 = vst.msk [vmem:[%s172 + $0x7c] sm:$0xf] %vm636, %v539
      %669 = vst.msk [vmem:[%s172 + $0x80] sm:$0xf] %vm636, %v540
      %670 = vst.msk [vmem:[%s172 + $0x84] sm:$0xf] %vm636, %v541
      %671 = vst.msk [vmem:[%s172 + $0x88] sm:$0xf] %vm636, %v542
      %672 = vst.msk [vmem:[%s172 + $0x8c] sm:$0xf] %vm636, %v543
      %673 = vst.msk [vmem:[%s172 + $0x90] sm:$0xf] %vm636, %v544
      %674 = vst.msk [vmem:[%s172 + $0x94] sm:$0xf] %vm636, %v545
      %675 = vst.msk [vmem:[%s172 + $0x98] sm:$0xf] %vm636, %v546
      %676 = vst.msk [vmem:[%s172 + $0x9c] sm:$0xf] %vm636, %v547
      %677 = vst.msk [vmem:[%s172 + $0xa0] sm:$0xf] %vm636, %v548
      %678 = vst.msk [vmem:[%s172 + $0xa4] sm:$0xf] %vm636, %v549
      %679 = vst.msk [vmem:[%s172 + $0xa8] sm:$0xf] %vm636, %v550
      %680 = vst.msk [vmem:[%s172 + $0xac] sm:$0xf] %vm636, %v551
      %681 = vst.msk [vmem:[%s172 + $0xb0] sm:$0xf] %vm636, %v552
      %682 = vst.msk [vmem:[%s172 + $0xb4] sm:$0xf] %vm636, %v553
      %683 = vst.msk [vmem:[%s172 + $0xb8] sm:$0xf] %vm636, %v554
      %684 = vst.msk [vmem:[%s172 + $0xbc] sm:$0xf] %vm636, %v555
      %685 = vst.msk [vmem:[%s172 + $0xc0] sm:$0xf] %vm636, %v556
      %686 = vst.msk [vmem:[%s172 + $0xc4] sm:$0xf] %vm636, %v557
      %687 = vst.msk [vmem:[%s172 + $0xc8] sm:$0xf] %vm636, %v558
      %688 = vst.msk [vmem:[%s172 + $0xcc] sm:$0xf] %vm636, %v559
      %689 = vst.msk [vmem:[%s172 + $0xd0] sm:$0xf] %vm636, %v560
      %690 = vst.msk [vmem:[%s172 + $0xd4] sm:$0xf] %vm636, %v561
      %691 = vst.msk [vmem:[%s172 + $0xd8] sm:$0xf] %vm636, %v562
      %692 = vst.msk [vmem:[%s172 + $0xdc] sm:$0xf] %vm636, %v563
      %693 = vst.msk [vmem:[%s172 + $0xe0] sm:$0xf] %vm636, %v564
      %694 = vst.msk [vmem:[%s172 + $0xe4] sm:$0xf] %vm636, %v565
      %695 = vst.msk [vmem:[%s172 + $0xe8] sm:$0xf] %vm636, %v566
      %696 = vst.msk [vmem:[%s172 + $0xec] sm:$0xf] %vm636, %v567
      %697 = vst.msk [vmem:[%s172 + $0xf0] sm:$0xf] %vm636, %v568
      %698 = vst.msk [vmem:[%s172 + $0xf4] sm:$0xf] %vm636, %v569
      %699 = vst.msk [vmem:[%s172 + $0xf8] sm:$0xf] %vm636, %v570
      %700 = vst.msk [vmem:[%s172 + $0xfc] sm:$0xf] %vm636, %v571
      %s701 = smul.u32 64, %s14
      %p702 = scmp.lt.s32.totalorder %s701, 255
      %s703 = scalar_select %p702, %s701, 255
      %s704 = smul.addr %s703, 4
      %s705 = scalar_lea.vmem %s3, %s704
      // Predicated region
      $region33: #{dcgan_forward.15} parent=31 // pred_check
        %p706 = pneg %p100
      $region34: #{dcgan_forward.15} parent=31 // pred_check_branch
        %708 = sbr.rel (%p706) target = $region36
      $region35: #{dcgan_forward.15} parent=31 // pred_region
        %s709 = smul.u32 64, %s14
      $region36: #{dcgan_forward.15} parent=31 // pred_fallthru
        _
    $region32: #{dcgan_forward.15} parent=5 // pred_fallthru
      _
    %p710 = scmp.le.s32.totalorder 2, %s9
    // Predicated region
    $region37: #{dcgan_forward.15} parent=5 // pred_check
      %p711 = pneg %p710
    $region38: #{dcgan_forward.15} parent=5 // pred_check_branch
      %713 = sbr.rel (%p711) target = $region40
    $region39: #{dcgan_forward.15} parent=5 // pred_region
      %s714 = ssub.s32 %s9, 2
      // Predicated region
      $region41: #{dcgan_forward.15} parent=39 // pred_check
        %p715 = pneg %p106
      $region42: #{dcgan_forward.15} parent=39 // pred_check_branch
        %717 = sbr.rel (%p715) target = $region44
      $region43: #{dcgan_forward.15} parent=39 // pred_region
        %s718 = smul.u32 64, %s15
        %p719 = scmp.lt.s32.totalorder %s718, 255
        %s720 = scalar_select %p719, %s718, 255
        %s721 = smul.addr %s720, 4
        %s722 = scalar_lea.vmem %s3, %s721
      $region44: #{dcgan_forward.15} parent=39 // pred_fallthru
        _
    $region40: #{dcgan_forward.15} parent=5 // pred_fallthru
      _
  $region6: #{dcgan_forward.15} parent=0 // loop_footer
    %s13 = sadd.s32 1, %s9
  $region7: #{dcgan_forward.15} parent=0 // loop_footer_branch
    %8 = sbr.rel target = $region3
  $region8: #{dcgan_forward.15} parent=0 // loop_exit
    _

// kernel: dcgan_forward.16
$region0: #{dcgan_forward.16}
  #allocation0 [shape = 'u32[]', space=smem, size = 0x4, offset = 0x4, fixed_abs, tag = 'smem constant byte address 0x4 - core index']
  #allocation1 [shape = 'u32[144,128]{1,0:T(1,128)}', space=vmem, size = 0x12000, scoped, tag = 'internal scratch']
  #allocation2 [shape = 'f32[256,128]{1,0:T(8,128)}', space=vmem, size = 0x20000, scoped, tag = 'scratch operand']
  %s0 = inlined_call_operand.vmem [shape: bf16[512,1024], index: 0, kind: input, shape index: {}]
  %s1 = inlined_call_operand.vmem [shape: bf16[1024,128], index: 1, kind: input, shape index: {}]
  %s2 = inlined_call_operand.vmem [shape: f32[512,128], index: 2, kind: output, shape index: {}]
  %s3 = sld [smem:[#allocation0]]
  $region72: #{dcgan_forward.16} parent=0
    _
  %s5 = ssub.s32 1, %s3
  %s6 = scalar_select 0, %s5, %s3
  $region1: #{dcgan_forward.16} parent=0
    #allocation3 [shape = 'u8[524288]{0}', space=vmem, size = 0x80000, scoped, tag = 'input window, operand 0']
    loop: start=0, step=1, limit=6
    $region2: #{dcgan_forward.16} parent=1 // loop_pre_header
      _
    $region3: #{dcgan_forward.16} parent=1 // loop_header
      %s8 = sphi 0, %s12
      %p9 = scmp.ge.s32.totalorder %s8, 6
      %s15 = sphi 0, %s34
      %s16 = sphi 0, %s30
      %s17 = sphi 0, %s26
      %s18 = sphi 0, %s15
      %s19 = sphi 0, %s16
      %s20 = sphi 0, %s17
      %s21 = sphi 0, %s18
      %s22 = sphi 0, %s19
      %s23 = sphi 0, %s20
      %s39 = sphi 0, %s41
      %s42 = sphi 0, %s39
      %s43 = sphi 0, %s42
      %s59 = sphi 0, %s43
      %s67 = sphi 0, %s69
      %s70 = sphi 0, %s67
      %s71 = sphi 0, %s70
      %s87 = sphi 0, %s71
      %s95 = sphi 0, %s97
      %s98 = sphi 0, %s95
      %s99 = sphi 0, %s98
      %s115 = sphi 0, %s99
    $region4: #{dcgan_forward.16} parent=1 // loop_header_branch
      %11 = sbr.rel (%p9) target = $region8
    $region5: #{dcgan_forward.16} parent=1 // loop_body
      %s13 = ssub.s32 %s8, 1
      %s14 = ssub.s32 %s8, 2
      %s24 = sadd.s32 1, %s17
      %p25 = scmp.ge.s32.totalorder %s24, 2
      %s26 = scalar_select %p25, 0, %s24
      %s27 = sadd.s32 1, %s16
      %s28 = scalar_select %p25, %s27, %s16
      %p29 = scmp.ge.s32.totalorder %s28, 1
      %s30 = scalar_select %p29, 0, %s28
      %s31 = sadd.s32 1, %s15
      %s32 = scalar_select %p29, %s31, %s15
      %p33 = scmp.ge.s32.totalorder %s32, 2
      %s34 = scalar_select %p33, 0, %s32
      %s35 = ssub.s32 %s15, %s34
      %s36 = ssub.s32 %s17, %s26
      %s37 = sor.u32 %s35, %s36
      %p38 = scmp.eq.s32.totalorder %s37, 0
      %s40 = sadd.s32 %s39, 1
      %s41 = scalar_select %p38, %s39, %s40
      %p44 = pneg %p38
      %p45 = scmp.eq.s32.totalorder %s8, 3
      %p46 = por %p44, %p45
      %p47 = scmp.ne.s32.totalorder %s39, %s42
      %p48 = scmp.eq.s32.totalorder %s8, 0
      %p49 = por %p47, %p48
      %p50 = scmp.ne.s32.totalorder %s39, %s42
      %p51 = scmp.eq.s32.totalorder %s13, 3
      %p52 = por %p50, %p51
      %p53 = scmp.ne.s32.totalorder %s42, %s43
      %p54 = scmp.eq.s32.totalorder %s13, 0
      %p55 = por %p53, %p54
      %p56 = scmp.ne.s32.totalorder %s42, %s43
      %p57 = scmp.eq.s32.totalorder %s14, 3
      %p58 = por %p56, %p57
      %p60 = scmp.ne.s32.totalorder %s43, %s59
      %p61 = scmp.eq.s32.totalorder %s14, 0
      %p62 = por %p60, %p61
      %s63 = ssub.s32 %s17, %s26
      %s64 = ssub.s32 %s16, %s30
      %s65 = sor.u32 %s63, %s64
      %p66 = scmp.eq.s32.totalorder %s65, 0
      %s68 = sadd.s32 %s67, 1
      %s69 = scalar_select %p66, %s67, %s68
      %p72 = pneg %p66
      %p73 = scmp.eq.s32.totalorder %s8, 3
      %p74 = por %p72, %p73
      %p75 = scmp.ne.s32.totalorder %s67, %s70
      %p76 = scmp.eq.s32.totalorder %s8, 0
      %p77 = por %p75, %p76
      %p78 = scmp.ne.s32.totalorder %s67, %s70
      %p79 = scmp.eq.s32.totalorder %s13, 3
      %p80 = por %p78, %p79
      %p81 = scmp.ne.s32.totalorder %s70, %s71
      %p82 = scmp.eq.s32.totalorder %s13, 0
      %p83 = por %p81, %p82
      %p84 = scmp.ne.s32.totalorder %s70, %s71
      %p85 = scmp.eq.s32.totalorder %s14, 3
      %p86 = por %p84, %p85
      %p88 = scmp.ne.s32.totalorder %s71, %s87
      %p89 = scmp.eq.s32.totalorder %s14, 0
      %p90 = por %p88, %p89
      %s91 = ssub.s32 %s15, %s34
      %s92 = ssub.s32 %s16, %s30
      %s93 = sor.u32 %s91, %s92
      %p94 = scmp.eq.s32.totalorder %s93, 0
      %s96 = sadd.s32 %s95, 1
      %s97 = scalar_select %p94, %s95, %s96
      %p100 = pneg %p94
      %p101 = scmp.eq.s32.totalorder %s8, 3
      %p102 = por %p100, %p101
      %p103 = scmp.ne.s32.totalorder %s95, %s98
      %p104 = scmp.eq.s32.totalorder %s8, 0
      %p105 = por %p103, %p104
      %p106 = scmp.ne.s32.totalorder %s95, %s98
      %p107 = scmp.eq.s32.totalorder %s13, 3
      %p108 = por %p106, %p107
      %p109 = scmp.ne.s32.totalorder %s98, %s99
      %p110 = scmp.eq.s32.totalorder %s13, 0
      %p111 = por %p109, %p110
      %p112 = scmp.ne.s32.totalorder %s98, %s99
      %p113 = scmp.eq.s32.totalorder %s14, 3
      %p114 = por %p112, %p113
      %p116 = scmp.ne.s32.totalorder %s99, %s115
      %p117 = scmp.eq.s32.totalorder %s14, 0
      %p118 = por %p116, %p117
      %p119 = scmp.le.s32.totalorder 1, %s8
      %p120 = scmp.lt.s32.totalorder %s8, 5
      %p121 = pnand %p119, %p120
      %p122 = pneg %p121
      // Predicated region
      $region9: #{dcgan_forward.16} parent=5 // pred_check
        _
      $region10: #{dcgan_forward.16} parent=5 // pred_check_branch
        %124 = sbr.rel (%p121) target = $region12
      $region11: #{dcgan_forward.16} parent=5 // pred_region
        %s125 = ssub.s32 %s8, 1
      $region12: #{dcgan_forward.16} parent=5 // pred_fallthru
        _
      %p126 = scmp.lt.s32.totalorder %s8, 4
      // Predicated region
      $region13: #{dcgan_forward.16} parent=5 // pred_check
        %p127 = pneg %p126
      $region14: #{dcgan_forward.16} parent=5 // pred_check_branch
        %129 = sbr.rel (%p127) target = $region16
      $region15: #{dcgan_forward.16} parent=5 // pred_region
        // Predicated region
        $region17: #{dcgan_forward.16} parent=15 // pred_check
          %p130 = pneg %p49
        $region18: #{dcgan_forward.16} parent=15 // pred_check_branch
          %132 = sbr.rel (%p130) target = $region20
        $region19: #{dcgan_forward.16} parent=15 // pred_region
          %s133 = sand.u32 %s39, 1
          %s134 = sand.u32 %s39, 1
          %s135 = smul.addr %s134, 512
          %s136 = scalar_lea.vmem [#allocation3], %s135
          %s137 = smul.u32 32, %s15
          %s138 = smul.u32 4, %s17
          %s139 = smul.addr %s137, 8
          %s140 = sadd.s32 %s138, %s139
          %s141 = smul.addr %s140, 4
          %s142 = scalar_lea.vmem %s0, %s141
          // Predicated region
          $region21: #{dcgan_forward.16} parent=19 // pred_check
            _
          $region22: #{dcgan_forward.16} parent=19 // pred_check_branch
            %144 = sbr.rel (0) target = $region24
          $region23: #{dcgan_forward.16} parent=19 // pred_region
            // Predicated region
            $region25: #{dcgan_forward.16} parent=23 // pred_check
              _
            $region26: #{dcgan_forward.16} parent=23 // pred_check_branch
              %146 = sbr.rel (0) target = $region28
            $region27: #{dcgan_forward.16} parent=23 // pred_region
              loop: start=0, step=1, limit=1
              $region29: #{dcgan_forward.16} parent=27 // loop_pre_header
                _
              $region30: #{dcgan_forward.16} parent=27 // loop_header
                %s148 = sphi 0, %s152
                %p149 = scmp.ge.s32.totalorder %s148, 1
                %s153 = sphi %s142, %s142
                %s154 = sphi %s136, %s136
              $region31: #{dcgan_forward.16} parent=27 // loop_header_branch
                %151 = sbr.rel (%p149) target = $region35
              $region32: #{dcgan_forward.16} parent=27 // loop_body
                %v155 = vld [vmem:[%s153] sm:$0xff]
                %156 = vst [vmem:[%s154] sm:$0xff] %v155
                %v157 = vld [vmem:[%s153 + $0x8] sm:$0xff]
                %158 = vst [vmem:[%s154 + $0x8] sm:$0xff] %v157
                %v159 = vld [vmem:[%s153 + $0x20] sm:$0xff]
                %160 = vst [vmem:[%s154 + $0x10] sm:$0xff] %v159
                %v161 = vld [vmem:[%s153 + $0x28] sm:$0xff]
                %162 = vst [vmem:[%s154 + $0x18] sm:$0xff] %v161
                %v163 = vld [vmem:[%s153 + $0x40] sm:$0xff]
                %164 = vst [vmem:[%s154 + $0x20] sm:$0xff] %v163
                %v165 = vld [vmem:[%s153 + $0x48] sm:$0xff]
                %166 = vst [vmem:[%s154 + $0x28] sm:$0xff] %v165
                %v167 = vld [vmem:[%s153 + $0x60] sm:$0xff]
                %168 = vst [vmem:[%s154 + $0x30] sm:$0xff] %v167
                %v169 = vld [vmem:[%s153 + $0x68] sm:$0xff]
                %170 = vst [vmem:[%s154 + $0x38] sm:$0xff] %v169
                %v171 = vld [vmem:[%s153 + $0x80] sm:$0xff]
                %172 = vst [vmem:[%s154 + $0x40] sm:$0xff] %v171
                %v173 = vld [vmem:[%s153 + $0x88] sm:$0xff]
                %174 = vst [vmem:[%s154 + $0x48] sm:$0xff] %v173
                %v175 = vld [vmem:[%s153 + $0xa0] sm:$0xff]
                %176 = vst [vmem:[%s154 + $0x50] sm:$0xff] %v175
                %v177 = vld [vmem:[%s153 + $0xa8] sm:$0xff]
                %178 = vst [vmem:[%s154 + $0x58] sm:$0xff] %v177
                %v179 = vld [vmem:[%s153 + $0xc0] sm:$0xff]
                %180 = vst [vmem:[%s154 + $0x60] sm:$0xff] %v179
                %v181 = vld [vmem:[%s153 + $0xc8] sm:$0xff]
                %182 = vst [vmem:[%s154 + $0x68] sm:$0xff] %v181
                %v183 = vld [vmem:[%s153 + $0xe0] sm:$0xff]
                %184 = vst [vmem:[%s154 + $0x70] sm:$0xff] %v183
                %v185 = vld [vmem:[%s153 + $0xe8] sm:$0xff]
                %186 = vst [vmem:[%s154 + $0x78] sm:$0xff] %v185
                %v187 = vld [vmem:[%s153 + $0x100] sm:$0xff]
                %188 = vst [vmem:[%s154 + $0x80] sm:$0xff] %v187
                %v189 = vld [vmem:[%s153 + $0x108] sm:$0xff]
                %190 = vst [vmem:[%s154 + $0x88] sm:$0xff] %v189
                %v191 = vld [vmem:[%s153 + $0x120] sm:$0xff]
                %192 = vst [vmem:[%s154 + $0x90] sm:$0xff] %v191
                %v193 = vld [vmem:[%s153 + $0x128] sm:$0xff]
                %194 = vst [vmem:[%s154 + $0x98] sm:$0xff] %v193
                %v195 = vld [vmem:[%s153 + $0x140] sm:$0xff]
                %196 = vst [vmem:[%s154 + $0xa0] sm:$0xff] %v195
                %v197 = vld [vmem:[%s153 + $0x148] sm:$0xff]
                %198 = vst [vmem:[%s154 + $0xa8] sm:$0xff] %v197
                %v199 = vld [vmem:[%s153 + $0x160] sm:$0xff]
                %200 = vst [vmem:[%s154 + $0xb0] sm:$0xff] %v199
                %v201 = vld [vmem:[%s153 + $0x168] sm:$0xff]
                %202 = vst [vmem:[%s154 + $0xb8] sm:$0xff] %v201
                %v203 = vld [vmem:[%s153 + $0x180] sm:$0xff]
                %204 = vst [vmem:[%s154 + $0xc0] sm:$0xff] %v203
                %v205 = vld [vmem:[%s153 + $0x188] sm:$0xff]
                %206 = vst [vmem:[%s154 + $0xc8] sm:$0xff] %v205
                %v207 = vld [vmem:[%s153 + $0x1a0] sm:$0xff]
                %208 = vst [vmem:[%s154 + $0xd0] sm:$0xff] %v207
                %v209 = vld [vmem:[%s153 + $0x1a8] sm:$0xff]
                %210 = vst [vmem:[%s154 + $0xd8] sm:$0xff] %v209
                %v211 = vld [vmem:[%s153 + $0x1c0] sm:$0xff]
                %212 = vst [vmem:[%s154 + $0xe0] sm:$0xff] %v211
                %v213 = vld [vmem:[%s153 + $0x1c8] sm:$0xff]
                %214 = vst [vmem:[%s154 + $0xe8] sm:$0xff] %v213
                %v215 = vld [vmem:[%s153 + $0x1e0] sm:$0xff]
                %216 = vst [vmem:[%s154 + $0xf0] sm:$0xff] %v215
                %v217 = vld [vmem:[%s153 + $0x1e8] sm:$0xff]
                %218 = vst [vmem:[%s154 + $0xf8] sm:$0xff] %v217
                %v219 = vld [vmem:[%s153 + $0x200] sm:$0xff]
                %220 = vst [vmem:[%s154 + $0x100] sm:$0xff] %v219
                %v221 = vld [vmem:[%s153 + $0x208] sm:$0xff]
                %222 = vst [vmem:[%s154 + $0x108] sm:$0xff] %v221
                %v223 = vld [vmem:[%s153 + $0x220] sm:$0xff]
                %224 = vst [vmem:[%s154 + $0x110] sm:$0xff] %v223
                %v225 = vld [vmem:[%s153 + $0x228] sm:$0xff]
                %226 = vst [vmem:[%s154 + $0x118] sm:$0xff] %v225
                %v227 = vld [vmem:[%s153 + $0x240] sm:$0xff]
                %228 = vst [vmem:[%s154 + $0x120] sm:$0xff] %v227
                %v229 = vld [vmem:[%s153 + $0x248] sm:$0xff]
                %230 = vst [vmem:[%s154 + $0x128] sm:$0xff] %v229
                %v231 = vld [vmem:[%s153 + $0x260] sm:$0xff]
                %232 = vst [vmem:[%s154 + $0x130] sm:$0xff] %v231
                %v233 = vld [vmem:[%s153 + $0x268] sm:$0xff]
                %234 = vst [vmem:[%s154 + $0x138] sm:$0xff] %v233
                %v235 = vld [vmem:[%s153 + $0x280] sm:$0xff]
                %236 = vst [vmem:[%s154 + $0x140] sm:$0xff] %v235
                %v237 = vld [vmem:[%s153 + $0x288] sm:$0xff]
                %238 = vst [vmem:[%s154 + $0x148] sm:$0xff] %v237
                %v239 = vld [vmem:[%s153 + $0x2a0] sm:$0xff]
                %240 = vst [vmem:[%s154 + $0x150] sm:$0xff] %v239
                %v241 = vld [vmem:[%s153 + $0x2a8] sm:$0xff]
                %242 = vst [vmem:[%s154 + $0x158] sm:$0xff] %v241
                %v243 = vld [vmem:[%s153 + $0x2c0] sm:$0xff]
                %244 = vst [vmem:[%s154 + $0x160] sm:$0xff] %v243
                %v245 = vld [vmem:[%s153 + $0x2c8] sm:$0xff]
                %246 = vst [vmem:[%s154 + $0x168] sm:$0xff] %v245
                %v247 = vld [vmem:[%s153 + $0x2e0] sm:$0xff]
                %248 = vst [vmem:[%s154 + $0x170] sm:$0xff] %v247
                %v249 = vld [vmem:[%s153 + $0x2e8] sm:$0xff]
                %250 = vst [vmem:[%s154 + $0x178] sm:$0xff] %v249
                %v251 = vld [vmem:[%s153 + $0x300] sm:$0xff]
                %252 = vst [vmem:[%s154 + $0x180] sm:$0xff] %v251
                %v253 = vld [vmem:[%s153 + $0x308] sm:$0xff]
                %254 = vst [vmem:[%s154 + $0x188] sm:$0xff] %v253
                %v255 = vld [vmem:[%s153 + $0x320] sm:$0xff]
                %256 = vst [vmem:[%s154 + $0x190] sm:$0xff] %v255
                %v257 = vld [vmem:[%s153 + $0x328] sm:$0xff]
                %258 = vst [vmem:[%s154 + $0x198] sm:$0xff] %v257
                %v259 = vld [vmem:[%s153 + $0x340] sm:$0xff]
                %260 = vst [vmem:[%s154 + $0x1a0] sm:$0xff] %v259
                %v261 = vld [vmem:[%s153 + $0x348] sm:$0xff]
                %262 = vst [vmem:[%s154 + $0x1a8] sm:$0xff] %v261
                %v263 = vld [vmem:[%s153 + $0x360] sm:$0xff]
                %264 = vst [vmem:[%s154 + $0x1b0] sm:$0xff] %v263
                %v265 = vld [vmem:[%s153 + $0x368] sm:$0xff]
                %266 = vst [vmem:[%s154 + $0x1b8] sm:$0xff] %v265
                %v267 = vld [vmem:[%s153 + $0x380] sm:$0xff]
                %268 = vst [vmem:[%s154 + $0x1c0] sm:$0xff] %v267
                %v269 = vld [vmem:[%s153 + $0x388] sm:$0xff]
                %270 = vst [vmem:[%s154 + $0x1c8] sm:$0xff] %v269
                %v271 = vld [vmem:[%s153 + $0x3a0] sm:$0xff]
                %272 = vst [vmem:[%s154 + $0x1d0] sm:$0xff] %v271
                %v273 = vld [vmem:[%s153 + $0x3a8] sm:$0xff]
                %274 = vst [vmem:[%s154 + $0x1d8] sm:$0xff] %v273
                %v275 = vld [vmem:[%s153 + $0x3c0] sm:$0xff]
                %276 = vst [vmem:[%s154 + $0x1e0] sm:$0xff] %v275
                %v277 = vld [vmem:[%s153 + $0x3c8] sm:$0xff]
                %278 = vst [vmem:[%s154 + $0x1e8] sm:$0xff] %v277
                %v279 = vld [vmem:[%s153 + $0x3e0] sm:$0xff]
                %280 = vst [vmem:[%s154 + $0x1f0] sm:$0xff] %v279
                %v281 = vld [vmem:[%s153 + $0x3e8] sm:$0xff]
                %282 = vst [vmem:[%s154 + $0x1f8] sm:$0xff] %v281
              $region33: #{dcgan_forward.16} parent=27 // loop_footer
                %s152 = sadd.s32 1, %s148
              $region34: #{dcgan_forward.16} parent=27 // loop_footer_branch
                %147 = sbr.rel target = $region30
              $region35: #{dcgan_forward.16} parent=27 // loop_exit
                _
            $region28: #{dcgan_forward.16} parent=23 // pred_fallthru
              _
            // Predicated region
            $region36: #{dcgan_forward.16} parent=23 // pred_check
              _
            $region37: #{dcgan_forward.16} parent=23 // pred_check_branch
              %284 = sbr.rel target = $region39
            $region38: #{dcgan_forward.16} parent=23 // pred_region
              _
            $region39: #{dcgan_forward.16} parent=23 // pred_fallthru
              _
          $region24: #{dcgan_forward.16} parent=19 // pred_fallthru
            _
          %285 = vnop
        $region20: #{dcgan_forward.16} parent=15 // pred_fallthru
          _
        // Predicated region
        $region40: #{dcgan_forward.16} parent=15 // pred_check
          %p286 = pneg %p77
        $region41: #{dcgan_forward.16} parent=15 // pred_check_branch
          %288 = sbr.rel (%p286) target = $region43
        $region42: #{dcgan_forward.16} parent=15 // pred_region
          %s289 = smul.u32 64, %s17
          %p290 = scmp.lt.s32.totalorder %s289, 127
          %s291 = scalar_select %p290, %s289, 127
          %p292 = scmp.lt.s32.totalorder %s16, 0
          %s293 = scalar_select %p292, %s16, 0
          %s294 = sadd.s32 %s293, %s291
          %s295 = smul.addr %s294, 4
          %s296 = scalar_lea.vmem %s1, %s295
          %s297 = smul.u32 64, %s17
        $region43: #{dcgan_forward.16} parent=15 // pred_fallthru
          _
      $region16: #{dcgan_forward.16} parent=5 // pred_fallthru
        _
      %p298 = scmp.le.s32.totalorder 1, %s8
      %p299 = scmp.lt.s32.totalorder %s8, 5
      %p300 = pnand %p298, %p299
      %p301 = pneg %p300
      // Predicated region
      $region44: #{dcgan_forward.16} parent=5 // pred_check
        _
      $region45: #{dcgan_forward.16} parent=5 // pred_check_branch
        %303 = sbr.rel (%p300) target = $region47
      $region46: #{dcgan_forward.16} parent=5 // pred_region
        %s304 = ssub.s32 %s8, 1
        %s305 = sand.u32 %s42, 1
        %s306 = sand.u32 %s42, 1
        %s307 = smul.addr %s306, 512
        %s308 = scalar_lea.vmem [#allocation3], %s307
        // Predicated region
        $region48: #{dcgan_forward.16} parent=46 // pred_check
          %p309 = pneg %p55
        $region49: #{dcgan_forward.16} parent=46 // pred_check_branch
          %311 = sbr.rel (%p309) target = $region51
        $region50: #{dcgan_forward.16} parent=46 // pred_region
          _
        $region51: #{dcgan_forward.16} parent=46 // pred_fallthru
          _
        %s312 = sand.u32 %s42, 1
        %s313 = sand.u32 %s42, 1
        %s314 = smul.addr %s313, 512
        %s315 = scalar_lea.vmem [#allocation3], %s314
        %p316 = pneg %p55
        %p317 = pneg %p52
        %s318 = smul.u32 64, %s20
        %p319 = scmp.lt.s32.totalorder %s318, 127
        %s320 = scalar_select %p319, %s318, 127
        %p321 = scmp.lt.s32.totalorder %s19, 0
        %s322 = scalar_select %p321, %s19, 0
        %s323 = sadd.s32 %s322, %s320
        %s324 = smul.addr %s323, 4
        %s325 = scalar_lea.vmem %s1, %s324
        %p326 = pneg %p83
        %p327 = pneg %p80
        %p328 = pneg %p111
        %p329 = pneg %p108
        %s330 = smul.u32 32, %s18
        %p331 = scmp.lt.s32.totalorder %s330, 63
        %s332 = scalar_select %p331, %s330, 63
        %p333 = scmp.lt.s32.totalorder %s19, 0
        %s334 = scalar_select %p333, %s19, 0
        %s335 = sadd.s32 %s334, %s332
        %s336 = smul.addr %s335, 8
        %s337 = scalar_lea.vmem %s2, %s336
        %s338 = smul.u32 32, %s18
        %s339 = smul.u32 4, %s20
        %s340 = smul.u32 64, %s20
        %p341 = scmp.lt.s32.totalorder %s340, 127
        %s342 = scalar_select %p341, %s340, 127
        %p343 = scmp.lt.s32.totalorder %s19, 0
        %s344 = scalar_select %p343, %s19, 0
        %s345 = sadd.s32 %s344, %s342
        %s346 = smul.addr %s345, 4
        %s347 = scalar_lea.vmem %s1, %s346
        %s348 = smul.u32 64, %s20
        %s349 = smul.u32 32, %s18
        %p350 = scmp.lt.s32.totalorder %s349, 63
        %s351 = scalar_select %p350, %s349, 63
        %p352 = scmp.lt.s32.totalorder %s19, 0
        %s353 = scalar_select %p352, %s19, 0
        %s354 = sadd.s32 %s353, %s351
        %s355 = smul.addr %s354, 8
        %s356 = scalar_lea.vmem %s2, %s355
        %s357 = smul.u32 32, %s18
        %v359 = vld [vmem:[%s308] sm:$0xff]
        %v360 = vld [vmem:[%s308 + $0x8] sm:$0xff]
        %v361 = vld [vmem:[%s308 + $0x10] sm:$0xff]
        %v362 = vld [vmem:[%s308 + $0x18] sm:$0xff]
        %v363 = vld [vmem:[%s308 + $0x20] sm:$0xff]
        %v364 = vld [vmem:[%s308 + $0x28] sm:$0xff]
        %v365 = vld [vmem:[%s308 + $0x30] sm:$0xff]
        %v366 = vld [vmem:[%s308 + $0x38] sm:$0xff]
        %v367 = vld [vmem:[%s308 + $0x40] sm:$0xff]
        %v368 = vld [vmem:[%s308 + $0x48] sm:$0xff]
        %v369 = vld [vmem:[%s308 + $0x50] sm:$0xff]
        %v370 = vld [vmem:[%s308 + $0x58] sm:$0xff]
        %v371 = vld [vmem:[%s308 + $0x60] sm:$0xff]
        %v372 = vld [vmem:[%s308 + $0x68] sm:$0xff]
        %v373 = vld [vmem:[%s308 + $0x70] sm:$0xff]
        %v374 = vld [vmem:[%s308 + $0x78] sm:$0xff]
        %v375 = vld [vmem:[%s308 + $0x80] sm:$0xff]
        %v376 = vld [vmem:[%s308 + $0x88] sm:$0xff]
        %v377 = vld [vmem:[%s308 + $0x90] sm:$0xff]
        %v378 = vld [vmem:[%s308 + $0x98] sm:$0xff]
        %v379 = vld [vmem:[%s308 + $0xa0] sm:$0xff]
        %v380 = vld [vmem:[%s308 + $0xa8] sm:$0xff]
        %v381 = vld [vmem:[%s308 + $0xb0] sm:$0xff]
        %v382 = vld [vmem:[%s308 + $0xb8] sm:$0xff]
        %v383 = vld [vmem:[%s308 + $0xc0] sm:$0xff]
        %v384 = vld [vmem:[%s308 + $0xc8] sm:$0xff]
        %v385 = vld [vmem:[%s308 + $0xd0] sm:$0xff]
        %v386 = vld [vmem:[%s308 + $0xd8] sm:$0xff]
        %v387 = vld [vmem:[%s308 + $0xe0] sm:$0xff]
        %v388 = vld [vmem:[%s308 + $0xe8] sm:$0xff]
        %v389 = vld [vmem:[%s308 + $0xf0] sm:$0xff]
        %v390 = vld [vmem:[%s308 + $0xf8] sm:$0xff]
        %v391 = vld [vmem:[%s308 + $0x100] sm:$0xff]
        %v392 = vld [vmem:[%s308 + $0x108] sm:$0xff]
        %v393 = vld [vmem:[%s308 + $0x110] sm:$0xff]
        %v394 = vld [vmem:[%s308 + $0x118] sm:$0xff]
        %v395 = vld [vmem:[%s308 + $0x120] sm:$0xff]
        %v396 = vld [vmem:[%s308 + $0x128] sm:$0xff]
        %v397 = vld [vmem:[%s308 + $0x130] sm:$0xff]
        %v398 = vld [vmem:[%s308 + $0x138] sm:$0xff]
        %v399 = vld [vmem:[%s308 + $0x140] sm:$0xff]
        %v400 = vld [vmem:[%s308 + $0x148] sm:$0xff]
        %v401 = vld [vmem:[%s308 + $0x150] sm:$0xff]
        %v402 = vld [vmem:[%s308 + $0x158] sm:$0xff]
        %v403 = vld [vmem:[%s308 + $0x160] sm:$0xff]
        %v404 = vld [vmem:[%s308 + $0x168] sm:$0xff]
        %v405 = vld [vmem:[%s308 + $0x170] sm:$0xff]
        %v406 = vld [vmem:[%s308 + $0x178] sm:$0xff]
        %v407 = vld [vmem:[%s308 + $0x180] sm:$0xff]
        %v408 = vld [vmem:[%s308 + $0x188] sm:$0xff]
        %v409 = vld [vmem:[%s308 + $0x190] sm:$0xff]
        %v410 = vld [vmem:[%s308 + $0x198] sm:$0xff]
        %v411 = vld [vmem:[%s308 + $0x1a0] sm:$0xff]
        %v412 = vld [vmem:[%s308 + $0x1a8] sm:$0xff]
        %v413 = vld [vmem:[%s308 + $0x1b0] sm:$0xff]
        %v414 = vld [vmem:[%s308 + $0x1b8] sm:$0xff]
        %v415 = vld [vmem:[%s308 + $0x1c0] sm:$0xff]
        %v416 = vld [vmem:[%s308 + $0x1c8] sm:$0xff]
        %v417 = vld [vmem:[%s308 + $0x1d0] sm:$0xff]
        %v418 = vld [vmem:[%s308 + $0x1d8] sm:$0xff]
        %v419 = vld [vmem:[%s308 + $0x1e0] sm:$0xff]
        %v420 = vld [vmem:[%s308 + $0x1e8] sm:$0xff]
        %v421 = vld [vmem:[%s308 + $0x1f0] sm:$0xff]
        %v422 = vld [vmem:[%s308 + $0x1f8] sm:$0xff]
        %v423 = vld [vmem:[%s347] sm:$0xf]
        %v424 = vld [vmem:[%s347 + $0x4] sm:$0xf]
        %v425 = vld [vmem:[%s347 + $0x8] sm:$0xf]
        %v426 = vld [vmem:[%s347 + $0xc] sm:$0xf]
        %v427 = vld [vmem:[%s347 + $0x10] sm:$0xf]
        %v428 = vld [vmem:[%s347 + $0x14] sm:$0xf]
        %v429 = vld [vmem:[%s347 + $0x18] sm:$0xf]
        %v430 = vld [vmem:[%s347 + $0x1c] sm:$0xf]
        %v431 = vld [vmem:[%s347 + $0x20] sm:$0xf]
        %v432 = vld [vmem:[%s347 + $0x24] sm:$0xf]
        %v433 = vld [vmem:[%s347 + $0x28] sm:$0xf]
        %v434 = vld [vmem:[%s347 + $0x2c] sm:$0xf]
        %v435 = vld [vmem:[%s347 + $0x30] sm:$0xf]
        %v436 = vld [vmem:[%s347 + $0x34] sm:$0xf]
        %v437 = vld [vmem:[%s347 + $0x38] sm:$0xf]
        %v438 = vld [vmem:[%s347 + $0x3c] sm:$0xf]
        %v439 = vld [vmem:[%s347 + $0x40] sm:$0xf]
        %v440 = vld [vmem:[%s347 + $0x44] sm:$0xf]
        %v441 = vld [vmem:[%s347 + $0x48] sm:$0xf]
        %v442 = vld [vmem:[%s347 + $0x4c] sm:$0xf]
        %v443 = vld [vmem:[%s347 + $0x50] sm:$0xf]
        %v444 = vld [vmem:[%s347 + $0x54] sm:$0xf]
        %v445 = vld [vmem:[%s347 + $0x58] sm:$0xf]
        %v446 = vld [vmem:[%s347 + $0x5c] sm:$0xf]
        %v447 = vld [vmem:[%s347 + $0x60] sm:$0xf]
        %v448 = vld [vmem:[%s347 + $0x64] sm:$0xf]
        %v449 = vld [vmem:[%s347 + $0x68] sm:$0xf]
        %v450 = vld [vmem:[%s347 + $0x6c] sm:$0xf]
        %v451 = vld [vmem:[%s347 + $0x70] sm:$0xf]
        %v452 = vld [vmem:[%s347 + $0x74] sm:$0xf]
        %v453 = vld [vmem:[%s347 + $0x78] sm:$0xf]
        %v454 = vld [vmem:[%s347 + $0x7c] sm:$0xf]
        %v455 = vld [vmem:[%s347 + $0x80] sm:$0xf]
        %v456 = vld [vmem:[%s347 + $0x84] sm:$0xf]
        %v457 = vld [vmem:[%s347 + $0x88] sm:$0xf]
        %v458 = vld [vmem:[%s347 + $0x8c] sm:$0xf]
        %v459 = vld [vmem:[%s347 + $0x90] sm:$0xf]
        %v460 = vld [vmem:[%s347 + $0x94] sm:$0xf]
        %v461 = vld [vmem:[%s347 + $0x98] sm:$0xf]
        %v462 = vld [vmem:[%s347 + $0x9c] sm:$0xf]
        %v463 = vld [vmem:[%s347 + $0xa0] sm:$0xf]
        %v464 = vld [vmem:[%s347 + $0xa4] sm:$0xf]
        %v465 = vld [vmem:[%s347 + $0xa8] sm:$0xf]
        %v466 = vld [vmem:[%s347 + $0xac] sm:$0xf]
        %v467 = vld [vmem:[%s347 + $0xb0] sm:$0xf]
        %v468 = vld [vmem:[%s347 + $0xb4] sm:$0xf]
        %v469 = vld [vmem:[%s347 + $0xb8] sm:$0xf]
        %v470 = vld [vmem:[%s347 + $0xbc] sm:$0xf]
        %v471 = vld [vmem:[%s347 + $0xc0] sm:$0xf]
        %v472 = vld [vmem:[%s347 + $0xc4] sm:$0xf]
        %v473 = vld [vmem:[%s347 + $0xc8] sm:$0xf]
        %v474 = vld [vmem:[%s347 + $0xcc] sm:$0xf]
        %v475 = vld [vmem:[%s347 + $0xd0] sm:$0xf]
        %v476 = vld [vmem:[%s347 + $0xd4] sm:$0xf]
        %v477 = vld [vmem:[%s347 + $0xd8] sm:$0xf]
        %v478 = vld [vmem:[%s347 + $0xdc] sm:$0xf]
        %v479 = vld [vmem:[%s347 + $0xe0] sm:$0xf]
        %v480 = vld [vmem:[%s347 + $0xe4] sm:$0xf]
        %v481 = vld [vmem:[%s347 + $0xe8] sm:$0xf]
        %v482 = vld [vmem:[%s347 + $0xec] sm:$0xf]
        %v483 = vld [vmem:[%s347 + $0xf0] sm:$0xf]
        %v484 = vld [vmem:[%s347 + $0xf4] sm:$0xf]
        %v485 = vld [vmem:[%s347 + $0xf8] sm:$0xf]
        %v486 = vld [vmem:[%s347 + $0xfc] sm:$0xf]
        %v551 = vunpack.c.l.b16 %v359
        %v552 = vunpack.c.h.b16 %v359
        %v553 = vunpack.c.l.b16 %v360
        %v554 = vunpack.c.h.b16 %v360
        %v555 = vunpack.c.l.b16 %v361
        %v556 = vunpack.c.h.b16 %v361
        %v557 = vunpack.c.l.b16 %v362
        %v558 = vunpack.c.h.b16 %v362
        %v559 = vunpack.c.l.b16 %v363
        %v560 = vunpack.c.h.b16 %v363
        %v561 = vunpack.c.l.b16 %v364
        %v562 = vunpack.c.h.b16 %v364
        %v563 = vunpack.c.l.b16 %v365
        %v564 = vunpack.c.h.b16 %v365
        %v565 = vunpack.c.l.b16 %v366
        %v566 = vunpack.c.h.b16 %v366
        %v567 = vunpack.c.l.b16 %v367
        %v568 = vunpack.c.h.b16 %v367
        %v569 = vunpack.c.l.b16 %v368
        %v570 = vunpack.c.h.b16 %v368
        %v571 = vunpack.c.l.b16 %v369
        %v572 = vunpack.c.h.b16 %v369
        %v573 = vunpack.c.l.b16 %v370
        %v574 = vunpack.c.h.b16 %v370
        %v575 = vunpack.c.l.b16 %v371
        %v576 = vunpack.c.h.b16 %v371
        %v577 = vunpack.c.l.b16 %v372
        %v578 = vunpack.c.h.b16 %v372
        %v579 = vunpack.c.l.b16 %v373
        %v580 = vunpack.c.h.b16 %v373
        %v581 = vunpack.c.l.b16 %v374
        %v582 = vunpack.c.h.b16 %v374
        %v583 = vunpack.c.l.b16 %v375
        %v584 = vunpack.c.h.b16 %v375
        %v585 = vunpack.c.l.b16 %v376
        %v586 = vunpack.c.h.b16 %v376
        %v587 = vunpack.c.l.b16 %v377
        %v588 = vunpack.c.h.b16 %v377
        %v589 = vunpack.c.l.b16 %v378
        %v590 = vunpack.c.h.b16 %v378
        %v591 = vunpack.c.l.b16 %v379
        %v592 = vunpack.c.h.b16 %v379
        %v593 = vunpack.c.l.b16 %v380
        %v594 = vunpack.c.h.b16 %v380
        %v595 = vunpack.c.l.b16 %v381
        %v596 = vunpack.c.h.b16 %v381
        %v597 = vunpack.c.l.b16 %v382
        %v598 = vunpack.c.h.b16 %v382
        %v599 = vunpack.c.l.b16 %v383
        %v600 = vunpack.c.h.b16 %v383
        %v601 = vunpack.c.l.b16 %v384
        %v602 = vunpack.c.h.b16 %v384
        %v603 = vunpack.c.l.b16 %v385
        %v604 = vunpack.c.h.b16 %v385
        %v605 = vunpack.c.l.b16 %v386
        %v606 = vunpack.c.h.b16 %v386
        %v607 = vunpack.c.l.b16 %v387
        %v608 = vunpack.c.h.b16 %v387
        %v609 = vunpack.c.l.b16 %v388
        %v610 = vunpack.c.h.b16 %v388
        %v611 = vunpack.c.l.b16 %v389
        %v612 = vunpack.c.h.b16 %v389
        %v613 = vunpack.c.l.b16 %v390
        %v614 = vunpack.c.h.b16 %v390
        %v615 = vunpack.c.l.b16 %v391
        %v616 = vunpack.c.h.b16 %v391
        %v617 = vunpack.c.l.b16 %v392
        %v618 = vunpack.c.h.b16 %v392
        %v619 = vunpack.c.l.b16 %v393
        %v620 = vunpack.c.h.b16 %v393
        %v621 = vunpack.c.l.b16 %v394
        %v622 = vunpack.c.h.b16 %v394
        %v623 = vunpack.c.l.b16 %v395
        %v624 = vunpack.c.h.b16 %v395
        %v625 = vunpack.c.l.b16 %v396
        %v626 = vunpack.c.h.b16 %v396
        %v627 = vunpack.c.l.b16 %v397
        %v628 = vunpack.c.h.b16 %v397
        %v629 = vunpack.c.l.b16 %v398
        %v630 = vunpack.c.h.b16 %v398
        %v631 = vunpack.c.l.b16 %v399
        %v632 = vunpack.c.h.b16 %v399
        %v633 = vunpack.c.l.b16 %v400
        %v634 = vunpack.c.h.b16 %v400
        %v635 = vunpack.c.l.b16 %v401
        %v636 = vunpack.c.h.b16 %v401
        %v637 = vunpack.c.l.b16 %v402
        %v638 = vunpack.c.h.b16 %v402
        %v639 = vunpack.c.l.b16 %v403
        %v640 = vunpack.c.h.b16 %v403
        %v641 = vunpack.c.l.b16 %v404
        %v642 = vunpack.c.h.b16 %v404
        %v643 = vunpack.c.l.b16 %v405
        %v644 = vunpack.c.h.b16 %v405
        %v645 = vunpack.c.l.b16 %v406
        %v646 = vunpack.c.h.b16 %v406
        %v647 = vunpack.c.l.b16 %v407
        %v648 = vunpack.c.h.b16 %v407
        %v649 = vunpack.c.l.b16 %v408
        %v650 = vunpack.c.h.b16 %v408
        %v651 = vunpack.c.l.b16 %v409
        %v652 = vunpack.c.h.b16 %v409
        %v653 = vunpack.c.l.b16 %v410
        %v654 = vunpack.c.h.b16 %v410
        %v655 = vunpack.c.l.b16 %v411
        %v656 = vunpack.c.h.b16 %v411
        %v657 = vunpack.c.l.b16 %v412
        %v658 = vunpack.c.h.b16 %v412
        %v659 = vunpack.c.l.b16 %v413
        %v660 = vunpack.c.h.b16 %v413
        %v661 = vunpack.c.l.b16 %v414
        %v662 = vunpack.c.h.b16 %v414
        %v663 = vunpack.c.l.b16 %v415
        %v664 = vunpack.c.h.b16 %v415
        %v665 = vunpack.c.l.b16 %v416
        %v666 = vunpack.c.h.b16 %v416
        %v667 = vunpack.c.l.b16 %v417
        %v668 = vunpack.c.h.b16 %v417
        %v669 = vunpack.c.l.b16 %v418
        %v670 = vunpack.c.h.b16 %v418
        %v671 = vunpack.c.l.b16 %v419
        %v672 = vunpack.c.h.b16 %v419
        %v673 = vunpack.c.l.b16 %v420
        %v674 = vunpack.c.h.b16 %v420
        %v675 = vunpack.c.l.b16 %v421
        %v676 = vunpack.c.h.b16 %v421
        %v677 = vunpack.c.l.b16 %v422
        %v678 = vunpack.c.h.b16 %v422
        %v679 = vpack.c.b16 %v555, %v551
        %v680 = vpack.c.b16 %v556, %v552
        %v681 = vpack.c.b16 %v557, %v553
        %v682 = vpack.c.b16 %v558, %v554
        %v683 = vpack.c.b16 %v563, %v559
        %v684 = vpack.c.b16 %v564, %v560
        %v685 = vpack.c.b16 %v565, %v561
        %v686 = vpack.c.b16 %v566, %v562
        %v687 = vpack.c.b16 %v571, %v567
        %v688 = vpack.c.b16 %v572, %v568
        %v689 = vpack.c.b16 %v573, %v569
        %v690 = vpack.c.b16 %v574, %v570
        %v691 = vpack.c.b16 %v579, %v575
        %v692 = vpack.c.b16 %v580, %v576
        %v693 = vpack.c.b16 %v581, %v577
        %v694 = vpack.c.b16 %v582, %v578
        %v695 = vpack.c.b16 %v587, %v583
        %v696 = vpack.c.b16 %v588, %v584
        %v697 = vpack.c.b16 %v589, %v585
        %v698 = vpack.c.b16 %v590, %v586
        %v699 = vpack.c.b16 %v595, %v591
        %v700 = vpack.c.b16 %v596, %v592
        %v701 = vpack.c.b16 %v597, %v593
        %v702 = vpack.c.b16 %v598, %v594
        %v703 = vpack.c.b16 %v603, %v599
        %v704 = vpack.c.b16 %v604, %v600
        %v705 = vpack.c.b16 %v605, %v601
        %v706 = vpack.c.b16 %v606, %v602
        %v707 = vpack.c.b16 %v611, %v607
        %v708 = vpack.c.b16 %v612, %v608
        %v709 = vpack.c.b16 %v613, %v609
        %v710 = vpack.c.b16 %v614, %v610
        %v711 = vpack.c.b16 %v619, %v615
        %v712 = vpack.c.b16 %v620, %v616
        %v713 = vpack.c.b16 %v621, %v617
        %v714 = vpack.c.b16 %v622, %v618
        %v715 = vpack.c.b16 %v627, %v623
        %v716 = vpack.c.b16 %v628, %v624
        %v717 = vpack.c.b16 %v629, %v625
        %v718 = vpack.c.b16 %v630, %v626
        %v719 = vpack.c.b16 %v635, %v631
        %v720 = vpack.c.b16 %v636, %v632
        %v721 = vpack.c.b16 %v637, %v633
        %v722 = vpack.c.b16 %v638, %v634
        %v723 = vpack.c.b16 %v643, %v639
        %v724 = vpack.c.b16 %v644, %v640
        %v725 = vpack.c.b16 %v645, %v641
        %v726 = vpack.c.b16 %v646, %v642
        %v727 = vpack.c.b16 %v651, %v647
        %v728 = vpack.c.b16 %v652, %v648
        %v729 = vpack.c.b16 %v653, %v649
        %v730 = vpack.c.b16 %v654, %v650
        %v731 = vpack.c.b16 %v659, %v655
        %v732 = vpack.c.b16 %v660, %v656
        %v733 = vpack.c.b16 %v661, %v657
        %v734 = vpack.c.b16 %v662, %v658
        %v735 = vpack.c.b16 %v667, %v663
        %v736 = vpack.c.b16 %v668, %v664
        %v737 = vpack.c.b16 %v669, %v665
        %v738 = vpack.c.b16 %v670, %v666
        %v739 = vpack.c.b16 %v675, %v671
        %v740 = vpack.c.b16 %v676, %v672
        %v741 = vpack.c.b16 %v677, %v673
        %v742 = vpack.c.b16 %v678, %v674
        %v871 = vunpack.c.l.b16 %v423
        %v872 = vunpack.c.l.b16 %v424
        %v873 = vunpack.c.l.b16 %v425
        %v874 = vunpack.c.l.b16 %v426
        %v875 = vunpack.c.l.b16 %v427
        %v876 = vunpack.c.l.b16 %v428
        %v877 = vunpack.c.l.b16 %v429
        %v878 = vunpack.c.l.b16 %v430
        %v879 = vunpack.c.l.b16 %v431
        %v880 = vunpack.c.l.b16 %v432
        %v881 = vunpack.c.l.b16 %v433
        %v882 = vunpack.c.l.b16 %v434
        %v883 = vunpack.c.l.b16 %v435
        %v884 = vunpack.c.l.b16 %v436
        %v885 = vunpack.c.l.b16 %v437
        %v886 = vunpack.c.l.b16 %v438
        %v887 = vunpack.c.l.b16 %v439
        %v888 = vunpack.c.l.b16 %v440
        %v889 = vunpack.c.l.b16 %v441
        %v890 = vunpack.c.l.b16 %v442
        %v891 = vunpack.c.l.b16 %v443
        %v892 = vunpack.c.l.b16 %v444
        %v893 = vunpack.c.l.b16 %v445
        %v894 = vunpack.c.l.b16 %v446
        %v895 = vunpack.c.l.b16 %v447
        %v896 = vunpack.c.l.b16 %v448
        %v897 = vunpack.c.l.b16 %v449
        %v898 = vunpack.c.l.b16 %v450
        %v899 = vunpack.c.l.b16 %v451
        %v900 = vunpack.c.l.b16 %v452
        %v901 = vunpack.c.l.b16 %v453
        %v902 = vunpack.c.l.b16 %v454
        %v903 = vunpack.c.l.b16 %v455
        %v904 = vunpack.c.l.b16 %v456
        %v905 = vunpack.c.l.b16 %v457
        %v906 = vunpack.c.l.b16 %v458
        %v907 = vunpack.c.l.b16 %v459
        %v908 = vunpack.c.l.b16 %v460
        %v909 = vunpack.c.l.b16 %v461
        %v910 = vunpack.c.l.b16 %v462
        %v911 = vunpack.c.l.b16 %v463
        %v912 = vunpack.c.l.b16 %v464
        %v913 = vunpack.c.l.b16 %v465
        %v914 = vunpack.c.l.b16 %v466
        %v915 = vunpack.c.l.b16 %v467
        %v916 = vunpack.c.l.b16 %v468
        %v917 = vunpack.c.l.b16 %v469
        %v918 = vunpack.c.l.b16 %v470
        %v919 = vunpack.c.l.b16 %v471
        %v920 = vunpack.c.l.b16 %v472
        %v921 = vunpack.c.l.b16 %v473
        %v922 = vunpack.c.l.b16 %v474
        %v923 = vunpack.c.l.b16 %v475
        %v924 = vunpack.c.l.b16 %v476
        %v925 = vunpack.c.l.b16 %v477
        %v926 = vunpack.c.l.b16 %v478
        %v927 = vunpack.c.l.b16 %v479
        %v928 = vunpack.c.l.b16 %v480
        %v929 = vunpack.c.l.b16 %v481
        %v930 = vunpack.c.l.b16 %v482
        %v931 = vunpack.c.l.b16 %v483
        %v932 = vunpack.c.l.b16 %v484
        %v933 = vunpack.c.l.b16 %v485
        %v934 = vunpack.c.l.b16 %v486
        %v935 = vpack.c.b16 %v872, %v871
        %v936 = vpack.c.b16 %v874, %v873
        %v937 = vpack.c.b16 %v876, %v875
        %v938 = vpack.c.b16 %v878, %v877
        %v939 = vpack.c.b16 %v880, %v879
        %v940 = vpack.c.b16 %v882, %v881
        %v941 = vpack.c.b16 %v884, %v883
        %v942 = vpack.c.b16 %v886, %v885
        %v943 = vpack.c.b16 %v888, %v887
        %v944 = vpack.c.b16 %v890, %v889
        %v945 = vpack.c.b16 %v892, %v891
        %v946 = vpack.c.b16 %v894, %v893
        %v947 = vpack.c.b16 %v896, %v895
        %v948 = vpack.c.b16 %v898, %v897
        %v949 = vpack.c.b16 %v900, %v899
        %v950 = vpack.c.b16 %v902, %v901
        %v951 = vpack.c.b16 %v904, %v903
        %v952 = vpack.c.b16 %v906, %v905
        %v953 = vpack.c.b16 %v908, %v907
        %v954 = vpack.c.b16 %v910, %v909
        %v955 = vpack.c.b16 %v912, %v911
        %v956 = vpack.c.b16 %v914, %v913
        %v957 = vpack.c.b16 %v916, %v915
        %v958 = vpack.c.b16 %v918, %v917
        %v959 = vpack.c.b16 %v920, %v919
        %v960 = vpack.c.b16 %v922, %v921
        %v961 = vpack.c.b16 %v924, %v923
        %v962 = vpack.c.b16 %v926, %v925
        %v963 = vpack.c.b16 %v928, %v927
        %v964 = vpack.c.b16 %v930, %v929
        %v965 = vpack.c.b16 %v932, %v931
        %v966 = vpack.c.b16 %v934, %v933
        %999 = vmatprep.subr.bf16.mxu0 0
        %1000 = vmatpush1.bf16.msra.mxu0 %v935
        %1001 = vmatprep.subr.bf16.mxu0 0
        %1002 = vmatpush1.bf16.msra.mxu0 %v936
        %1003 = vmatprep.subr.bf16.mxu0 0
        %1004 = vmatpush1.bf16.msra.mxu0 %v937
        %1005 = vmatprep.subr.bf16.mxu0 0
        %1006 = vmatpush1.bf16.msra.mxu0 %v938
        %1007 = vmatprep.subr.bf16.mxu0 0
        %1008 = vmatpush1.bf16.msra.mxu0 %v939
        %1009 = vmatprep.subr.bf16.mxu0 0
        %1010 = vmatpush1.bf16.msra.mxu0 %v940
        %1011 = vmatprep.subr.bf16.mxu0 0
        %1012 = vmatpush1.bf16.msra.mxu0 %v941
        %1013 = vmatprep.subr.bf16.mxu0 0
        %1014 = vmatpush1.bf16.msra.mxu0 %v942
        %1015 = vmatprep.subr.bf16.mxu0 0
        %1016 = vmatpush1.bf16.msra.mxu0 %v943
        %1017 = vmatprep.subr.bf16.mxu0 0
        %1018 = vmatpush1.bf16.msra.mxu0 %v944
        %1019 = vmatprep.subr.bf16.mxu0 0
        %1020 = vmatpush1.bf16.msra.mxu0 %v945
        %1021 = vmatprep.subr.bf16.mxu0 0
        %1022 = vmatpush1.bf16.msra.mxu0 %v946
        %1023 = vmatprep.subr.bf16.mxu0 0
        %1024 = vmatpush1.bf16.msra.mxu0 %v947
        %1025 = vmatprep.subr.bf16.mxu0 0
        %1026 = vmatpush1.bf16.msra.mxu0 %v948
        %1027 = vmatprep.subr.bf16.mxu0 0
        %1028 = vmatpush1.bf16.msra.mxu0 %v949
        %1029 = vmatprep.subr.bf16.mxu0 0
        %1030 = vmatpush1.bf16.msra.mxu0 %v950
        %1031 = vmatprep.mubr.bf16.mxu0 %v680
        %1032 = vmatmul.mubr.bf16.gmra.mrb[0].mxu0 %v679
        %v1033 = vpop.f32.mrb[0].mxu0
        %v1034 = vadd.f32 0.0, %v1033
        %v1035 = vpop.f32.mrb[0].mxu0
        %v1036 = vpop.f32.mrb[0].mxu0
        %v1037 = vadd.f32 0.0, %v1036
        %v1038 = vpop.f32.mrb[0].mxu0
        %1039 = vmatprep.mubr.bf16.mxu0 %v684
        %1040 = vmatmul.mubr.bf16.gmra.mrb[0].mxu0 %v683
        %v1041 = vpop.f32.mrb[0].mxu0
        %v1042 = vadd.f32 0.0, %v1041
        %v1043 = vpop.f32.mrb[0].mxu0
        %v1044 = vpop.f32.mrb[0].mxu0
        %v1045 = vadd.f32 0.0, %v1044
        %v1046 = vpop.f32.mrb[0].mxu0
        %1047 = vmatprep.mubr.bf16.mxu0 %v688
        %1048 = vmatmul.mubr.bf16.gmra.mrb[0].mxu0 %v687
        %v1049 = vpop.f32.mrb[0].mxu0
        %v1050 = vadd.f32 0.0, %v1049
        %v1051 = vpop.f32.mrb[0].mxu0
        %v1052 = vpop.f32.mrb[0].mxu0
        %v1053 = vadd.f32 0.0, %v1052
        %v1054 = vpop.f32.mrb[0].mxu0
        %1055 = vmatprep.mubr.bf16.mxu0 %v692
        %1056 = vmatmul.mubr.bf16.gmra.mrb[0].mxu0 %v691
        %v1057 = vpop.f32.mrb[0].mxu0
        %v1058 = vadd.f32 0.0, %v1057
        %v1059 = vpop.f32.mrb[0].mxu0
        %v1060 = vpop.f32.mrb[0].mxu0
        %v1061 = vadd.f32 0.0, %v1060
        %v1062 = vpop.f32.mrb[0].mxu0
        %1063 = vmatprep.mubr.bf16.mxu0 %v696
        %1064 = vmatmul.mubr.bf16.gmra.mrb[0].mxu0 %v695
        %v1065 = vpop.f32.mrb[0].mxu0
        %v1066 = vadd.f32 0.0, %v1065
        %v1067 = vpop.f32.mrb[0].mxu0
        %v1068 = vpop.f32.mrb[0].mxu0
        %v1069 = vadd.f32 0.0, %v1068
        %v1070 = vpop.f32.mrb[0].mxu0
        %1071 = vmatprep.mubr.bf16.mxu0 %v700
        %1072 = vmatmul.mubr.bf16.gmra.mrb[0].mxu0 %v699
        %v1073 = vpop.f32.mrb[0].mxu0
        %v1074 = vadd.f32 0.0, %v1073
        %v1075 = vpop.f32.mrb[0].mxu0
        %v1076 = vpop.f32.mrb[0].mxu0
        %v1077 = vadd.f32 0.0, %v1076
        %v1078 = vpop.f32.mrb[0].mxu0
        %1079 = vmatprep.mubr.bf16.mxu0 %v704
        %1080 = vmatmul.mubr.bf16.gmra.mrb[0].mxu0 %v703
        %v1081 = vpop.f32.mrb[0].mxu0
        %v1082 = vadd.f32 0.0, %v1081
        %v1083 = vpop.f32.mrb[0].mxu0
        %v1084 = vpop.f32.mrb[0].mxu0
        %v1085 = vadd.f32 0.0, %v1084
        %v1086 = vpop.f32.mrb[0].mxu0
        %1087 = vmatprep.mubr.bf16.mxu0 %v708
        %1088 = vmatmul.mubr.bf16.gmra.mrb[0].mxu0 %v707
        %v1089 = vpop.f32.mrb[0].mxu0
        %v1090 = vadd.f32 0.0, %v1089
        %v1091 = vpop.f32.mrb[0].mxu0
        %v1092 = vpop.f32.mrb[0].mxu0
        %v1093 = vadd.f32 0.0, %v1092
        %v1094 = vpop.f32.mrb[0].mxu0
        %1095 = vmatprep.mubr.bf16.mxu0 %v712
        %1096 = vmatmul.mubr.bf16.gmra.mrb[0].mxu0 %v711
        %v1097 = vpop.f32.mrb[0].mxu0
        %v1098 = vadd.f32 0.0, %v1097
        %v1099 = vpop.f32.mrb[0].mxu0
        %v1100 = vpop.f32.mrb[0].mxu0
        %v1101 = vadd.f32 0.0, %v1100
        %v1102 = vpop.f32.mrb[0].mxu0
        %1103 = vmatprep.mubr.bf16.mxu0 %v716
        %1104 = vmatmul.mubr.bf16.gmra.mrb[0].mxu0 %v715
        %v1105 = vpop.f32.mrb[0].mxu0
        %v1106 = vadd.f32 0.0, %v1105
        %v1107 = vpop.f32.mrb[0].mxu0
        %v1108 = vpop.f32.mrb[0].mxu0
        %v1109 = vadd.f32 0.0, %v1108
        %v1110 = vpop.f32.mrb[0].mxu0
        %1111 = vmatprep.mubr.bf16.mxu0 %v720
        %1112 = vmatmul.mubr.bf16.gmra.mrb[0].mxu0 %v719
        %v1113 = vpop.f32.mrb[0].mxu0
        %v1114 = vadd.f32 0.0, %v1113
        %v1115 = vpop.f32.mrb[0].mxu0
        %v1116 = vpop.f32.mrb[0].mxu0
        %v1117 = vadd.f32 0.0, %v1116
        %v1118 = vpop.f32.mrb[0].mxu0
        %1119 = vmatprep.mubr.bf16.mxu0 %v724
        %1120 = vmatmul.mubr.bf16.gmra.mrb[0].mxu0 %v723
        %v1121 = vpop.f32.mrb[0].mxu0
        %v1122 = vadd.f32 0.0, %v1121
        %v1123 = vpop.f32.mrb[0].mxu0
        %v1124 = vpop.f32.mrb[0].mxu0
        %v1125 = vadd.f32 0.0, %v1124
        %v1126 = vpop.f32.mrb[0].mxu0
        %1127 = vmatprep.mubr.bf16.mxu0 %v728
        %1128 = vmatmul.mubr.bf16.gmra.mrb[0].mxu0 %v727
        %v1129 = vpop.f32.mrb[0].mxu0
        %v1130 = vadd.f32 0.0, %v1129
        %v1131 = vpop.f32.mrb[0].mxu0
        %v1132 = vpop.f32.mrb[0].mxu0
        %v1133 = vadd.f32 0.0, %v1132
        %v1134 = vpop.f32.mrb[0].mxu0
        %1135 = vmatprep.mubr.bf16.mxu0 %v732
        %1136 = vmatmul.mubr.bf16.gmra.mrb[0].mxu0 %v731
        %v1137 = vpop.f32.mrb[0].mxu0
        %v1138 = vadd.f32 0.0, %v1137
        %v1139 = vpop.f32.mrb[0].mxu0
        %v1140 = vpop.f32.mrb[0].mxu0
        %v1141 = vadd.f32 0.0, %v1140
        %v1142 = vpop.f32.mrb[0].mxu0
        %1143 = vmatprep.mubr.bf16.mxu0 %v736
        %1144 = vmatmul.mubr.bf16.gmra.mrb[0].mxu0 %v735
        %v1145 = vpop.f32.mrb[0].mxu0
        %v1146 = vadd.f32 0.0, %v1145
        %v1147 = vpop.f32.mrb[0].mxu0
        %v1148 = vpop.f32.mrb[0].mxu0
        %v1149 = vadd.f32 0.0, %v1148
        %v1150 = vpop.f32.mrb[0].mxu0
        %1151 = vmatprep.mubr.bf16.mxu0 %v740
        %1152 = vmatmul.mubr.bf16.gmra.mrb[0].mxu0 %v739
        %v1153 = vpop.f32.mrb[0].mxu0
        %v1154 = vadd.f32 0.0, %v1153
        %v1155 = vpop.f32.mrb[0].mxu0
        %v1156 = vpop.f32.mrb[0].mxu0
        %v1157 = vadd.f32 0.0, %v1156
        %v1158 = vpop.f32.mrb[0].mxu0
        %1159 = vdwg.mxu0
        %1160 = vmatprep.subr.bf16.mxu0 0
        %1161 = vmatpush1.bf16.msra.mxu0 %v951
        %1162 = vmatprep.subr.bf16.mxu0 0
        %1163 = vmatpush1.bf16.msra.mxu0 %v952
        %1164 = vmatprep.subr.bf16.mxu0 0
        %1165 = vmatpush1.bf16.msra.mxu0 %v953
        %1166 = vmatprep.subr.bf16.mxu0 0
        %1167 = vmatpush1.bf16.msra.mxu0 %v954
        %1168 = vmatprep.subr.bf16.mxu0 0
        %1169 = vmatpush1.bf16.msra.mxu0 %v955
        %1170 = vmatprep.subr.bf16.mxu0 0
        %1171 = vmatpush1.bf16.msra.mxu0 %v956
        %1172 = vmatprep.subr.bf16.mxu0 0
        %1173 = vmatpush1.bf16.msra.mxu0 %v957
        %1174 = vmatprep.subr.bf16.mxu0 0
        %1175 = vmatpush1.bf16.msra.mxu0 %v958
        %1176 = vmatprep.subr.bf16.mxu0 0
        %1177 = vmatpush1.bf16.msra.mxu0 %v959
        %1178 = vmatprep.subr.bf16.mxu0 0
        %1179 = vmatpush1.bf16.msra.mxu0 %v960
        %1180 = vmatprep.subr.bf16.mxu0 0
        %1181 = vmatpush1.bf16.msra.mxu0 %v961
        %1182 = vmatprep.subr.bf16.mxu0 0
        %1183 = vmatpush1.bf16.msra.mxu0 %v962
        %1184 = vmatprep.subr.bf16.mxu0 0
        %1185 = vmatpush1.bf16.msra.mxu0 %v963
        %1186 = vmatprep.subr.bf16.mxu0 0
        %1187 = vmatpush1.bf16.msra.mxu0 %v964
        %1188 = vmatprep.subr.bf16.mxu0 0
        %1189 = vmatpush1.bf16.msra.mxu0 %v965
        %1190 = vmatprep.subr.bf16.mxu0 0
        %1191 = vmatpush1.bf16.msra.mxu0 %v966
        %1192 = vmatprep.mubr.bf16.mxu0 %v682
        %1193 = vmatmul.mubr.bf16.gmra.mrb[0].mxu0 %v681
        %v1194 = vpop.f32.mrb[0].mxu0
        %v1195 = vadd.f32 %v1034, %v1194
        %v1196 = vpop.f32.mrb[0].mxu0
        %v1197 = vpop.f32.mrb[0].mxu0
        %v1198 = vadd.f32 %v1037, %v1197
        %v1199 = vpop.f32.mrb[0].mxu0
        %1200 = vmatprep.mubr.bf16.mxu0 %v686
        %1201 = vmatmul.mubr.bf16.gmra.mrb[0].mxu0 %v685
        %v1202 = vpop.f32.mrb[0].mxu0
        %v1203 = vadd.f32 %v1042, %v1202
        %v1204 = vpop.f32.mrb[0].mxu0
        %v1205 = vpop.f32.mrb[0].mxu0
        %v1206 = vadd.f32 %v1045, %v1205
        %v1207 = vpop.f32.mrb[0].mxu0
        %1208 = vmatprep.mubr.bf16.mxu0 %v690
        %1209 = vmatmul.mubr.bf16.gmra.mrb[0].mxu0 %v689
        %v1210 = vpop.f32.mrb[0].mxu0
        %v1211 = vadd.f32 %v1050, %v1210
        %v1212 = vpop.f32.mrb[0].mxu0
        %v1213 = vpop.f32.mrb[0].mxu0
        %v1214 = vadd.f32 %v1053, %v1213
        %v1215 = vpop.f32.mrb[0].mxu0
        %1216 = vmatprep.mubr.bf16.mxu0 %v694
        %1217 = vmatmul.mubr.bf16.gmra.mrb[0].mxu0 %v693
        %v1218 = vpop.f32.mrb[0].mxu0
        %v1219 = vadd.f32 %v1058, %v1218
        %v1220 = vpop.f32.mrb[0].mxu0
        %v1221 = vpop.f32.mrb[0].mxu0
        %v1222 = vadd.f32 %v1061, %v1221
        %v1223 = vpop.f32.mrb[0].mxu0
        %1224 = vmatprep.mubr.bf16.mxu0 %v698
        %1225 = vmatmul.mubr.bf16.gmra.mrb[0].mxu0 %v697
        %v1226 = vpop.f32.mrb[0].mxu0
        %v1227 = vadd.f32 %v1066, %v1226
        %v1228 = vpop.f32.mrb[0].mxu0
        %v1229 = vpop.f32.mrb[0].mxu0
        %v1230 = vadd.f32 %v1069, %v1229
        %v1231 = vpop.f32.mrb[0].mxu0
        %1232 = vmatprep.mubr.bf16.mxu0 %v702
        %1233 = vmatmul.mubr.bf16.gmra.mrb[0].mxu0 %v701
        %v1234 = vpop.f32.mrb[0].mxu0
        %v1235 = vadd.f32 %v1074, %v1234
        %v1236 = vpop.f32.mrb[0].mxu0
        %v1237 = vpop.f32.mrb[0].mxu0
        %v1238 = vadd.f32 %v1077, %v1237
        %v1239 = vpop.f32.mrb[0].mxu0
        %1240 = vmatprep.mubr.bf16.mxu0 %v706
        %1241 = vmatmul.mubr.bf16.gmra.mrb[0].mxu0 %v705
        %v1242 = vpop.f32.mrb[0].mxu0
        %v1243 = vadd.f32 %v1082, %v1242
        %v1244 = vpop.f32.mrb[0].mxu0
        %v1245 = vpop.f32.mrb[0].mxu0
        %v1246 = vadd.f32 %v1085, %v1245
        %v1247 = vpop.f32.mrb[0].mxu0
        %1248 = vmatprep.mubr.bf16.mxu0 %v710
        %1249 = vmatmul.mubr.bf16.gmra.mrb[0].mxu0 %v709
        %v1250 = vpop.f32.mrb[0].mxu0
        %v1251 = vadd.f32 %v1090, %v1250
        %v1252 = vpop.f32.mrb[0].mxu0
        %v1253 = vpop.f32.mrb[0].mxu0
        %v1254 = vadd.f32 %v1093, %v1253
        %v1255 = vpop.f32.mrb[0].mxu0
        %1256 = vmatprep.mubr.bf16.mxu0 %v714
        %1257 = vmatmul.mubr.bf16.gmra.mrb[0].mxu0 %v713
        %v1258 = vpop.f32.mrb[0].mxu0
        %v1259 = vadd.f32 %v1098, %v1258
        %v1260 = vpop.f32.mrb[0].mxu0
        %v1261 = vpop.f32.mrb[0].mxu0
        %v1262 = vadd.f32 %v1101, %v1261
        %v1263 = vpop.f32.mrb[0].mxu0
        %1264 = vmatprep.mubr.bf16.mxu0 %v718
        %1265 = vmatmul.mubr.bf16.gmra.mrb[0].mxu0 %v717
        %v1266 = vpop.f32.mrb[0].mxu0
        %v1267 = vadd.f32 %v1106, %v1266
        %v1268 = vpop.f32.mrb[0].mxu0
        %v1269 = vpop.f32.mrb[0].mxu0
        %v1270 = vadd.f32 %v1109, %v1269
        %v1271 = vpop.f32.mrb[0].mxu0
        %1272 = vmatprep.mubr.bf16.mxu0 %v722
        %1273 = vmatmul.mubr.bf16.gmra.mrb[0].mxu0 %v721
        %v1274 = vpop.f32.mrb[0].mxu0
        %v1275 = vadd.f32 %v1114, %v1274
        %v1276 = vpop.f32.mrb[0].mxu0
        %v1277 = vpop.f32.mrb[0].mxu0
        %v1278 = vadd.f32 %v1117, %v1277
        %v1279 = vpop.f32.mrb[0].mxu0
        %1280 = vmatprep.mubr.bf16.mxu0 %v726
        %1281 = vmatmul.mubr.bf16.gmra.mrb[0].mxu0 %v725
        %v1282 = vpop.f32.mrb[0].mxu0
        %v1283 = vadd.f32 %v1122, %v1282
        %v1284 = vpop.f32.mrb[0].mxu0
        %v1285 = vpop.f32.mrb[0].mxu0
        %v1286 = vadd.f32 %v1125, %v1285
        %v1287 = vpop.f32.mrb[0].mxu0
        %1288 = vmatprep.mubr.bf16.mxu0 %v730
        %1289 = vmatmul.mubr.bf16.gmra.mrb[0].mxu0 %v729
        %v1290 = vpop.f32.mrb[0].mxu0
        %v1291 = vadd.f32 %v1130, %v1290
        %v1292 = vpop.f32.mrb[0].mxu0
        %v1293 = vpop.f32.mrb[0].mxu0
        %v1294 = vadd.f32 %v1133, %v1293
        %v1295 = vpop.f32.mrb[0].mxu0
        %1296 = vmatprep.mubr.bf16.mxu0 %v734
        %1297 = vmatmul.mubr.bf16.gmra.mrb[0].mxu0 %v733
        %v1298 = vpop.f32.mrb[0].mxu0
        %v1299 = vadd.f32 %v1138, %v1298
        %v1300 = vpop.f32.mrb[0].mxu0
        %v1301 = vpop.f32.mrb[0].mxu0
        %v1302 = vadd.f32 %v1141, %v1301
        %v1303 = vpop.f32.mrb[0].mxu0
        %1304 = vmatprep.mubr.bf16.mxu0 %v738
        %1305 = vmatmul.mubr.bf16.gmra.mrb[0].mxu0 %v737
        %v1306 = vpop.f32.mrb[0].mxu0
        %v1307 = vadd.f32 %v1146, %v1306
        %v1308 = vpop.f32.mrb[0].mxu0
        %v1309 = vpop.f32.mrb[0].mxu0
        %v1310 = vadd.f32 %v1149, %v1309
        %v1311 = vpop.f32.mrb[0].mxu0
        %1312 = vmatprep.mubr.bf16.mxu0 %v742
        %1313 = vmatmul.mubr.bf16.gmra.mrb[0].mxu0 %v741
        %v1314 = vpop.f32.mrb[0].mxu0
        %v1315 = vadd.f32 %v1154, %v1314
        %v1316 = vpop.f32.mrb[0].mxu0
        %v1317 = vpop.f32.mrb[0].mxu0
        %v1318 = vadd.f32 %v1157, %v1317
        %v1319 = vpop.f32.mrb[0].mxu0
        %1320 = vdwg.mxu0
        %p1321 = scmp.eq.s32.totalorder %s20, 0
        // Predicated region
        $region52: #{dcgan_forward.16} parent=46 // pred_check
          %p1322 = pneg %p1321
        $region53: #{dcgan_forward.16} parent=46 // pred_check_branch
          %1324 = sbr.rel (%p1322) target = $region55
        $region54: #{dcgan_forward.16} parent=46 // pred_region
          %1325 = vst [vmem:[#allocation2] sm:$0xff] 0.0
          %1326 = vst [vmem:[#allocation2 + $0x8] sm:$0xff] 0.0
          %1327 = vst [vmem:[#allocation2 + $0x10] sm:$0xff] 0.0
          %1328 = vst [vmem:[#allocation2 + $0x18] sm:$0xff] 0.0
          %1329 = vst [vmem:[#allocation2 + $0x20] sm:$0xff] 0.0
          %1330 = vst [vmem:[#allocation2 + $0x28] sm:$0xff] 0.0
          %1331 = vst [vmem:[#allocation2 + $0x30] sm:$0xff] 0.0
          %1332 = vst [vmem:[#allocation2 + $0x38] sm:$0xff] 0.0
          %1333 = vst [vmem:[#allocation2 + $0x40] sm:$0xff] 0.0
          %1334 = vst [vmem:[#allocation2 + $0x48] sm:$0xff] 0.0
          %1335 = vst [vmem:[#allocation2 + $0x50] sm:$0xff] 0.0
          %1336 = vst [vmem:[#allocation2 + $0x58] sm:$0xff] 0.0
          %1337 = vst [vmem:[#allocation2 + $0x60] sm:$0xff] 0.0
          %1338 = vst [vmem:[#allocation2 + $0x68] sm:$0xff] 0.0
          %1339 = vst [vmem:[#allocation2 + $0x70] sm:$0xff] 0.0
          %1340 = vst [vmem:[#allocation2 + $0x78] sm:$0xff] 0.0
          %1341 = vst [vmem:[#allocation2 + $0x80] sm:$0xff] 0.0
          %1342 = vst [vmem:[#allocation2 + $0x88] sm:$0xff] 0.0
          %1343 = vst [vmem:[#allocation2 + $0x90] sm:$0xff] 0.0
          %1344 = vst [vmem:[#allocation2 + $0x98] sm:$0xff] 0.0
          %1345 = vst [vmem:[#allocation2 + $0xa0] sm:$0xff] 0.0
          %1346 = vst [vmem:[#allocation2 + $0xa8] sm:$0xff] 0.0
          %1347 = vst [vmem:[#allocation2 + $0xb0] sm:$0xff] 0.0
          %1348 = vst [vmem:[#allocation2 + $0xb8] sm:$0xff] 0.0
          %1349 = vst [vmem:[#allocation2 + $0xc0] sm:$0xff] 0.0
          %1350 = vst [vmem:[#allocation2 + $0xc8] sm:$0xff] 0.0
          %1351 = vst [vmem:[#allocation2 + $0xd0] sm:$0xff] 0.0
          %1352 = vst [vmem:[#allocation2 + $0xd8] sm:$0xff] 0.0
          %1353 = vst [vmem:[#allocation2 + $0xe0] sm:$0xff] 0.0
          %1354 = vst [vmem:[#allocation2 + $0xe8] sm:$0xff] 0.0
          %1355 = vst [vmem:[#allocation2 + $0xf0] sm:$0xff] 0.0
          %1356 = vst [vmem:[#allocation2 + $0xf8] sm:$0xff] 0.0
        $region55: #{dcgan_forward.16} parent=46 // pred_fallthru
          _
        %v1357 = vld [vmem:[#allocation2] sm:$0xff]
        %v1358 = vld [vmem:[#allocation2 + $0x8] sm:$0xff]
        %v1359 = vld [vmem:[#allocation2 + $0x10] sm:$0xff]
        %v1360 = vld [vmem:[#allocation2 + $0x18] sm:$0xff]
        %v1361 = vld [vmem:[#allocation2 + $0x20] sm:$0xff]
        %v1362 = vld [vmem:[#allocation2 + $0x28] sm:$0xff]
        %v1363 = vld [vmem:[#allocation2 + $0x30] sm:$0xff]
        %v1364 = vld [vmem:[#allocation2 + $0x38] sm:$0xff]
        %v1365 = vld [vmem:[#allocation2 + $0x40] sm:$0xff]
        %v1366 = vld [vmem:[#allocation2 + $0x48] sm:$0xff]
        %v1367 = vld [vmem:[#allocation2 + $0x50] sm:$0xff]
        %v1368 = vld [vmem:[#allocation2 + $0x58] sm:$0xff]
        %v1369 = vld [vmem:[#allocation2 + $0x60] sm:$0xff]
        %v1370 = vld [vmem:[#allocation2 + $0x68] sm:$0xff]
        %v1371 = vld [vmem:[#allocation2 + $0x70] sm:$0xff]
        %v1372 = vld [vmem:[#allocation2 + $0x78] sm:$0xff]
        %v1373 = vld [vmem:[#allocation2 + $0x80] sm:$0xff]
        %v1374 = vld [vmem:[#allocation2 + $0x88] sm:$0xff]
        %v1375 = vld [vmem:[#allocation2 + $0x90] sm:$0xff]
        %v1376 = vld [vmem:[#allocation2 + $0x98] sm:$0xff]
        %v1377 = vld [vmem:[#allocation2 + $0xa0] sm:$0xff]
        %v1378 = vld [vmem:[#allocation2 + $0xa8] sm:$0xff]
        %v1379 = vld [vmem:[#allocation2 + $0xb0] sm:$0xff]
        %v1380 = vld [vmem:[#allocation2 + $0xb8] sm:$0xff]
        %v1381 = vld [vmem:[#allocation2 + $0xc0] sm:$0xff]
        %v1382 = vld [vmem:[#allocation2 + $0xc8] sm:$0xff]
        %v1383 = vld [vmem:[#allocation2 + $0xd0] sm:$0xff]
        %v1384 = vld [vmem:[#allocation2 + $0xd8] sm:$0xff]
        %v1385 = vld [vmem:[#allocation2 + $0xe0] sm:$0xff]
        %v1386 = vld [vmem:[#allocation2 + $0xe8] sm:$0xff]
        %v1387 = vld [vmem:[#allocation2 + $0xf0] sm:$0xff]
        %v1388 = vld [vmem:[#allocation2 + $0xf8] sm:$0xff]
        %v1389 = vadd.f32 %v1357, %v1195
        %v1390 = vadd.f32 %v1358, %v1198
        %v1391 = vadd.f32 %v1359, %v1203
        %v1392 = vadd.f32 %v1360, %v1206
        %v1393 = vadd.f32 %v1361, %v1211
        %v1394 = vadd.f32 %v1362, %v1214
        %v1395 = vadd.f32 %v1363, %v1219
        %v1396 = vadd.f32 %v1364, %v1222
        %v1397 = vadd.f32 %v1365, %v1227
        %v1398 = vadd.f32 %v1366, %v1230
        %v1399 = vadd.f32 %v1367, %v1235
        %v1400 = vadd.f32 %v1368, %v1238
        %v1401 = vadd.f32 %v1369, %v1243
        %v1402 = vadd.f32 %v1370, %v1246
        %v1403 = vadd.f32 %v1371, %v1251
        %v1404 = vadd.f32 %v1372, %v1254
        %v1405 = vadd.f32 %v1373, %v1259
        %v1406 = vadd.f32 %v1374, %v1262
        %v1407 = vadd.f32 %v1375, %v1267
        %v1408 = vadd.f32 %v1376, %v1270
        %v1409 = vadd.f32 %v1377, %v1275
        %v1410 = vadd.f32 %v1378, %v1278
        %v1411 = vadd.f32 %v1379, %v1283
        %v1412 = vadd.f32 %v1380, %v1286
        %v1413 = vadd.f32 %v1381, %v1291
        %v1414 = vadd.f32 %v1382, %v1294
        %v1415 = vadd.f32 %v1383, %v1299
        %v1416 = vadd.f32 %v1384, %v1302
        %v1417 = vadd.f32 %v1385, %v1307
        %v1418 = vadd.f32 %v1386, %v1310
        %v1419 = vadd.f32 %v1387, %v1315
        %v1420 = vadd.f32 %v1388, %v1318
        %1421 = vst [vmem:[#allocation2] sm:$0xff] %v1389
        %1422 = vst [vmem:[#allocation2 + $0x8] sm:$0xff] %v1390
        %1423 = vst [vmem:[#allocation2 + $0x10] sm:$0xff] %v1391
        %1424 = vst [vmem:[#allocation2 + $0x18] sm:$0xff] %v1392
        %1425 = vst [vmem:[#allocation2 + $0x20] sm:$0xff] %v1393
        %1426 = vst [vmem:[#allocation2 + $0x28] sm:$0xff] %v1394
        %1427 = vst [vmem:[#allocation2 + $0x30] sm:$0xff] %v1395
        %1428 = vst [vmem:[#allocation2 + $0x38] sm:$0xff] %v1396
        %1429 = vst [vmem:[#allocation2 + $0x40] sm:$0xff] %v1397
        %1430 = vst [vmem:[#allocation2 + $0x48] sm:$0xff] %v1398
        %1431 = vst [vmem:[#allocation2 + $0x50] sm:$0xff] %v1399
        %1432 = vst [vmem:[#allocation2 + $0x58] sm:$0xff] %v1400
        %1433 = vst [vmem:[#allocation2 + $0x60] sm:$0xff] %v1401
        %1434 = vst [vmem:[#allocation2 + $0x68] sm:$0xff] %v1402
        %1435 = vst [vmem:[#allocation2 + $0x70] sm:$0xff] %v1403
        %1436 = vst [vmem:[#allocation2 + $0x78] sm:$0xff] %v1404
        %1437 = vst [vmem:[#allocation2 + $0x80] sm:$0xff] %v1405
        %1438 = vst [vmem:[#allocation2 + $0x88] sm:$0xff] %v1406
        %1439 = vst [vmem:[#allocation2 + $0x90] sm:$0xff] %v1407
        %1440 = vst [vmem:[#allocation2 + $0x98] sm:$0xff] %v1408
        %1441 = vst [vmem:[#allocation2 + $0xa0] sm:$0xff] %v1409
        %1442 = vst [vmem:[#allocation2 + $0xa8] sm:$0xff] %v1410
        %1443 = vst [vmem:[#allocation2 + $0xb0] sm:$0xff] %v1411
        %1444 = vst [vmem:[#allocation2 + $0xb8] sm:$0xff] %v1412
        %1445 = vst [vmem:[#allocation2 + $0xc0] sm:$0xff] %v1413
        %1446 = vst [vmem:[#allocation2 + $0xc8] sm:$0xff] %v1414
        %1447 = vst [vmem:[#allocation2 + $0xd0] sm:$0xff] %v1415
        %1448 = vst [vmem:[#allocation2 + $0xd8] sm:$0xff] %v1416
        %1449 = vst [vmem:[#allocation2 + $0xe0] sm:$0xff] %v1417
        %1450 = vst [vmem:[#allocation2 + $0xe8] sm:$0xff] %v1418
        %1451 = vst [vmem:[#allocation2 + $0xf0] sm:$0xff] %v1419
        %1452 = vst [vmem:[#allocation2 + $0xf8] sm:$0xff] %v1420
        %p1453 = scmp.eq.s32.totalorder %s20, 1
        // Predicated region
        $region56: #{dcgan_forward.16} parent=46 // pred_check
          %p1454 = pneg %p1453
        $region57: #{dcgan_forward.16} parent=46 // pred_check_branch
          %1456 = sbr.rel (%p1454) target = $region59
        $region58: #{dcgan_forward.16} parent=46 // pred_region
          %v1457 = vld [vmem:[#allocation2] sm:$0xff]
          %v1458 = vld [vmem:[#allocation2 + $0x8] sm:$0xff]
          %v1459 = vld [vmem:[#allocation2 + $0x10] sm:$0xff]
          %v1460 = vld [vmem:[#allocation2 + $0x18] sm:$0xff]
          %v1461 = vld [vmem:[#allocation2 + $0x20] sm:$0xff]
          %v1462 = vld [vmem:[#allocation2 + $0x28] sm:$0xff]
          %v1463 = vld [vmem:[#allocation2 + $0x30] sm:$0xff]
          %v1464 = vld [vmem:[#allocation2 + $0x38] sm:$0xff]
          %v1465 = vld [vmem:[#allocation2 + $0x40] sm:$0xff]
          %v1466 = vld [vmem:[#allocation2 + $0x48] sm:$0xff]
          %v1467 = vld [vmem:[#allocation2 + $0x50] sm:$0xff]
          %v1468 = vld [vmem:[#allocation2 + $0x58] sm:$0xff]
          %v1469 = vld [vmem:[#allocation2 + $0x60] sm:$0xff]
          %v1470 = vld [vmem:[#allocation2 + $0x68] sm:$0xff]
          %v1471 = vld [vmem:[#allocation2 + $0x70] sm:$0xff]
          %v1472 = vld [vmem:[#allocation2 + $0x78] sm:$0xff]
          %v1473 = vld [vmem:[#allocation2 + $0x80] sm:$0xff]
          %v1474 = vld [vmem:[#allocation2 + $0x88] sm:$0xff]
          %v1475 = vld [vmem:[#allocation2 + $0x90] sm:$0xff]
          %v1476 = vld [vmem:[#allocation2 + $0x98] sm:$0xff]
          %v1477 = vld [vmem:[#allocation2 + $0xa0] sm:$0xff]
          %v1478 = vld [vmem:[#allocation2 + $0xa8] sm:$0xff]
          %v1479 = vld [vmem:[#allocation2 + $0xb0] sm:$0xff]
          %v1480 = vld [vmem:[#allocation2 + $0xb8] sm:$0xff]
          %v1481 = vld [vmem:[#allocation2 + $0xc0] sm:$0xff]
          %v1482 = vld [vmem:[#allocation2 + $0xc8] sm:$0xff]
          %v1483 = vld [vmem:[#allocation2 + $0xd0] sm:$0xff]
          %v1484 = vld [vmem:[#allocation2 + $0xd8] sm:$0xff]
          %v1485 = vld [vmem:[#allocation2 + $0xe0] sm:$0xff]
          %v1486 = vld [vmem:[#allocation2 + $0xe8] sm:$0xff]
          %v1487 = vld [vmem:[#allocation2 + $0xf0] sm:$0xff]
          %v1488 = vld [vmem:[#allocation2 + $0xf8] sm:$0xff]
          %1489 = vst [vmem:[%s356] sm:$0xff] %v1457
          %1490 = vst [vmem:[%s356 + $0x8] sm:$0xff] %v1458
          %1491 = vst [vmem:[%s356 + $0x10] sm:$0xff] %v1459
          %1492 = vst [vmem:[%s356 + $0x18] sm:$0xff] %v1460
          %1493 = vst [vmem:[%s356 + $0x20] sm:$0xff] %v1461
          %1494 = vst [vmem:[%s356 + $0x28] sm:$0xff] %v1462
          %1495 = vst [vmem:[%s356 + $0x30] sm:$0xff] %v1463
          %1496 = vst [vmem:[%s356 + $0x38] sm:$0xff] %v1464
          %1497 = vst [vmem:[%s356 + $0x40] sm:$0xff] %v1465
          %1498 = vst [vmem:[%s356 + $0x48] sm:$0xff] %v1466
          %1499 = vst [vmem:[%s356 + $0x50] sm:$0xff] %v1467
          %1500 = vst [vmem:[%s356 + $0x58] sm:$0xff] %v1468
          %1501 = vst [vmem:[%s356 + $0x60] sm:$0xff] %v1469
          %1502 = vst [vmem:[%s356 + $0x68] sm:$0xff] %v1470
          %1503 = vst [vmem:[%s356 + $0x70] sm:$0xff] %v1471
          %1504 = vst [vmem:[%s356 + $0x78] sm:$0xff] %v1472
          %1505 = vst [vmem:[%s356 + $0x80] sm:$0xff] %v1473
          %1506 = vst [vmem:[%s356 + $0x88] sm:$0xff] %v1474
          %1507 = vst [vmem:[%s356 + $0x90] sm:$0xff] %v1475
          %1508 = vst [vmem:[%s356 + $0x98] sm:$0xff] %v1476
          %1509 = vst [vmem:[%s356 + $0xa0] sm:$0xff] %v1477
          %1510 = vst [vmem:[%s356 + $0xa8] sm:$0xff] %v1478
          %1511 = vst [vmem:[%s356 + $0xb0] sm:$0xff] %v1479
          %1512 = vst [vmem:[%s356 + $0xb8] sm:$0xff] %v1480
          %1513 = vst [vmem:[%s356 + $0xc0] sm:$0xff] %v1481
          %1514 = vst [vmem:[%s356 + $0xc8] sm:$0xff] %v1482
          %1515 = vst [vmem:[%s356 + $0xd0] sm:$0xff] %v1483
          %1516 = vst [vmem:[%s356 + $0xd8] sm:$0xff] %v1484
          %1517 = vst [vmem:[%s356 + $0xe0] sm:$0xff] %v1485
          %1518 = vst [vmem:[%s356 + $0xe8] sm:$0xff] %v1486
          %1519 = vst [vmem:[%s356 + $0xf0] sm:$0xff] %v1487
          %1520 = vst [vmem:[%s356 + $0xf8] sm:$0xff] %v1488
        $region59: #{dcgan_forward.16} parent=46 // pred_fallthru
          _
        %s1521 = smul.u32 32, %s18
        %p1522 = scmp.lt.s32.totalorder %s1521, 63
        %s1523 = scalar_select %p1522, %s1521, 63
        %p1524 = scmp.lt.s32.totalorder %s19, 0
        %s1525 = scalar_select %p1524, %s19, 0
        %s1526 = sadd.s32 %s1525, %s1523
        %s1527 = smul.addr %s1526, 8
        %s1528 = scalar_lea.vmem %s2, %s1527
        // Predicated region
        $region60: #{dcgan_forward.16} parent=46 // pred_check
          %p1529 = pneg %p108
        $region61: #{dcgan_forward.16} parent=46 // pred_check_branch
          %1531 = sbr.rel (%p1529) target = $region63
        $region62: #{dcgan_forward.16} parent=46 // pred_region
          %s1532 = smul.u32 32, %s18
        $region63: #{dcgan_forward.16} parent=46 // pred_fallthru
          _
      $region47: #{dcgan_forward.16} parent=5 // pred_fallthru
        _
      %p1533 = scmp.le.s32.totalorder 2, %s8
      // Predicated region
      $region64: #{dcgan_forward.16} parent=5 // pred_check
        %p1534 = pneg %p1533
      $region65: #{dcgan_forward.16} parent=5 // pred_check_branch
        %1536 = sbr.rel (%p1534) target = $region67
      $region66: #{dcgan_forward.16} parent=5 // pred_region
        %s1537 = ssub.s32 %s8, 2
        // Predicated region
        $region68: #{dcgan_forward.16} parent=66 // pred_check
          %p1538 = pneg %p114
        $region69: #{dcgan_forward.16} parent=66 // pred_check_branch
          %1540 = sbr.rel (%p1538) target = $region71
        $region70: #{dcgan_forward.16} parent=66 // pred_region
          %s1541 = smul.u32 32, %s21
          %p1542 = scmp.lt.s32.totalorder %s1541, 63
          %s1543 = scalar_select %p1542, %s1541, 63
          %p1544 = scmp.lt.s32.totalorder %s22, 0
          %s1545 = scalar_select %p1544, %s22, 0
          %s1546 = sadd.s32 %s1545, %s1543
          %s1547 = smul.addr %s1546, 8
          %s1548 = scalar_lea.vmem %s2, %s1547
        $region71: #{dcgan_forward.16} parent=66 // pred_fallthru
          _
      $region67: #{dcgan_forward.16} parent=5 // pred_fallthru
        _
    $region6: #{dcgan_forward.16} parent=1 // loop_footer
      %s12 = sadd.s32 1, %s8
    $region7: #{dcgan_forward.16} parent=1 // loop_footer_branch
      %7 = sbr.rel target = $region3
    $region8: #{dcgan_forward.16} parent=1 // loop_exit
      _

// kernel: dcgan_forward.17
$region0: #{dcgan_forward.17}
  #allocation0 [shape = 'u32[]', space=smem, size = 0x4, offset = 0x4, fixed_abs, tag = 'smem constant byte address 0x4 - core index']
  #allocation1 [shape = 'u32[144,128]{1,0:T(1,128)}', space=vmem, size = 0x12000, scoped, tag = 'internal scratch']
  %s0 = inlined_call_operand.vmem [shape: f32[512,128], index: 0, kind: input, shape index: {}]
  %s1 = inlined_call_operand.vmem [shape: f32[1,128], index: 1, kind: output, shape index: {0}]
  %s2 = inlined_call_operand.vmem [shape: f32[1,128], index: 2, kind: output, shape index: {1}]
  %3 = xla_tuple %s1, %s2
  %s4 = sld [smem:[#allocation0]]
  $region26: #{dcgan_forward.17} parent=0
    _
  %s6 = ssub.s32 1, %s4
  %s7 = scalar_select 0, %s6, %s4
  // Predicated region
  $region2: #{dcgan_forward.17} parent=0 // pred_check
    _
  $region3: #{dcgan_forward.17} parent=0 // pred_check_branch
    %9 = sbr.rel (0) target = $region5
  $region4: #{dcgan_forward.17} parent=0 // pred_region
    _
  $region5: #{dcgan_forward.17} parent=0 // pred_fallthru
    _
  %p10 = scmp.eq.s32.totalorder 0, 0
  // Predicated region
  $region6: #{dcgan_forward.17} parent=0 // pred_check
    %p11 = pneg %p10
  $region7: #{dcgan_forward.17} parent=0 // pred_check_branch
    %13 = sbr.rel (%p11) target = $region9
  $region8: #{dcgan_forward.17} parent=0 // pred_region
    %14 = vst [vmem:[%s1] sm:$0x1] 0.0
    %15 = vst [vmem:[%s2] sm:$0x1] 0.0
  $region9: #{dcgan_forward.17} parent=0 // pred_fallthru
    _
  %v16 = vld [vmem:[%s0] sm:$0xff]
  %v17 = vld [vmem:[%s0 + $0x8] sm:$0xff]
  %v18 = vld [vmem:[%s0 + $0x10] sm:$0xff]
  %v19 = vld [vmem:[%s0 + $0x18] sm:$0xff]
  %v20 = vld [vmem:[%s0 + $0x20] sm:$0xff]
  %v21 = vld [vmem:[%s0 + $0x28] sm:$0xff]
  %v22 = vld [vmem:[%s0 + $0x30] sm:$0xff]
  %v23 = vld [vmem:[%s0 + $0x38] sm:$0xff]
  %v24 = vld [vmem:[%s0 + $0x40] sm:$0xff]
  %v25 = vld [vmem:[%s0 + $0x48] sm:$0xff]
  %v26 = vld [vmem:[%s0 + $0x50] sm:$0xff]
  %v27 = vld [vmem:[%s0 + $0x58] sm:$0xff]
  %v28 = vld [vmem:[%s0 + $0x60] sm:$0xff]
  %v29 = vld [vmem:[%s0 + $0x68] sm:$0xff]
  %v30 = vld [vmem:[%s0 + $0x70] sm:$0xff]
  %v31 = vld [vmem:[%s0 + $0x78] sm:$0xff]
  %v32 = vld [vmem:[%s0 + $0x80] sm:$0xff]
  %v33 = vld [vmem:[%s0 + $0x88] sm:$0xff]
  %v34 = vld [vmem:[%s0 + $0x90] sm:$0xff]
  %v35 = vld [vmem:[%s0 + $0x98] sm:$0xff]
  %v36 = vld [vmem:[%s0 + $0xa0] sm:$0xff]
  %v37 = vld [vmem:[%s0 + $0xa8] sm:$0xff]
  %v38 = vld [vmem:[%s0 + $0xb0] sm:$0xff]
  %v39 = vld [vmem:[%s0 + $0xb8] sm:$0xff]
  %v40 = vld [vmem:[%s0 + $0xc0] sm:$0xff]
  %v41 = vld [vmem:[%s0 + $0xc8] sm:$0xff]
  %v42 = vld [vmem:[%s0 + $0xd0] sm:$0xff]
  %v43 = vld [vmem:[%s0 + $0xd8] sm:$0xff]
  %v44 = vld [vmem:[%s0 + $0xe0] sm:$0xff]
  %v45 = vld [vmem:[%s0 + $0xe8] sm:$0xff]
  %v46 = vld [vmem:[%s0 + $0xf0] sm:$0xff]
  %v47 = vld [vmem:[%s0 + $0xf8] sm:$0xff]
  %v48 = vld [vmem:[%s0 + $0x100] sm:$0xff]
  %v49 = vld [vmem:[%s0 + $0x108] sm:$0xff]
  %v50 = vld [vmem:[%s0 + $0x110] sm:$0xff]
  %v51 = vld [vmem:[%s0 + $0x118] sm:$0xff]
  %v52 = vld [vmem:[%s0 + $0x120] sm:$0xff]
  %v53 = vld [vmem:[%s0 + $0x128] sm:$0xff]
  %v54 = vld [vmem:[%s0 + $0x130] sm:$0xff]
  %v55 = vld [vmem:[%s0 + $0x138] sm:$0xff]
  %v56 = vld [vmem:[%s0 + $0x140] sm:$0xff]
  %v57 = vld [vmem:[%s0 + $0x148] sm:$0xff]
  %v58 = vld [vmem:[%s0 + $0x150] sm:$0xff]
  %v59 = vld [vmem:[%s0 + $0x158] sm:$0xff]
  %v60 = vld [vmem:[%s0 + $0x160] sm:$0xff]
  %v61 = vld [vmem:[%s0 + $0x168] sm:$0xff]
  %v62 = vld [vmem:[%s0 + $0x170] sm:$0xff]
  %v63 = vld [vmem:[%s0 + $0x178] sm:$0xff]
  %v64 = vld [vmem:[%s0 + $0x180] sm:$0xff]
  %v65 = vld [vmem:[%s0 + $0x188] sm:$0xff]
  %v66 = vld [vmem:[%s0 + $0x190] sm:$0xff]
  %v67 = vld [vmem:[%s0 + $0x198] sm:$0xff]
  %v68 = vld [vmem:[%s0 + $0x1a0] sm:$0xff]
  %v69 = vld [vmem:[%s0 + $0x1a8] sm:$0xff]
  %v70 = vld [vmem:[%s0 + $0x1b0] sm:$0xff]
  %v71 = vld [vmem:[%s0 + $0x1b8] sm:$0xff]
  %v72 = vld [vmem:[%s0 + $0x1c0] sm:$0xff]
  %v73 = vld [vmem:[%s0 + $0x1c8] sm:$0xff]
  %v74 = vld [vmem:[%s0 + $0x1d0] sm:$0xff]
  %v75 = vld [vmem:[%s0 + $0x1d8] sm:$0xff]
  %v76 = vld [vmem:[%s0 + $0x1e0] sm:$0xff]
  %v77 = vld [vmem:[%s0 + $0x1e8] sm:$0xff]
  %v78 = vld [vmem:[%s0 + $0x1f0] sm:$0xff]
  %v79 = vld [vmem:[%s0 + $0x1f8] sm:$0xff]
  %v80 = vld [vmem:[%s1] sm:$0x1]
  %v81 = vadd.f32 %v16, %v17
  %v82 = vadd.f32 %v81, %v18
  %v83 = vadd.f32 %v82, %v19
  %v84 = vadd.f32 %v83, %v20
  %v85 = vadd.f32 %v84, %v21
  %v86 = vadd.f32 %v85, %v22
  %v87 = vadd.f32 %v86, %v23
  %v88 = vadd.f32 %v87, %v24
  %v89 = vadd.f32 %v88, %v25
  %v90 = vadd.f32 %v89, %v26
  %v91 = vadd.f32 %v90, %v27
  %v92 = vadd.f32 %v91, %v28
  %v93 = vadd.f32 %v92, %v29
  %v94 = vadd.f32 %v93, %v30
  %v95 = vadd.f32 %v94, %v31
  %v96 = vadd.f32 %v95, %v32
  %v97 = vadd.f32 %v96, %v33
  %v98 = vadd.f32 %v97, %v34
  %v99 = vadd.f32 %v98, %v35
  %v100 = vadd.f32 %v99, %v36
  %v101 = vadd.f32 %v100, %v37
  %v102 = vadd.f32 %v101, %v38
  %v103 = vadd.f32 %v102, %v39
  %v104 = vadd.f32 %v103, %v40
  %v105 = vadd.f32 %v104, %v41
  %v106 = vadd.f32 %v105, %v42
  %v107 = vadd.f32 %v106, %v43
  %v108 = vadd.f32 %v107, %v44
  %v109 = vadd.f32 %v108, %v45
  %v110 = vadd.f32 %v109, %v46
  %v111 = vadd.f32 %v110, %v47
  %v112 = vadd.f32 %v111, %v48
  %v113 = vadd.f32 %v112, %v49
  %v114 = vadd.f32 %v113, %v50
  %v115 = vadd.f32 %v114, %v51
  %v116 = vadd.f32 %v115, %v52
  %v117 = vadd.f32 %v116, %v53
  %v118 = vadd.f32 %v117, %v54
  %v119 = vadd.f32 %v118, %v55
  %v120 = vadd.f32 %v119, %v56
  %v121 = vadd.f32 %v120, %v57
  %v122 = vadd.f32 %v121, %v58
  %v123 = vadd.f32 %v122, %v59
  %v124 = vadd.f32 %v123, %v60
  %v125 = vadd.f32 %v124, %v61
  %v126 = vadd.f32 %v125, %v62
  %v127 = vadd.f32 %v126, %v63
  %v128 = vadd.f32 %v127, %v64
  %v129 = vadd.f32 %v128, %v65
  %v130 = vadd.f32 %v129, %v66
  %v131 = vadd.f32 %v130, %v67
  %v132 = vadd.f32 %v131, %v68
  %v133 = vadd.f32 %v132, %v69
  %v134 = vadd.f32 %v133, %v70
  %v135 = vadd.f32 %v134, %v71
  %v136 = vadd.f32 %v135, %v72
  %v137 = vadd.f32 %v136, %v73
  %v138 = vadd.f32 %v137, %v74
  %v139 = vadd.f32 %v138, %v75
  %v140 = vadd.f32 %v139, %v76
  %v141 = vadd.f32 %v140, %v77
  %v142 = vadd.f32 %v141, %v78
  %v143 = vadd.f32 %v142, %v79
  %v144 = vrot.slane %v143, 4
  %v145 = vadd.f32 %v143, %v144
  %v146 = vrot.slane %v145, 2
  %v147 = vadd.f32 %v145, %v146
  %v148 = vrot.slane %v147, 1
  %v149 = vadd.f32 %v147, %v148
  %v150 = vadd.f32 %v80, %v149
  %151 = vst [vmem:[%s1] sm:$0x1] %v150
  %v152 = vld [vmem:[%s2] sm:$0x1]
  %v153 = vmul.f32 %v16, %v16
  %v154 = vmul.f32 %v17, %v17
  %v155 = vmul.f32 %v18, %v18
  %v156 = vmul.f32 %v19, %v19
  %v157 = vmul.f32 %v20, %v20
  %v158 = vmul.f32 %v21, %v21
  %v159 = vmul.f32 %v22, %v22
  %v160 = vmul.f32 %v23, %v23
  %v161 = vmul.f32 %v24, %v24
  %v162 = vmul.f32 %v25, %v25
  %v163 = vmul.f32 %v26, %v26
  %v164 = vmul.f32 %v27, %v27
  %v165 = vmul.f32 %v28, %v28
  %v166 = vmul.f32 %v29, %v29
  %v167 = vmul.f32 %v30, %v30
  %v168 = vmul.f32 %v31, %v31
  %v169 = vmul.f32 %v32, %v32
  %v170 = vmul.f32 %v33, %v33
  %v171 = vmul.f32 %v34, %v34
  %v172 = vmul.f32 %v35, %v35
  %v173 = vmul.f32 %v36, %v36
  %v174 = vmul.f32 %v37, %v37
  %v175 = vmul.f32 %v38, %v38
  %v176 = vmul.f32 %v39, %v39
  %v177 = vmul.f32 %v40, %v40
  %v178 = vmul.f32 %v41, %v41
  %v179 = vmul.f32 %v42, %v42
  %v180 = vmul.f32 %v43, %v43
  %v181 = vmul.f32 %v44, %v44
  %v182 = vmul.f32 %v45, %v45
  %v183 = vmul.f32 %v46, %v46
  %v184 = vmul.f32 %v47, %v47
  %v185 = vmul.f32 %v48, %v48
  %v186 = vmul.f32 %v49, %v49
  %v187 = vmul.f32 %v50, %v50
  %v188 = vmul.f32 %v51, %v51
  %v189 = vmul.f32 %v52, %v52
  %v190 = vmul.f32 %v53, %v53
  %v191 = vmul.f32 %v54, %v54
  %v192 = vmul.f32 %v55, %v55
  %v193 = vmul.f32 %v56, %v56
  %v194 = vmul.f32 %v57, %v57
  %v195 = vmul.f32 %v58, %v58
  %v196 = vmul.f32 %v59, %v59
  %v197 = vmul.f32 %v60, %v60
  %v198 = vmul.f32 %v61, %v61
  %v199 = vmul.f32 %v62, %v62
  %v200 = vmul.f32 %v63, %v63
  %v201 = vmul.f32 %v64, %v64
  %v202 = vmul.f32 %v65, %v65
  %v203 = vmul.f32 %v66, %v66
  %v204 = vmul.f32 %v67, %v67
  %v205 = vmul.f32 %v68, %v68
  %v206 = vmul.f32 %v69, %v69
  %v207 = vmul.f32 %v70, %v70
  %v208 = vmul.f32 %v71, %v71
  %v209 = vmul.f32 %v72, %v72
  %v210 = vmul.f32 %v73, %v73
  %v211 = vmul.f32 %v74, %v74
  %v212 = vmul.f32 %v75, %v75
  %v213 = vmul.f32 %v76, %v76
  %v214 = vmul.f32 %v77, %v77
  %v215 = vmul.f32 %v78, %v78
  %v216 = vmul.f32 %v79, %v79
  %v217 = vadd.f32 %v153, %v154
  %v218 = vadd.f32 %v217, %v155
  %v219 = vadd.f32 %v218, %v156
  %v220 = vadd.f32 %v219, %v157
  %v221 = vadd.f32 %v220, %v158
  %v222 = vadd.f32 %v221, %v159
  %v223 = vadd.f32 %v222, %v160
  %v224 = vadd.f32 %v223, %v161
  %v225 = vadd.f32 %v224, %v162
  %v226 = vadd.f32 %v225, %v163
  %v227 = vadd.f32 %v226, %v164
  %v228 = vadd.f32 %v227, %v165
  %v229 = vadd.f32 %v228, %v166
  %v230 = vadd.f32 %v229, %v167
  %v231 = vadd.f32 %v230, %v168
  %v232 = vadd.f32 %v231, %v169
  %v233 = vadd.f32 %v232, %v170
  %v234 = vadd.f32 %v233, %v171
  %v235 = vadd.f32 %v234, %v172
  %v236 = vadd.f32 %v235, %v173
  %v237 = vadd.f32 %v236, %v174
  %v238 = vadd.f32 %v237, %v175
  %v239 = vadd.f32 %v238, %v176
  %v240 = vadd.f32 %v239, %v177
  %v241 = vadd.f32 %v240, %v178
  %v242 = vadd.f32 %v241, %v179
  %v243 = vadd.f32 %v242, %v180
  %v244 = vadd.f32 %v243, %v181
  %v245 = vadd.f32 %v244, %v182
  %v246 = vadd.f32 %v245, %v183
  %v247 = vadd.f32 %v246, %v184
  %v248 = vadd.f32 %v247, %v185
  %v249 = vadd.f32 %v248, %v186
  %v250 = vadd.f32 %v249, %v187
  %v251 = vadd.f32 %v250, %v188
  %v252 = vadd.f32 %v251, %v189
  %v253 = vadd.f32 %v252, %v190
  %v254 = vadd.f32 %v253, %v191
  %v255 = vadd.f32 %v254, %v192
  %v256 = vadd.f32 %v255, %v193
  %v257 = vadd.f32 %v256, %v194
  %v258 = vadd.f32 %v257, %v195
  %v259 = vadd.f32 %v258, %v196
  %v260 = vadd.f32 %v259, %v197
  %v261 = vadd.f32 %v260, %v198
  %v262 = vadd.f32 %v261, %v199
  %v263 = vadd.f32 %v262, %v200
  %v264 = vadd.f32 %v263, %v201
  %v265 = vadd.f32 %v264, %v202
  %v266 = vadd.f32 %v265, %v203
  %v267 = vadd.f32 %v266, %v204
  %v268 = vadd.f32 %v267, %v205
  %v269 = vadd.f32 %v268, %v206
  %v270 = vadd.f32 %v269, %v207
  %v271 = vadd.f32 %v270, %v208
  %v272 = vadd.f32 %v271, %v209
  %v273 = vadd.f32 %v272, %v210
  %v274 = vadd.f32 %v273, %v211
  %v275 = vadd.f32 %v274, %v212
  %v276 = vadd.f32 %v275, %v213
  %v277 = vadd.f32 %v276, %v214
  %v278 = vadd.f32 %v277, %v215
  %v279 = vadd.f32 %v278, %v216
  %v280 = vrot.slane %v279, 4
  %v281 = vadd.f32 %v279, %v280
  %v282 = vrot.slane %v281, 2
  %v283 = vadd.f32 %v281, %v282
  %v284 = vrot.slane %v283, 1
  %v285 = vadd.f32 %v283, %v284
  %v286 = vadd.f32 %v152, %v285
  %287 = vst [vmem:[%s2] sm:$0x1] %v286
  // Predicated region
  $region10: #{dcgan_forward.17} parent=0 // pred_check
    _
  $region11: #{dcgan_forward.17} parent=0 // pred_check_branch
    %289 = sbr.rel (0) target = $region13
  $region12: #{dcgan_forward.17} parent=0 // pred_region
    _
  $region13: #{dcgan_forward.17} parent=0 // pred_fallthru
    _
  // Predicated region
  $region14: #{dcgan_forward.17} parent=0 // pred_check
    _
  $region15: #{dcgan_forward.17} parent=0 // pred_check_branch
    %291 = sbr.rel (0) target = $region17
  $region16: #{dcgan_forward.17} parent=0 // pred_region
    _
  $region17: #{dcgan_forward.17} parent=0 // pred_fallthru
    _
  // Predicated region
  $region18: #{dcgan_forward.17} parent=0 // pred_check
    _
  $region19: #{dcgan_forward.17} parent=0 // pred_check_branch
    %293 = sbr.rel (0) target = $region21
  $region20: #{dcgan_forward.17} parent=0 // pred_region
    _
  $region21: #{dcgan_forward.17} parent=0 // pred_fallthru
    _
  // Predicated region
  $region22: #{dcgan_forward.17} parent=0 // pred_check
    _
  $region23: #{dcgan_forward.17} parent=0 // pred_check_branch
    %295 = sbr.rel (0) target = $region25
  $region24: #{dcgan_forward.17} parent=0 // pred_region
    _
  $region25: #{dcgan_forward.17} parent=0 // pred_fallthru
    _

// kernel: dcgan_forward.18
$region0: #{dcgan_forward.18}
  #allocation0 [shape = 'u32[]', space=smem, size = 0x4, offset = 0x4, fixed_abs, tag = 'smem constant byte address 0x4 - core index']
  #allocation1 [shape = 'u32[144,128]{1,0:T(1,128)}', space=vmem, size = 0x12000, scoped, tag = 'internal scratch']
  %s0 = inlined_call_operand.vmem [shape: f32[512,128], index: 0, kind: input, shape index: {}]
  %s1 = inlined_call_operand.vmem [shape: f32[1,128], index: 1, kind: input, shape index: {}]
  %s2 = inlined_call_operand.vmem [shape: f32[1,128], index: 2, kind: input, shape index: {}]
  %s3 = inlined_call_operand.vmem [shape: bf16[512,128], index: 3, kind: output, shape index: {}]
  %s4 = sld [smem:[#allocation0]]
  $region22: #{dcgan_forward.18} parent=0
    _
  %s6 = ssub.s32 1, %s4
  %s7 = scalar_select 0, %s6, %s4
  // Predicated region
  $region2: #{dcgan_forward.18} parent=0 // pred_check
    _
  $region3: #{dcgan_forward.18} parent=0 // pred_check_branch
    %9 = sbr.rel (0) target = $region5
  $region4: #{dcgan_forward.18} parent=0 // pred_region
    _
  $region5: #{dcgan_forward.18} parent=0 // pred_fallthru
    _
  // Predicated region
  $region6: #{dcgan_forward.18} parent=0 // pred_check
    _
  $region7: #{dcgan_forward.18} parent=0 // pred_check_branch
    %11 = sbr.rel (0) target = $region9
  $region8: #{dcgan_forward.18} parent=0 // pred_region
    _
  $region9: #{dcgan_forward.18} parent=0 // pred_fallthru
    _
  // Predicated region
  $region10: #{dcgan_forward.18} parent=0 // pred_check
    _
  $region11: #{dcgan_forward.18} parent=0 // pred_check_branch
    %13 = sbr.rel (0) target = $region13
  $region12: #{dcgan_forward.18} parent=0 // pred_region
    _
  $region13: #{dcgan_forward.18} parent=0 // pred_fallthru
    _
  %v14 = vld [vmem:[%s0] sm:$0xff]
  %v15 = vld [vmem:[%s0 + $0x8] sm:$0xff]
  %v16 = vld [vmem:[%s0 + $0x10] sm:$0xff]
  %v17 = vld [vmem:[%s0 + $0x18] sm:$0xff]
  %v18 = vld [vmem:[%s0 + $0x20] sm:$0xff]
  %v19 = vld [vmem:[%s0 + $0x28] sm:$0xff]
  %v20 = vld [vmem:[%s0 + $0x30] sm:$0xff]
  %v21 = vld [vmem:[%s0 + $0x38] sm:$0xff]
  %v22 = vld [vmem:[%s0 + $0x40] sm:$0xff]
  %v23 = vld [vmem:[%s0 + $0x48] sm:$0xff]
  %v24 = vld [vmem:[%s0 + $0x50] sm:$0xff]
  %v25 = vld [vmem:[%s0 + $0x58] sm:$0xff]
  %v26 = vld [vmem:[%s0 + $0x60] sm:$0xff]
  %v27 = vld [vmem:[%s0 + $0x68] sm:$0xff]
  %v28 = vld [vmem:[%s0 + $0x70] sm:$0xff]
  %v29 = vld [vmem:[%s0 + $0x78] sm:$0xff]
  %v30 = vld [vmem:[%s0 + $0x80] sm:$0xff]
  %v31 = vld [vmem:[%s0 + $0x88] sm:$0xff]
  %v32 = vld [vmem:[%s0 + $0x90] sm:$0xff]
  %v33 = vld [vmem:[%s0 + $0x98] sm:$0xff]
  %v34 = vld [vmem:[%s0 + $0xa0] sm:$0xff]
  %v35 = vld [vmem:[%s0 + $0xa8] sm:$0xff]
  %v36 = vld [vmem:[%s0 + $0xb0] sm:$0xff]
  %v37 = vld [vmem:[%s0 + $0xb8] sm:$0xff]
  %v38 = vld [vmem:[%s0 + $0xc0] sm:$0xff]
  %v39 = vld [vmem:[%s0 + $0xc8] sm:$0xff]
  %v40 = vld [vmem:[%s0 + $0xd0] sm:$0xff]
  %v41 = vld [vmem:[%s0 + $0xd8] sm:$0xff]
  %v42 = vld [vmem:[%s0 + $0xe0] sm:$0xff]
  %v43 = vld [vmem:[%s0 + $0xe8] sm:$0xff]
  %v44 = vld [vmem:[%s0 + $0xf0] sm:$0xff]
  %v45 = vld [vmem:[%s0 + $0xf8] sm:$0xff]
  %v46 = vld [vmem:[%s0 + $0x100] sm:$0xff]
  %v47 = vld [vmem:[%s0 + $0x108] sm:$0xff]
  %v48 = vld [vmem:[%s0 + $0x110] sm:$0xff]
  %v49 = vld [vmem:[%s0 + $0x118] sm:$0xff]
  %v50 = vld [vmem:[%s0 + $0x120] sm:$0xff]
  %v51 = vld [vmem:[%s0 + $0x128] sm:$0xff]
  %v52 = vld [vmem:[%s0 + $0x130] sm:$0xff]
  %v53 = vld [vmem:[%s0 + $0x138] sm:$0xff]
  %v54 = vld [vmem:[%s0 + $0x140] sm:$0xff]
  %v55 = vld [vmem:[%s0 + $0x148] sm:$0xff]
  %v56 = vld [vmem:[%s0 + $0x150] sm:$0xff]
  %v57 = vld [vmem:[%s0 + $0x158] sm:$0xff]
  %v58 = vld [vmem:[%s0 + $0x160] sm:$0xff]
  %v59 = vld [vmem:[%s0 + $0x168] sm:$0xff]
  %v60 = vld [vmem:[%s0 + $0x170] sm:$0xff]
  %v61 = vld [vmem:[%s0 + $0x178] sm:$0xff]
  %v62 = vld [vmem:[%s0 + $0x180] sm:$0xff]
  %v63 = vld [vmem:[%s0 + $0x188] sm:$0xff]
  %v64 = vld [vmem:[%s0 + $0x190] sm:$0xff]
  %v65 = vld [vmem:[%s0 + $0x198] sm:$0xff]
  %v66 = vld [vmem:[%s0 + $0x1a0] sm:$0xff]
  %v67 = vld [vmem:[%s0 + $0x1a8] sm:$0xff]
  %v68 = vld [vmem:[%s0 + $0x1b0] sm:$0xff]
  %v69 = vld [vmem:[%s0 + $0x1b8] sm:$0xff]
  %v70 = vld [vmem:[%s0 + $0x1c0] sm:$0xff]
  %v71 = vld [vmem:[%s0 + $0x1c8] sm:$0xff]
  %v72 = vld [vmem:[%s0 + $0x1d0] sm:$0xff]
  %v73 = vld [vmem:[%s0 + $0x1d8] sm:$0xff]
  %v74 = vld [vmem:[%s0 + $0x1e0] sm:$0xff]
  %v75 = vld [vmem:[%s0 + $0x1e8] sm:$0xff]
  %v76 = vld [vmem:[%s0 + $0x1f0] sm:$0xff]
  %v77 = vld [vmem:[%s0 + $0x1f8] sm:$0xff]
  %v78 = vld [vmem:[%s1] sm:$0x1]
  %v80 = vlaneseq
  %v81 = vshrl.u32 %v80, 7
  %v82 = vsub.s32 0, %v81
  %v83 = vrot.slane %v78, %v82
  %v85 = vmul.f32 %v14, %v83
  %v86 = vmul.f32 %v15, %v83
  %v87 = vmul.f32 %v16, %v83
  %v88 = vmul.f32 %v17, %v83
  %v89 = vmul.f32 %v18, %v83
  %v90 = vmul.f32 %v19, %v83
  %v91 = vmul.f32 %v20, %v83
  %v92 = vmul.f32 %v21, %v83
  %v93 = vmul.f32 %v22, %v83
  %v94 = vmul.f32 %v23, %v83
  %v95 = vmul.f32 %v24, %v83
  %v96 = vmul.f32 %v25, %v83
  %v97 = vmul.f32 %v26, %v83
  %v98 = vmul.f32 %v27, %v83
  %v99 = vmul.f32 %v28, %v83
  %v100 = vmul.f32 %v29, %v83
  %v101 = vmul.f32 %v30, %v83
  %v102 = vmul.f32 %v31, %v83
  %v103 = vmul.f32 %v32, %v83
  %v104 = vmul.f32 %v33, %v83
  %v105 = vmul.f32 %v34, %v83
  %v106 = vmul.f32 %v35, %v83
  %v107 = vmul.f32 %v36, %v83
  %v108 = vmul.f32 %v37, %v83
  %v109 = vmul.f32 %v38, %v83
  %v110 = vmul.f32 %v39, %v83
  %v111 = vmul.f32 %v40, %v83
  %v112 = vmul.f32 %v41, %v83
  %v113 = vmul.f32 %v42, %v83
  %v114 = vmul.f32 %v43, %v83
  %v115 = vmul.f32 %v44, %v83
  %v116 = vmul.f32 %v45, %v83
  %v117 = vmul.f32 %v46, %v83
  %v118 = vmul.f32 %v47, %v83
  %v119 = vmul.f32 %v48, %v83
  %v120 = vmul.f32 %v49, %v83
  %v121 = vmul.f32 %v50, %v83
  %v122 = vmul.f32 %v51, %v83
  %v123 = vmul.f32 %v52, %v83
  %v124 = vmul.f32 %v53, %v83
  %v125 = vmul.f32 %v54, %v83
  %v126 = vmul.f32 %v55, %v83
  %v127 = vmul.f32 %v56, %v83
  %v128 = vmul.f32 %v57, %v83
  %v129 = vmul.f32 %v58, %v83
  %v130 = vmul.f32 %v59, %v83
  %v131 = vmul.f32 %v60, %v83
  %v132 = vmul.f32 %v61, %v83
  %v133 = vmul.f32 %v62, %v83
  %v134 = vmul.f32 %v63, %v83
  %v135 = vmul.f32 %v64, %v83
  %v136 = vmul.f32 %v65, %v83
  %v137 = vmul.f32 %v66, %v83
  %v138 = vmul.f32 %v67, %v83
  %v139 = vmul.f32 %v68, %v83
  %v140 = vmul.f32 %v69, %v83
  %v141 = vmul.f32 %v70, %v83
  %v142 = vmul.f32 %v71, %v83
  %v143 = vmul.f32 %v72, %v83
  %v144 = vmul.f32 %v73, %v83
  %v145 = vmul.f32 %v74, %v83
  %v146 = vmul.f32 %v75, %v83
  %v147 = vmul.f32 %v76, %v83
  %v148 = vmul.f32 %v77, %v83
  %v149 = vld [vmem:[%s2] sm:$0x1]
  %v151 = vlaneseq
  %v152 = vshrl.u32 %v151, 7
  %v153 = vsub.s32 0, %v152
  %v154 = vrot.slane %v149, %v153
  %v156 = vadd.f32 %v85, %v154
  %v157 = vadd.f32 %v86, %v154
  %v158 = vadd.f32 %v87, %v154
  %v159 = vadd.f32 %v88, %v154
  %v160 = vadd.f32 %v89, %v154
  %v161 = vadd.f32 %v90, %v154
  %v162 = vadd.f32 %v91, %v154
  %v163 = vadd.f32 %v92, %v154
  %v164 = vadd.f32 %v93, %v154
  %v165 = vadd.f32 %v94, %v154
  %v166 = vadd.f32 %v95, %v154
  %v167 = vadd.f32 %v96, %v154
  %v168 = vadd.f32 %v97, %v154
  %v169 = vadd.f32 %v98, %v154
  %v170 = vadd.f32 %v99, %v154
  %v171 = vadd.f32 %v100, %v154
  %v172 = vadd.f32 %v101, %v154
  %v173 = vadd.f32 %v102, %v154
  %v174 = vadd.f32 %v103, %v154
  %v175 = vadd.f32 %v104, %v154
  %v176 = vadd.f32 %v105, %v154
  %v177 = vadd.f32 %v106, %v154
  %v178 = vadd.f32 %v107, %v154
  %v179 = vadd.f32 %v108, %v154
  %v180 = vadd.f32 %v109, %v154
  %v181 = vadd.f32 %v110, %v154
  %v182 = vadd.f32 %v111, %v154
  %v183 = vadd.f32 %v112, %v154
  %v184 = vadd.f32 %v113, %v154
  %v185 = vadd.f32 %v114, %v154
  %v186 = vadd.f32 %v115, %v154
  %v187 = vadd.f32 %v116, %v154
  %v188 = vadd.f32 %v117, %v154
  %v189 = vadd.f32 %v118, %v154
  %v190 = vadd.f32 %v119, %v154
  %v191 = vadd.f32 %v120, %v154
  %v192 = vadd.f32 %v121, %v154
  %v193 = vadd.f32 %v122, %v154
  %v194 = vadd.f32 %v123, %v154
  %v195 = vadd.f32 %v124, %v154
  %v196 = vadd.f32 %v125, %v154
  %v197 = vadd.f32 %v126, %v154
  %v198 = vadd.f32 %v127, %v154
  %v199 = vadd.f32 %v128, %v154
  %v200 = vadd.f32 %v129, %v154
  %v201 = vadd.f32 %v130, %v154
  %v202 = vadd.f32 %v131, %v154
  %v203 = vadd.f32 %v132, %v154
  %v204 = vadd.f32 %v133, %v154
  %v205 = vadd.f32 %v134, %v154
  %v206 = vadd.f32 %v135, %v154
  %v207 = vadd.f32 %v136, %v154
  %v208 = vadd.f32 %v137, %v154
  %v209 = vadd.f32 %v138, %v154
  %v210 = vadd.f32 %v139, %v154
  %v211 = vadd.f32 %v140, %v154
  %v212 = vadd.f32 %v141, %v154
  %v213 = vadd.f32 %v142, %v154
  %v214 = vadd.f32 %v143, %v154
  %v215 = vadd.f32 %v144, %v154
  %v216 = vadd.f32 %v145, %v154
  %v217 = vadd.f32 %v146, %v154
  %v218 = vadd.f32 %v147, %v154
  %v219 = vadd.f32 %v148, %v154
  %v220 = vpack.c.bf16 %v157, %v156
  %v221 = vpack.c.bf16 %v159, %v158
  %v222 = vpack.c.bf16 %v161, %v160
  %v223 = vpack.c.bf16 %v163, %v162
  %v224 = vpack.c.bf16 %v165, %v164
  %v225 = vpack.c.bf16 %v167, %v166
  %v226 = vpack.c.bf16 %v169, %v168
  %v227 = vpack.c.bf16 %v171, %v170
  %v228 = vpack.c.bf16 %v173, %v172
  %v229 = vpack.c.bf16 %v175, %v174
  %v230 = vpack.c.bf16 %v177, %v176
  %v231 = vpack.c.bf16 %v179, %v178
  %v232 = vpack.c.bf16 %v181, %v180
  %v233 = vpack.c.bf16 %v183, %v182
  %v234 = vpack.c.bf16 %v185, %v184
  %v235 = vpack.c.bf16 %v187, %v186
  %v236 = vpack.c.bf16 %v189, %v188
  %v237 = vpack.c.bf16 %v191, %v190
  %v238 = vpack.c.bf16 %v193, %v192
  %v239 = vpack.c.bf16 %v195, %v194
  %v240 = vpack.c.bf16 %v197, %v196
  %v241 = vpack.c.bf16 %v199, %v198
  %v242 = vpack.c.bf16 %v201, %v200
  %v243 = vpack.c.bf16 %v203, %v202
  %v244 = vpack.c.bf16 %v205, %v204
  %v245 = vpack.c.bf16 %v207, %v206
  %v246 = vpack.c.bf16 %v209, %v208
  %v247 = vpack.c.bf16 %v211, %v210
  %v248 = vpack.c.bf16 %v213, %v212
  %v249 = vpack.c.bf16 %v215, %v214
  %v250 = vpack.c.bf16 %v217, %v216
  %v251 = vpack.c.bf16 %v219, %v218
  %v284 = vunpack.c.l.b16 %v220
  %v285 = vunpack.c.h.b16 %v220
  %v286 = vunpack.c.l.b16 %v221
  %v287 = vunpack.c.h.b16 %v221
  %v288 = vunpack.c.l.b16 %v222
  %v289 = vunpack.c.h.b16 %v222
  %v290 = vunpack.c.l.b16 %v223
  %v291 = vunpack.c.h.b16 %v223
  %v292 = vunpack.c.l.b16 %v224
  %v293 = vunpack.c.h.b16 %v224
  %v294 = vunpack.c.l.b16 %v225
  %v295 = vunpack.c.h.b16 %v225
  %v296 = vunpack.c.l.b16 %v226
  %v297 = vunpack.c.h.b16 %v226
  %v298 = vunpack.c.l.b16 %v227
  %v299 = vunpack.c.h.b16 %v227
  %v300 = vunpack.c.l.b16 %v228
  %v301 = vunpack.c.h.b16 %v228
  %v302 = vunpack.c.l.b16 %v229
  %v303 = vunpack.c.h.b16 %v229
  %v304 = vunpack.c.l.b16 %v230
  %v305 = vunpack.c.h.b16 %v230
  %v306 = vunpack.c.l.b16 %v231
  %v307 = vunpack.c.h.b16 %v231
  %v308 = vunpack.c.l.b16 %v232
  %v309 = vunpack.c.h.b16 %v232
  %v310 = vunpack.c.l.b16 %v233
  %v311 = vunpack.c.h.b16 %v233
  %v312 = vunpack.c.l.b16 %v234
  %v313 = vunpack.c.h.b16 %v234
  %v314 = vunpack.c.l.b16 %v235
  %v315 = vunpack.c.h.b16 %v235
  %v316 = vunpack.c.l.b16 %v236
  %v317 = vunpack.c.h.b16 %v236
  %v318 = vunpack.c.l.b16 %v237
  %v319 = vunpack.c.h.b16 %v237
  %v320 = vunpack.c.l.b16 %v238
  %v321 = vunpack.c.h.b16 %v238
  %v322 = vunpack.c.l.b16 %v239
  %v323 = vunpack.c.h.b16 %v239
  %v324 = vunpack.c.l.b16 %v240
  %v325 = vunpack.c.h.b16 %v240
  %v326 = vunpack.c.l.b16 %v241
  %v327 = vunpack.c.h.b16 %v241
  %v328 = vunpack.c.l.b16 %v242
  %v329 = vunpack.c.h.b16 %v242
  %v330 = vunpack.c.l.b16 %v243
  %v331 = vunpack.c.h.b16 %v243
  %v332 = vunpack.c.l.b16 %v244
  %v333 = vunpack.c.h.b16 %v244
  %v334 = vunpack.c.l.b16 %v245
  %v335 = vunpack.c.h.b16 %v245
  %v336 = vunpack.c.l.b16 %v246
  %v337 = vunpack.c.h.b16 %v246
  %v338 = vunpack.c.l.b16 %v247
  %v339 = vunpack.c.h.b16 %v247
  %v340 = vunpack.c.l.b16 %v248
  %v341 = vunpack.c.h.b16 %v248
  %v342 = vunpack.c.l.b16 %v249
  %v343 = vunpack.c.h.b16 %v249
  %v344 = vunpack.c.l.b16 %v250
  %v345 = vunpack.c.h.b16 %v250
  %v346 = vunpack.c.l.b16 %v251
  %v347 = vunpack.c.h.b16 %v251
  %v348 = vpack.c.b16 %v284, %v284
  %v349 = vpack.c.b16 %v285, %v285
  %v350 = vpack.c.b16 %v286, %v286
  %v351 = vpack.c.b16 %v287, %v287
  %v352 = vpack.c.b16 %v288, %v288
  %v353 = vpack.c.b16 %v289, %v289
  %v354 = vpack.c.b16 %v290, %v290
  %v355 = vpack.c.b16 %v291, %v291
  %v356 = vpack.c.b16 %v292, %v292
  %v357 = vpack.c.b16 %v293, %v293
  %v358 = vpack.c.b16 %v294, %v294
  %v359 = vpack.c.b16 %v295, %v295
  %v360 = vpack.c.b16 %v296, %v296
  %v361 = vpack.c.b16 %v297, %v297
  %v362 = vpack.c.b16 %v298, %v298
  %v363 = vpack.c.b16 %v299, %v299
  %v364 = vpack.c.b16 %v300, %v300
  %v365 = vpack.c.b16 %v301, %v301
  %v366 = vpack.c.b16 %v302, %v302
  %v367 = vpack.c.b16 %v303, %v303
  %v368 = vpack.c.b16 %v304, %v304
  %v369 = vpack.c.b16 %v305, %v305
  %v370 = vpack.c.b16 %v306, %v306
  %v371 = vpack.c.b16 %v307, %v307
  %v372 = vpack.c.b16 %v308, %v308
  %v373 = vpack.c.b16 %v309, %v309
  %v374 = vpack.c.b16 %v310, %v310
  %v375 = vpack.c.b16 %v311, %v311
  %v376 = vpack.c.b16 %v312, %v312
  %v377 = vpack.c.b16 %v313, %v313
  %v378 = vpack.c.b16 %v314, %v314
  %v379 = vpack.c.b16 %v315, %v315
  %v380 = vpack.c.b16 %v316, %v316
  %v381 = vpack.c.b16 %v317, %v317
  %v382 = vpack.c.b16 %v318, %v318
  %v383 = vpack.c.b16 %v319, %v319
  %v384 = vpack.c.b16 %v320, %v320
  %v385 = vpack.c.b16 %v321, %v321
  %v386 = vpack.c.b16 %v322, %v322
  %v387 = vpack.c.b16 %v323, %v323
  %v388 = vpack.c.b16 %v324, %v324
  %v389 = vpack.c.b16 %v325, %v325
  %v390 = vpack.c.b16 %v326, %v326
  %v391 = vpack.c.b16 %v327, %v327
  %v392 = vpack.c.b16 %v328, %v328
  %v393 = vpack.c.b16 %v329, %v329
  %v394 = vpack.c.b16 %v330, %v330
  %v395 = vpack.c.b16 %v331, %v331
  %v396 = vpack.c.b16 %v332, %v332
  %v397 = vpack.c.b16 %v333, %v333
  %v398 = vpack.c.b16 %v334, %v334
  %v399 = vpack.c.b16 %v335, %v335
  %v400 = vpack.c.b16 %v336, %v336
  %v401 = vpack.c.b16 %v337, %v337
  %v402 = vpack.c.b16 %v338, %v338
  %v403 = vpack.c.b16 %v339, %v339
  %v404 = vpack.c.b16 %v340, %v340
  %v405 = vpack.c.b16 %v341, %v341
  %v406 = vpack.c.b16 %v342, %v342
  %v407 = vpack.c.b16 %v343, %v343
  %v408 = vpack.c.b16 %v344, %v344
  %v409 = vpack.c.b16 %v345, %v345
  %v410 = vpack.c.b16 %v346, %v346
  %v411 = vpack.c.b16 %v347, %v347
  %476 = vst [vmem:[%s3] sm:$0xf] %v348
  %477 = vst [vmem:[%s3 + $0x4] sm:$0xf] %v349
  %478 = vst [vmem:[%s3 + $0x8] sm:$0xf] %v350
  %479 = vst [vmem:[%s3 + $0xc] sm:$0xf] %v351
  %480 = vst [vmem:[%s3 + $0x10] sm:$0xf] %v352
  %481 = vst [vmem:[%s3 + $0x14] sm:$0xf] %v353
  %482 = vst [vmem:[%s3 + $0x18] sm:$0xf] %v354
  %483 = vst [vmem:[%s3 + $0x1c] sm:$0xf] %v355
  %484 = vst [vmem:[%s3 + $0x20] sm:$0xf] %v356
  %485 = vst [vmem:[%s3 + $0x24] sm:$0xf] %v357
  %486 = vst [vmem:[%s3 + $0x28] sm:$0xf] %v358
  %487 = vst [vmem:[%s3 + $0x2c] sm:$0xf] %v359
  %488 = vst [vmem:[%s3 + $0x30] sm:$0xf] %v360
  %489 = vst [vmem:[%s3 + $0x34] sm:$0xf] %v361
  %490 = vst [vmem:[%s3 + $0x38] sm:$0xf] %v362
  %491 = vst [vmem:[%s3 + $0x3c] sm:$0xf] %v363
  %492 = vst [vmem:[%s3 + $0x40] sm:$0xf] %v364
  %493 = vst [vmem:[%s3 + $0x44] sm:$0xf] %v365
  %494 = vst [vmem:[%s3 + $0x48] sm:$0xf] %v366
  %495 = vst [vmem:[%s3 + $0x4c] sm:$0xf] %v367
  %496 = vst [vmem:[%s3 + $0x50] sm:$0xf] %v368
  %497 = vst [vmem:[%s3 + $0x54] sm:$0xf] %v369
  %498 = vst [vmem:[%s3 + $0x58] sm:$0xf] %v370
  %499 = vst [vmem:[%s3 + $0x5c] sm:$0xf] %v371
  %500 = vst [vmem:[%s3 + $0x60] sm:$0xf] %v372
  %501 = vst [vmem:[%s3 + $0x64] sm:$0xf] %v373
  %502 = vst [vmem:[%s3 + $0x68] sm:$0xf] %v374
  %503 = vst [vmem:[%s3 + $0x6c] sm:$0xf] %v375
  %504 = vst [vmem:[%s3 + $0x70] sm:$0xf] %v376
  %505 = vst [vmem:[%s3 + $0x74] sm:$0xf] %v377
  %506 = vst [vmem:[%s3 + $0x78] sm:$0xf] %v378
  %507 = vst [vmem:[%s3 + $0x7c] sm:$0xf] %v379
  %508 = vst [vmem:[%s3 + $0x80] sm:$0xf] %v380
  %509 = vst [vmem:[%s3 + $0x84] sm:$0xf] %v381
  %510 = vst [vmem:[%s3 + $0x88] sm:$0xf] %v382
  %511 = vst [vmem:[%s3 + $0x8c] sm:$0xf] %v383
  %512 = vst [vmem:[%s3 + $0x90] sm:$0xf] %v384
  %513 = vst [vmem:[%s3 + $0x94] sm:$0xf] %v385
  %514 = vst [vmem:[%s3 + $0x98] sm:$0xf] %v386
  %515 = vst [vmem:[%s3 + $0x9c] sm:$0xf] %v387
  %516 = vst [vmem:[%s3 + $0xa0] sm:$0xf] %v388
  %517 = vst [vmem:[%s3 + $0xa4] sm:$0xf] %v389
  %518 = vst [vmem:[%s3 + $0xa8] sm:$0xf] %v390
  %519 = vst [vmem:[%s3 + $0xac] sm:$0xf] %v391
  %520 = vst [vmem:[%s3 + $0xb0] sm:$0xf] %v392
  %521 = vst [vmem:[%s3 + $0xb4] sm:$0xf] %v393
  %522 = vst [vmem:[%s3 + $0xb8] sm:$0xf] %v394
  %523 = vst [vmem:[%s3 + $0xbc] sm:$0xf] %v395
  %524 = vst [vmem:[%s3 + $0xc0] sm:$0xf] %v396
  %525 = vst [vmem:[%s3 + $0xc4] sm:$0xf] %v397
  %526 = vst [vmem:[%s3 + $0xc8] sm:$0xf] %v398
  %527 = vst [vmem:[%s3 + $0xcc] sm:$0xf] %v399
  %528 = vst [vmem:[%s3 + $0xd0] sm:$0xf] %v400
  %529 = vst [vmem:[%s3 + $0xd4] sm:$0xf] %v401
  %530 = vst [vmem:[%s3 + $0xd8] sm:$0xf] %v402
  %531 = vst [vmem:[%s3 + $0xdc] sm:$0xf] %v403
  %532 = vst [vmem:[%s3 + $0xe0] sm:$0xf] %v404
  %533 = vst [vmem:[%s3 + $0xe4] sm:$0xf] %v405
  %534 = vst [vmem:[%s3 + $0xe8] sm:$0xf] %v406
  %535 = vst [vmem:[%s3 + $0xec] sm:$0xf] %v407
  %536 = vst [vmem:[%s3 + $0xf0] sm:$0xf] %v408
  %537 = vst [vmem:[%s3 + $0xf4] sm:$0xf] %v409
  %538 = vst [vmem:[%s3 + $0xf8] sm:$0xf] %v410
  %539 = vst [vmem:[%s3 + $0xfc] sm:$0xf] %v411
  // Predicated region
  $region14: #{dcgan_forward.18} parent=0 // pred_check
    _
  $region15: #{dcgan_forward.18} parent=0 // pred_check_branch
    %541 = sbr.rel (0) target = $region17
  $region16: #{dcgan_forward.18} parent=0 // pred_region
    _
  $region17: #{dcgan_forward.18} parent=0 // pred_fallthru
    _
  // Predicated region
  $region18: #{dcgan_forward.18} parent=0 // pred_check
    _
  $region19: #{dcgan_forward.18} parent=0 // pred_check_branch
    %543 = sbr.rel (0) target = $region21
  $region20: #{dcgan_forward.18} parent=0 // pred_region
    _
  $region21: #{dcgan_forward.18} parent=0 // pred_fallthru
    _

// kernel: dcgan_forward.19
$region0: #{dcgan_forward.19}
  #allocation0 [shape = 'u32[]', space=smem, size = 0x4, offset = 0x4, fixed_abs, tag = 'smem constant byte address 0x4 - core index']
  #allocation1 [shape = 'u32[144,128]{1,0:T(1,128)}', space=vmem, size = 0x12000, scoped, tag = 'internal scratch']
  #allocation2 [shape = 'f32[128,256]{1,0:T(8,128)}', space=vmem, size = 0x20000, scoped, tag = 'scratch operand']
  %s0 = inlined_call_operand.vmem [shape: bf16[128,2048], index: 0, kind: input, shape index: {}]
  %s1 = inlined_call_operand.vmem [shape: bf16[2048,256], index: 1, kind: input, shape index: {}]
  %s2 = inlined_call_operand.vmem [shape: f32[128,256], index: 2, kind: output, shape index: {}]
  %s3 = sld [smem:[#allocation0]]
  $region72: #{dcgan_forward.19} parent=0
    _
  %s5 = ssub.s32 1, %s3
  %s6 = scalar_select 0, %s5, %s3
  $region1: #{dcgan_forward.19} parent=0
    #allocation3 [shape = 'u8[262144]{0}', space=vmem, size = 0x40000, scoped, tag = 'input window, operand 0']
    loop: start=0, step=1, limit=6
    $region2: #{dcgan_forward.19} parent=1 // loop_pre_header
      _
    $region3: #{dcgan_forward.19} parent=1 // loop_header
      %s8 = sphi 0, %s12
      %p9 = scmp.ge.s32.totalorder %s8, 6
      %s15 = sphi 0, %s34
      %s16 = sphi 0, %s30
      %s17 = sphi 0, %s26
      %s18 = sphi 0, %s15
      %s19 = sphi 0, %s16
      %s20 = sphi 0, %s17
      %s21 = sphi 0, %s18
      %s22 = sphi 0, %s19
      %s23 = sphi 0, %s20
      %s39 = sphi 0, %s41
      %s42 = sphi 0, %s39
      %s43 = sphi 0, %s42
      %s59 = sphi 0, %s43
      %s67 = sphi 0, %s69
      %s70 = sphi 0, %s67
      %s71 = sphi 0, %s70
      %s87 = sphi 0, %s71
      %s95 = sphi 0, %s97
      %s98 = sphi 0, %s95
      %s99 = sphi 0, %s98
      %s115 = sphi 0, %s99
    $region4: #{dcgan_forward.19} parent=1 // loop_header_branch
      %11 = sbr.rel (%p9) target = $region8
    $region5: #{dcgan_forward.19} parent=1 // loop_body
      %s13 = ssub.s32 %s8, 1
      %s14 = ssub.s32 %s8, 2
      %s24 = sadd.s32 1, %s17
      %p25 = scmp.ge.s32.totalorder %s24, 4
      %s26 = scalar_select %p25, 0, %s24
      %s27 = sadd.s32 1, %s16
      %s28 = scalar_select %p25, %s27, %s16
      %p29 = scmp.ge.s32.totalorder %s28, 1
      %s30 = scalar_select %p29, 0, %s28
      %s31 = sadd.s32 1, %s15
      %s32 = scalar_select %p29, %s31, %s15
      %p33 = scmp.ge.s32.totalorder %s32, 1
      %s34 = scalar_select %p33, 0, %s32
      %s35 = ssub.s32 %s15, %s34
      %s36 = ssub.s32 %s17, %s26
      %s37 = sor.u32 %s35, %s36
      %p38 = scmp.eq.s32.totalorder %s37, 0
      %s40 = sadd.s32 %s39, 1
      %s41 = scalar_select %p38, %s39, %s40
      %p44 = pneg %p38
      %p45 = scmp.eq.s32.totalorder %s8, 3
      %p46 = por %p44, %p45
      %p47 = scmp.ne.s32.totalorder %s39, %s42
      %p48 = scmp.eq.s32.totalorder %s8, 0
      %p49 = por %p47, %p48
      %p50 = scmp.ne.s32.totalorder %s39, %s42
      %p51 = scmp.eq.s32.totalorder %s13, 3
      %p52 = por %p50, %p51
      %p53 = scmp.ne.s32.totalorder %s42, %s43
      %p54 = scmp.eq.s32.totalorder %s13, 0
      %p55 = por %p53, %p54
      %p56 = scmp.ne.s32.totalorder %s42, %s43
      %p57 = scmp.eq.s32.totalorder %s14, 3
      %p58 = por %p56, %p57
      %p60 = scmp.ne.s32.totalorder %s43, %s59
      %p61 = scmp.eq.s32.totalorder %s14, 0
      %p62 = por %p60, %p61
      %s63 = ssub.s32 %s17, %s26
      %s64 = ssub.s32 %s16, %s30
      %s65 = sor.u32 %s63, %s64
      %p66 = scmp.eq.s32.totalorder %s65, 0
      %s68 = sadd.s32 %s67, 1
      %s69 = scalar_select %p66, %s67, %s68
      %p72 = pneg %p66
      %p73 = scmp.eq.s32.totalorder %s8, 3
      %p74 = por %p72, %p73
      %p75 = scmp.ne.s32.totalorder %s67, %s70
      %p76 = scmp.eq.s32.totalorder %s8, 0
      %p77 = por %p75, %p76
      %p78 = scmp.ne.s32.totalorder %s67, %s70
      %p79 = scmp.eq.s32.totalorder %s13, 3
      %p80 = por %p78, %p79
      %p81 = scmp.ne.s32.totalorder %s70, %s71
      %p82 = scmp.eq.s32.totalorder %s13, 0
      %p83 = por %p81, %p82
      %p84 = scmp.ne.s32.totalorder %s70, %s71
      %p85 = scmp.eq.s32.totalorder %s14, 3
      %p86 = por %p84, %p85
      %p88 = scmp.ne.s32.totalorder %s71, %s87
      %p89 = scmp.eq.s32.totalorder %s14, 0
      %p90 = por %p88, %p89
      %s91 = ssub.s32 %s15, %s34
      %s92 = ssub.s32 %s16, %s30
      %s93 = sor.u32 %s91, %s92
      %p94 = scmp.eq.s32.totalorder %s93, 0
      %s96 = sadd.s32 %s95, 1
      %s97 = scalar_select %p94, %s95, %s96
      %p100 = pneg %p94
      %p101 = scmp.eq.s32.totalorder %s8, 3
      %p102 = por %p100, %p101
      %p103 = scmp.ne.s32.totalorder %s95, %s98
      %p104 = scmp.eq.s32.totalorder %s8, 0
      %p105 = por %p103, %p104
      %p106 = scmp.ne.s32.totalorder %s95, %s98
      %p107 = scmp.eq.s32.totalorder %s13, 3
      %p108 = por %p106, %p107
      %p109 = scmp.ne.s32.totalorder %s98, %s99
      %p110 = scmp.eq.s32.totalorder %s13, 0
      %p111 = por %p109, %p110
      %p112 = scmp.ne.s32.totalorder %s98, %s99
      %p113 = scmp.eq.s32.totalorder %s14, 3
      %p114 = por %p112, %p113
      %p116 = scmp.ne.s32.totalorder %s99, %s115
      %p117 = scmp.eq.s32.totalorder %s14, 0
      %p118 = por %p116, %p117
      %p119 = scmp.le.s32.totalorder 1, %s8
      %p120 = scmp.lt.s32.totalorder %s8, 5
      %p121 = pnand %p119, %p120
      %p122 = pneg %p121
      // Predicated region
      $region9: #{dcgan_forward.19} parent=5 // pred_check
        _
      $region10: #{dcgan_forward.19} parent=5 // pred_check_branch
        %124 = sbr.rel (%p121) target = $region12
      $region11: #{dcgan_forward.19} parent=5 // pred_region
        %s125 = ssub.s32 %s8, 1
      $region12: #{dcgan_forward.19} parent=5 // pred_fallthru
        _
      %p126 = scmp.lt.s32.totalorder %s8, 4
      // Predicated region
      $region13: #{dcgan_forward.19} parent=5 // pred_check
        %p127 = pneg %p126
      $region14: #{dcgan_forward.19} parent=5 // pred_check_branch
        %129 = sbr.rel (%p127) target = $region16
      $region15: #{dcgan_forward.19} parent=5 // pred_region
        // Predicated region
        $region17: #{dcgan_forward.19} parent=15 // pred_check
          %p130 = pneg %p49
        $region18: #{dcgan_forward.19} parent=15 // pred_check_branch
          %132 = sbr.rel (%p130) target = $region20
        $region19: #{dcgan_forward.19} parent=15 // pred_region
          %s133 = sand.u32 %s39, 1
          %s134 = sand.u32 %s39, 1
          %s135 = smul.addr %s134, 256
          %s136 = scalar_lea.vmem [#allocation3], %s135
          %s137 = smul.u32 16, %s15
          %s138 = smul.u32 4, %s17
          %s139 = smul.addr %s137, 16
          %s140 = sadd.s32 %s138, %s139
          %s141 = smul.addr %s140, 4
          %s142 = scalar_lea.vmem %s0, %s141
          // Predicated region
          $region21: #{dcgan_forward.19} parent=19 // pred_check
            _
          $region22: #{dcgan_forward.19} parent=19 // pred_check_branch
            %144 = sbr.rel (0) target = $region24
          $region23: #{dcgan_forward.19} parent=19 // pred_region
            // Predicated region
            $region25: #{dcgan_forward.19} parent=23 // pred_check
              _
            $region26: #{dcgan_forward.19} parent=23 // pred_check_branch
              %146 = sbr.rel (0) target = $region28
            $region27: #{dcgan_forward.19} parent=23 // pred_region
              loop: start=0, step=1, limit=1
              $region29: #{dcgan_forward.19} parent=27 // loop_pre_header
                _
              $region30: #{dcgan_forward.19} parent=27 // loop_header
                %s148 = sphi 0, %s152
                %p149 = scmp.ge.s32.totalorder %s148, 1
                %s153 = sphi %s142, %s142
                %s154 = sphi %s136, %s136
              $region31: #{dcgan_forward.19} parent=27 // loop_header_branch
                %151 = sbr.rel (%p149) target = $region35
              $region32: #{dcgan_forward.19} parent=27 // loop_body
                %v155 = vld [vmem:[%s153] sm:$0xff]
                %156 = vst [vmem:[%s154] sm:$0xff] %v155
                %v157 = vld [vmem:[%s153 + $0x8] sm:$0xff]
                %158 = vst [vmem:[%s154 + $0x8] sm:$0xff] %v157
                %v159 = vld [vmem:[%s153 + $0x40] sm:$0xff]
                %160 = vst [vmem:[%s154 + $0x10] sm:$0xff] %v159
                %v161 = vld [vmem:[%s153 + $0x48] sm:$0xff]
                %162 = vst [vmem:[%s154 + $0x18] sm:$0xff] %v161
                %v163 = vld [vmem:[%s153 + $0x80] sm:$0xff]
                %164 = vst [vmem:[%s154 + $0x20] sm:$0xff] %v163
                %v165 = vld [vmem:[%s153 + $0x88] sm:$0xff]
                %166 = vst [vmem:[%s154 + $0x28] sm:$0xff] %v165
                %v167 = vld [vmem:[%s153 + $0xc0] sm:$0xff]
                %168 = vst [vmem:[%s154 + $0x30] sm:$0xff] %v167
                %v169 = vld [vmem:[%s153 + $0xc8] sm:$0xff]
                %170 = vst [vmem:[%s154 + $0x38] sm:$0xff] %v169
                %v171 = vld [vmem:[%s153 + $0x100] sm:$0xff]
                %172 = vst [vmem:[%s154 + $0x40] sm:$0xff] %v171
                %v173 = vld [vmem:[%s153 + $0x108] sm:$0xff]
                %174 = vst [vmem:[%s154 + $0x48] sm:$0xff] %v173
                %v175 = vld [vmem:[%s153 + $0x140] sm:$0xff]
                %176 = vst [vmem:[%s154 + $0x50] sm:$0xff] %v175
                %v177 = vld [vmem:[%s153 + $0x148] sm:$0xff]
                %178 = vst [vmem:[%s154 + $0x58] sm:$0xff] %v177
                %v179 = vld [vmem:[%s153 + $0x180] sm:$0xff]
                %180 = vst [vmem:[%s154 + $0x60] sm:$0xff] %v179
                %v181 = vld [vmem:[%s153 + $0x188] sm:$0xff]
                %182 = vst [vmem:[%s154 + $0x68] sm:$0xff] %v181
                %v183 = vld [vmem:[%s153 + $0x1c0] sm:$0xff]
                %184 = vst [vmem:[%s154 + $0x70] sm:$0xff] %v183
                %v185 = vld [vmem:[%s153 + $0x1c8] sm:$0xff]
                %186 = vst [vmem:[%s154 + $0x78] sm:$0xff] %v185
                %v187 = vld [vmem:[%s153 + $0x200] sm:$0xff]
                %188 = vst [vmem:[%s154 + $0x80] sm:$0xff] %v187
                %v189 = vld [vmem:[%s153 + $0x208] sm:$0xff]
                %190 = vst [vmem:[%s154 + $0x88] sm:$0xff] %v189
                %v191 = vld [vmem:[%s153 + $0x240] sm:$0xff]
                %192 = vst [vmem:[%s154 + $0x90] sm:$0xff] %v191
                %v193 = vld [vmem:[%s153 + $0x248] sm:$0xff]
                %194 = vst [vmem:[%s154 + $0x98] sm:$0xff] %v193
                %v195 = vld [vmem:[%s153 + $0x280] sm:$0xff]
                %196 = vst [vmem:[%s154 + $0xa0] sm:$0xff] %v195
                %v197 = vld [vmem:[%s153 + $0x288] sm:$0xff]
                %198 = vst [vmem:[%s154 + $0xa8] sm:$0xff] %v197
                %v199 = vld [vmem:[%s153 + $0x2c0] sm:$0xff]
                %200 = vst [vmem:[%s154 + $0xb0] sm:$0xff] %v199
                %v201 = vld [vmem:[%s153 + $0x2c8] sm:$0xff]
                %202 = vst [vmem:[%s154 + $0xb8] sm:$0xff] %v201
                %v203 = vld [vmem:[%s153 + $0x300] sm:$0xff]
                %204 = vst [vmem:[%s154 + $0xc0] sm:$0xff] %v203
                %v205 = vld [vmem:[%s153 + $0x308] sm:$0xff]
                %206 = vst [vmem:[%s154 + $0xc8] sm:$0xff] %v205
                %v207 = vld [vmem:[%s153 + $0x340] sm:$0xff]
                %208 = vst [vmem:[%s154 + $0xd0] sm:$0xff] %v207
                %v209 = vld [vmem:[%s153 + $0x348] sm:$0xff]
                %210 = vst [vmem:[%s154 + $0xd8] sm:$0xff] %v209
                %v211 = vld [vmem:[%s153 + $0x380] sm:$0xff]
                %212 = vst [vmem:[%s154 + $0xe0] sm:$0xff] %v211
                %v213 = vld [vmem:[%s153 + $0x388] sm:$0xff]
                %214 = vst [vmem:[%s154 + $0xe8] sm:$0xff] %v213
                %v215 = vld [vmem:[%s153 + $0x3c0] sm:$0xff]
                %216 = vst [vmem:[%s154 + $0xf0] sm:$0xff] %v215
                %v217 = vld [vmem:[%s153 + $0x3c8] sm:$0xff]
                %218 = vst [vmem:[%s154 + $0xf8] sm:$0xff] %v217
              $region33: #{dcgan_forward.19} parent=27 // loop_footer
                %s152 = sadd.s32 1, %s148
              $region34: #{dcgan_forward.19} parent=27 // loop_footer_branch
                %147 = sbr.rel target = $region30
              $region35: #{dcgan_forward.19} parent=27 // loop_exit
                _
            $region28: #{dcgan_forward.19} parent=23 // pred_fallthru
              _
            // Predicated region
            $region36: #{dcgan_forward.19} parent=23 // pred_check
              _
            $region37: #{dcgan_forward.19} parent=23 // pred_check_branch
              %220 = sbr.rel target = $region39
            $region38: #{dcgan_forward.19} parent=23 // pred_region
              _
            $region39: #{dcgan_forward.19} parent=23 // pred_fallthru
              _
          $region24: #{dcgan_forward.19} parent=19 // pred_fallthru
            _
          %221 = vnop
        $region20: #{dcgan_forward.19} parent=15 // pred_fallthru
          _
        // Predicated region
        $region40: #{dcgan_forward.19} parent=15 // pred_check
          %p222 = pneg %p77
        $region41: #{dcgan_forward.19} parent=15 // pred_check_branch
          %224 = sbr.rel (%p222) target = $region43
        $region42: #{dcgan_forward.19} parent=15 // pred_region
          %s225 = smul.u32 64, %s17
          %s226 = smul.u32 2, %s16
          %p227 = scmp.lt.s32.totalorder %s225, 255
          %s228 = scalar_select %p227, %s225, 255
          %p229 = scmp.lt.s32.totalorder %s226, 1
          %s230 = scalar_select %p229, %s226, 1
          %s231 = smul.addr %s228, 2
          %s232 = sadd.s32 %s230, %s231
          %s233 = smul.addr %s232, 4
          %s234 = scalar_lea.vmem %s1, %s233
          %s235 = smul.u32 64, %s17
          %s236 = smul.u32 2, %s16
        $region43: #{dcgan_forward.19} parent=15 // pred_fallthru
          _
      $region16: #{dcgan_forward.19} parent=5 // pred_fallthru
        _
      %p237 = scmp.le.s32.totalorder 1, %s8
      %p238 = scmp.lt.s32.totalorder %s8, 5
      %p239 = pnand %p237, %p238
      %p240 = pneg %p239
      // Predicated region
      $region44: #{dcgan_forward.19} parent=5 // pred_check
        _
      $region45: #{dcgan_forward.19} parent=5 // pred_check_branch
        %242 = sbr.rel (%p239) target = $region47
      $region46: #{dcgan_forward.19} parent=5 // pred_region
        %s243 = ssub.s32 %s8, 1
        %s244 = sand.u32 %s42, 1
        %s245 = sand.u32 %s42, 1
        %s246 = smul.addr %s245, 256
        %s247 = scalar_lea.vmem [#allocation3], %s246
        // Predicated region
        $region48: #{dcgan_forward.19} parent=46 // pred_check
          %p248 = pneg %p55
        $region49: #{dcgan_forward.19} parent=46 // pred_check_branch
          %250 = sbr.rel (%p248) target = $region51
        $region50: #{dcgan_forward.19} parent=46 // pred_region
          _
        $region51: #{dcgan_forward.19} parent=46 // pred_fallthru
          _
        %s251 = sand.u32 %s42, 1
        %s252 = sand.u32 %s42, 1
        %s253 = smul.addr %s252, 256
        %s254 = scalar_lea.vmem [#allocation3], %s253
        %p255 = pneg %p55
        %p256 = pneg %p52
        %s257 = smul.u32 64, %s20
        %s258 = smul.u32 2, %s19
        %p259 = scmp.lt.s32.totalorder %s257, 255
        %s260 = scalar_select %p259, %s257, 255
        %p261 = scmp.lt.s32.totalorder %s258, 1
        %s262 = scalar_select %p261, %s258, 1
        %s263 = smul.addr %s260, 2
        %s264 = sadd.s32 %s262, %s263
        %s265 = smul.addr %s264, 4
        %s266 = scalar_lea.vmem %s1, %s265
        %p267 = pneg %p83
        %p268 = pneg %p80
        %p269 = pneg %p111
        %p270 = pneg %p108
        %s271 = smul.u32 16, %s18
        %s272 = smul.u32 2, %s19
        %p273 = scmp.lt.s32.totalorder %s271, 15
        %s274 = scalar_select %p273, %s271, 15
        %p275 = scmp.lt.s32.totalorder %s272, 1
        %s276 = scalar_select %p275, %s272, 1
        %s277 = smul.addr %s274, 2
        %s278 = sadd.s32 %s276, %s277
        %s279 = smul.addr %s278, 8
        %s280 = scalar_lea.vmem %s2, %s279
        %s281 = smul.u32 16, %s18
        %s282 = smul.u32 4, %s20
        %s283 = smul.u32 64, %s20
        %s284 = smul.u32 2, %s19
        %p285 = scmp.lt.s32.totalorder %s283, 255
        %s286 = scalar_select %p285, %s283, 255
        %p287 = scmp.lt.s32.totalorder %s284, 1
        %s288 = scalar_select %p287, %s284, 1
        %s289 = smul.addr %s286, 2
        %s290 = sadd.s32 %s288, %s289
        %s291 = smul.addr %s290, 4
        %s292 = scalar_lea.vmem %s1, %s291
        %s293 = smul.u32 64, %s20
        %s294 = smul.u32 2, %s19
        %s295 = smul.u32 16, %s18
        %s296 = smul.u32 2, %s19
        %p297 = scmp.lt.s32.totalorder %s295, 15
        %s298 = scalar_select %p297, %s295, 15
        %p299 = scmp.lt.s32.totalorder %s296, 1
        %s300 = scalar_select %p299, %s296, 1
        %s301 = smul.addr %s298, 2
        %s302 = sadd.s32 %s300, %s301
        %s303 = smul.addr %s302, 8
        %s304 = scalar_lea.vmem %s2, %s303
        %s305 = smul.u32 16, %s18
        %s306 = smul.u32 2, %s19
        %v307 = vld [vmem:[%s247] sm:$0xff]
        %v308 = vld [vmem:[%s247 + $0x8] sm:$0xff]
        %v309 = vld [vmem:[%s247 + $0x10] sm:$0xff]
        %v310 = vld [vmem:[%s247 + $0x18] sm:$0xff]
        %v311 = vld [vmem:[%s247 + $0x20] sm:$0xff]
        %v312 = vld [vmem:[%s247 + $0x28] sm:$0xff]
        %v313 = vld [vmem:[%s247 + $0x30] sm:$0xff]
        %v314 = vld [vmem:[%s247 + $0x38] sm:$0xff]
        %v315 = vld [vmem:[%s247 + $0x40] sm:$0xff]
        %v316 = vld [vmem:[%s247 + $0x48] sm:$0xff]
        %v317 = vld [vmem:[%s247 + $0x50] sm:$0xff]
        %v318 = vld [vmem:[%s247 + $0x58] sm:$0xff]
        %v319 = vld [vmem:[%s247 + $0x60] sm:$0xff]
        %v320 = vld [vmem:[%s247 + $0x68] sm:$0xff]
        %v321 = vld [vmem:[%s247 + $0x70] sm:$0xff]
        %v322 = vld [vmem:[%s247 + $0x78] sm:$0xff]
        %v323 = vld [vmem:[%s247 + $0x80] sm:$0xff]
        %v324 = vld [vmem:[%s247 + $0x88] sm:$0xff]
        %v325 = vld [vmem:[%s247 + $0x90] sm:$0xff]
        %v326 = vld [vmem:[%s247 + $0x98] sm:$0xff]
        %v327 = vld [vmem:[%s247 + $0xa0] sm:$0xff]
        %v328 = vld [vmem:[%s247 + $0xa8] sm:$0xff]
        %v329 = vld [vmem:[%s247 + $0xb0] sm:$0xff]
        %v330 = vld [vmem:[%s247 + $0xb8] sm:$0xff]
        %v331 = vld [vmem:[%s247 + $0xc0] sm:$0xff]
        %v332 = vld [vmem:[%s247 + $0xc8] sm:$0xff]
        %v333 = vld [vmem:[%s247 + $0xd0] sm:$0xff]
        %v334 = vld [vmem:[%s247 + $0xd8] sm:$0xff]
        %v335 = vld [vmem:[%s247 + $0xe0] sm:$0xff]
        %v336 = vld [vmem:[%s247 + $0xe8] sm:$0xff]
        %v337 = vld [vmem:[%s247 + $0xf0] sm:$0xff]
        %v338 = vld [vmem:[%s247 + $0xf8] sm:$0xff]
        %v339 = vld [vmem:[%s292] sm:$0xff]
        %v340 = vld [vmem:[%s292 + $0x8] sm:$0xff]
        %v341 = vld [vmem:[%s292 + $0x10] sm:$0xff]
        %v342 = vld [vmem:[%s292 + $0x18] sm:$0xff]
        %v343 = vld [vmem:[%s292 + $0x20] sm:$0xff]
        %v344 = vld [vmem:[%s292 + $0x28] sm:$0xff]
        %v345 = vld [vmem:[%s292 + $0x30] sm:$0xff]
        %v346 = vld [vmem:[%s292 + $0x38] sm:$0xff]
        %v347 = vld [vmem:[%s292 + $0x40] sm:$0xff]
        %v348 = vld [vmem:[%s292 + $0x48] sm:$0xff]
        %v349 = vld [vmem:[%s292 + $0x50] sm:$0xff]
        %v350 = vld [vmem:[%s292 + $0x58] sm:$0xff]
        %v351 = vld [vmem:[%s292 + $0x60] sm:$0xff]
        %v352 = vld [vmem:[%s292 + $0x68] sm:$0xff]
        %v353 = vld [vmem:[%s292 + $0x70] sm:$0xff]
        %v354 = vld [vmem:[%s292 + $0x78] sm:$0xff]
        %v355 = vld [vmem:[%s292 + $0x80] sm:$0xff]
        %v356 = vld [vmem:[%s292 + $0x88] sm:$0xff]
        %v357 = vld [vmem:[%s292 + $0x90] sm:$0xff]
        %v358 = vld [vmem:[%s292 + $0x98] sm:$0xff]
        %v359 = vld [vmem:[%s292 + $0xa0] sm:$0xff]
        %v360 = vld [vmem:[%s292 + $0xa8] sm:$0xff]
        %v361 = vld [vmem:[%s292 + $0xb0] sm:$0xff]
        %v362 = vld [vmem:[%s292 + $0xb8] sm:$0xff]
        %v363 = vld [vmem:[%s292 + $0xc0] sm:$0xff]
        %v364 = vld [vmem:[%s292 + $0xc8] sm:$0xff]
        %v365 = vld [vmem:[%s292 + $0xd0] sm:$0xff]
        %v366 = vld [vmem:[%s292 + $0xd8] sm:$0xff]
        %v367 = vld [vmem:[%s292 + $0xe0] sm:$0xff]
        %v368 = vld [vmem:[%s292 + $0xe8] sm:$0xff]
        %v369 = vld [vmem:[%s292 + $0xf0] sm:$0xff]
        %v370 = vld [vmem:[%s292 + $0xf8] sm:$0xff]
        %v371 = vld [vmem:[%s292 + $0x100] sm:$0xff]
        %v372 = vld [vmem:[%s292 + $0x108] sm:$0xff]
        %v373 = vld [vmem:[%s292 + $0x110] sm:$0xff]
        %v374 = vld [vmem:[%s292 + $0x118] sm:$0xff]
        %v375 = vld [vmem:[%s292 + $0x120] sm:$0xff]
        %v376 = vld [vmem:[%s292 + $0x128] sm:$0xff]
        %v377 = vld [vmem:[%s292 + $0x130] sm:$0xff]
        %v378 = vld [vmem:[%s292 + $0x138] sm:$0xff]
        %v379 = vld [vmem:[%s292 + $0x140] sm:$0xff]
        %v380 = vld [vmem:[%s292 + $0x148] sm:$0xff]
        %v381 = vld [vmem:[%s292 + $0x150] sm:$0xff]
        %v382 = vld [vmem:[%s292 + $0x158] sm:$0xff]
        %v383 = vld [vmem:[%s292 + $0x160] sm:$0xff]
        %v384 = vld [vmem:[%s292 + $0x168] sm:$0xff]
        %v385 = vld [vmem:[%s292 + $0x170] sm:$0xff]
        %v386 = vld [vmem:[%s292 + $0x178] sm:$0xff]
        %v387 = vld [vmem:[%s292 + $0x180] sm:$0xff]
        %v388 = vld [vmem:[%s292 + $0x188] sm:$0xff]
        %v389 = vld [vmem:[%s292 + $0x190] sm:$0xff]
        %v390 = vld [vmem:[%s292 + $0x198] sm:$0xff]
        %v391 = vld [vmem:[%s292 + $0x1a0] sm:$0xff]
        %v392 = vld [vmem:[%s292 + $0x1a8] sm:$0xff]
        %v393 = vld [vmem:[%s292 + $0x1b0] sm:$0xff]
        %v394 = vld [vmem:[%s292 + $0x1b8] sm:$0xff]
        %v395 = vld [vmem:[%s292 + $0x1c0] sm:$0xff]
        %v396 = vld [vmem:[%s292 + $0x1c8] sm:$0xff]
        %v397 = vld [vmem:[%s292 + $0x1d0] sm:$0xff]
        %v398 = vld [vmem:[%s292 + $0x1d8] sm:$0xff]
        %v399 = vld [vmem:[%s292 + $0x1e0] sm:$0xff]
        %v400 = vld [vmem:[%s292 + $0x1e8] sm:$0xff]
        %v401 = vld [vmem:[%s292 + $0x1f0] sm:$0xff]
        %v402 = vld [vmem:[%s292 + $0x1f8] sm:$0xff]
        %v435 = vunpack.c.l.b16 %v307
        %v436 = vunpack.c.h.b16 %v307
        %v437 = vunpack.c.l.b16 %v308
        %v438 = vunpack.c.h.b16 %v308
        %v439 = vunpack.c.l.b16 %v309
        %v440 = vunpack.c.h.b16 %v309
        %v441 = vunpack.c.l.b16 %v310
        %v442 = vunpack.c.h.b16 %v310
        %v443 = vunpack.c.l.b16 %v311
        %v444 = vunpack.c.h.b16 %v311
        %v445 = vunpack.c.l.b16 %v312
        %v446 = vunpack.c.h.b16 %v312
        %v447 = vunpack.c.l.b16 %v313
        %v448 = vunpack.c.h.b16 %v313
        %v449 = vunpack.c.l.b16 %v314
        %v450 = vunpack.c.h.b16 %v314
        %v451 = vunpack.c.l.b16 %v315
        %v452 = vunpack.c.h.b16 %v315
        %v453 = vunpack.c.l.b16 %v316
        %v454 = vunpack.c.h.b16 %v316
        %v455 = vunpack.c.l.b16 %v317
        %v456 = vunpack.c.h.b16 %v317
        %v457 = vunpack.c.l.b16 %v318
        %v458 = vunpack.c.h.b16 %v318
        %v459 = vunpack.c.l.b16 %v319
        %v460 = vunpack.c.h.b16 %v319
        %v461 = vunpack.c.l.b16 %v320
        %v462 = vunpack.c.h.b16 %v320
        %v463 = vunpack.c.l.b16 %v321
        %v464 = vunpack.c.h.b16 %v321
        %v465 = vunpack.c.l.b16 %v322
        %v466 = vunpack.c.h.b16 %v322
        %v467 = vunpack.c.l.b16 %v323
        %v468 = vunpack.c.h.b16 %v323
        %v469 = vunpack.c.l.b16 %v324
        %v470 = vunpack.c.h.b16 %v324
        %v471 = vunpack.c.l.b16 %v325
        %v472 = vunpack.c.h.b16 %v325
        %v473 = vunpack.c.l.b16 %v326
        %v474 = vunpack.c.h.b16 %v326
        %v475 = vunpack.c.l.b16 %v327
        %v476 = vunpack.c.h.b16 %v327
        %v477 = vunpack.c.l.b16 %v328
        %v478 = vunpack.c.h.b16 %v328
        %v479 = vunpack.c.l.b16 %v329
        %v480 = vunpack.c.h.b16 %v329
        %v481 = vunpack.c.l.b16 %v330
        %v482 = vunpack.c.h.b16 %v330
        %v483 = vunpack.c.l.b16 %v331
        %v484 = vunpack.c.h.b16 %v331
        %v485 = vunpack.c.l.b16 %v332
        %v486 = vunpack.c.h.b16 %v332
        %v487 = vunpack.c.l.b16 %v333
        %v488 = vunpack.c.h.b16 %v333
        %v489 = vunpack.c.l.b16 %v334
        %v490 = vunpack.c.h.b16 %v334
        %v491 = vunpack.c.l.b16 %v335
        %v492 = vunpack.c.h.b16 %v335
        %v493 = vunpack.c.l.b16 %v336
        %v494 = vunpack.c.h.b16 %v336
        %v495 = vunpack.c.l.b16 %v337
        %v496 = vunpack.c.h.b16 %v337
        %v497 = vunpack.c.l.b16 %v338
        %v498 = vunpack.c.h.b16 %v338
        %v499 = vpack.c.b16 %v439, %v435
        %v500 = vpack.c.b16 %v440, %v436
        %v501 = vpack.c.b16 %v441, %v437
        %v502 = vpack.c.b16 %v442, %v438
        %v503 = vpack.c.b16 %v447, %v443
        %v504 = vpack.c.b16 %v448, %v444
        %v505 = vpack.c.b16 %v449, %v445
        %v506 = vpack.c.b16 %v450, %v446
        %v507 = vpack.c.b16 %v455, %v451
        %v508 = vpack.c.b16 %v456, %v452
        %v509 = vpack.c.b16 %v457, %v453
        %v510 = vpack.c.b16 %v458, %v454
        %v511 = vpack.c.b16 %v463, %v459
        %v512 = vpack.c.b16 %v464, %v460
        %v513 = vpack.c.b16 %v465, %v461
        %v514 = vpack.c.b16 %v466, %v462
        %v515 = vpack.c.b16 %v471, %v467
        %v516 = vpack.c.b16 %v472, %v468
        %v517 = vpack.c.b16 %v473, %v469
        %v518 = vpack.c.b16 %v474, %v470
        %v519 = vpack.c.b16 %v479, %v475
        %v520 = vpack.c.b16 %v480, %v476
        %v521 = vpack.c.b16 %v481, %v477
        %v522 = vpack.c.b16 %v482, %v478
        %v523 = vpack.c.b16 %v487, %v483
        %v524 = vpack.c.b16 %v488, %v484
        %v525 = vpack.c.b16 %v489, %v485
        %v526 = vpack.c.b16 %v490, %v486
        %v527 = vpack.c.b16 %v495, %v491
        %v528 = vpack.c.b16 %v496, %v492
        %v529 = vpack.c.b16 %v497, %v493
        %v530 = vpack.c.b16 %v498, %v494
        %v627 = vunpack.c.l.b16 %v339
        %v628 = vunpack.c.h.b16 %v339
        %v629 = vunpack.c.l.b16 %v340
        %v630 = vunpack.c.h.b16 %v340
        %v631 = vunpack.c.l.b16 %v341
        %v632 = vunpack.c.h.b16 %v341
        %v633 = vunpack.c.l.b16 %v342
        %v634 = vunpack.c.h.b16 %v342
        %v635 = vunpack.c.l.b16 %v343
        %v636 = vunpack.c.h.b16 %v343
        %v637 = vunpack.c.l.b16 %v344
        %v638 = vunpack.c.h.b16 %v344
        %v639 = vunpack.c.l.b16 %v345
        %v640 = vunpack.c.h.b16 %v345
        %v641 = vunpack.c.l.b16 %v346
        %v642 = vunpack.c.h.b16 %v346
        %v643 = vunpack.c.l.b16 %v347
        %v644 = vunpack.c.h.b16 %v347
        %v645 = vunpack.c.l.b16 %v348
        %v646 = vunpack.c.h.b16 %v348
        %v647 = vunpack.c.l.b16 %v349
        %v648 = vunpack.c.h.b16 %v349
        %v649 = vunpack.c.l.b16 %v350
        %v650 = vunpack.c.h.b16 %v350
        %v651 = vunpack.c.l.b16 %v351
        %v652 = vunpack.c.h.b16 %v351
        %v653 = vunpack.c.l.b16 %v352
        %v654 = vunpack.c.h.b16 %v352
        %v655 = vunpack.c.l.b16 %v353
        %v656 = vunpack.c.h.b16 %v353
        %v657 = vunpack.c.l.b16 %v354
        %v658 = vunpack.c.h.b16 %v354
        %v659 = vunpack.c.l.b16 %v355
        %v660 = vunpack.c.h.b16 %v355
        %v661 = vunpack.c.l.b16 %v356
        %v662 = vunpack.c.h.b16 %v356
        %v663 = vunpack.c.l.b16 %v357
        %v664 = vunpack.c.h.b16 %v357
        %v665 = vunpack.c.l.b16 %v358
        %v666 = vunpack.c.h.b16 %v358
        %v667 = vunpack.c.l.b16 %v359
        %v668 = vunpack.c.h.b16 %v359
        %v669 = vunpack.c.l.b16 %v360
        %v670 = vunpack.c.h.b16 %v360
        %v671 = vunpack.c.l.b16 %v361
        %v672 = vunpack.c.h.b16 %v361
        %v673 = vunpack.c.l.b16 %v362
        %v674 = vunpack.c.h.b16 %v362
        %v675 = vunpack.c.l.b16 %v363
        %v676 = vunpack.c.h.b16 %v363
        %v677 = vunpack.c.l.b16 %v364
        %v678 = vunpack.c.h.b16 %v364
        %v679 = vunpack.c.l.b16 %v365
        %v680 = vunpack.c.h.b16 %v365
        %v681 = vunpack.c.l.b16 %v366
        %v682 = vunpack.c.h.b16 %v366
        %v683 = vunpack.c.l.b16 %v367
        %v684 = vunpack.c.h.b16 %v367
        %v685 = vunpack.c.l.b16 %v368
        %v686 = vunpack.c.h.b16 %v368
        %v687 = vunpack.c.l.b16 %v369
        %v688 = vunpack.c.h.b16 %v369
        %v689 = vunpack.c.l.b16 %v370
        %v690 = vunpack.c.h.b16 %v370
        %v691 = vunpack.c.l.b16 %v371
        %v692 = vunpack.c.h.b16 %v371
        %v693 = vunpack.c.l.b16 %v372
        %v694 = vunpack.c.h.b16 %v372
        %v695 = vunpack.c.l.b16 %v373
        %v696 = vunpack.c.h.b16 %v373
        %v697 = vunpack.c.l.b16 %v374
        %v698 = vunpack.c.h.b16 %v374
        %v699 = vunpack.c.l.b16 %v375
        %v700 = vunpack.c.h.b16 %v375
        %v701 = vunpack.c.l.b16 %v376
        %v702 = vunpack.c.h.b16 %v376
        %v703 = vunpack.c.l.b16 %v377
        %v704 = vunpack.c.h.b16 %v377
        %v705 = vunpack.c.l.b16 %v378
        %v706 = vunpack.c.h.b16 %v378
        %v707 = vunpack.c.l.b16 %v379
        %v708 = vunpack.c.h.b16 %v379
        %v709 = vunpack.c.l.b16 %v380
        %v710 = vunpack.c.h.b16 %v380
        %v711 = vunpack.c.l.b16 %v381
        %v712 = vunpack.c.h.b16 %v381
        %v713 = vunpack.c.l.b16 %v382
        %v714 = vunpack.c.h.b16 %v382
        %v715 = vunpack.c.l.b16 %v383
        %v716 = vunpack.c.h.b16 %v383
        %v717 = vunpack.c.l.b16 %v384
        %v718 = vunpack.c.h.b16 %v384
        %v719 = vunpack.c.l.b16 %v385
        %v720 = vunpack.c.h.b16 %v385
        %v721 = vunpack.c.l.b16 %v386
        %v722 = vunpack.c.h.b16 %v386
        %v723 = vunpack.c.l.b16 %v387
        %v724 = vunpack.c.h.b16 %v387
        %v725 = vunpack.c.l.b16 %v388
        %v726 = vunpack.c.h.b16 %v388
        %v727 = vunpack.c.l.b16 %v389
        %v728 = vunpack.c.h.b16 %v389
        %v729 = vunpack.c.l.b16 %v390
        %v730 = vunpack.c.h.b16 %v390
        %v731 = vunpack.c.l.b16 %v391
        %v732 = vunpack.c.h.b16 %v391
        %v733 = vunpack.c.l.b16 %v392
        %v734 = vunpack.c.h.b16 %v392
        %v735 = vunpack.c.l.b16 %v393
        %v736 = vunpack.c.h.b16 %v393
        %v737 = vunpack.c.l.b16 %v394
        %v738 = vunpack.c.h.b16 %v394
        %v739 = vunpack.c.l.b16 %v395
        %v740 = vunpack.c.h.b16 %v395
        %v741 = vunpack.c.l.b16 %v396
        %v742 = vunpack.c.h.b16 %v396
        %v743 = vunpack.c.l.b16 %v397
        %v744 = vunpack.c.h.b16 %v397
        %v745 = vunpack.c.l.b16 %v398
        %v746 = vunpack.c.h.b16 %v398
        %v747 = vunpack.c.l.b16 %v399
        %v748 = vunpack.c.h.b16 %v399
        %v749 = vunpack.c.l.b16 %v400
        %v750 = vunpack.c.h.b16 %v400
        %v751 = vunpack.c.l.b16 %v401
        %v752 = vunpack.c.h.b16 %v401
        %v753 = vunpack.c.l.b16 %v402
        %v754 = vunpack.c.h.b16 %v402
        %v755 = vpack.c.b16 %v629, %v627
        %v756 = vpack.c.b16 %v630, %v628
        %v757 = vpack.c.b16 %v633, %v631
        %v758 = vpack.c.b16 %v634, %v632
        %v759 = vpack.c.b16 %v637, %v635
        %v760 = vpack.c.b16 %v638, %v636
        %v761 = vpack.c.b16 %v641, %v639
        %v762 = vpack.c.b16 %v642, %v640
        %v763 = vpack.c.b16 %v645, %v643
        %v764 = vpack.c.b16 %v646, %v644
        %v765 = vpack.c.b16 %v649, %v647
        %v766 = vpack.c.b16 %v650, %v648
        %v767 = vpack.c.b16 %v653, %v651
        %v768 = vpack.c.b16 %v654, %v652
        %v769 = vpack.c.b16 %v657, %v655
        %v770 = vpack.c.b16 %v658, %v656
        %v771 = vpack.c.b16 %v661, %v659
        %v772 = vpack.c.b16 %v662, %v660
        %v773 = vpack.c.b16 %v665, %v663
        %v774 = vpack.c.b16 %v666, %v664
        %v775 = vpack.c.b16 %v669, %v667
        %v776 = vpack.c.b16 %v670, %v668
        %v777 = vpack.c.b16 %v673, %v671
        %v778 = vpack.c.b16 %v674, %v672
        %v779 = vpack.c.b16 %v677, %v675
        %v780 = vpack.c.b16 %v678, %v676
        %v781 = vpack.c.b16 %v681, %v679
        %v782 = vpack.c.b16 %v682, %v680
        %v783 = vpack.c.b16 %v685, %v683
        %v784 = vpack.c.b16 %v686, %v684
        %v785 = vpack.c.b16 %v689, %v687
        %v786 = vpack.c.b16 %v690, %v688
        %v787 = vpack.c.b16 %v693, %v691
        %v788 = vpack.c.b16 %v694, %v692
        %v789 = vpack.c.b16 %v697, %v695
        %v790 = vpack.c.b16 %v698, %v696
        %v791 = vpack.c.b16 %v701, %v699
        %v792 = vpack.c.b16 %v702, %v700
        %v793 = vpack.c.b16 %v705, %v703
        %v794 = vpack.c.b16 %v706, %v704
        %v795 = vpack.c.b16 %v709, %v707
        %v796 = vpack.c.b16 %v710, %v708
        %v797 = vpack.c.b16 %v713, %v711
        %v798 = vpack.c.b16 %v714, %v712
        %v799 = vpack.c.b16 %v717, %v715
        %v800 = vpack.c.b16 %v718, %v716
        %v801 = vpack.c.b16 %v721, %v719
        %v802 = vpack.c.b16 %v722, %v720
        %v803 = vpack.c.b16 %v725, %v723
        %v804 = vpack.c.b16 %v726, %v724
        %v805 = vpack.c.b16 %v729, %v727
        %v806 = vpack.c.b16 %v730, %v728
        %v807 = vpack.c.b16 %v733, %v731
        %v808 = vpack.c.b16 %v734, %v732
        %v809 = vpack.c.b16 %v737, %v735
        %v810 = vpack.c.b16 %v738, %v736
        %v811 = vpack.c.b16 %v741, %v739
        %v812 = vpack.c.b16 %v742, %v740
        %v813 = vpack.c.b16 %v745, %v743
        %v814 = vpack.c.b16 %v746, %v744
        %v815 = vpack.c.b16 %v749, %v747
        %v816 = vpack.c.b16 %v750, %v748
        %v817 = vpack.c.b16 %v753, %v751
        %v818 = vpack.c.b16 %v754, %v752
        %883 = vmatprep.subr.bf16.mxu0 %v756
        %884 = vmatpush1.bf16.msra.mxu0 %v755
        %885 = vmatprep.subr.bf16.mxu0 %v758
        %886 = vmatpush1.bf16.msra.mxu0 %v757
        %887 = vmatprep.subr.bf16.mxu0 %v760
        %888 = vmatpush1.bf16.msra.mxu0 %v759
        %889 = vmatprep.subr.bf16.mxu0 %v762
        %890 = vmatpush1.bf16.msra.mxu0 %v761
        %891 = vmatprep.subr.bf16.mxu0 %v764
        %892 = vmatpush1.bf16.msra.mxu0 %v763
        %893 = vmatprep.subr.bf16.mxu0 %v766
        %894 = vmatpush1.bf16.msra.mxu0 %v765
        %895 = vmatprep.subr.bf16.mxu0 %v768
        %896 = vmatpush1.bf16.msra.mxu0 %v767
        %897 = vmatprep.subr.bf16.mxu0 %v770
        %898 = vmatpush1.bf16.msra.mxu0 %v769
        %899 = vmatprep.subr.bf16.mxu0 %v772
        %900 = vmatpush1.bf16.msra.mxu0 %v771
        %901 = vmatprep.subr.bf16.mxu0 %v774
        %902 = vmatpush1.bf16.msra.mxu0 %v773
        %903 = vmatprep.subr.bf16.mxu0 %v776
        %904 = vmatpush1.bf16.msra.mxu0 %v775
        %905 = vmatprep.subr.bf16.mxu0 %v778
        %906 = vmatpush1.bf16.msra.mxu0 %v777
        %907 = vmatprep.subr.bf16.mxu0 %v780
        %908 = vmatpush1.bf16.msra.mxu0 %v779
        %909 = vmatprep.subr.bf16.mxu0 %v782
        %910 = vmatpush1.bf16.msra.mxu0 %v781
        %911 = vmatprep.subr.bf16.mxu0 %v784
        %912 = vmatpush1.bf16.msra.mxu0 %v783
        %913 = vmatprep.subr.bf16.mxu0 %v786
        %914 = vmatpush1.bf16.msra.mxu0 %v785
        %915 = vmatprep.mubr.bf16.mxu0 %v500
        %916 = vmatmul.mubr.bf16.gmra.mrb[0].mxu0 %v499
        %v917 = vpop.f32.mrb[0].mxu0
        %v918 = vadd.f32 0.0, %v917
        %v919 = vpop.f32.mrb[0].mxu0
        %v920 = vadd.f32 0.0, %v919
        %v921 = vpop.f32.mrb[0].mxu0
        %v922 = vadd.f32 0.0, %v921
        %v923 = vpop.f32.mrb[0].mxu0
        %v924 = vadd.f32 0.0, %v923
        %925 = vmatprep.mubr.bf16.mxu0 %v504
        %926 = vmatmul.mubr.bf16.gmra.mrb[0].mxu0 %v503
        %v927 = vpop.f32.mrb[0].mxu0
        %v928 = vadd.f32 0.0, %v927
        %v929 = vpop.f32.mrb[0].mxu0
        %v930 = vadd.f32 0.0, %v929
        %v931 = vpop.f32.mrb[0].mxu0
        %v932 = vadd.f32 0.0, %v931
        %v933 = vpop.f32.mrb[0].mxu0
        %v934 = vadd.f32 0.0, %v933
        %935 = vmatprep.mubr.bf16.mxu0 %v508
        %936 = vmatmul.mubr.bf16.gmra.mrb[0].mxu0 %v507
        %v937 = vpop.f32.mrb[0].mxu0
        %v938 = vadd.f32 0.0, %v937
        %v939 = vpop.f32.mrb[0].mxu0
        %v940 = vadd.f32 0.0, %v939
        %v941 = vpop.f32.mrb[0].mxu0
        %v942 = vadd.f32 0.0, %v941
        %v943 = vpop.f32.mrb[0].mxu0
        %v944 = vadd.f32 0.0, %v943
        %945 = vmatprep.mubr.bf16.mxu0 %v512
        %946 = vmatmul.mubr.bf16.gmra.mrb[0].mxu0 %v511
        %v947 = vpop.f32.mrb[0].mxu0
        %v948 = vadd.f32 0.0, %v947
        %v949 = vpop.f32.mrb[0].mxu0
        %v950 = vadd.f32 0.0, %v949
        %v951 = vpop.f32.mrb[0].mxu0
        %v952 = vadd.f32 0.0, %v951
        %v953 = vpop.f32.mrb[0].mxu0
        %v954 = vadd.f32 0.0, %v953
        %955 = vmatprep.mubr.bf16.mxu0 %v516
        %956 = vmatmul.mubr.bf16.gmra.mrb[0].mxu0 %v515
        %v957 = vpop.f32.mrb[0].mxu0
        %v958 = vadd.f32 0.0, %v957
        %v959 = vpop.f32.mrb[0].mxu0
        %v960 = vadd.f32 0.0, %v959
        %v961 = vpop.f32.mrb[0].mxu0
        %v962 = vadd.f32 0.0, %v961
        %v963 = vpop.f32.mrb[0].mxu0
        %v964 = vadd.f32 0.0, %v963
        %965 = vmatprep.mubr.bf16.mxu0 %v520
        %966 = vmatmul.mubr.bf16.gmra.mrb[0].mxu0 %v519
        %v967 = vpop.f32.mrb[0].mxu0
        %v968 = vadd.f32 0.0, %v967
        %v969 = vpop.f32.mrb[0].mxu0
        %v970 = vadd.f32 0.0, %v969
        %v971 = vpop.f32.mrb[0].mxu0
        %v972 = vadd.f32 0.0, %v971
        %v973 = vpop.f32.mrb[0].mxu0
        %v974 = vadd.f32 0.0, %v973
        %975 = vmatprep.mubr.bf16.mxu0 %v524
        %976 = vmatmul.mubr.bf16.gmra.mrb[0].mxu0 %v523
        %v977 = vpop.f32.mrb[0].mxu0
        %v978 = vadd.f32 0.0, %v977
        %v979 = vpop.f32.mrb[0].mxu0
        %v980 = vadd.f32 0.0, %v979
        %v981 = vpop.f32.mrb[0].mxu0
        %v982 = vadd.f32 0.0, %v981
        %v983 = vpop.f32.mrb[0].mxu0
        %v984 = vadd.f32 0.0, %v983
        %985 = vmatprep.mubr.bf16.mxu0 %v528
        %986 = vmatmul.mubr.bf16.gmra.mrb[0].mxu0 %v527
        %v987 = vpop.f32.mrb[0].mxu0
        %v988 = vadd.f32 0.0, %v987
        %v989 = vpop.f32.mrb[0].mxu0
        %v990 = vadd.f32 0.0, %v989
        %v991 = vpop.f32.mrb[0].mxu0
        %v992 = vadd.f32 0.0, %v991
        %v993 = vpop.f32.mrb[0].mxu0
        %v994 = vadd.f32 0.0, %v993
        %995 = vdwg.mxu0
        %996 = vmatprep.subr.bf16.mxu0 %v788
        %997 = vmatpush1.bf16.msra.mxu0 %v787
        %998 = vmatprep.subr.bf16.mxu0 %v790
        %999 = vmatpush1.bf16.msra.mxu0 %v789
        %1000 = vmatprep.subr.bf16.mxu0 %v792
        %1001 = vmatpush1.bf16.msra.mxu0 %v791
        %1002 = vmatprep.subr.bf16.mxu0 %v794
        %1003 = vmatpush1.bf16.msra.mxu0 %v793
        %1004 = vmatprep.subr.bf16.mxu0 %v796
        %1005 = vmatpush1.bf16.msra.mxu0 %v795
        %1006 = vmatprep.subr.bf16.mxu0 %v798
        %1007 = vmatpush1.bf16.msra.mxu0 %v797
        %1008 = vmatprep.subr.bf16.mxu0 %v800
        %1009 = vmatpush1.bf16.msra.mxu0 %v799
        %1010 = vmatprep.subr.bf16.mxu0 %v802
        %1011 = vmatpush1.bf16.msra.mxu0 %v801
        %1012 = vmatprep.subr.bf16.mxu0 %v804
        %1013 = vmatpush1.bf16.msra.mxu0 %v803
        %1014 = vmatprep.subr.bf16.mxu0 %v806
        %1015 = vmatpush1.bf16.msra.mxu0 %v805
        %1016 = vmatprep.subr.bf16.mxu0 %v808
        %1017 = vmatpush1.bf16.msra.mxu0 %v807
        %1018 = vmatprep.subr.bf16.mxu0 %v810
        %1019 = vmatpush1.bf16.msra.mxu0 %v809
        %1020 = vmatprep.subr.bf16.mxu0 %v812
        %1021 = vmatpush1.bf16.msra.mxu0 %v811
        %1022 = vmatprep.subr.bf16.mxu0 %v814
        %1023 = vmatpush1.bf16.msra.mxu0 %v813
        %1024 = vmatprep.subr.bf16.mxu0 %v816
        %1025 = vmatpush1.bf16.msra.mxu0 %v815
        %1026 = vmatprep.subr.bf16.mxu0 %v818
        %1027 = vmatpush1.bf16.msra.mxu0 %v817
        %1028 = vmatprep.mubr.bf16.mxu0 %v502
        %1029 = vmatmul.mubr.bf16.gmra.mrb[0].mxu0 %v501
        %v1030 = vpop.f32.mrb[0].mxu0
        %v1031 = vadd.f32 %v918, %v1030
        %v1032 = vpop.f32.mrb[0].mxu0
        %v1033 = vadd.f32 %v920, %v1032
        %v1034 = vpop.f32.mrb[0].mxu0
        %v1035 = vadd.f32 %v922, %v1034
        %v1036 = vpop.f32.mrb[0].mxu0
        %v1037 = vadd.f32 %v924, %v1036
        %1038 = vmatprep.mubr.bf16.mxu0 %v506
        %1039 = vmatmul.mubr.bf16.gmra.mrb[0].mxu0 %v505
        %v1040 = vpop.f32.mrb[0].mxu0
        %v1041 = vadd.f32 %v928, %v1040
        %v1042 = vpop.f32.mrb[0].mxu0
        %v1043 = vadd.f32 %v930, %v1042
        %v1044 = vpop.f32.mrb[0].mxu0
        %v1045 = vadd.f32 %v932, %v1044
        %v1046 = vpop.f32.mrb[0].mxu0
        %v1047 = vadd.f32 %v934, %v1046
        %1048 = vmatprep.mubr.bf16.mxu0 %v510
        %1049 = vmatmul.mubr.bf16.gmra.mrb[0].mxu0 %v509
        %v1050 = vpop.f32.mrb[0].mxu0
        %v1051 = vadd.f32 %v938, %v1050
        %v1052 = vpop.f32.mrb[0].mxu0
        %v1053 = vadd.f32 %v940, %v1052
        %v1054 = vpop.f32.mrb[0].mxu0
        %v1055 = vadd.f32 %v942, %v1054
        %v1056 = vpop.f32.mrb[0].mxu0
        %v1057 = vadd.f32 %v944, %v1056
        %1058 = vmatprep.mubr.bf16.mxu0 %v514
        %1059 = vmatmul.mubr.bf16.gmra.mrb[0].mxu0 %v513
        %v1060 = vpop.f32.mrb[0].mxu0
        %v1061 = vadd.f32 %v948, %v1060
        %v1062 = vpop.f32.mrb[0].mxu0
        %v1063 = vadd.f32 %v950, %v1062
        %v1064 = vpop.f32.mrb[0].mxu0
        %v1065 = vadd.f32 %v952, %v1064
        %v1066 = vpop.f32.mrb[0].mxu0
        %v1067 = vadd.f32 %v954, %v1066
        %1068 = vmatprep.mubr.bf16.mxu0 %v518
        %1069 = vmatmul.mubr.bf16.gmra.mrb[0].mxu0 %v517
        %v1070 = vpop.f32.mrb[0].mxu0
        %v1071 = vadd.f32 %v958, %v1070
        %v1072 = vpop.f32.mrb[0].mxu0
        %v1073 = vadd.f32 %v960, %v1072
        %v1074 = vpop.f32.mrb[0].mxu0
        %v1075 = vadd.f32 %v962, %v1074
        %v1076 = vpop.f32.mrb[0].mxu0
        %v1077 = vadd.f32 %v964, %v1076
        %1078 = vmatprep.mubr.bf16.mxu0 %v522
        %1079 = vmatmul.mubr.bf16.gmra.mrb[0].mxu0 %v521
        %v1080 = vpop.f32.mrb[0].mxu0
        %v1081 = vadd.f32 %v968, %v1080
        %v1082 = vpop.f32.mrb[0].mxu0
        %v1083 = vadd.f32 %v970, %v1082
        %v1084 = vpop.f32.mrb[0].mxu0
        %v1085 = vadd.f32 %v972, %v1084
        %v1086 = vpop.f32.mrb[0].mxu0
        %v1087 = vadd.f32 %v974, %v1086
        %1088 = vmatprep.mubr.bf16.mxu0 %v526
        %1089 = vmatmul.mubr.bf16.gmra.mrb[0].mxu0 %v525
        %v1090 = vpop.f32.mrb[0].mxu0
        %v1091 = vadd.f32 %v978, %v1090
        %v1092 = vpop.f32.mrb[0].mxu0
        %v1093 = vadd.f32 %v980, %v1092
        %v1094 = vpop.f32.mrb[0].mxu0
        %v1095 = vadd.f32 %v982, %v1094
        %v1096 = vpop.f32.mrb[0].mxu0
        %v1097 = vadd.f32 %v984, %v1096
        %1098 = vmatprep.mubr.bf16.mxu0 %v530
        %1099 = vmatmul.mubr.bf16.gmra.mrb[0].mxu0 %v529
        %v1100 = vpop.f32.mrb[0].mxu0
        %v1101 = vadd.f32 %v988, %v1100
        %v1102 = vpop.f32.mrb[0].mxu0
        %v1103 = vadd.f32 %v990, %v1102
        %v1104 = vpop.f32.mrb[0].mxu0
        %v1105 = vadd.f32 %v992, %v1104
        %v1106 = vpop.f32.mrb[0].mxu0
        %v1107 = vadd.f32 %v994, %v1106
        %1108 = vdwg.mxu0
        %p1109 = scmp.eq.s32.totalorder %s20, 0
        // Predicated region
        $region52: #{dcgan_forward.19} parent=46 // pred_check
          %p1110 = pneg %p1109
        $region53: #{dcgan_forward.19} parent=46 // pred_check_branch
          %1112 = sbr.rel (%p1110) target = $region55
        $region54: #{dcgan_forward.19} parent=46 // pred_region
          %1113 = vst [vmem:[#allocation2] sm:$0xff] 0.0
          %1114 = vst [vmem:[#allocation2 + $0x8] sm:$0xff] 0.0
          %1115 = vst [vmem:[#allocation2 + $0x10] sm:$0xff] 0.0
          %1116 = vst [vmem:[#allocation2 + $0x18] sm:$0xff] 0.0
          %1117 = vst [vmem:[#allocation2 + $0x20] sm:$0xff] 0.0
          %1118 = vst [vmem:[#allocation2 + $0x28] sm:$0xff] 0.0
          %1119 = vst [vmem:[#allocation2 + $0x30] sm:$0xff] 0.0
          %1120 = vst [vmem:[#allocation2 + $0x38] sm:$0xff] 0.0
          %1121 = vst [vmem:[#allocation2 + $0x40] sm:$0xff] 0.0
          %1122 = vst [vmem:[#allocation2 + $0x48] sm:$0xff] 0.0
          %1123 = vst [vmem:[#allocation2 + $0x50] sm:$0xff] 0.0
          %1124 = vst [vmem:[#allocation2 + $0x58] sm:$0xff] 0.0
          %1125 = vst [vmem:[#allocation2 + $0x60] sm:$0xff] 0.0
          %1126 = vst [vmem:[#allocation2 + $0x68] sm:$0xff] 0.0
          %1127 = vst [vmem:[#allocation2 + $0x70] sm:$0xff] 0.0
          %1128 = vst [vmem:[#allocation2 + $0x78] sm:$0xff] 0.0
          %1129 = vst [vmem:[#allocation2 + $0x80] sm:$0xff] 0.0
          %1130 = vst [vmem:[#allocation2 + $0x88] sm:$0xff] 0.0
          %1131 = vst [vmem:[#allocation2 + $0x90] sm:$0xff] 0.0
          %1132 = vst [vmem:[#allocation2 + $0x98] sm:$0xff] 0.0
          %1133 = vst [vmem:[#allocation2 + $0xa0] sm:$0xff] 0.0
          %1134 = vst [vmem:[#allocation2 + $0xa8] sm:$0xff] 0.0
          %1135 = vst [vmem:[#allocation2 + $0xb0] sm:$0xff] 0.0
          %1136 = vst [vmem:[#allocation2 + $0xb8] sm:$0xff] 0.0
          %1137 = vst [vmem:[#allocation2 + $0xc0] sm:$0xff] 0.0
          %1138 = vst [vmem:[#allocation2 + $0xc8] sm:$0xff] 0.0
          %1139 = vst [vmem:[#allocation2 + $0xd0] sm:$0xff] 0.0
          %1140 = vst [vmem:[#allocation2 + $0xd8] sm:$0xff] 0.0
          %1141 = vst [vmem:[#allocation2 + $0xe0] sm:$0xff] 0.0
          %1142 = vst [vmem:[#allocation2 + $0xe8] sm:$0xff] 0.0
          %1143 = vst [vmem:[#allocation2 + $0xf0] sm:$0xff] 0.0
          %1144 = vst [vmem:[#allocation2 + $0xf8] sm:$0xff] 0.0
        $region55: #{dcgan_forward.19} parent=46 // pred_fallthru
          _
        %v1145 = vld [vmem:[#allocation2] sm:$0xff]
        %v1146 = vld [vmem:[#allocation2 + $0x8] sm:$0xff]
        %v1147 = vld [vmem:[#allocation2 + $0x10] sm:$0xff]
        %v1148 = vld [vmem:[#allocation2 + $0x18] sm:$0xff]
        %v1149 = vld [vmem:[#allocation2 + $0x20] sm:$0xff]
        %v1150 = vld [vmem:[#allocation2 + $0x28] sm:$0xff]
        %v1151 = vld [vmem:[#allocation2 + $0x30] sm:$0xff]
        %v1152 = vld [vmem:[#allocation2 + $0x38] sm:$0xff]
        %v1153 = vld [vmem:[#allocation2 + $0x40] sm:$0xff]
        %v1154 = vld [vmem:[#allocation2 + $0x48] sm:$0xff]
        %v1155 = vld [vmem:[#allocation2 + $0x50] sm:$0xff]
        %v1156 = vld [vmem:[#allocation2 + $0x58] sm:$0xff]
        %v1157 = vld [vmem:[#allocation2 + $0x60] sm:$0xff]
        %v1158 = vld [vmem:[#allocation2 + $0x68] sm:$0xff]
        %v1159 = vld [vmem:[#allocation2 + $0x70] sm:$0xff]
        %v1160 = vld [vmem:[#allocation2 + $0x78] sm:$0xff]
        %v1161 = vld [vmem:[#allocation2 + $0x80] sm:$0xff]
        %v1162 = vld [vmem:[#allocation2 + $0x88] sm:$0xff]
        %v1163 = vld [vmem:[#allocation2 + $0x90] sm:$0xff]
        %v1164 = vld [vmem:[#allocation2 + $0x98] sm:$0xff]
        %v1165 = vld [vmem:[#allocation2 + $0xa0] sm:$0xff]
        %v1166 = vld [vmem:[#allocation2 + $0xa8] sm:$0xff]
        %v1167 = vld [vmem:[#allocation2 + $0xb0] sm:$0xff]
        %v1168 = vld [vmem:[#allocation2 + $0xb8] sm:$0xff]
        %v1169 = vld [vmem:[#allocation2 + $0xc0] sm:$0xff]
        %v1170 = vld [vmem:[#allocation2 + $0xc8] sm:$0xff]
        %v1171 = vld [vmem:[#allocation2 + $0xd0] sm:$0xff]
        %v1172 = vld [vmem:[#allocation2 + $0xd8] sm:$0xff]
        %v1173 = vld [vmem:[#allocation2 + $0xe0] sm:$0xff]
        %v1174 = vld [vmem:[#allocation2 + $0xe8] sm:$0xff]
        %v1175 = vld [vmem:[#allocation2 + $0xf0] sm:$0xff]
        %v1176 = vld [vmem:[#allocation2 + $0xf8] sm:$0xff]
        %v1177 = vadd.f32 %v1145, %v1031
        %v1178 = vadd.f32 %v1146, %v1033
        %v1179 = vadd.f32 %v1147, %v1035
        %v1180 = vadd.f32 %v1148, %v1037
        %v1181 = vadd.f32 %v1149, %v1041
        %v1182 = vadd.f32 %v1150, %v1043
        %v1183 = vadd.f32 %v1151, %v1045
        %v1184 = vadd.f32 %v1152, %v1047
        %v1185 = vadd.f32 %v1153, %v1051
        %v1186 = vadd.f32 %v1154, %v1053
        %v1187 = vadd.f32 %v1155, %v1055
        %v1188 = vadd.f32 %v1156, %v1057
        %v1189 = vadd.f32 %v1157, %v1061
        %v1190 = vadd.f32 %v1158, %v1063
        %v1191 = vadd.f32 %v1159, %v1065
        %v1192 = vadd.f32 %v1160, %v1067
        %v1193 = vadd.f32 %v1161, %v1071
        %v1194 = vadd.f32 %v1162, %v1073
        %v1195 = vadd.f32 %v1163, %v1075
        %v1196 = vadd.f32 %v1164, %v1077
        %v1197 = vadd.f32 %v1165, %v1081
        %v1198 = vadd.f32 %v1166, %v1083
        %v1199 = vadd.f32 %v1167, %v1085
        %v1200 = vadd.f32 %v1168, %v1087
        %v1201 = vadd.f32 %v1169, %v1091
        %v1202 = vadd.f32 %v1170, %v1093
        %v1203 = vadd.f32 %v1171, %v1095
        %v1204 = vadd.f32 %v1172, %v1097
        %v1205 = vadd.f32 %v1173, %v1101
        %v1206 = vadd.f32 %v1174, %v1103
        %v1207 = vadd.f32 %v1175, %v1105
        %v1208 = vadd.f32 %v1176, %v1107
        %1209 = vst [vmem:[#allocation2] sm:$0xff] %v1177
        %1210 = vst [vmem:[#allocation2 + $0x8] sm:$0xff] %v1178
        %1211 = vst [vmem:[#allocation2 + $0x10] sm:$0xff] %v1179
        %1212 = vst [vmem:[#allocation2 + $0x18] sm:$0xff] %v1180
        %1213 = vst [vmem:[#allocation2 + $0x20] sm:$0xff] %v1181
        %1214 = vst [vmem:[#allocation2 + $0x28] sm:$0xff] %v1182
        %1215 = vst [vmem:[#allocation2 + $0x30] sm:$0xff] %v1183
        %1216 = vst [vmem:[#allocation2 + $0x38] sm:$0xff] %v1184
        %1217 = vst [vmem:[#allocation2 + $0x40] sm:$0xff] %v1185
        %1218 = vst [vmem:[#allocation2 + $0x48] sm:$0xff] %v1186
        %1219 = vst [vmem:[#allocation2 + $0x50] sm:$0xff] %v1187
        %1220 = vst [vmem:[#allocation2 + $0x58] sm:$0xff] %v1188
        %1221 = vst [vmem:[#allocation2 + $0x60] sm:$0xff] %v1189
        %1222 = vst [vmem:[#allocation2 + $0x68] sm:$0xff] %v1190
        %1223 = vst [vmem:[#allocation2 + $0x70] sm:$0xff] %v1191
        %1224 = vst [vmem:[#allocation2 + $0x78] sm:$0xff] %v1192
        %1225 = vst [vmem:[#allocation2 + $0x80] sm:$0xff] %v1193
        %1226 = vst [vmem:[#allocation2 + $0x88] sm:$0xff] %v1194
        %1227 = vst [vmem:[#allocation2 + $0x90] sm:$0xff] %v1195
        %1228 = vst [vmem:[#allocation2 + $0x98] sm:$0xff] %v1196
        %1229 = vst [vmem:[#allocation2 + $0xa0] sm:$0xff] %v1197
        %1230 = vst [vmem:[#allocation2 + $0xa8] sm:$0xff] %v1198
        %1231 = vst [vmem:[#allocation2 + $0xb0] sm:$0xff] %v1199
        %1232 = vst [vmem:[#allocation2 + $0xb8] sm:$0xff] %v1200
        %1233 = vst [vmem:[#allocation2 + $0xc0] sm:$0xff] %v1201
        %1234 = vst [vmem:[#allocation2 + $0xc8] sm:$0xff] %v1202
        %1235 = vst [vmem:[#allocation2 + $0xd0] sm:$0xff] %v1203
        %1236 = vst [vmem:[#allocation2 + $0xd8] sm:$0xff] %v1204
        %1237 = vst [vmem:[#allocation2 + $0xe0] sm:$0xff] %v1205
        %1238 = vst [vmem:[#allocation2 + $0xe8] sm:$0xff] %v1206
        %1239 = vst [vmem:[#allocation2 + $0xf0] sm:$0xff] %v1207
        %1240 = vst [vmem:[#allocation2 + $0xf8] sm:$0xff] %v1208
        %p1241 = scmp.eq.s32.totalorder %s20, 3
        // Predicated region
        $region56: #{dcgan_forward.19} parent=46 // pred_check
          %p1242 = pneg %p1241
        $region57: #{dcgan_forward.19} parent=46 // pred_check_branch
          %1244 = sbr.rel (%p1242) target = $region59
        $region58: #{dcgan_forward.19} parent=46 // pred_region
          %v1245 = vld [vmem:[#allocation2] sm:$0xff]
          %v1246 = vld [vmem:[#allocation2 + $0x8] sm:$0xff]
          %v1247 = vld [vmem:[#allocation2 + $0x10] sm:$0xff]
          %v1248 = vld [vmem:[#allocation2 + $0x18] sm:$0xff]
          %v1249 = vld [vmem:[#allocation2 + $0x20] sm:$0xff]
          %v1250 = vld [vmem:[#allocation2 + $0x28] sm:$0xff]
          %v1251 = vld [vmem:[#allocation2 + $0x30] sm:$0xff]
          %v1252 = vld [vmem:[#allocation2 + $0x38] sm:$0xff]
          %v1253 = vld [vmem:[#allocation2 + $0x40] sm:$0xff]
          %v1254 = vld [vmem:[#allocation2 + $0x48] sm:$0xff]
          %v1255 = vld [vmem:[#allocation2 + $0x50] sm:$0xff]
          %v1256 = vld [vmem:[#allocation2 + $0x58] sm:$0xff]
          %v1257 = vld [vmem:[#allocation2 + $0x60] sm:$0xff]
          %v1258 = vld [vmem:[#allocation2 + $0x68] sm:$0xff]
          %v1259 = vld [vmem:[#allocation2 + $0x70] sm:$0xff]
          %v1260 = vld [vmem:[#allocation2 + $0x78] sm:$0xff]
          %v1261 = vld [vmem:[#allocation2 + $0x80] sm:$0xff]
          %v1262 = vld [vmem:[#allocation2 + $0x88] sm:$0xff]
          %v1263 = vld [vmem:[#allocation2 + $0x90] sm:$0xff]
          %v1264 = vld [vmem:[#allocation2 + $0x98] sm:$0xff]
          %v1265 = vld [vmem:[#allocation2 + $0xa0] sm:$0xff]
          %v1266 = vld [vmem:[#allocation2 + $0xa8] sm:$0xff]
          %v1267 = vld [vmem:[#allocation2 + $0xb0] sm:$0xff]
          %v1268 = vld [vmem:[#allocation2 + $0xb8] sm:$0xff]
          %v1269 = vld [vmem:[#allocation2 + $0xc0] sm:$0xff]
          %v1270 = vld [vmem:[#allocation2 + $0xc8] sm:$0xff]
          %v1271 = vld [vmem:[#allocation2 + $0xd0] sm:$0xff]
          %v1272 = vld [vmem:[#allocation2 + $0xd8] sm:$0xff]
          %v1273 = vld [vmem:[#allocation2 + $0xe0] sm:$0xff]
          %v1274 = vld [vmem:[#allocation2 + $0xe8] sm:$0xff]
          %v1275 = vld [vmem:[#allocation2 + $0xf0] sm:$0xff]
          %v1276 = vld [vmem:[#allocation2 + $0xf8] sm:$0xff]
          %1277 = vst [vmem:[%s304] sm:$0xff] %v1245
          %1278 = vst [vmem:[%s304 + $0x8] sm:$0xff] %v1246
          %1279 = vst [vmem:[%s304 + $0x10] sm:$0xff] %v1247
          %1280 = vst [vmem:[%s304 + $0x18] sm:$0xff] %v1248
          %1281 = vst [vmem:[%s304 + $0x20] sm:$0xff] %v1249
          %1282 = vst [vmem:[%s304 + $0x28] sm:$0xff] %v1250
          %1283 = vst [vmem:[%s304 + $0x30] sm:$0xff] %v1251
          %1284 = vst [vmem:[%s304 + $0x38] sm:$0xff] %v1252
          %1285 = vst [vmem:[%s304 + $0x40] sm:$0xff] %v1253
          %1286 = vst [vmem:[%s304 + $0x48] sm:$0xff] %v1254
          %1287 = vst [vmem:[%s304 + $0x50] sm:$0xff] %v1255
          %1288 = vst [vmem:[%s304 + $0x58] sm:$0xff] %v1256
          %1289 = vst [vmem:[%s304 + $0x60] sm:$0xff] %v1257
          %1290 = vst [vmem:[%s304 + $0x68] sm:$0xff] %v1258
          %1291 = vst [vmem:[%s304 + $0x70] sm:$0xff] %v1259
          %1292 = vst [vmem:[%s304 + $0x78] sm:$0xff] %v1260
          %1293 = vst [vmem:[%s304 + $0x80] sm:$0xff] %v1261
          %1294 = vst [vmem:[%s304 + $0x88] sm:$0xff] %v1262
          %1295 = vst [vmem:[%s304 + $0x90] sm:$0xff] %v1263
          %1296 = vst [vmem:[%s304 + $0x98] sm:$0xff] %v1264
          %1297 = vst [vmem:[%s304 + $0xa0] sm:$0xff] %v1265
          %1298 = vst [vmem:[%s304 + $0xa8] sm:$0xff] %v1266
          %1299 = vst [vmem:[%s304 + $0xb0] sm:$0xff] %v1267
          %1300 = vst [vmem:[%s304 + $0xb8] sm:$0xff] %v1268
          %1301 = vst [vmem:[%s304 + $0xc0] sm:$0xff] %v1269
          %1302 = vst [vmem:[%s304 + $0xc8] sm:$0xff] %v1270
          %1303 = vst [vmem:[%s304 + $0xd0] sm:$0xff] %v1271
          %1304 = vst [vmem:[%s304 + $0xd8] sm:$0xff] %v1272
          %1305 = vst [vmem:[%s304 + $0xe0] sm:$0xff] %v1273
          %1306 = vst [vmem:[%s304 + $0xe8] sm:$0xff] %v1274
          %1307 = vst [vmem:[%s304 + $0xf0] sm:$0xff] %v1275
          %1308 = vst [vmem:[%s304 + $0xf8] sm:$0xff] %v1276
        $region59: #{dcgan_forward.19} parent=46 // pred_fallthru
          _
        %s1309 = smul.u32 16, %s18
        %s1310 = smul.u32 2, %s19
        %p1311 = scmp.lt.s32.totalorder %s1309, 15
        %s1312 = scalar_select %p1311, %s1309, 15
        %p1313 = scmp.lt.s32.totalorder %s1310, 1
        %s1314 = scalar_select %p1313, %s1310, 1
        %s1315 = smul.addr %s1312, 2
        %s1316 = sadd.s32 %s1314, %s1315
        %s1317 = smul.addr %s1316, 8
        %s1318 = scalar_lea.vmem %s2, %s1317
        // Predicated region
        $region60: #{dcgan_forward.19} parent=46 // pred_check
          %p1319 = pneg %p108
        $region61: #{dcgan_forward.19} parent=46 // pred_check_branch
          %1321 = sbr.rel (%p1319) target = $region63
        $region62: #{dcgan_forward.19} parent=46 // pred_region
          %s1322 = smul.u32 16, %s18
          %s1323 = smul.u32 2, %s19
        $region63: #{dcgan_forward.19} parent=46 // pred_fallthru
          _
        // Predicated region
        $region64: #{dcgan_forward.19} parent=46 // pred_check
          %p1324 = pneg %p108
        $region65: #{dcgan_forward.19} parent=46 // pred_check_branch
          %1326 = sbr.rel (%p1324) target = $region67
        $region66: #{dcgan_forward.19} parent=46 // pred_region
          %s1327 = smul.u32 16, %s18
          %s1328 = smul.u32 2, %s19
          %p1329 = scmp.lt.s32.totalorder %s1327, 15
          %s1330 = scalar_select %p1329, %s1327, 15
          %p1331 = scmp.lt.s32.totalorder %s1328, 1
          %s1332 = scalar_select %p1331, %s1328, 1
          %s1333 = smul.addr %s1330, 2
          %s1334 = sadd.s32 %s1332, %s1333
          %s1335 = smul.addr %s1334, 8
          %s1336 = scalar_lea.vmem %s2, %s1335
        $region67: #{dcgan_forward.19} parent=46 // pred_fallthru
          _
      $region47: #{dcgan_forward.19} parent=5 // pred_fallthru
        _
      %p1337 = scmp.le.s32.totalorder 2, %s8
      // Predicated region
      $region68: #{dcgan_forward.19} parent=5 // pred_check
        %p1338 = pneg %p1337
      $region69: #{dcgan_forward.19} parent=5 // pred_check_branch
        %1340 = sbr.rel (%p1338) target = $region71
      $region70: #{dcgan_forward.19} parent=5 // pred_region
        %s1341 = ssub.s32 %s8, 2
      $region71: #{dcgan_forward.19} parent=5 // pred_fallthru
        _
    $region6: #{dcgan_forward.19} parent=1 // loop_footer
      %s12 = sadd.s32 1, %s8
    $region7: #{dcgan_forward.19} parent=1 // loop_footer_branch
      %7 = sbr.rel target = $region3
    $region8: #{dcgan_forward.19} parent=1 // loop_exit
      _

// kernel: dcgan_forward.20
$region0: #{dcgan_forward.20}
  #allocation0 [shape = 'u32[]', space=smem, size = 0x4, offset = 0x4, fixed_abs, tag = 'smem constant byte address 0x4 - core index']
  #allocation1 [shape = 'u32[144,128]{1,0:T(1,128)}', space=vmem, size = 0x12000, scoped, tag = 'internal scratch']
  %s0 = inlined_call_operand.vmem [shape: f32[128,256], index: 0, kind: input, shape index: {}]
  %s1 = inlined_call_operand.vmem [shape: f32[1,256], index: 1, kind: output, shape index: {0}]
  %s2 = inlined_call_operand.vmem [shape: f32[1,256], index: 2, kind: output, shape index: {1}]
  %3 = xla_tuple %s1, %s2
  %s4 = sld [smem:[#allocation0]]
  $region26: #{dcgan_forward.20} parent=0
    _
  %s6 = ssub.s32 1, %s4
  %s7 = scalar_select 0, %s6, %s4
  // Predicated region
  $region2: #{dcgan_forward.20} parent=0 // pred_check
    _
  $region3: #{dcgan_forward.20} parent=0 // pred_check_branch
    %9 = sbr.rel (0) target = $region5
  $region4: #{dcgan_forward.20} parent=0 // pred_region
    _
  $region5: #{dcgan_forward.20} parent=0 // pred_fallthru
    _
  %p10 = scmp.eq.s32.totalorder 0, 0
  // Predicated region
  $region6: #{dcgan_forward.20} parent=0 // pred_check
    %p11 = pneg %p10
  $region7: #{dcgan_forward.20} parent=0 // pred_check_branch
    %13 = sbr.rel (%p11) target = $region9
  $region8: #{dcgan_forward.20} parent=0 // pred_region
    %v14 = vlaneseq
    %vm15 = vcmp.ge.s32.totalorder %v14, 0
    %vm16 = vcmp.lt.s32.totalorder %v14, 256
    %vm17 = vmand %vm15, %vm16
    %18 = vst.msk [vmem:[%s1] sm:$0x3] %vm17, 0.0
    %19 = vst.msk [vmem:[%s2] sm:$0x3] %vm17, 0.0
  $region9: #{dcgan_forward.20} parent=0 // pred_fallthru
    _
  %v20 = vld [vmem:[%s0] sm:$0xff]
  %v21 = vld [vmem:[%s0 + $0x8] sm:$0xff]
  %v22 = vld [vmem:[%s0 + $0x10] sm:$0xff]
  %v23 = vld [vmem:[%s0 + $0x18] sm:$0xff]
  %v24 = vld [vmem:[%s0 + $0x20] sm:$0xff]
  %v25 = vld [vmem:[%s0 + $0x28] sm:$0xff]
  %v26 = vld [vmem:[%s0 + $0x30] sm:$0xff]
  %v27 = vld [vmem:[%s0 + $0x38] sm:$0xff]
  %v28 = vld [vmem:[%s0 + $0x40] sm:$0xff]
  %v29 = vld [vmem:[%s0 + $0x48] sm:$0xff]
  %v30 = vld [vmem:[%s0 + $0x50] sm:$0xff]
  %v31 = vld [vmem:[%s0 + $0x58] sm:$0xff]
  %v32 = vld [vmem:[%s0 + $0x60] sm:$0xff]
  %v33 = vld [vmem:[%s0 + $0x68] sm:$0xff]
  %v34 = vld [vmem:[%s0 + $0x70] sm:$0xff]
  %v35 = vld [vmem:[%s0 + $0x78] sm:$0xff]
  %v36 = vld [vmem:[%s0 + $0x80] sm:$0xff]
  %v37 = vld [vmem:[%s0 + $0x88] sm:$0xff]
  %v38 = vld [vmem:[%s0 + $0x90] sm:$0xff]
  %v39 = vld [vmem:[%s0 + $0x98] sm:$0xff]
  %v40 = vld [vmem:[%s0 + $0xa0] sm:$0xff]
  %v41 = vld [vmem:[%s0 + $0xa8] sm:$0xff]
  %v42 = vld [vmem:[%s0 + $0xb0] sm:$0xff]
  %v43 = vld [vmem:[%s0 + $0xb8] sm:$0xff]
  %v44 = vld [vmem:[%s0 + $0xc0] sm:$0xff]
  %v45 = vld [vmem:[%s0 + $0xc8] sm:$0xff]
  %v46 = vld [vmem:[%s0 + $0xd0] sm:$0xff]
  %v47 = vld [vmem:[%s0 + $0xd8] sm:$0xff]
  %v48 = vld [vmem:[%s0 + $0xe0] sm:$0xff]
  %v49 = vld [vmem:[%s0 + $0xe8] sm:$0xff]
  %v50 = vld [vmem:[%s0 + $0xf0] sm:$0xff]
  %v51 = vld [vmem:[%s0 + $0xf8] sm:$0xff]
  %v52 = vld [vmem:[%s1] sm:$0x3]
  %v53 = vadd.f32 %v20, %v22
  %v54 = vadd.f32 %v53, %v24
  %v55 = vadd.f32 %v54, %v26
  %v56 = vadd.f32 %v55, %v28
  %v57 = vadd.f32 %v56, %v30
  %v58 = vadd.f32 %v57, %v32
  %v59 = vadd.f32 %v58, %v34
  %v60 = vadd.f32 %v59, %v36
  %v61 = vadd.f32 %v60, %v38
  %v62 = vadd.f32 %v61, %v40
  %v63 = vadd.f32 %v62, %v42
  %v64 = vadd.f32 %v63, %v44
  %v65 = vadd.f32 %v64, %v46
  %v66 = vadd.f32 %v65, %v48
  %v67 = vadd.f32 %v66, %v50
  %v68 = vrot.slane %v67, 4
  %v69 = vadd.f32 %v67, %v68
  %v70 = vrot.slane %v69, 2
  %v71 = vadd.f32 %v69, %v70
  %v72 = vrot.slane %v71, 1
  %v73 = vadd.f32 %v71, %v72
  %v74 = vadd.f32 %v21, %v23
  %v75 = vadd.f32 %v74, %v25
  %v76 = vadd.f32 %v75, %v27
  %v77 = vadd.f32 %v76, %v29
  %v78 = vadd.f32 %v77, %v31
  %v79 = vadd.f32 %v78, %v33
  %v80 = vadd.f32 %v79, %v35
  %v81 = vadd.f32 %v80, %v37
  %v82 = vadd.f32 %v81, %v39
  %v83 = vadd.f32 %v82, %v41
  %v84 = vadd.f32 %v83, %v43
  %v85 = vadd.f32 %v84, %v45
  %v86 = vadd.f32 %v85, %v47
  %v87 = vadd.f32 %v86, %v49
  %v88 = vadd.f32 %v87, %v51
  %v89 = vrot.slane %v88, 4
  %v90 = vadd.f32 %v88, %v89
  %v91 = vrot.slane %v90, 2
  %v92 = vadd.f32 %v90, %v91
  %v93 = vrot.slane %v92, 1
  %v94 = vadd.f32 %v92, %v93
  %v97 = vcombine.low %v73, %v94
  %v99 = vunpack.c.l.s4 1966171168
  %v100 = vunpack.c.0.s8 %v99
  %v101 = vlaneseq
  %v102 = vshrl.u32 %v101, 7
  %v103 = vsub.s32 %v100, %v102
  %v104 = vrot.slane %v97, %v103
  %v106 = vunpack.c.l.s4 1966171168
  %v107 = vunpack.c.0.s8 %v106
  %v108 = vlaneseq
  %v109 = vshrl.u32 %v108, 7
  %v110 = vsub.s32 %v107, %v109
  %v111 = vrot.slane %v104, %v110
  %v113 = vadd.f32 %v52, %v111
  %v114 = vlaneseq
  %vm115 = vcmp.ge.s32.totalorder %v114, 0
  %vm116 = vcmp.lt.s32.totalorder %v114, 256
  %vm117 = vmand %vm115, %vm116
  %118 = vst.msk [vmem:[%s1] sm:$0x3] %vm117, %v113
  %v119 = vld [vmem:[%s2] sm:$0x3]
  %v120 = vmul.f32 %v20, %v20
  %v121 = vmul.f32 %v21, %v21
  %v122 = vmul.f32 %v22, %v22
  %v123 = vmul.f32 %v23, %v23
  %v124 = vmul.f32 %v24, %v24
  %v125 = vmul.f32 %v25, %v25
  %v126 = vmul.f32 %v26, %v26
  %v127 = vmul.f32 %v27, %v27
  %v128 = vmul.f32 %v28, %v28
  %v129 = vmul.f32 %v29, %v29
  %v130 = vmul.f32 %v30, %v30
  %v131 = vmul.f32 %v31, %v31
  %v132 = vmul.f32 %v32, %v32
  %v133 = vmul.f32 %v33, %v33
  %v134 = vmul.f32 %v34, %v34
  %v135 = vmul.f32 %v35, %v35
  %v136 = vmul.f32 %v36, %v36
  %v137 = vmul.f32 %v37, %v37
  %v138 = vmul.f32 %v38, %v38
  %v139 = vmul.f32 %v39, %v39
  %v140 = vmul.f32 %v40, %v40
  %v141 = vmul.f32 %v41, %v41
  %v142 = vmul.f32 %v42, %v42
  %v143 = vmul.f32 %v43, %v43
  %v144 = vmul.f32 %v44, %v44
  %v145 = vmul.f32 %v45, %v45
  %v146 = vmul.f32 %v46, %v46
  %v147 = vmul.f32 %v47, %v47
  %v148 = vmul.f32 %v48, %v48
  %v149 = vmul.f32 %v49, %v49
  %v150 = vmul.f32 %v50, %v50
  %v151 = vmul.f32 %v51, %v51
  %v152 = vadd.f32 %v120, %v122
  %v153 = vadd.f32 %v152, %v124
  %v154 = vadd.f32 %v153, %v126
  %v155 = vadd.f32 %v154, %v128
  %v156 = vadd.f32 %v155, %v130
  %v157 = vadd.f32 %v156, %v132
  %v158 = vadd.f32 %v157, %v134
  %v159 = vadd.f32 %v158, %v136
  %v160 = vadd.f32 %v159, %v138
  %v161 = vadd.f32 %v160, %v140
  %v162 = vadd.f32 %v161, %v142
  %v163 = vadd.f32 %v162, %v144
  %v164 = vadd.f32 %v163, %v146
  %v165 = vadd.f32 %v164, %v148
  %v166 = vadd.f32 %v165, %v150
  %v167 = vrot.slane %v166, 4
  %v168 = vadd.f32 %v166, %v167
  %v169 = vrot.slane %v168, 2
  %v170 = vadd.f32 %v168, %v169
  %v171 = vrot.slane %v170, 1
  %v172 = vadd.f32 %v170, %v171
  %v173 = vadd.f32 %v121, %v123
  %v174 = vadd.f32 %v173, %v125
  %v175 = vadd.f32 %v174, %v127
  %v176 = vadd.f32 %v175, %v129
  %v177 = vadd.f32 %v176, %v131
  %v178 = vadd.f32 %v177, %v133
  %v179 = vadd.f32 %v178, %v135
  %v180 = vadd.f32 %v179, %v137
  %v181 = vadd.f32 %v180, %v139
  %v182 = vadd.f32 %v181, %v141
  %v183 = vadd.f32 %v182, %v143
  %v184 = vadd.f32 %v183, %v145
  %v185 = vadd.f32 %v184, %v147
  %v186 = vadd.f32 %v185, %v149
  %v187 = vadd.f32 %v186, %v151
  %v188 = vrot.slane %v187, 4
  %v189 = vadd.f32 %v187, %v188
  %v190 = vrot.slane %v189, 2
  %v191 = vadd.f32 %v189, %v190
  %v192 = vrot.slane %v191, 1
  %v193 = vadd.f32 %v191, %v192
  %v196 = vcombine.low %v172, %v193
  %v198 = vunpack.c.l.s4 1966171168
  %v199 = vunpack.c.0.s8 %v198
  %v200 = vlaneseq
  %v201 = vshrl.u32 %v200, 7
  %v202 = vsub.s32 %v199, %v201
  %v203 = vrot.slane %v196, %v202
  %v205 = vunpack.c.l.s4 1966171168
  %v206 = vunpack.c.0.s8 %v205
  %v207 = vlaneseq
  %v208 = vshrl.u32 %v207, 7
  %v209 = vsub.s32 %v206, %v208
  %v210 = vrot.slane %v203, %v209
  %v212 = vadd.f32 %v119, %v210
  %213 = vst.msk [vmem:[%s2] sm:$0x3] %vm117, %v212
  // Predicated region
  $region10: #{dcgan_forward.20} parent=0 // pred_check
    _
  $region11: #{dcgan_forward.20} parent=0 // pred_check_branch
    %215 = sbr.rel (0) target = $region13
  $region12: #{dcgan_forward.20} parent=0 // pred_region
    _
  $region13: #{dcgan_forward.20} parent=0 // pred_fallthru
    _
  // Predicated region
  $region14: #{dcgan_forward.20} parent=0 // pred_check
    _
  $region15: #{dcgan_forward.20} parent=0 // pred_check_branch
    %217 = sbr.rel (0) target = $region17
  $region16: #{dcgan_forward.20} parent=0 // pred_region
    _
  $region17: #{dcgan_forward.20} parent=0 // pred_fallthru
    _
  // Predicated region
  $region18: #{dcgan_forward.20} parent=0 // pred_check
    _
  $region19: #{dcgan_forward.20} parent=0 // pred_check_branch
    %219 = sbr.rel (0) target = $region21
  $region20: #{dcgan_forward.20} parent=0 // pred_region
    _
  $region21: #{dcgan_forward.20} parent=0 // pred_fallthru
    _
  // Predicated region
  $region22: #{dcgan_forward.20} parent=0 // pred_check
    _
  $region23: #{dcgan_forward.20} parent=0 // pred_check_branch
    %221 = sbr.rel (0) target = $region25
  $region24: #{dcgan_forward.20} parent=0 // pred_region
    _
  $region25: #{dcgan_forward.20} parent=0 // pred_fallthru
    _

// kernel: dcgan_forward.21
$region0: #{dcgan_forward.21}
  #allocation0 [shape = 'u32[]', space=smem, size = 0x4, offset = 0x4, fixed_abs, tag = 'smem constant byte address 0x4 - core index']
  #allocation1 [shape = 'u32[144,128]{1,0:T(1,128)}', space=vmem, size = 0x12000, scoped, tag = 'internal scratch']
  %s0 = inlined_call_operand.vmem [shape: f32[128,256], index: 0, kind: input, shape index: {}]
  %s1 = inlined_call_operand.vmem [shape: f32[1,256], index: 1, kind: input, shape index: {}]
  %s2 = inlined_call_operand.vmem [shape: f32[1,256], index: 2, kind: input, shape index: {}]
  %s3 = inlined_call_operand.vmem [shape: bf16[128,256], index: 3, kind: output, shape index: {}]
  %s4 = sld [smem:[#allocation0]]
  $region22: #{dcgan_forward.21} parent=0
    _
  %s6 = ssub.s32 1, %s4
  %s7 = scalar_select 0, %s6, %s4
  // Predicated region
  $region2: #{dcgan_forward.21} parent=0 // pred_check
    _
  $region3: #{dcgan_forward.21} parent=0 // pred_check_branch
    %9 = sbr.rel (0) target = $region5
  $region4: #{dcgan_forward.21} parent=0 // pred_region
    _
  $region5: #{dcgan_forward.21} parent=0 // pred_fallthru
    _
  // Predicated region
  $region6: #{dcgan_forward.21} parent=0 // pred_check
    _
  $region7: #{dcgan_forward.21} parent=0 // pred_check_branch
    %11 = sbr.rel (0) target = $region9
  $region8: #{dcgan_forward.21} parent=0 // pred_region
    _
  $region9: #{dcgan_forward.21} parent=0 // pred_fallthru
    _
  // Predicated region
  $region10: #{dcgan_forward.21} parent=0 // pred_check
    _
  $region11: #{dcgan_forward.21} parent=0 // pred_check_branch
    %13 = sbr.rel (0) target = $region13
  $region12: #{dcgan_forward.21} parent=0 // pred_region
    _
  $region13: #{dcgan_forward.21} parent=0 // pred_fallthru
    _
  %v14 = vld [vmem:[%s0] sm:$0xff]
  %v15 = vld [vmem:[%s0 + $0x8] sm:$0xff]
  %v16 = vld [vmem:[%s0 + $0x10] sm:$0xff]
  %v17 = vld [vmem:[%s0 + $0x18] sm:$0xff]
  %v18 = vld [vmem:[%s0 + $0x20] sm:$0xff]
  %v19 = vld [vmem:[%s0 + $0x28] sm:$0xff]
  %v20 = vld [vmem:[%s0 + $0x30] sm:$0xff]
  %v21 = vld [vmem:[%s0 + $0x38] sm:$0xff]
  %v22 = vld [vmem:[%s0 + $0x40] sm:$0xff]
  %v23 = vld [vmem:[%s0 + $0x48] sm:$0xff]
  %v24 = vld [vmem:[%s0 + $0x50] sm:$0xff]
  %v25 = vld [vmem:[%s0 + $0x58] sm:$0xff]
  %v26 = vld [vmem:[%s0 + $0x60] sm:$0xff]
  %v27 = vld [vmem:[%s0 + $0x68] sm:$0xff]
  %v28 = vld [vmem:[%s0 + $0x70] sm:$0xff]
  %v29 = vld [vmem:[%s0 + $0x78] sm:$0xff]
  %v30 = vld [vmem:[%s0 + $0x80] sm:$0xff]
  %v31 = vld [vmem:[%s0 + $0x88] sm:$0xff]
  %v32 = vld [vmem:[%s0 + $0x90] sm:$0xff]
  %v33 = vld [vmem:[%s0 + $0x98] sm:$0xff]
  %v34 = vld [vmem:[%s0 + $0xa0] sm:$0xff]
  %v35 = vld [vmem:[%s0 + $0xa8] sm:$0xff]
  %v36 = vld [vmem:[%s0 + $0xb0] sm:$0xff]
  %v37 = vld [vmem:[%s0 + $0xb8] sm:$0xff]
  %v38 = vld [vmem:[%s0 + $0xc0] sm:$0xff]
  %v39 = vld [vmem:[%s0 + $0xc8] sm:$0xff]
  %v40 = vld [vmem:[%s0 + $0xd0] sm:$0xff]
  %v41 = vld [vmem:[%s0 + $0xd8] sm:$0xff]
  %v42 = vld [vmem:[%s0 + $0xe0] sm:$0xff]
  %v43 = vld [vmem:[%s0 + $0xe8] sm:$0xff]
  %v44 = vld [vmem:[%s0 + $0xf0] sm:$0xff]
  %v45 = vld [vmem:[%s0 + $0xf8] sm:$0xff]
  %v46 = vld [vmem:[%s1] sm:$0x3]
  %v48 = vlaneseq
  %v49 = vshrl.u32 %v48, 7
  %v50 = vsub.s32 0, %v49
  %v51 = vrot.slane %v46, %v50
  %v52 = vlaneseq
  %v53 = vshrl.u32 %v52, 7
  %v54 = vsub.s32 1, %v53
  %v55 = vrot.slane %v46, %v54
  %v58 = vmul.f32 %v14, %v51
  %v59 = vmul.f32 %v15, %v55
  %v60 = vmul.f32 %v16, %v51
  %v61 = vmul.f32 %v17, %v55
  %v62 = vmul.f32 %v18, %v51
  %v63 = vmul.f32 %v19, %v55
  %v64 = vmul.f32 %v20, %v51
  %v65 = vmul.f32 %v21, %v55
  %v66 = vmul.f32 %v22, %v51
  %v67 = vmul.f32 %v23, %v55
  %v68 = vmul.f32 %v24, %v51
  %v69 = vmul.f32 %v25, %v55
  %v70 = vmul.f32 %v26, %v51
  %v71 = vmul.f32 %v27, %v55
  %v72 = vmul.f32 %v28, %v51
  %v73 = vmul.f32 %v29, %v55
  %v74 = vmul.f32 %v30, %v51
  %v75 = vmul.f32 %v31, %v55
  %v76 = vmul.f32 %v32, %v51
  %v77 = vmul.f32 %v33, %v55
  %v78 = vmul.f32 %v34, %v51
  %v79 = vmul.f32 %v35, %v55
  %v80 = vmul.f32 %v36, %v51
  %v81 = vmul.f32 %v37, %v55
  %v82 = vmul.f32 %v38, %v51
  %v83 = vmul.f32 %v39, %v55
  %v84 = vmul.f32 %v40, %v51
  %v85 = vmul.f32 %v41, %v55
  %v86 = vmul.f32 %v42, %v51
  %v87 = vmul.f32 %v43, %v55
  %v88 = vmul.f32 %v44, %v51
  %v89 = vmul.f32 %v45, %v55
  %v90 = vld [vmem:[%s2] sm:$0x3]
  %v92 = vlaneseq
  %v93 = vshrl.u32 %v92, 7
  %v94 = vsub.s32 0, %v93
  %v95 = vrot.slane %v90, %v94
  %v96 = vlaneseq
  %v97 = vshrl.u32 %v96, 7
  %v98 = vsub.s32 1, %v97
  %v99 = vrot.slane %v90, %v98
  %v102 = vadd.f32 %v58, %v95
  %v103 = vadd.f32 %v59, %v99
  %v104 = vadd.f32 %v60, %v95
  %v105 = vadd.f32 %v61, %v99
  %v106 = vadd.f32 %v62, %v95
  %v107 = vadd.f32 %v63, %v99
  %v108 = vadd.f32 %v64, %v95
  %v109 = vadd.f32 %v65, %v99
  %v110 = vadd.f32 %v66, %v95
  %v111 = vadd.f32 %v67, %v99
  %v112 = vadd.f32 %v68, %v95
  %v113 = vadd.f32 %v69, %v99
  %v114 = vadd.f32 %v70, %v95
  %v115 = vadd.f32 %v71, %v99
  %v116 = vadd.f32 %v72, %v95
  %v117 = vadd.f32 %v73, %v99
  %v118 = vadd.f32 %v74, %v95
  %v119 = vadd.f32 %v75, %v99
  %v120 = vadd.f32 %v76, %v95
  %v121 = vadd.f32 %v77, %v99
  %v122 = vadd.f32 %v78, %v95
  %v123 = vadd.f32 %v79, %v99
  %v124 = vadd.f32 %v80, %v95
  %v125 = vadd.f32 %v81, %v99
  %v126 = vadd.f32 %v82, %v95
  %v127 = vadd.f32 %v83, %v99
  %v128 = vadd.f32 %v84, %v95
  %v129 = vadd.f32 %v85, %v99
  %v130 = vadd.f32 %v86, %v95
  %v131 = vadd.f32 %v87, %v99
  %v132 = vadd.f32 %v88, %v95
  %v133 = vadd.f32 %v89, %v99
  %v134 = vpack.c.bf16 %v104, %v102
  %v135 = vpack.c.bf16 %v105, %v103
  %v136 = vpack.c.bf16 %v108, %v106
  %v137 = vpack.c.bf16 %v109, %v107
  %v138 = vpack.c.bf16 %v112, %v110
  %v139 = vpack.c.bf16 %v113, %v111
  %v140 = vpack.c.bf16 %v116, %v114
  %v141 = vpack.c.bf16 %v117, %v115
  %v142 = vpack.c.bf16 %v120, %v118
  %v143 = vpack.c.bf16 %v121, %v119
  %v144 = vpack.c.bf16 %v124, %v122
  %v145 = vpack.c.bf16 %v125, %v123
  %v146 = vpack.c.bf16 %v128, %v126
  %v147 = vpack.c.bf16 %v129, %v127
  %v148 = vpack.c.bf16 %v132, %v130
  %v149 = vpack.c.bf16 %v133, %v131
  %v166 = vunpack.c.l.b16 %v134
  %v167 = vunpack.c.l.b16 %v135
  %v168 = vunpack.c.h.b16 %v134
  %v169 = vunpack.c.h.b16 %v135
  %v170 = vunpack.c.l.b16 %v136
  %v171 = vunpack.c.l.b16 %v137
  %v172 = vunpack.c.h.b16 %v136
  %v173 = vunpack.c.h.b16 %v137
  %v174 = vunpack.c.l.b16 %v138
  %v175 = vunpack.c.l.b16 %v139
  %v176 = vunpack.c.h.b16 %v138
  %v177 = vunpack.c.h.b16 %v139
  %v178 = vunpack.c.l.b16 %v140
  %v179 = vunpack.c.l.b16 %v141
  %v180 = vunpack.c.h.b16 %v140
  %v181 = vunpack.c.h.b16 %v141
  %v182 = vunpack.c.l.b16 %v142
  %v183 = vunpack.c.l.b16 %v143
  %v184 = vunpack.c.h.b16 %v142
  %v185 = vunpack.c.h.b16 %v143
  %v186 = vunpack.c.l.b16 %v144
  %v187 = vunpack.c.l.b16 %v145
  %v188 = vunpack.c.h.b16 %v144
  %v189 = vunpack.c.h.b16 %v145
  %v190 = vunpack.c.l.b16 %v146
  %v191 = vunpack.c.l.b16 %v147
  %v192 = vunpack.c.h.b16 %v146
  %v193 = vunpack.c.h.b16 %v147
  %v194 = vunpack.c.l.b16 %v148
  %v195 = vunpack.c.l.b16 %v149
  %v196 = vunpack.c.h.b16 %v148
  %v197 = vunpack.c.h.b16 %v149
  %v198 = vpack.c.b16 %v167, %v166
  %v199 = vpack.c.b16 %v169, %v168
  %v200 = vpack.c.b16 %v171, %v170
  %v201 = vpack.c.b16 %v173, %v172
  %v202 = vpack.c.b16 %v175, %v174
  %v203 = vpack.c.b16 %v177, %v176
  %v204 = vpack.c.b16 %v179, %v178
  %v205 = vpack.c.b16 %v181, %v180
  %v206 = vpack.c.b16 %v183, %v182
  %v207 = vpack.c.b16 %v185, %v184
  %v208 = vpack.c.b16 %v187, %v186
  %v209 = vpack.c.b16 %v189, %v188
  %v210 = vpack.c.b16 %v191, %v190
  %v211 = vpack.c.b16 %v193, %v192
  %v212 = vpack.c.b16 %v195, %v194
  %v213 = vpack.c.b16 %v197, %v196
  %230 = vst [vmem:[%s3] sm:$0xff] %v198
  %231 = vst [vmem:[%s3 + $0x8] sm:$0xff] %v199
  %232 = vst [vmem:[%s3 + $0x10] sm:$0xff] %v200
  %233 = vst [vmem:[%s3 + $0x18] sm:$0xff] %v201
  %234 = vst [vmem:[%s3 + $0x20] sm:$0xff] %v202
  %235 = vst [vmem:[%s3 + $0x28] sm:$0xff] %v203
  %236 = vst [vmem:[%s3 + $0x30] sm:$0xff] %v204
  %237 = vst [vmem:[%s3 + $0x38] sm:$0xff] %v205
  %238 = vst [vmem:[%s3 + $0x40] sm:$0xff] %v206
  %239 = vst [vmem:[%s3 + $0x48] sm:$0xff] %v207
  %240 = vst [vmem:[%s3 + $0x50] sm:$0xff] %v208
  %241 = vst [vmem:[%s3 + $0x58] sm:$0xff] %v209
  %242 = vst [vmem:[%s3 + $0x60] sm:$0xff] %v210
  %243 = vst [vmem:[%s3 + $0x68] sm:$0xff] %v211
  %244 = vst [vmem:[%s3 + $0x70] sm:$0xff] %v212
  %245 = vst [vmem:[%s3 + $0x78] sm:$0xff] %v213
  // Predicated region
  $region14: #{dcgan_forward.21} parent=0 // pred_check
    _
  $region15: #{dcgan_forward.21} parent=0 // pred_check_branch
    %247 = sbr.rel (0) target = $region17
  $region16: #{dcgan_forward.21} parent=0 // pred_region
    _
  $region17: #{dcgan_forward.21} parent=0 // pred_fallthru
    _
  // Predicated region
  $region18: #{dcgan_forward.21} parent=0 // pred_check
    _
  $region19: #{dcgan_forward.21} parent=0 // pred_check_branch
    %249 = sbr.rel (0) target = $region21
  $region20: #{dcgan_forward.21} parent=0 // pred_region
    _
  $region21: #{dcgan_forward.21} parent=0 // pred_fallthru
    _

// kernel: dcgan_forward.22
$region0: #{dcgan_forward.22}
  #allocation0 [shape = 'u32[]', space=smem, size = 0x4, offset = 0x4, fixed_abs, tag = 'smem constant byte address 0x4 - core index']
  #allocation1 [shape = 'u32[144,128]{1,0:T(1,128)}', space=vmem, size = 0x12000, scoped, tag = 'internal scratch']
  #allocation2 [shape = 'f32[32,512]{1,0:T(8,128)}', space=vmem, size = 0x10000, scoped, tag = 'scratch operand']
  %s0 = inlined_call_operand.vmem [shape: bf16[32,4096], index: 0, kind: input, shape index: {}]
  %s1 = inlined_call_operand.vmem [shape: bf16[4096,512], index: 1, kind: input, shape index: {}]
  %s2 = inlined_call_operand.vmem [shape: f32[32,512], index: 2, kind: output, shape index: {}]
  %s3 = sld [smem:[#allocation0]]
  $region72: #{dcgan_forward.22} parent=0
    _
  %s5 = ssub.s32 1, %s3
  %s6 = scalar_select 0, %s5, %s3
  $region1: #{dcgan_forward.22} parent=0
    #allocation3 [shape = 'u8[65536]{0}', space=vmem, size = 0x10000, scoped, tag = 'input window, operand 0']
    loop: start=0, step=1, limit=10
    $region2: #{dcgan_forward.22} parent=1 // loop_pre_header
      _
    $region3: #{dcgan_forward.22} parent=1 // loop_header
      %s8 = sphi 0, %s12
      %p9 = scmp.ge.s32.totalorder %s8, 10
      %s15 = sphi 0, %s34
      %s16 = sphi 0, %s30
      %s17 = sphi 0, %s26
      %s18 = sphi 0, %s15
      %s19 = sphi 0, %s16
      %s20 = sphi 0, %s17
      %s21 = sphi 0, %s18
      %s22 = sphi 0, %s19
      %s23 = sphi 0, %s20
      %s39 = sphi 0, %s41
      %s42 = sphi 0, %s39
      %s43 = sphi 0, %s42
      %s59 = sphi 0, %s43
      %s67 = sphi 0, %s69
      %s70 = sphi 0, %s67
      %s71 = sphi 0, %s70
      %s87 = sphi 0, %s71
      %s95 = sphi 0, %s97
      %s98 = sphi 0, %s95
      %s99 = sphi 0, %s98
      %s115 = sphi 0, %s99
    $region4: #{dcgan_forward.22} parent=1 // loop_header_branch
      %11 = sbr.rel (%p9) target = $region8
    $region5: #{dcgan_forward.22} parent=1 // loop_body
      %s13 = ssub.s32 %s8, 1
      %s14 = ssub.s32 %s8, 2
      %s24 = sadd.s32 1, %s17
      %p25 = scmp.ge.s32.totalorder %s24, 8
      %s26 = scalar_select %p25, 0, %s24
      %s27 = sadd.s32 1, %s16
      %s28 = scalar_select %p25, %s27, %s16
      %p29 = scmp.ge.s32.totalorder %s28, 1
      %s30 = scalar_select %p29, 0, %s28
      %s31 = sadd.s32 1, %s15
      %s32 = scalar_select %p29, %s31, %s15
      %p33 = scmp.ge.s32.totalorder %s32, 1
      %s34 = scalar_select %p33, 0, %s32
      %s35 = ssub.s32 %s15, %s34
      %s36 = ssub.s32 %s17, %s26
      %s37 = sor.u32 %s35, %s36
      %p38 = scmp.eq.s32.totalorder %s37, 0
      %s40 = sadd.s32 %s39, 1
      %s41 = scalar_select %p38, %s39, %s40
      %p44 = pneg %p38
      %p45 = scmp.eq.s32.totalorder %s8, 7
      %p46 = por %p44, %p45
      %p47 = scmp.ne.s32.totalorder %s39, %s42
      %p48 = scmp.eq.s32.totalorder %s8, 0
      %p49 = por %p47, %p48
      %p50 = scmp.ne.s32.totalorder %s39, %s42
      %p51 = scmp.eq.s32.totalorder %s13, 7
      %p52 = por %p50, %p51
      %p53 = scmp.ne.s32.totalorder %s42, %s43
      %p54 = scmp.eq.s32.totalorder %s13, 0
      %p55 = por %p53, %p54
      %p56 = scmp.ne.s32.totalorder %s42, %s43
      %p57 = scmp.eq.s32.totalorder %s14, 7
      %p58 = por %p56, %p57
      %p60 = scmp.ne.s32.totalorder %s43, %s59
      %p61 = scmp.eq.s32.totalorder %s14, 0
      %p62 = por %p60, %p61
      %s63 = ssub.s32 %s17, %s26
      %s64 = ssub.s32 %s16, %s30
      %s65 = sor.u32 %s63, %s64
      %p66 = scmp.eq.s32.totalorder %s65, 0
      %s68 = sadd.s32 %s67, 1
      %s69 = scalar_select %p66, %s67, %s68
      %p72 = pneg %p66
      %p73 = scmp.eq.s32.totalorder %s8, 7
      %p74 = por %p72, %p73
      %p75 = scmp.ne.s32.totalorder %s67, %s70
      %p76 = scmp.eq.s32.totalorder %s8, 0
      %p77 = por %p75, %p76
      %p78 = scmp.ne.s32.totalorder %s67, %s70
      %p79 = scmp.eq.s32.totalorder %s13, 7
      %p80 = por %p78, %p79
      %p81 = scmp.ne.s32.totalorder %s70, %s71
      %p82 = scmp.eq.s32.totalorder %s13, 0
      %p83 = por %p81, %p82
      %p84 = scmp.ne.s32.totalorder %s70, %s71
      %p85 = scmp.eq.s32.totalorder %s14, 7
      %p86 = por %p84, %p85
      %p88 = scmp.ne.s32.totalorder %s71, %s87
      %p89 = scmp.eq.s32.totalorder %s14, 0
      %p90 = por %p88, %p89
      %s91 = ssub.s32 %s15, %s34
      %s92 = ssub.s32 %s16, %s30
      %s93 = sor.u32 %s91, %s92
      %p94 = scmp.eq.s32.totalorder %s93, 0
      %s96 = sadd.s32 %s95, 1
      %s97 = scalar_select %p94, %s95, %s96
      %p100 = pneg %p94
      %p101 = scmp.eq.s32.totalorder %s8, 7
      %p102 = por %p100, %p101
      %p103 = scmp.ne.s32.totalorder %s95, %s98
      %p104 = scmp.eq.s32.totalorder %s8, 0
      %p105 = por %p103, %p104
      %p106 = scmp.ne.s32.totalorder %s95, %s98
      %p107 = scmp.eq.s32.totalorder %s13, 7
      %p108 = por %p106, %p107
      %p109 = scmp.ne.s32.totalorder %s98, %s99
      %p110 = scmp.eq.s32.totalorder %s13, 0
      %p111 = por %p109, %p110
      %p112 = scmp.ne.s32.totalorder %s98, %s99
      %p113 = scmp.eq.s32.totalorder %s14, 7
      %p114 = por %p112, %p113
      %p116 = scmp.ne.s32.totalorder %s99, %s115
      %p117 = scmp.eq.s32.totalorder %s14, 0
      %p118 = por %p116, %p117
      %p119 = scmp.le.s32.totalorder 1, %s8
      %p120 = scmp.lt.s32.totalorder %s8, 9
      %p121 = pnand %p119, %p120
      %p122 = pneg %p121
      // Predicated region
      $region9: #{dcgan_forward.22} parent=5 // pred_check
        _
      $region10: #{dcgan_forward.22} parent=5 // pred_check_branch
        %124 = sbr.rel (%p121) target = $region12
      $region11: #{dcgan_forward.22} parent=5 // pred_region
        %s125 = ssub.s32 %s8, 1
      $region12: #{dcgan_forward.22} parent=5 // pred_fallthru
        _
      %p126 = scmp.lt.s32.totalorder %s8, 8
      // Predicated region
      $region13: #{dcgan_forward.22} parent=5 // pred_check
        %p127 = pneg %p126
      $region14: #{dcgan_forward.22} parent=5 // pred_check_branch
        %129 = sbr.rel (%p127) target = $region16
      $region15: #{dcgan_forward.22} parent=5 // pred_region
        // Predicated region
        $region17: #{dcgan_forward.22} parent=15 // pred_check
          %p130 = pneg %p49
        $region18: #{dcgan_forward.22} parent=15 // pred_check_branch
          %132 = sbr.rel (%p130) target = $region20
        $region19: #{dcgan_forward.22} parent=15 // pred_region
          %s133 = sand.u32 %s39, 1
          %s134 = sand.u32 %s39, 1
          %s135 = smul.addr %s134, 64
          %s136 = scalar_lea.vmem [#allocation3], %s135
          %s137 = smul.u32 4, %s15
          %s138 = smul.u32 4, %s17
          %s139 = smul.addr %s137, 32
          %s140 = sadd.s32 %s138, %s139
          %s141 = smul.addr %s140, 4
          %s142 = scalar_lea.vmem %s0, %s141
          // Predicated region
          $region21: #{dcgan_forward.22} parent=19 // pred_check
            _
          $region22: #{dcgan_forward.22} parent=19 // pred_check_branch
            %144 = sbr.rel (0) target = $region24
          $region23: #{dcgan_forward.22} parent=19 // pred_region
            // Predicated region
            $region25: #{dcgan_forward.22} parent=23 // pred_check
              _
            $region26: #{dcgan_forward.22} parent=23 // pred_check_branch
              %146 = sbr.rel (0) target = $region28
            $region27: #{dcgan_forward.22} parent=23 // pred_region
              loop: start=0, step=1, limit=1
              $region29: #{dcgan_forward.22} parent=27 // loop_pre_header
                _
              $region30: #{dcgan_forward.22} parent=27 // loop_header
                %s148 = sphi 0, %s152
                %p149 = scmp.ge.s32.totalorder %s148, 1
                %s153 = sphi %s142, %s142
                %s154 = sphi %s136, %s136
              $region31: #{dcgan_forward.22} parent=27 // loop_header_branch
                %151 = sbr.rel (%p149) target = $region35
              $region32: #{dcgan_forward.22} parent=27 // loop_body
                %v155 = vld [vmem:[%s153] sm:$0xff]
                %156 = vst [vmem:[%s154] sm:$0xff] %v155
                %v157 = vld [vmem:[%s153 + $0x8] sm:$0xff]
                %158 = vst [vmem:[%s154 + $0x8] sm:$0xff] %v157
                %v159 = vld [vmem:[%s153 + $0x80] sm:$0xff]
                %160 = vst [vmem:[%s154 + $0x10] sm:$0xff] %v159
                %v161 = vld [vmem:[%s153 + $0x88] sm:$0xff]
                %162 = vst [vmem:[%s154 + $0x18] sm:$0xff] %v161
                %v163 = vld [vmem:[%s153 + $0x100] sm:$0xff]
                %164 = vst [vmem:[%s154 + $0x20] sm:$0xff] %v163
                %v165 = vld [vmem:[%s153 + $0x108] sm:$0xff]
                %166 = vst [vmem:[%s154 + $0x28] sm:$0xff] %v165
                %v167 = vld [vmem:[%s153 + $0x180] sm:$0xff]
                %168 = vst [vmem:[%s154 + $0x30] sm:$0xff] %v167
                %v169 = vld [vmem:[%s153 + $0x188] sm:$0xff]
                %170 = vst [vmem:[%s154 + $0x38] sm:$0xff] %v169
              $region33: #{dcgan_forward.22} parent=27 // loop_footer
                %s152 = sadd.s32 1, %s148
              $region34: #{dcgan_forward.22} parent=27 // loop_footer_branch
                %147 = sbr.rel target = $region30
              $region35: #{dcgan_forward.22} parent=27 // loop_exit
                _
            $region28: #{dcgan_forward.22} parent=23 // pred_fallthru
              _
            // Predicated region
            $region36: #{dcgan_forward.22} parent=23 // pred_check
              _
            $region37: #{dcgan_forward.22} parent=23 // pred_check_branch
              %172 = sbr.rel target = $region39
            $region38: #{dcgan_forward.22} parent=23 // pred_region
              _
            $region39: #{dcgan_forward.22} parent=23 // pred_fallthru
              _
          $region24: #{dcgan_forward.22} parent=19 // pred_fallthru
            _
          %173 = vnop
        $region20: #{dcgan_forward.22} parent=15 // pred_fallthru
          _
        // Predicated region
        $region40: #{dcgan_forward.22} parent=15 // pred_check
          %p174 = pneg %p77
        $region41: #{dcgan_forward.22} parent=15 // pred_check_branch
          %176 = sbr.rel (%p174) target = $region43
        $region42: #{dcgan_forward.22} parent=15 // pred_region
          %s177 = smul.u32 64, %s17
          %s178 = smul.u32 4, %s16
          %p179 = scmp.lt.s32.totalorder %s177, 511
          %s180 = scalar_select %p179, %s177, 511
          %p181 = scmp.lt.s32.totalorder %s178, 3
          %s182 = scalar_select %p181, %s178, 3
          %s183 = smul.addr %s180, 4
          %s184 = sadd.s32 %s182, %s183
          %s185 = smul.addr %s184, 4
          %s186 = scalar_lea.vmem %s1, %s185
          %s187 = smul.u32 64, %s17
          %s188 = smul.u32 4, %s16
        $region43: #{dcgan_forward.22} parent=15 // pred_fallthru
          _
      $region16: #{dcgan_forward.22} parent=5 // pred_fallthru
        _
      %p189 = scmp.le.s32.totalorder 1, %s8
      %p190 = scmp.lt.s32.totalorder %s8, 9
      %p191 = pnand %p189, %p190
      %p192 = pneg %p191
      // Predicated region
      $region44: #{dcgan_forward.22} parent=5 // pred_check
        _
      $region45: #{dcgan_forward.22} parent=5 // pred_check_branch
        %194 = sbr.rel (%p191) target = $region47
      $region46: #{dcgan_forward.22} parent=5 // pred_region
        %s195 = ssub.s32 %s8, 1
        %s196 = sand.u32 %s42, 1
        %s197 = sand.u32 %s42, 1
        %s198 = smul.addr %s197, 64
        %s199 = scalar_lea.vmem [#allocation3], %s198
        // Predicated region
        $region48: #{dcgan_forward.22} parent=46 // pred_check
          %p200 = pneg %p55
        $region49: #{dcgan_forward.22} parent=46 // pred_check_branch
          %202 = sbr.rel (%p200) target = $region51
        $region50: #{dcgan_forward.22} parent=46 // pred_region
          _
        $region51: #{dcgan_forward.22} parent=46 // pred_fallthru
          _
        %s203 = sand.u32 %s42, 1
        %s204 = sand.u32 %s42, 1
        %s205 = smul.addr %s204, 64
        %s206 = scalar_lea.vmem [#allocation3], %s205
        %p207 = pneg %p55
        %p208 = pneg %p52
        %s209 = smul.u32 64, %s20
        %s210 = smul.u32 4, %s19
        %p211 = scmp.lt.s32.totalorder %s209, 511
        %s212 = scalar_select %p211, %s209, 511
        %p213 = scmp.lt.s32.totalorder %s210, 3
        %s214 = scalar_select %p213, %s210, 3
        %s215 = smul.addr %s212, 4
        %s216 = sadd.s32 %s214, %s215
        %s217 = smul.addr %s216, 4
        %s218 = scalar_lea.vmem %s1, %s217
        %p219 = pneg %p83
        %p220 = pneg %p80
        %p221 = pneg %p111
        %p222 = pneg %p108
        %s223 = smul.u32 4, %s18
        %s224 = smul.u32 4, %s19
        %p225 = scmp.lt.s32.totalorder %s223, 3
        %s226 = scalar_select %p225, %s223, 3
        %p227 = scmp.lt.s32.totalorder %s224, 3
        %s228 = scalar_select %p227, %s224, 3
        %s229 = smul.addr %s226, 4
        %s230 = sadd.s32 %s228, %s229
        %s231 = smul.addr %s230, 8
        %s232 = scalar_lea.vmem %s2, %s231
        %s233 = smul.u32 4, %s18
        %s234 = smul.u32 4, %s20
        %s235 = smul.u32 64, %s20
        %s236 = smul.u32 4, %s19
        %p237 = scmp.lt.s32.totalorder %s235, 511
        %s238 = scalar_select %p237, %s235, 511
        %p239 = scmp.lt.s32.totalorder %s236, 3
        %s240 = scalar_select %p239, %s236, 3
        %s241 = smul.addr %s238, 4
        %s242 = sadd.s32 %s240, %s241
        %s243 = smul.addr %s242, 4
        %s244 = scalar_lea.vmem %s1, %s243
        %s245 = smul.u32 64, %s20
        %s246 = smul.u32 4, %s19
        %s247 = smul.u32 4, %s18
        %s248 = smul.u32 4, %s19
        %p249 = scmp.lt.s32.totalorder %s247, 3
        %s250 = scalar_select %p249, %s247, 3
        %p251 = scmp.lt.s32.totalorder %s248, 3
        %s252 = scalar_select %p251, %s248, 3
        %s253 = smul.addr %s250, 4
        %s254 = sadd.s32 %s252, %s253
        %s255 = smul.addr %s254, 8
        %s256 = scalar_lea.vmem %s2, %s255
        %s257 = smul.u32 4, %s18
        %s258 = smul.u32 4, %s19
        %v259 = vld [vmem:[%s199] sm:$0xff]
        %v260 = vld [vmem:[%s199 + $0x8] sm:$0xff]
        %v261 = vld [vmem:[%s199 + $0x10] sm:$0xff]
        %v262 = vld [vmem:[%s199 + $0x18] sm:$0xff]
        %v263 = vld [vmem:[%s199 + $0x20] sm:$0xff]
        %v264 = vld [vmem:[%s199 + $0x28] sm:$0xff]
        %v265 = vld [vmem:[%s199 + $0x30] sm:$0xff]
        %v266 = vld [vmem:[%s199 + $0x38] sm:$0xff]
        %v267 = vld [vmem:[%s244] sm:$0xff]
        %v268 = vld [vmem:[%s244 + $0x8] sm:$0xff]
        %v269 = vld [vmem:[%s244 + $0x10] sm:$0xff]
        %v270 = vld [vmem:[%s244 + $0x18] sm:$0xff]
        %v271 = vld [vmem:[%s244 + $0x20] sm:$0xff]
        %v272 = vld [vmem:[%s244 + $0x28] sm:$0xff]
        %v273 = vld [vmem:[%s244 + $0x30] sm:$0xff]
        %v274 = vld [vmem:[%s244 + $0x38] sm:$0xff]
        %v275 = vld [vmem:[%s244 + $0x40] sm:$0xff]
        %v276 = vld [vmem:[%s244 + $0x48] sm:$0xff]
        %v277 = vld [vmem:[%s244 + $0x50] sm:$0xff]
        %v278 = vld [vmem:[%s244 + $0x58] sm:$0xff]
        %v279 = vld [vmem:[%s244 + $0x60] sm:$0xff]
        %v280 = vld [vmem:[%s244 + $0x68] sm:$0xff]
        %v281 = vld [vmem:[%s244 + $0x70] sm:$0xff]
        %v282 = vld [vmem:[%s244 + $0x78] sm:$0xff]
        %v283 = vld [vmem:[%s244 + $0x80] sm:$0xff]
        %v284 = vld [vmem:[%s244 + $0x88] sm:$0xff]
        %v285 = vld [vmem:[%s244 + $0x90] sm:$0xff]
        %v286 = vld [vmem:[%s244 + $0x98] sm:$0xff]
        %v287 = vld [vmem:[%s244 + $0xa0] sm:$0xff]
        %v288 = vld [vmem:[%s244 + $0xa8] sm:$0xff]
        %v289 = vld [vmem:[%s244 + $0xb0] sm:$0xff]
        %v290 = vld [vmem:[%s244 + $0xb8] sm:$0xff]
        %v291 = vld [vmem:[%s244 + $0xc0] sm:$0xff]
        %v292 = vld [vmem:[%s244 + $0xc8] sm:$0xff]
        %v293 = vld [vmem:[%s244 + $0xd0] sm:$0xff]
        %v294 = vld [vmem:[%s244 + $0xd8] sm:$0xff]
        %v295 = vld [vmem:[%s244 + $0xe0] sm:$0xff]
        %v296 = vld [vmem:[%s244 + $0xe8] sm:$0xff]
        %v297 = vld [vmem:[%s244 + $0xf0] sm:$0xff]
        %v298 = vld [vmem:[%s244 + $0xf8] sm:$0xff]
        %v299 = vld [vmem:[%s244 + $0x100] sm:$0xff]
        %v300 = vld [vmem:[%s244 + $0x108] sm:$0xff]
        %v301 = vld [vmem:[%s244 + $0x110] sm:$0xff]
        %v302 = vld [vmem:[%s244 + $0x118] sm:$0xff]
        %v303 = vld [vmem:[%s244 + $0x120] sm:$0xff]
        %v304 = vld [vmem:[%s244 + $0x128] sm:$0xff]
        %v305 = vld [vmem:[%s244 + $0x130] sm:$0xff]
        %v306 = vld [vmem:[%s244 + $0x138] sm:$0xff]
        %v307 = vld [vmem:[%s244 + $0x140] sm:$0xff]
        %v308 = vld [vmem:[%s244 + $0x148] sm:$0xff]
        %v309 = vld [vmem:[%s244 + $0x150] sm:$0xff]
        %v310 = vld [vmem:[%s244 + $0x158] sm:$0xff]
        %v311 = vld [vmem:[%s244 + $0x160] sm:$0xff]
        %v312 = vld [vmem:[%s244 + $0x168] sm:$0xff]
        %v313 = vld [vmem:[%s244 + $0x170] sm:$0xff]
        %v314 = vld [vmem:[%s244 + $0x178] sm:$0xff]
        %v315 = vld [vmem:[%s244 + $0x180] sm:$0xff]
        %v316 = vld [vmem:[%s244 + $0x188] sm:$0xff]
        %v317 = vld [vmem:[%s244 + $0x190] sm:$0xff]
        %v318 = vld [vmem:[%s244 + $0x198] sm:$0xff]
        %v319 = vld [vmem:[%s244 + $0x1a0] sm:$0xff]
        %v320 = vld [vmem:[%s244 + $0x1a8] sm:$0xff]
        %v321 = vld [vmem:[%s244 + $0x1b0] sm:$0xff]
        %v322 = vld [vmem:[%s244 + $0x1b8] sm:$0xff]
        %v323 = vld [vmem:[%s244 + $0x1c0] sm:$0xff]
        %v324 = vld [vmem:[%s244 + $0x1c8] sm:$0xff]
        %v325 = vld [vmem:[%s244 + $0x1d0] sm:$0xff]
        %v326 = vld [vmem:[%s244 + $0x1d8] sm:$0xff]
        %v327 = vld [vmem:[%s244 + $0x1e0] sm:$0xff]
        %v328 = vld [vmem:[%s244 + $0x1e8] sm:$0xff]
        %v329 = vld [vmem:[%s244 + $0x1f0] sm:$0xff]
        %v330 = vld [vmem:[%s244 + $0x1f8] sm:$0xff]
        %v331 = vld [vmem:[%s244 + $0x200] sm:$0xff]
        %v332 = vld [vmem:[%s244 + $0x208] sm:$0xff]
        %v333 = vld [vmem:[%s244 + $0x210] sm:$0xff]
        %v334 = vld [vmem:[%s244 + $0x218] sm:$0xff]
        %v335 = vld [vmem:[%s244 + $0x220] sm:$0xff]
        %v336 = vld [vmem:[%s244 + $0x228] sm:$0xff]
        %v337 = vld [vmem:[%s244 + $0x230] sm:$0xff]
        %v338 = vld [vmem:[%s244 + $0x238] sm:$0xff]
        %v339 = vld [vmem:[%s244 + $0x240] sm:$0xff]
        %v340 = vld [vmem:[%s244 + $0x248] sm:$0xff]
        %v341 = vld [vmem:[%s244 + $0x250] sm:$0xff]
        %v342 = vld [vmem:[%s244 + $0x258] sm:$0xff]
        %v343 = vld [vmem:[%s244 + $0x260] sm:$0xff]
        %v344 = vld [vmem:[%s244 + $0x268] sm:$0xff]
        %v345 = vld [vmem:[%s244 + $0x270] sm:$0xff]
        %v346 = vld [vmem:[%s244 + $0x278] sm:$0xff]
        %v347 = vld [vmem:[%s244 + $0x280] sm:$0xff]
        %v348 = vld [vmem:[%s244 + $0x288] sm:$0xff]
        %v349 = vld [vmem:[%s244 + $0x290] sm:$0xff]
        %v350 = vld [vmem:[%s244 + $0x298] sm:$0xff]
        %v351 = vld [vmem:[%s244 + $0x2a0] sm:$0xff]
        %v352 = vld [vmem:[%s244 + $0x2a8] sm:$0xff]
        %v353 = vld [vmem:[%s244 + $0x2b0] sm:$0xff]
        %v354 = vld [vmem:[%s244 + $0x2b8] sm:$0xff]
        %v355 = vld [vmem:[%s244 + $0x2c0] sm:$0xff]
        %v356 = vld [vmem:[%s244 + $0x2c8] sm:$0xff]
        %v357 = vld [vmem:[%s244 + $0x2d0] sm:$0xff]
        %v358 = vld [vmem:[%s244 + $0x2d8] sm:$0xff]
        %v359 = vld [vmem:[%s244 + $0x2e0] sm:$0xff]
        %v360 = vld [vmem:[%s244 + $0x2e8] sm:$0xff]
        %v361 = vld [vmem:[%s244 + $0x2f0] sm:$0xff]
        %v362 = vld [vmem:[%s244 + $0x2f8] sm:$0xff]
        %v363 = vld [vmem:[%s244 + $0x300] sm:$0xff]
        %v364 = vld [vmem:[%s244 + $0x308] sm:$0xff]
        %v365 = vld [vmem:[%s244 + $0x310] sm:$0xff]
        %v366 = vld [vmem:[%s244 + $0x318] sm:$0xff]
        %v367 = vld [vmem:[%s244 + $0x320] sm:$0xff]
        %v368 = vld [vmem:[%s244 + $0x328] sm:$0xff]
        %v369 = vld [vmem:[%s244 + $0x330] sm:$0xff]
        %v370 = vld [vmem:[%s244 + $0x338] sm:$0xff]
        %v371 = vld [vmem:[%s244 + $0x340] sm:$0xff]
        %v372 = vld [vmem:[%s244 + $0x348] sm:$0xff]
        %v373 = vld [vmem:[%s244 + $0x350] sm:$0xff]
        %v374 = vld [vmem:[%s244 + $0x358] sm:$0xff]
        %v375 = vld [vmem:[%s244 + $0x360] sm:$0xff]
        %v376 = vld [vmem:[%s244 + $0x368] sm:$0xff]
        %v377 = vld [vmem:[%s244 + $0x370] sm:$0xff]
        %v378 = vld [vmem:[%s244 + $0x378] sm:$0xff]
        %v379 = vld [vmem:[%s244 + $0x380] sm:$0xff]
        %v380 = vld [vmem:[%s244 + $0x388] sm:$0xff]
        %v381 = vld [vmem:[%s244 + $0x390] sm:$0xff]
        %v382 = vld [vmem:[%s244 + $0x398] sm:$0xff]
        %v383 = vld [vmem:[%s244 + $0x3a0] sm:$0xff]
        %v384 = vld [vmem:[%s244 + $0x3a8] sm:$0xff]
        %v385 = vld [vmem:[%s244 + $0x3b0] sm:$0xff]
        %v386 = vld [vmem:[%s244 + $0x3b8] sm:$0xff]
        %v387 = vld [vmem:[%s244 + $0x3c0] sm:$0xff]
        %v388 = vld [vmem:[%s244 + $0x3c8] sm:$0xff]
        %v389 = vld [vmem:[%s244 + $0x3d0] sm:$0xff]
        %v390 = vld [vmem:[%s244 + $0x3d8] sm:$0xff]
        %v391 = vld [vmem:[%s244 + $0x3e0] sm:$0xff]
        %v392 = vld [vmem:[%s244 + $0x3e8] sm:$0xff]
        %v393 = vld [vmem:[%s244 + $0x3f0] sm:$0xff]
        %v394 = vld [vmem:[%s244 + $0x3f8] sm:$0xff]
        %v403 = vunpack.c.l.b16 %v259
        %v404 = vunpack.c.h.b16 %v259
        %v405 = vunpack.c.l.b16 %v260
        %v406 = vunpack.c.h.b16 %v260
        %v407 = vunpack.c.l.b16 %v261
        %v408 = vunpack.c.h.b16 %v261
        %v409 = vunpack.c.l.b16 %v262
        %v410 = vunpack.c.h.b16 %v262
        %v411 = vunpack.c.l.b16 %v263
        %v412 = vunpack.c.h.b16 %v263
        %v413 = vunpack.c.l.b16 %v264
        %v414 = vunpack.c.h.b16 %v264
        %v415 = vunpack.c.l.b16 %v265
        %v416 = vunpack.c.h.b16 %v265
        %v417 = vunpack.c.l.b16 %v266
        %v418 = vunpack.c.h.b16 %v266
        %v419 = vpack.c.b16 %v407, %v403
        %v420 = vpack.c.b16 %v408, %v404
        %v421 = vpack.c.b16 %v409, %v405
        %v422 = vpack.c.b16 %v410, %v406
        %v423 = vpack.c.b16 %v415, %v411
        %v424 = vpack.c.b16 %v416, %v412
        %v425 = vpack.c.b16 %v417, %v413
        %v426 = vpack.c.b16 %v418, %v414
        %v563 = vunpack.c.l.b16 %v267
        %v564 = vunpack.c.h.b16 %v267
        %v565 = vunpack.c.l.b16 %v268
        %v566 = vunpack.c.h.b16 %v268
        %v567 = vunpack.c.l.b16 %v269
        %v568 = vunpack.c.h.b16 %v269
        %v569 = vunpack.c.l.b16 %v270
        %v570 = vunpack.c.h.b16 %v270
        %v571 = vunpack.c.l.b16 %v271
        %v572 = vunpack.c.h.b16 %v271
        %v573 = vunpack.c.l.b16 %v272
        %v574 = vunpack.c.h.b16 %v272
        %v575 = vunpack.c.l.b16 %v273
        %v576 = vunpack.c.h.b16 %v273
        %v577 = vunpack.c.l.b16 %v274
        %v578 = vunpack.c.h.b16 %v274
        %v579 = vunpack.c.l.b16 %v275
        %v580 = vunpack.c.h.b16 %v275
        %v581 = vunpack.c.l.b16 %v276
        %v582 = vunpack.c.h.b16 %v276
        %v583 = vunpack.c.l.b16 %v277
        %v584 = vunpack.c.h.b16 %v277
        %v585 = vunpack.c.l.b16 %v278
        %v586 = vunpack.c.h.b16 %v278
        %v587 = vunpack.c.l.b16 %v279
        %v588 = vunpack.c.h.b16 %v279
        %v589 = vunpack.c.l.b16 %v280
        %v590 = vunpack.c.h.b16 %v280
        %v591 = vunpack.c.l.b16 %v281
        %v592 = vunpack.c.h.b16 %v281
        %v593 = vunpack.c.l.b16 %v282
        %v594 = vunpack.c.h.b16 %v282
        %v595 = vunpack.c.l.b16 %v283
        %v596 = vunpack.c.h.b16 %v283
        %v597 = vunpack.c.l.b16 %v284
        %v598 = vunpack.c.h.b16 %v284
        %v599 = vunpack.c.l.b16 %v285
        %v600 = vunpack.c.h.b16 %v285
        %v601 = vunpack.c.l.b16 %v286
        %v602 = vunpack.c.h.b16 %v286
        %v603 = vunpack.c.l.b16 %v287
        %v604 = vunpack.c.h.b16 %v287
        %v605 = vunpack.c.l.b16 %v288
        %v606 = vunpack.c.h.b16 %v288
        %v607 = vunpack.c.l.b16 %v289
        %v608 = vunpack.c.h.b16 %v289
        %v609 = vunpack.c.l.b16 %v290
        %v610 = vunpack.c.h.b16 %v290
        %v611 = vunpack.c.l.b16 %v291
        %v612 = vunpack.c.h.b16 %v291
        %v613 = vunpack.c.l.b16 %v292
        %v614 = vunpack.c.h.b16 %v292
        %v615 = vunpack.c.l.b16 %v293
        %v616 = vunpack.c.h.b16 %v293
        %v617 = vunpack.c.l.b16 %v294
        %v618 = vunpack.c.h.b16 %v294
        %v619 = vunpack.c.l.b16 %v295
        %v620 = vunpack.c.h.b16 %v295
        %v621 = vunpack.c.l.b16 %v296
        %v622 = vunpack.c.h.b16 %v296
        %v623 = vunpack.c.l.b16 %v297
        %v624 = vunpack.c.h.b16 %v297
        %v625 = vunpack.c.l.b16 %v298
        %v626 = vunpack.c.h.b16 %v298
        %v627 = vunpack.c.l.b16 %v299
        %v628 = vunpack.c.h.b16 %v299
        %v629 = vunpack.c.l.b16 %v300
        %v630 = vunpack.c.h.b16 %v300
        %v631 = vunpack.c.l.b16 %v301
        %v632 = vunpack.c.h.b16 %v301
        %v633 = vunpack.c.l.b16 %v302
        %v634 = vunpack.c.h.b16 %v302
        %v635 = vunpack.c.l.b16 %v303
        %v636 = vunpack.c.h.b16 %v303
        %v637 = vunpack.c.l.b16 %v304
        %v638 = vunpack.c.h.b16 %v304
        %v639 = vunpack.c.l.b16 %v305
        %v640 = vunpack.c.h.b16 %v305
        %v641 = vunpack.c.l.b16 %v306
        %v642 = vunpack.c.h.b16 %v306
        %v643 = vunpack.c.l.b16 %v307
        %v644 = vunpack.c.h.b16 %v307
        %v645 = vunpack.c.l.b16 %v308
        %v646 = vunpack.c.h.b16 %v308
        %v647 = vunpack.c.l.b16 %v309
        %v648 = vunpack.c.h.b16 %v309
        %v649 = vunpack.c.l.b16 %v310
        %v650 = vunpack.c.h.b16 %v310
        %v651 = vunpack.c.l.b16 %v311
        %v652 = vunpack.c.h.b16 %v311
        %v653 = vunpack.c.l.b16 %v312
        %v654 = vunpack.c.h.b16 %v312
        %v655 = vunpack.c.l.b16 %v313
        %v656 = vunpack.c.h.b16 %v313
        %v657 = vunpack.c.l.b16 %v314
        %v658 = vunpack.c.h.b16 %v314
        %v659 = vunpack.c.l.b16 %v315
        %v660 = vunpack.c.h.b16 %v315
        %v661 = vunpack.c.l.b16 %v316
        %v662 = vunpack.c.h.b16 %v316
        %v663 = vunpack.c.l.b16 %v317
        %v664 = vunpack.c.h.b16 %v317
        %v665 = vunpack.c.l.b16 %v318
        %v666 = vunpack.c.h.b16 %v318
        %v667 = vunpack.c.l.b16 %v319
        %v668 = vunpack.c.h.b16 %v319
        %v669 = vunpack.c.l.b16 %v320
        %v670 = vunpack.c.h.b16 %v320
        %v671 = vunpack.c.l.b16 %v321
        %v672 = vunpack.c.h.b16 %v321
        %v673 = vunpack.c.l.b16 %v322
        %v674 = vunpack.c.h.b16 %v322
        %v675 = vunpack.c.l.b16 %v323
        %v676 = vunpack.c.h.b16 %v323
        %v677 = vunpack.c.l.b16 %v324
        %v678 = vunpack.c.h.b16 %v324
        %v679 = vunpack.c.l.b16 %v325
        %v680 = vunpack.c.h.b16 %v325
        %v681 = vunpack.c.l.b16 %v326
        %v682 = vunpack.c.h.b16 %v326
        %v683 = vunpack.c.l.b16 %v327
        %v684 = vunpack.c.h.b16 %v327
        %v685 = vunpack.c.l.b16 %v328
        %v686 = vunpack.c.h.b16 %v328
        %v687 = vunpack.c.l.b16 %v329
        %v688 = vunpack.c.h.b16 %v329
        %v689 = vunpack.c.l.b16 %v330
        %v690 = vunpack.c.h.b16 %v330
        %v691 = vunpack.c.l.b16 %v331
        %v692 = vunpack.c.h.b16 %v331
        %v693 = vunpack.c.l.b16 %v332
        %v694 = vunpack.c.h.b16 %v332
        %v695 = vunpack.c.l.b16 %v333
        %v696 = vunpack.c.h.b16 %v333
        %v697 = vunpack.c.l.b16 %v334
        %v698 = vunpack.c.h.b16 %v334
        %v699 = vunpack.c.l.b16 %v335
        %v700 = vunpack.c.h.b16 %v335
        %v701 = vunpack.c.l.b16 %v336
        %v702 = vunpack.c.h.b16 %v336
        %v703 = vunpack.c.l.b16 %v337
        %v704 = vunpack.c.h.b16 %v337
        %v705 = vunpack.c.l.b16 %v338
        %v706 = vunpack.c.h.b16 %v338
        %v707 = vunpack.c.l.b16 %v339
        %v708 = vunpack.c.h.b16 %v339
        %v709 = vunpack.c.l.b16 %v340
        %v710 = vunpack.c.h.b16 %v340
        %v711 = vunpack.c.l.b16 %v341
        %v712 = vunpack.c.h.b16 %v341
        %v713 = vunpack.c.l.b16 %v342
        %v714 = vunpack.c.h.b16 %v342
        %v715 = vunpack.c.l.b16 %v343
        %v716 = vunpack.c.h.b16 %v343
        %v717 = vunpack.c.l.b16 %v344
        %v718 = vunpack.c.h.b16 %v344
        %v719 = vunpack.c.l.b16 %v345
        %v720 = vunpack.c.h.b16 %v345
        %v721 = vunpack.c.l.b16 %v346
        %v722 = vunpack.c.h.b16 %v346
        %v723 = vunpack.c.l.b16 %v347
        %v724 = vunpack.c.h.b16 %v347
        %v725 = vunpack.c.l.b16 %v348
        %v726 = vunpack.c.h.b16 %v348
        %v727 = vunpack.c.l.b16 %v349
        %v728 = vunpack.c.h.b16 %v349
        %v729 = vunpack.c.l.b16 %v350
        %v730 = vunpack.c.h.b16 %v350
        %v731 = vunpack.c.l.b16 %v351
        %v732 = vunpack.c.h.b16 %v351
        %v733 = vunpack.c.l.b16 %v352
        %v734 = vunpack.c.h.b16 %v352
        %v735 = vunpack.c.l.b16 %v353
        %v736 = vunpack.c.h.b16 %v353
        %v737 = vunpack.c.l.b16 %v354
        %v738 = vunpack.c.h.b16 %v354
        %v739 = vunpack.c.l.b16 %v355
        %v740 = vunpack.c.h.b16 %v355
        %v741 = vunpack.c.l.b16 %v356
        %v742 = vunpack.c.h.b16 %v356
        %v743 = vunpack.c.l.b16 %v357
        %v744 = vunpack.c.h.b16 %v357
        %v745 = vunpack.c.l.b16 %v358
        %v746 = vunpack.c.h.b16 %v358
        %v747 = vunpack.c.l.b16 %v359
        %v748 = vunpack.c.h.b16 %v359
        %v749 = vunpack.c.l.b16 %v360
        %v750 = vunpack.c.h.b16 %v360
        %v751 = vunpack.c.l.b16 %v361
        %v752 = vunpack.c.h.b16 %v361
        %v753 = vunpack.c.l.b16 %v362
        %v754 = vunpack.c.h.b16 %v362
        %v755 = vunpack.c.l.b16 %v363
        %v756 = vunpack.c.h.b16 %v363
        %v757 = vunpack.c.l.b16 %v364
        %v758 = vunpack.c.h.b16 %v364
        %v759 = vunpack.c.l.b16 %v365
        %v760 = vunpack.c.h.b16 %v365
        %v761 = vunpack.c.l.b16 %v366
        %v762 = vunpack.c.h.b16 %v366
        %v763 = vunpack.c.l.b16 %v367
        %v764 = vunpack.c.h.b16 %v367
        %v765 = vunpack.c.l.b16 %v368
        %v766 = vunpack.c.h.b16 %v368
        %v767 = vunpack.c.l.b16 %v369
        %v768 = vunpack.c.h.b16 %v369
        %v769 = vunpack.c.l.b16 %v370
        %v770 = vunpack.c.h.b16 %v370
        %v771 = vunpack.c.l.b16 %v371
        %v772 = vunpack.c.h.b16 %v371
        %v773 = vunpack.c.l.b16 %v372
        %v774 = vunpack.c.h.b16 %v372
        %v775 = vunpack.c.l.b16 %v373
        %v776 = vunpack.c.h.b16 %v373
        %v777 = vunpack.c.l.b16 %v374
        %v778 = vunpack.c.h.b16 %v374
        %v779 = vunpack.c.l.b16 %v375
        %v780 = vunpack.c.h.b16 %v375
        %v781 = vunpack.c.l.b16 %v376
        %v782 = vunpack.c.h.b16 %v376
        %v783 = vunpack.c.l.b16 %v377
        %v784 = vunpack.c.h.b16 %v377
        %v785 = vunpack.c.l.b16 %v378
        %v786 = vunpack.c.h.b16 %v378
        %v787 = vunpack.c.l.b16 %v379
        %v788 = vunpack.c.h.b16 %v379
        %v789 = vunpack.c.l.b16 %v380
        %v790 = vunpack.c.h.b16 %v380
        %v791 = vunpack.c.l.b16 %v381
        %v792 = vunpack.c.h.b16 %v381
        %v793 = vunpack.c.l.b16 %v382
        %v794 = vunpack.c.h.b16 %v382
        %v795 = vunpack.c.l.b16 %v383
        %v796 = vunpack.c.h.b16 %v383
        %v797 = vunpack.c.l.b16 %v384
        %v798 = vunpack.c.h.b16 %v384
        %v799 = vunpack.c.l.b16 %v385
        %v800 = vunpack.c.h.b16 %v385
        %v801 = vunpack.c.l.b16 %v386
        %v802 = vunpack.c.h.b16 %v386
        %v803 = vunpack.c.l.b16 %v387
        %v804 = vunpack.c.h.b16 %v387
        %v805 = vunpack.c.l.b16 %v388
        %v806 = vunpack.c.h.b16 %v388
        %v807 = vunpack.c.l.b16 %v389
        %v808 = vunpack.c.h.b16 %v389
        %v809 = vunpack.c.l.b16 %v390
        %v810 = vunpack.c.h.b16 %v390
        %v811 = vunpack.c.l.b16 %v391
        %v812 = vunpack.c.h.b16 %v391
        %v813 = vunpack.c.l.b16 %v392
        %v814 = vunpack.c.h.b16 %v392
        %v815 = vunpack.c.l.b16 %v393
        %v816 = vunpack.c.h.b16 %v393
        %v817 = vunpack.c.l.b16 %v394
        %v818 = vunpack.c.h.b16 %v394
        %v819 = vpack.c.b16 %v567, %v563
        %v820 = vpack.c.b16 %v568, %v564
        %v821 = vpack.c.b16 %v569, %v565
        %v822 = vpack.c.b16 %v570, %v566
        %v823 = vpack.c.b16 %v575, %v571
        %v824 = vpack.c.b16 %v576, %v572
        %v825 = vpack.c.b16 %v577, %v573
        %v826 = vpack.c.b16 %v578, %v574
        %v827 = vpack.c.b16 %v583, %v579
        %v828 = vpack.c.b16 %v584, %v580
        %v829 = vpack.c.b16 %v585, %v581
        %v830 = vpack.c.b16 %v586, %v582
        %v831 = vpack.c.b16 %v591, %v587
        %v832 = vpack.c.b16 %v592, %v588
        %v833 = vpack.c.b16 %v593, %v589
        %v834 = vpack.c.b16 %v594, %v590
        %v835 = vpack.c.b16 %v599, %v595
        %v836 = vpack.c.b16 %v600, %v596
        %v837 = vpack.c.b16 %v601, %v597
        %v838 = vpack.c.b16 %v602, %v598
        %v839 = vpack.c.b16 %v607, %v603
        %v840 = vpack.c.b16 %v608, %v604
        %v841 = vpack.c.b16 %v609, %v605
        %v842 = vpack.c.b16 %v610, %v606
        %v843 = vpack.c.b16 %v615, %v611
        %v844 = vpack.c.b16 %v616, %v612
        %v845 = vpack.c.b16 %v617, %v613
        %v846 = vpack.c.b16 %v618, %v614
        %v847 = vpack.c.b16 %v623, %v619
        %v848 = vpack.c.b16 %v624, %v620
        %v849 = vpack.c.b16 %v625, %v621
        %v850 = vpack.c.b16 %v626, %v622
        %v851 = vpack.c.b16 %v631, %v627
        %v852 = vpack.c.b16 %v632, %v628
        %v853 = vpack.c.b16 %v633, %v629
        %v854 = vpack.c.b16 %v634, %v630
        %v855 = vpack.c.b16 %v639, %v635
        %v856 = vpack.c.b16 %v640, %v636
        %v857 = vpack.c.b16 %v641, %v637
        %v858 = vpack.c.b16 %v642, %v638
        %v859 = vpack.c.b16 %v647, %v643
        %v860 = vpack.c.b16 %v648, %v644
        %v861 = vpack.c.b16 %v649, %v645
        %v862 = vpack.c.b16 %v650, %v646
        %v863 = vpack.c.b16 %v655, %v651
        %v864 = vpack.c.b16 %v656, %v652
        %v865 = vpack.c.b16 %v657, %v653
        %v866 = vpack.c.b16 %v658, %v654
        %v867 = vpack.c.b16 %v663, %v659
        %v868 = vpack.c.b16 %v664, %v660
        %v869 = vpack.c.b16 %v665, %v661
        %v870 = vpack.c.b16 %v666, %v662
        %v871 = vpack.c.b16 %v671, %v667
        %v872 = vpack.c.b16 %v672, %v668
        %v873 = vpack.c.b16 %v673, %v669
        %v874 = vpack.c.b16 %v674, %v670
        %v875 = vpack.c.b16 %v679, %v675
        %v876 = vpack.c.b16 %v680, %v676
        %v877 = vpack.c.b16 %v681, %v677
        %v878 = vpack.c.b16 %v682, %v678
        %v879 = vpack.c.b16 %v687, %v683
        %v880 = vpack.c.b16 %v688, %v684
        %v881 = vpack.c.b16 %v689, %v685
        %v882 = vpack.c.b16 %v690, %v686
        %v883 = vpack.c.b16 %v695, %v691
        %v884 = vpack.c.b16 %v696, %v692
        %v885 = vpack.c.b16 %v697, %v693
        %v886 = vpack.c.b16 %v698, %v694
        %v887 = vpack.c.b16 %v703, %v699
        %v888 = vpack.c.b16 %v704, %v700
        %v889 = vpack.c.b16 %v705, %v701
        %v890 = vpack.c.b16 %v706, %v702
        %v891 = vpack.c.b16 %v711, %v707
        %v892 = vpack.c.b16 %v712, %v708
        %v893 = vpack.c.b16 %v713, %v709
        %v894 = vpack.c.b16 %v714, %v710
        %v895 = vpack.c.b16 %v719, %v715
        %v896 = vpack.c.b16 %v720, %v716
        %v897 = vpack.c.b16 %v721, %v717
        %v898 = vpack.c.b16 %v722, %v718
        %v899 = vpack.c.b16 %v727, %v723
        %v900 = vpack.c.b16 %v728, %v724
        %v901 = vpack.c.b16 %v729, %v725
        %v902 = vpack.c.b16 %v730, %v726
        %v903 = vpack.c.b16 %v735, %v731
        %v904 = vpack.c.b16 %v736, %v732
        %v905 = vpack.c.b16 %v737, %v733
        %v906 = vpack.c.b16 %v738, %v734
        %v907 = vpack.c.b16 %v743, %v739
        %v908 = vpack.c.b16 %v744, %v740
        %v909 = vpack.c.b16 %v745, %v741
        %v910 = vpack.c.b16 %v746, %v742
        %v911 = vpack.c.b16 %v751, %v747
        %v912 = vpack.c.b16 %v752, %v748
        %v913 = vpack.c.b16 %v753, %v749
        %v914 = vpack.c.b16 %v754, %v750
        %v915 = vpack.c.b16 %v759, %v755
        %v916 = vpack.c.b16 %v760, %v756
        %v917 = vpack.c.b16 %v761, %v757
        %v918 = vpack.c.b16 %v762, %v758
        %v919 = vpack.c.b16 %v767, %v763
        %v920 = vpack.c.b16 %v768, %v764
        %v921 = vpack.c.b16 %v769, %v765
        %v922 = vpack.c.b16 %v770, %v766
        %v923 = vpack.c.b16 %v775, %v771
        %v924 = vpack.c.b16 %v776, %v772
        %v925 = vpack.c.b16 %v777, %v773
        %v926 = vpack.c.b16 %v778, %v774
        %v927 = vpack.c.b16 %v783, %v779
        %v928 = vpack.c.b16 %v784, %v780
        %v929 = vpack.c.b16 %v785, %v781
        %v930 = vpack.c.b16 %v786, %v782
        %v931 = vpack.c.b16 %v791, %v787
        %v932 = vpack.c.b16 %v792, %v788
        %v933 = vpack.c.b16 %v793, %v789
        %v934 = vpack.c.b16 %v794, %v790
        %v935 = vpack.c.b16 %v799, %v795
        %v936 = vpack.c.b16 %v800, %v796
        %v937 = vpack.c.b16 %v801, %v797
        %v938 = vpack.c.b16 %v802, %v798
        %v939 = vpack.c.b16 %v807, %v803
        %v940 = vpack.c.b16 %v808, %v804
        %v941 = vpack.c.b16 %v809, %v805
        %v942 = vpack.c.b16 %v810, %v806
        %v943 = vpack.c.b16 %v815, %v811
        %v944 = vpack.c.b16 %v816, %v812
        %v945 = vpack.c.b16 %v817, %v813
        %v946 = vpack.c.b16 %v818, %v814
        %1075 = vmatprep.subr.bf16.mxu0 %v820
        %1076 = vmatpush1.bf16.msra.mxu0 %v819
        %1077 = vmatprep.subr.bf16.mxu0 %v824
        %1078 = vmatpush1.bf16.msra.mxu0 %v823
        %1079 = vmatprep.subr.bf16.mxu0 %v828
        %1080 = vmatpush1.bf16.msra.mxu0 %v827
        %1081 = vmatprep.subr.bf16.mxu0 %v832
        %1082 = vmatpush1.bf16.msra.mxu0 %v831
        %1083 = vmatprep.subr.bf16.mxu0 %v836
        %1084 = vmatpush1.bf16.msra.mxu0 %v835
        %1085 = vmatprep.subr.bf16.mxu0 %v840
        %1086 = vmatpush1.bf16.msra.mxu0 %v839
        %1087 = vmatprep.subr.bf16.mxu0 %v844
        %1088 = vmatpush1.bf16.msra.mxu0 %v843
        %1089 = vmatprep.subr.bf16.mxu0 %v848
        %1090 = vmatpush1.bf16.msra.mxu0 %v847
        %1091 = vmatprep.subr.bf16.mxu0 %v852
        %1092 = vmatpush1.bf16.msra.mxu0 %v851
        %1093 = vmatprep.subr.bf16.mxu0 %v856
        %1094 = vmatpush1.bf16.msra.mxu0 %v855
        %1095 = vmatprep.subr.bf16.mxu0 %v860
        %1096 = vmatpush1.bf16.msra.mxu0 %v859
        %1097 = vmatprep.subr.bf16.mxu0 %v864
        %1098 = vmatpush1.bf16.msra.mxu0 %v863
        %1099 = vmatprep.subr.bf16.mxu0 %v868
        %1100 = vmatpush1.bf16.msra.mxu0 %v867
        %1101 = vmatprep.subr.bf16.mxu0 %v872
        %1102 = vmatpush1.bf16.msra.mxu0 %v871
        %1103 = vmatprep.subr.bf16.mxu0 %v876
        %1104 = vmatpush1.bf16.msra.mxu0 %v875
        %1105 = vmatprep.subr.bf16.mxu0 %v880
        %1106 = vmatpush1.bf16.msra.mxu0 %v879
        %1107 = vmatprep.mubr.bf16.mxu0 %v420
        %1108 = vmatmul.mubr.bf16.gmra.mrb[0].mxu0 %v419
        %v1109 = vpop.f32.mrb[0].mxu0
        %v1110 = vadd.f32 0.0, %v1109
        %v1111 = vpop.f32.mrb[0].mxu0
        %v1112 = vadd.f32 0.0, %v1111
        %v1113 = vpop.f32.mrb[0].mxu0
        %v1114 = vadd.f32 0.0, %v1113
        %v1115 = vpop.f32.mrb[0].mxu0
        %v1116 = vadd.f32 0.0, %v1115
        %1117 = vmatprep.mubr.bf16.mxu0 %v424
        %1118 = vmatmul.mubr.bf16.gmra.mrb[0].mxu0 %v423
        %v1119 = vpop.f32.mrb[0].mxu0
        %v1120 = vadd.f32 0.0, %v1119
        %v1121 = vpop.f32.mrb[0].mxu0
        %v1122 = vadd.f32 0.0, %v1121
        %v1123 = vpop.f32.mrb[0].mxu0
        %v1124 = vadd.f32 0.0, %v1123
        %v1125 = vpop.f32.mrb[0].mxu0
        %v1126 = vadd.f32 0.0, %v1125
        %1127 = vdwg.mxu0
        %1128 = vmatprep.subr.bf16.mxu0 %v884
        %1129 = vmatpush1.bf16.msra.mxu0 %v883
        %1130 = vmatprep.subr.bf16.mxu0 %v888
        %1131 = vmatpush1.bf16.msra.mxu0 %v887
        %1132 = vmatprep.subr.bf16.mxu0 %v892
        %1133 = vmatpush1.bf16.msra.mxu0 %v891
        %1134 = vmatprep.subr.bf16.mxu0 %v896
        %1135 = vmatpush1.bf16.msra.mxu0 %v895
        %1136 = vmatprep.subr.bf16.mxu0 %v900
        %1137 = vmatpush1.bf16.msra.mxu0 %v899
        %1138 = vmatprep.subr.bf16.mxu0 %v904
        %1139 = vmatpush1.bf16.msra.mxu0 %v903
        %1140 = vmatprep.subr.bf16.mxu0 %v908
        %1141 = vmatpush1.bf16.msra.mxu0 %v907
        %1142 = vmatprep.subr.bf16.mxu0 %v912
        %1143 = vmatpush1.bf16.msra.mxu0 %v911
        %1144 = vmatprep.subr.bf16.mxu0 %v916
        %1145 = vmatpush1.bf16.msra.mxu0 %v915
        %1146 = vmatprep.subr.bf16.mxu0 %v920
        %1147 = vmatpush1.bf16.msra.mxu0 %v919
        %1148 = vmatprep.subr.bf16.mxu0 %v924
        %1149 = vmatpush1.bf16.msra.mxu0 %v923
        %1150 = vmatprep.subr.bf16.mxu0 %v928
        %1151 = vmatpush1.bf16.msra.mxu0 %v927
        %1152 = vmatprep.subr.bf16.mxu0 %v932
        %1153 = vmatpush1.bf16.msra.mxu0 %v931
        %1154 = vmatprep.subr.bf16.mxu0 %v936
        %1155 = vmatpush1.bf16.msra.mxu0 %v935
        %1156 = vmatprep.subr.bf16.mxu0 %v940
        %1157 = vmatpush1.bf16.msra.mxu0 %v939
        %1158 = vmatprep.subr.bf16.mxu0 %v944
        %1159 = vmatpush1.bf16.msra.mxu0 %v943
        %1160 = vmatprep.mubr.bf16.mxu0 %v422
        %1161 = vmatmul.mubr.bf16.gmra.mrb[0].mxu0 %v421
        %v1162 = vpop.f32.mrb[0].mxu0
        %v1163 = vadd.f32 %v1110, %v1162
        %v1164 = vpop.f32.mrb[0].mxu0
        %v1165 = vadd.f32 %v1112, %v1164
        %v1166 = vpop.f32.mrb[0].mxu0
        %v1167 = vadd.f32 %v1114, %v1166
        %v1168 = vpop.f32.mrb[0].mxu0
        %v1169 = vadd.f32 %v1116, %v1168
        %1170 = vmatprep.mubr.bf16.mxu0 %v426
        %1171 = vmatmul.mubr.bf16.gmra.mrb[0].mxu0 %v425
        %v1172 = vpop.f32.mrb[0].mxu0
        %v1173 = vadd.f32 %v1120, %v1172
        %v1174 = vpop.f32.mrb[0].mxu0
        %v1175 = vadd.f32 %v1122, %v1174
        %v1176 = vpop.f32.mrb[0].mxu0
        %v1177 = vadd.f32 %v1124, %v1176
        %v1178 = vpop.f32.mrb[0].mxu0
        %v1179 = vadd.f32 %v1126, %v1178
        %1180 = vdwg.mxu0
        %1181 = vmatprep.subr.bf16.mxu0 %v822
        %1182 = vmatpush1.bf16.msra.mxu0 %v821
        %1183 = vmatprep.subr.bf16.mxu0 %v826
        %1184 = vmatpush1.bf16.msra.mxu0 %v825
        %1185 = vmatprep.subr.bf16.mxu0 %v830
        %1186 = vmatpush1.bf16.msra.mxu0 %v829
        %1187 = vmatprep.subr.bf16.mxu0 %v834
        %1188 = vmatpush1.bf16.msra.mxu0 %v833
        %1189 = vmatprep.subr.bf16.mxu0 %v838
        %1190 = vmatpush1.bf16.msra.mxu0 %v837
        %1191 = vmatprep.subr.bf16.mxu0 %v842
        %1192 = vmatpush1.bf16.msra.mxu0 %v841
        %1193 = vmatprep.subr.bf16.mxu0 %v846
        %1194 = vmatpush1.bf16.msra.mxu0 %v845
        %1195 = vmatprep.subr.bf16.mxu0 %v850
        %1196 = vmatpush1.bf16.msra.mxu0 %v849
        %1197 = vmatprep.subr.bf16.mxu0 %v854
        %1198 = vmatpush1.bf16.msra.mxu0 %v853
        %1199 = vmatprep.subr.bf16.mxu0 %v858
        %1200 = vmatpush1.bf16.msra.mxu0 %v857
        %1201 = vmatprep.subr.bf16.mxu0 %v862
        %1202 = vmatpush1.bf16.msra.mxu0 %v861
        %1203 = vmatprep.subr.bf16.mxu0 %v866
        %1204 = vmatpush1.bf16.msra.mxu0 %v865
        %1205 = vmatprep.subr.bf16.mxu0 %v870
        %1206 = vmatpush1.bf16.msra.mxu0 %v869
        %1207 = vmatprep.subr.bf16.mxu0 %v874
        %1208 = vmatpush1.bf16.msra.mxu0 %v873
        %1209 = vmatprep.subr.bf16.mxu0 %v878
        %1210 = vmatpush1.bf16.msra.mxu0 %v877
        %1211 = vmatprep.subr.bf16.mxu0 %v882
        %1212 = vmatpush1.bf16.msra.mxu0 %v881
        %1213 = vmatprep.mubr.bf16.mxu0 %v420
        %1214 = vmatmul.mubr.bf16.gmra.mrb[0].mxu0 %v419
        %v1215 = vpop.f32.mrb[0].mxu0
        %v1216 = vadd.f32 0.0, %v1215
        %v1217 = vpop.f32.mrb[0].mxu0
        %v1218 = vadd.f32 0.0, %v1217
        %v1219 = vpop.f32.mrb[0].mxu0
        %v1220 = vadd.f32 0.0, %v1219
        %v1221 = vpop.f32.mrb[0].mxu0
        %v1222 = vadd.f32 0.0, %v1221
        %1223 = vmatprep.mubr.bf16.mxu0 %v424
        %1224 = vmatmul.mubr.bf16.gmra.mrb[0].mxu0 %v423
        %v1225 = vpop.f32.mrb[0].mxu0
        %v1226 = vadd.f32 0.0, %v1225
        %v1227 = vpop.f32.mrb[0].mxu0
        %v1228 = vadd.f32 0.0, %v1227
        %v1229 = vpop.f32.mrb[0].mxu0
        %v1230 = vadd.f32 0.0, %v1229
        %v1231 = vpop.f32.mrb[0].mxu0
        %v1232 = vadd.f32 0.0, %v1231
        %1233 = vdwg.mxu0
        %1234 = vmatprep.subr.bf16.mxu0 %v886
        %1235 = vmatpush1.bf16.msra.mxu0 %v885
        %1236 = vmatprep.subr.bf16.mxu0 %v890
        %1237 = vmatpush1.bf16.msra.mxu0 %v889
        %1238 = vmatprep.subr.bf16.mxu0 %v894
        %1239 = vmatpush1.bf16.msra.mxu0 %v893
        %1240 = vmatprep.subr.bf16.mxu0 %v898
        %1241 = vmatpush1.bf16.msra.mxu0 %v897
        %1242 = vmatprep.subr.bf16.mxu0 %v902
        %1243 = vmatpush1.bf16.msra.mxu0 %v901
        %1244 = vmatprep.subr.bf16.mxu0 %v906
        %1245 = vmatpush1.bf16.msra.mxu0 %v905
        %1246 = vmatprep.subr.bf16.mxu0 %v910
        %1247 = vmatpush1.bf16.msra.mxu0 %v909
        %1248 = vmatprep.subr.bf16.mxu0 %v914
        %1249 = vmatpush1.bf16.msra.mxu0 %v913
        %1250 = vmatprep.subr.bf16.mxu0 %v918
        %1251 = vmatpush1.bf16.msra.mxu0 %v917
        %1252 = vmatprep.subr.bf16.mxu0 %v922
        %1253 = vmatpush1.bf16.msra.mxu0 %v921
        %1254 = vmatprep.subr.bf16.mxu0 %v926
        %1255 = vmatpush1.bf16.msra.mxu0 %v925
        %1256 = vmatprep.subr.bf16.mxu0 %v930
        %1257 = vmatpush1.bf16.msra.mxu0 %v929
        %1258 = vmatprep.subr.bf16.mxu0 %v934
        %1259 = vmatpush1.bf16.msra.mxu0 %v933
        %1260 = vmatprep.subr.bf16.mxu0 %v938
        %1261 = vmatpush1.bf16.msra.mxu0 %v937
        %1262 = vmatprep.subr.bf16.mxu0 %v942
        %1263 = vmatpush1.bf16.msra.mxu0 %v941
        %1264 = vmatprep.subr.bf16.mxu0 %v946
        %1265 = vmatpush1.bf16.msra.mxu0 %v945
        %1266 = vmatprep.mubr.bf16.mxu0 %v422
        %1267 = vmatmul.mubr.bf16.gmra.mrb[0].mxu0 %v421
        %v1268 = vpop.f32.mrb[0].mxu0
        %v1269 = vadd.f32 %v1216, %v1268
        %v1270 = vpop.f32.mrb[0].mxu0
        %v1271 = vadd.f32 %v1218, %v1270
        %v1272 = vpop.f32.mrb[0].mxu0
        %v1273 = vadd.f32 %v1220, %v1272
        %v1274 = vpop.f32.mrb[0].mxu0
        %v1275 = vadd.f32 %v1222, %v1274
        %1276 = vmatprep.mubr.bf16.mxu0 %v426
        %1277 = vmatmul.mubr.bf16.gmra.mrb[0].mxu0 %v425
        %v1278 = vpop.f32.mrb[0].mxu0
        %v1279 = vadd.f32 %v1226, %v1278
        %v1280 = vpop.f32.mrb[0].mxu0
        %v1281 = vadd.f32 %v1228, %v1280
        %v1282 = vpop.f32.mrb[0].mxu0
        %v1283 = vadd.f32 %v1230, %v1282
        %v1284 = vpop.f32.mrb[0].mxu0
        %v1285 = vadd.f32 %v1232, %v1284
        %1286 = vdwg.mxu0
        %p1287 = scmp.eq.s32.totalorder %s20, 0
        // Predicated region
        $region52: #{dcgan_forward.22} parent=46 // pred_check
          %p1288 = pneg %p1287
        $region53: #{dcgan_forward.22} parent=46 // pred_check_branch
          %1290 = sbr.rel (%p1288) target = $region55
        $region54: #{dcgan_forward.22} parent=46 // pred_region
          %1291 = vst [vmem:[#allocation2] sm:$0xff] 0.0
          %1292 = vst [vmem:[#allocation2 + $0x8] sm:$0xff] 0.0
          %1293 = vst [vmem:[#allocation2 + $0x10] sm:$0xff] 0.0
          %1294 = vst [vmem:[#allocation2 + $0x18] sm:$0xff] 0.0
          %1295 = vst [vmem:[#allocation2 + $0x20] sm:$0xff] 0.0
          %1296 = vst [vmem:[#allocation2 + $0x28] sm:$0xff] 0.0
          %1297 = vst [vmem:[#allocation2 + $0x30] sm:$0xff] 0.0
          %1298 = vst [vmem:[#allocation2 + $0x38] sm:$0xff] 0.0
          %1299 = vst [vmem:[#allocation2 + $0x40] sm:$0xff] 0.0
          %1300 = vst [vmem:[#allocation2 + $0x48] sm:$0xff] 0.0
          %1301 = vst [vmem:[#allocation2 + $0x50] sm:$0xff] 0.0
          %1302 = vst [vmem:[#allocation2 + $0x58] sm:$0xff] 0.0
          %1303 = vst [vmem:[#allocation2 + $0x60] sm:$0xff] 0.0
          %1304 = vst [vmem:[#allocation2 + $0x68] sm:$0xff] 0.0
          %1305 = vst [vmem:[#allocation2 + $0x70] sm:$0xff] 0.0
          %1306 = vst [vmem:[#allocation2 + $0x78] sm:$0xff] 0.0
        $region55: #{dcgan_forward.22} parent=46 // pred_fallthru
          _
        %v1307 = vld [vmem:[#allocation2] sm:$0xff]
        %v1308 = vld [vmem:[#allocation2 + $0x8] sm:$0xff]
        %v1309 = vld [vmem:[#allocation2 + $0x10] sm:$0xff]
        %v1310 = vld [vmem:[#allocation2 + $0x18] sm:$0xff]
        %v1311 = vld [vmem:[#allocation2 + $0x20] sm:$0xff]
        %v1312 = vld [vmem:[#allocation2 + $0x28] sm:$0xff]
        %v1313 = vld [vmem:[#allocation2 + $0x30] sm:$0xff]
        %v1314 = vld [vmem:[#allocation2 + $0x38] sm:$0xff]
        %v1315 = vld [vmem:[#allocation2 + $0x40] sm:$0xff]
        %v1316 = vld [vmem:[#allocation2 + $0x48] sm:$0xff]
        %v1317 = vld [vmem:[#allocation2 + $0x50] sm:$0xff]
        %v1318 = vld [vmem:[#allocation2 + $0x58] sm:$0xff]
        %v1319 = vld [vmem:[#allocation2 + $0x60] sm:$0xff]
        %v1320 = vld [vmem:[#allocation2 + $0x68] sm:$0xff]
        %v1321 = vld [vmem:[#allocation2 + $0x70] sm:$0xff]
        %v1322 = vld [vmem:[#allocation2 + $0x78] sm:$0xff]
        %v1323 = vadd.f32 %v1307, %v1163
        %v1324 = vadd.f32 %v1308, %v1165
        %v1325 = vadd.f32 %v1309, %v1269
        %v1326 = vadd.f32 %v1310, %v1271
        %v1327 = vadd.f32 %v1311, %v1167
        %v1328 = vadd.f32 %v1312, %v1169
        %v1329 = vadd.f32 %v1313, %v1273
        %v1330 = vadd.f32 %v1314, %v1275
        %v1331 = vadd.f32 %v1315, %v1173
        %v1332 = vadd.f32 %v1316, %v1175
        %v1333 = vadd.f32 %v1317, %v1279
        %v1334 = vadd.f32 %v1318, %v1281
        %v1335 = vadd.f32 %v1319, %v1177
        %v1336 = vadd.f32 %v1320, %v1179
        %v1337 = vadd.f32 %v1321, %v1283
        %v1338 = vadd.f32 %v1322, %v1285
        %1339 = vst [vmem:[#allocation2] sm:$0xff] %v1323
        %1340 = vst [vmem:[#allocation2 + $0x8] sm:$0xff] %v1324
        %1341 = vst [vmem:[#allocation2 + $0x10] sm:$0xff] %v1325
        %1342 = vst [vmem:[#allocation2 + $0x18] sm:$0xff] %v1326
        %1343 = vst [vmem:[#allocation2 + $0x20] sm:$0xff] %v1327
        %1344 = vst [vmem:[#allocation2 + $0x28] sm:$0xff] %v1328
        %1345 = vst [vmem:[#allocation2 + $0x30] sm:$0xff] %v1329
        %1346 = vst [vmem:[#allocation2 + $0x38] sm:$0xff] %v1330
        %1347 = vst [vmem:[#allocation2 + $0x40] sm:$0xff] %v1331
        %1348 = vst [vmem:[#allocation2 + $0x48] sm:$0xff] %v1332
        %1349 = vst [vmem:[#allocation2 + $0x50] sm:$0xff] %v1333
        %1350 = vst [vmem:[#allocation2 + $0x58] sm:$0xff] %v1334
        %1351 = vst [vmem:[#allocation2 + $0x60] sm:$0xff] %v1335
        %1352 = vst [vmem:[#allocation2 + $0x68] sm:$0xff] %v1336
        %1353 = vst [vmem:[#allocation2 + $0x70] sm:$0xff] %v1337
        %1354 = vst [vmem:[#allocation2 + $0x78] sm:$0xff] %v1338
        %p1355 = scmp.eq.s32.totalorder %s20, 7
        // Predicated region
        $region56: #{dcgan_forward.22} parent=46 // pred_check
          %p1356 = pneg %p1355
        $region57: #{dcgan_forward.22} parent=46 // pred_check_branch
          %1358 = sbr.rel (%p1356) target = $region59
        $region58: #{dcgan_forward.22} parent=46 // pred_region
          %v1359 = vld [vmem:[#allocation2] sm:$0xff]
          %v1360 = vld [vmem:[#allocation2 + $0x8] sm:$0xff]
          %v1361 = vld [vmem:[#allocation2 + $0x10] sm:$0xff]
          %v1362 = vld [vmem:[#allocation2 + $0x18] sm:$0xff]
          %v1363 = vld [vmem:[#allocation2 + $0x20] sm:$0xff]
          %v1364 = vld [vmem:[#allocation2 + $0x28] sm:$0xff]
          %v1365 = vld [vmem:[#allocation2 + $0x30] sm:$0xff]
          %v1366 = vld [vmem:[#allocation2 + $0x38] sm:$0xff]
          %v1367 = vld [vmem:[#allocation2 + $0x40] sm:$0xff]
          %v1368 = vld [vmem:[#allocation2 + $0x48] sm:$0xff]
          %v1369 = vld [vmem:[#allocation2 + $0x50] sm:$0xff]
          %v1370 = vld [vmem:[#allocation2 + $0x58] sm:$0xff]
          %v1371 = vld [vmem:[#allocation2 + $0x60] sm:$0xff]
          %v1372 = vld [vmem:[#allocation2 + $0x68] sm:$0xff]
          %v1373 = vld [vmem:[#allocation2 + $0x70] sm:$0xff]
          %v1374 = vld [vmem:[#allocation2 + $0x78] sm:$0xff]
          %1375 = vst [vmem:[%s256] sm:$0xff] %v1359
          %1376 = vst [vmem:[%s256 + $0x8] sm:$0xff] %v1360
          %1377 = vst [vmem:[%s256 + $0x10] sm:$0xff] %v1361
          %1378 = vst [vmem:[%s256 + $0x18] sm:$0xff] %v1362
          %1379 = vst [vmem:[%s256 + $0x20] sm:$0xff] %v1363
          %1380 = vst [vmem:[%s256 + $0x28] sm:$0xff] %v1364
          %1381 = vst [vmem:[%s256 + $0x30] sm:$0xff] %v1365
          %1382 = vst [vmem:[%s256 + $0x38] sm:$0xff] %v1366
          %1383 = vst [vmem:[%s256 + $0x40] sm:$0xff] %v1367
          %1384 = vst [vmem:[%s256 + $0x48] sm:$0xff] %v1368
          %1385 = vst [vmem:[%s256 + $0x50] sm:$0xff] %v1369
          %1386 = vst [vmem:[%s256 + $0x58] sm:$0xff] %v1370
          %1387 = vst [vmem:[%s256 + $0x60] sm:$0xff] %v1371
          %1388 = vst [vmem:[%s256 + $0x68] sm:$0xff] %v1372
          %1389 = vst [vmem:[%s256 + $0x70] sm:$0xff] %v1373
          %1390 = vst [vmem:[%s256 + $0x78] sm:$0xff] %v1374
        $region59: #{dcgan_forward.22} parent=46 // pred_fallthru
          _
        %s1391 = smul.u32 4, %s18
        %s1392 = smul.u32 4, %s19
        %p1393 = scmp.lt.s32.totalorder %s1391, 3
        %s1394 = scalar_select %p1393, %s1391, 3
        %p1395 = scmp.lt.s32.totalorder %s1392, 3
        %s1396 = scalar_select %p1395, %s1392, 3
        %s1397 = smul.addr %s1394, 4
        %s1398 = sadd.s32 %s1396, %s1397
        %s1399 = smul.addr %s1398, 8
        %s1400 = scalar_lea.vmem %s2, %s1399
        // Predicated region
        $region60: #{dcgan_forward.22} parent=46 // pred_check
          %p1401 = pneg %p108
        $region61: #{dcgan_forward.22} parent=46 // pred_check_branch
          %1403 = sbr.rel (%p1401) target = $region63
        $region62: #{dcgan_forward.22} parent=46 // pred_region
          %s1404 = smul.u32 4, %s18
          %s1405 = smul.u32 4, %s19
        $region63: #{dcgan_forward.22} parent=46 // pred_fallthru
          _
        // Predicated region
        $region64: #{dcgan_forward.22} parent=46 // pred_check
          %p1406 = pneg %p108
        $region65: #{dcgan_forward.22} parent=46 // pred_check_branch
          %1408 = sbr.rel (%p1406) target = $region67
        $region66: #{dcgan_forward.22} parent=46 // pred_region
          %s1409 = smul.u32 4, %s18
          %s1410 = smul.u32 4, %s19
          %p1411 = scmp.lt.s32.totalorder %s1409, 3
          %s1412 = scalar_select %p1411, %s1409, 3
          %p1413 = scmp.lt.s32.totalorder %s1410, 3
          %s1414 = scalar_select %p1413, %s1410, 3
          %s1415 = smul.addr %s1412, 4
          %s1416 = sadd.s32 %s1414, %s1415
          %s1417 = smul.addr %s1416, 8
          %s1418 = scalar_lea.vmem %s2, %s1417
        $region67: #{dcgan_forward.22} parent=46 // pred_fallthru
          _
      $region47: #{dcgan_forward.22} parent=5 // pred_fallthru
        _
      %p1419 = scmp.le.s32.totalorder 2, %s8
      // Predicated region
      $region68: #{dcgan_forward.22} parent=5 // pred_check
        %p1420 = pneg %p1419
      $region69: #{dcgan_forward.22} parent=5 // pred_check_branch
        %1422 = sbr.rel (%p1420) target = $region71
      $region70: #{dcgan_forward.22} parent=5 // pred_region
        %s1423 = ssub.s32 %s8, 2
      $region71: #{dcgan_forward.22} parent=5 // pred_fallthru
        _
    $region6: #{dcgan_forward.22} parent=1 // loop_footer
      %s12 = sadd.s32 1, %s8
    $region7: #{dcgan_forward.22} parent=1 // loop_footer_branch
      %7 = sbr.rel target = $region3
    $region8: #{dcgan_forward.22} parent=1 // loop_exit
      _

// kernel: dcgan_forward.23
$region0: #{dcgan_forward.23}
  #allocation0 [shape = 'u32[]', space=smem, size = 0x4, offset = 0x4, fixed_abs, tag = 'smem constant byte address 0x4 - core index']
  #allocation1 [shape = 'u32[144,128]{1,0:T(1,128)}', space=vmem, size = 0x12000, scoped, tag = 'internal scratch']
  %s0 = inlined_call_operand.vmem [shape: f32[32,512], index: 0, kind: input, shape index: {}]
  %s1 = inlined_call_operand.vmem [shape: f32[1,512], index: 1, kind: output, shape index: {0}]
  %s2 = inlined_call_operand.vmem [shape: f32[1,512], index: 2, kind: output, shape index: {1}]
  %3 = xla_tuple %s1, %s2
  %s4 = sld [smem:[#allocation0]]
  $region26: #{dcgan_forward.23} parent=0
    _
  %s6 = ssub.s32 1, %s4
  %s7 = scalar_select 0, %s6, %s4
  // Predicated region
  $region2: #{dcgan_forward.23} parent=0 // pred_check
    _
  $region3: #{dcgan_forward.23} parent=0 // pred_check_branch
    %9 = sbr.rel (0) target = $region5
  $region4: #{dcgan_forward.23} parent=0 // pred_region
    _
  $region5: #{dcgan_forward.23} parent=0 // pred_fallthru
    _
  %p10 = scmp.eq.s32.totalorder 0, 0
  // Predicated region
  $region6: #{dcgan_forward.23} parent=0 // pred_check
    %p11 = pneg %p10
  $region7: #{dcgan_forward.23} parent=0 // pred_check_branch
    %13 = sbr.rel (%p11) target = $region9
  $region8: #{dcgan_forward.23} parent=0 // pred_region
    %v14 = vlaneseq
    %vm15 = vcmp.ge.s32.totalorder %v14, 0
    %vm16 = vcmp.lt.s32.totalorder %v14, 512
    %vm17 = vmand %vm15, %vm16
    %18 = vst.msk [vmem:[%s1] sm:$0xf] %vm17, 0.0
    %19 = vst.msk [vmem:[%s2] sm:$0xf] %vm17, 0.0
  $region9: #{dcgan_forward.23} parent=0 // pred_fallthru
    _
  %v20 = vld [vmem:[%s0] sm:$0xff]
  %v21 = vld [vmem:[%s0 + $0x8] sm:$0xff]
  %v22 = vld [vmem:[%s0 + $0x10] sm:$0xff]
  %v23 = vld [vmem:[%s0 + $0x18] sm:$0xff]
  %v24 = vld [vmem:[%s0 + $0x20] sm:$0xff]
  %v25 = vld [vmem:[%s0 + $0x28] sm:$0xff]
  %v26 = vld [vmem:[%s0 + $0x30] sm:$0xff]
  %v27 = vld [vmem:[%s0 + $0x38] sm:$0xff]
  %v28 = vld [vmem:[%s0 + $0x40] sm:$0xff]
  %v29 = vld [vmem:[%s0 + $0x48] sm:$0xff]
  %v30 = vld [vmem:[%s0 + $0x50] sm:$0xff]
  %v31 = vld [vmem:[%s0 + $0x58] sm:$0xff]
  %v32 = vld [vmem:[%s0 + $0x60] sm:$0xff]
  %v33 = vld [vmem:[%s0 + $0x68] sm:$0xff]
  %v34 = vld [vmem:[%s0 + $0x70] sm:$0xff]
  %v35 = vld [vmem:[%s0 + $0x78] sm:$0xff]
  %v36 = vld [vmem:[%s1] sm:$0xf]
  %v37 = vadd.f32 %v20, %v24
  %v38 = vadd.f32 %v37, %v28
  %v39 = vadd.f32 %v38, %v32
  %v40 = vrot.slane %v39, 4
  %v41 = vadd.f32 %v39, %v40
  %v42 = vrot.slane %v41, 2
  %v43 = vadd.f32 %v41, %v42
  %v44 = vrot.slane %v43, 1
  %v45 = vadd.f32 %v43, %v44
  %v46 = vadd.f32 %v21, %v25
  %v47 = vadd.f32 %v46, %v29
  %v48 = vadd.f32 %v47, %v33
  %v49 = vrot.slane %v48, 4
  %v50 = vadd.f32 %v48, %v49
  %v51 = vrot.slane %v50, 2
  %v52 = vadd.f32 %v50, %v51
  %v53 = vrot.slane %v52, 1
  %v54 = vadd.f32 %v52, %v53
  %v55 = vadd.f32 %v22, %v26
  %v56 = vadd.f32 %v55, %v30
  %v57 = vadd.f32 %v56, %v34
  %v58 = vrot.slane %v57, 4
  %v59 = vadd.f32 %v57, %v58
  %v60 = vrot.slane %v59, 2
  %v61 = vadd.f32 %v59, %v60
  %v62 = vrot.slane %v61, 1
  %v63 = vadd.f32 %v61, %v62
  %v64 = vadd.f32 %v23, %v27
  %v65 = vadd.f32 %v64, %v31
  %v66 = vadd.f32 %v65, %v35
  %v67 = vrot.slane %v66, 4
  %v68 = vadd.f32 %v66, %v67
  %v69 = vrot.slane %v68, 2
  %v70 = vadd.f32 %v68, %v69
  %v71 = vrot.slane %v70, 1
  %v72 = vadd.f32 %v70, %v71
  %v77 = vcombine.low %v45, %v54
  %v78 = vcombine.low %v63, %v72
  %v80 = vunpack.c.l.s4 1966171168
  %v81 = vunpack.c.0.s8 %v80
  %v82 = vlaneseq
  %v83 = vshrl.u32 %v82, 7
  %v84 = vsub.s32 %v81, %v83
  %v85 = vrot.slane %v77, %v84
  %v87 = vunpack.c.l.s4 1966171168
  %v88 = vunpack.c.0.s8 %v87
  %v89 = vlaneseq
  %v90 = vshrl.u32 %v89, 7
  %v91 = vsub.s32 %v88, %v90
  %v92 = vrot.slane %v78, %v91
  %v93 = vcombine.low %v85, %v92
  %v95 = vunpack.c.l.s4 1966171168
  %v96 = vunpack.c.0.s8 %v95
  %v97 = vlaneseq
  %v98 = vshrl.u32 %v97, 7
  %v99 = vsub.s32 %v96, %v98
  %v100 = vrot.slane %v93, %v99
  %v102 = vadd.f32 %v36, %v100
  %v103 = vlaneseq
  %vm104 = vcmp.ge.s32.totalorder %v103, 0
  %vm105 = vcmp.lt.s32.totalorder %v103, 512
  %vm106 = vmand %vm104, %vm105
  %107 = vst.msk [vmem:[%s1] sm:$0xf] %vm106, %v102
  %v108 = vld [vmem:[%s2] sm:$0xf]
  %v109 = vmul.f32 %v20, %v20
  %v110 = vmul.f32 %v21, %v21
  %v111 = vmul.f32 %v22, %v22
  %v112 = vmul.f32 %v23, %v23
  %v113 = vmul.f32 %v24, %v24
  %v114 = vmul.f32 %v25, %v25
  %v115 = vmul.f32 %v26, %v26
  %v116 = vmul.f32 %v27, %v27
  %v117 = vmul.f32 %v28, %v28
  %v118 = vmul.f32 %v29, %v29
  %v119 = vmul.f32 %v30, %v30
  %v120 = vmul.f32 %v31, %v31
  %v121 = vmul.f32 %v32, %v32
  %v122 = vmul.f32 %v33, %v33
  %v123 = vmul.f32 %v34, %v34
  %v124 = vmul.f32 %v35, %v35
  %v125 = vadd.f32 %v109, %v113
  %v126 = vadd.f32 %v125, %v117
  %v127 = vadd.f32 %v126, %v121
  %v128 = vrot.slane %v127, 4
  %v129 = vadd.f32 %v127, %v128
  %v130 = vrot.slane %v129, 2
  %v131 = vadd.f32 %v129, %v130
  %v132 = vrot.slane %v131, 1
  %v133 = vadd.f32 %v131, %v132
  %v134 = vadd.f32 %v110, %v114
  %v135 = vadd.f32 %v134, %v118
  %v136 = vadd.f32 %v135, %v122
  %v137 = vrot.slane %v136, 4
  %v138 = vadd.f32 %v136, %v137
  %v139 = vrot.slane %v138, 2
  %v140 = vadd.f32 %v138, %v139
  %v141 = vrot.slane %v140, 1
  %v142 = vadd.f32 %v140, %v141
  %v143 = vadd.f32 %v111, %v115
  %v144 = vadd.f32 %v143, %v119
  %v145 = vadd.f32 %v144, %v123
  %v146 = vrot.slane %v145, 4
  %v147 = vadd.f32 %v145, %v146
  %v148 = vrot.slane %v147, 2
  %v149 = vadd.f32 %v147, %v148
  %v150 = vrot.slane %v149, 1
  %v151 = vadd.f32 %v149, %v150
  %v152 = vadd.f32 %v112, %v116
  %v153 = vadd.f32 %v152, %v120
  %v154 = vadd.f32 %v153, %v124
  %v155 = vrot.slane %v154, 4
  %v156 = vadd.f32 %v154, %v155
  %v157 = vrot.slane %v156, 2
  %v158 = vadd.f32 %v156, %v157
  %v159 = vrot.slane %v158, 1
  %v160 = vadd.f32 %v158, %v159
  %v165 = vcombine.low %v133, %v142
  %v166 = vcombine.low %v151, %v160
  %v168 = vunpack.c.l.s4 1966171168
  %v169 = vunpack.c.0.s8 %v168
  %v170 = vlaneseq
  %v171 = vshrl.u32 %v170, 7
  %v172 = vsub.s32 %v169, %v171
  %v173 = vrot.slane %v165, %v172
  %v175 = vunpack.c.l.s4 1966171168
  %v176 = vunpack.c.0.s8 %v175
  %v177 = vlaneseq
  %v178 = vshrl.u32 %v177, 7
  %v179 = vsub.s32 %v176, %v178
  %v180 = vrot.slane %v166, %v179
  %v181 = vcombine.low %v173, %v180
  %v183 = vunpack.c.l.s4 1966171168
  %v184 = vunpack.c.0.s8 %v183
  %v185 = vlaneseq
  %v186 = vshrl.u32 %v185, 7
  %v187 = vsub.s32 %v184, %v186
  %v188 = vrot.slane %v181, %v187
  %v190 = vadd.f32 %v108, %v188
  %191 = vst.msk [vmem:[%s2] sm:$0xf] %vm106, %v190
  // Predicated region
  $region10: #{dcgan_forward.23} parent=0 // pred_check
    _
  $region11: #{dcgan_forward.23} parent=0 // pred_check_branch
    %193 = sbr.rel (0) target = $region13
  $region12: #{dcgan_forward.23} parent=0 // pred_region
    _
  $region13: #{dcgan_forward.23} parent=0 // pred_fallthru
    _
  // Predicated region
  $region14: #{dcgan_forward.23} parent=0 // pred_check
    _
  $region15: #{dcgan_forward.23} parent=0 // pred_check_branch
    %195 = sbr.rel (0) target = $region17
  $region16: #{dcgan_forward.23} parent=0 // pred_region
    _
  $region17: #{dcgan_forward.23} parent=0 // pred_fallthru
    _
  // Predicated region
  $region18: #{dcgan_forward.23} parent=0 // pred_check
    _
  $region19: #{dcgan_forward.23} parent=0 // pred_check_branch
    %197 = sbr.rel (0) target = $region21
  $region20: #{dcgan_forward.23} parent=0 // pred_region
    _
  $region21: #{dcgan_forward.23} parent=0 // pred_fallthru
    _
  // Predicated region
  $region22: #{dcgan_forward.23} parent=0 // pred_check
    _
  $region23: #{dcgan_forward.23} parent=0 // pred_check_branch
    %199 = sbr.rel (0) target = $region25
  $region24: #{dcgan_forward.23} parent=0 // pred_region
    _
  $region25: #{dcgan_forward.23} parent=0 // pred_fallthru
    _

// kernel: dcgan_forward.24
$region0: #{dcgan_forward.24}
  #allocation0 [shape = 'u32[]', space=smem, size = 0x4, offset = 0x4, fixed_abs, tag = 'smem constant byte address 0x4 - core index']
  #allocation1 [shape = 'u32[144,128]{1,0:T(1,128)}', space=vmem, size = 0x12000, scoped, tag = 'internal scratch']
  %s0 = inlined_call_operand.vmem [shape: f32[32,512], index: 0, kind: input, shape index: {}]
  %s1 = inlined_call_operand.vmem [shape: f32[1,512], index: 1, kind: input, shape index: {}]
  %s2 = inlined_call_operand.vmem [shape: f32[1,512], index: 2, kind: input, shape index: {}]
  %s3 = inlined_call_operand.vmem [shape: bf16[32,512], index: 3, kind: output, shape index: {}]
  %s4 = sld [smem:[#allocation0]]
  $region22: #{dcgan_forward.24} parent=0
    _
  %s6 = ssub.s32 1, %s4
  %s7 = scalar_select 0, %s6, %s4
  // Predicated region
  $region2: #{dcgan_forward.24} parent=0 // pred_check
    _
  $region3: #{dcgan_forward.24} parent=0 // pred_check_branch
    %9 = sbr.rel (0) target = $region5
  $region4: #{dcgan_forward.24} parent=0 // pred_region
    _
  $region5: #{dcgan_forward.24} parent=0 // pred_fallthru
    _
  // Predicated region
  $region6: #{dcgan_forward.24} parent=0 // pred_check
    _
  $region7: #{dcgan_forward.24} parent=0 // pred_check_branch
    %11 = sbr.rel (0) target = $region9
  $region8: #{dcgan_forward.24} parent=0 // pred_region
    _
  $region9: #{dcgan_forward.24} parent=0 // pred_fallthru
    _
  // Predicated region
  $region10: #{dcgan_forward.24} parent=0 // pred_check
    _
  $region11: #{dcgan_forward.24} parent=0 // pred_check_branch
    %13 = sbr.rel (0) target = $region13
  $region12: #{dcgan_forward.24} parent=0 // pred_region
    _
  $region13: #{dcgan_forward.24} parent=0 // pred_fallthru
    _
  %v14 = vld [vmem:[%s0] sm:$0xff]
  %v15 = vld [vmem:[%s0 + $0x8] sm:$0xff]
  %v16 = vld [vmem:[%s0 + $0x10] sm:$0xff]
  %v17 = vld [vmem:[%s0 + $0x18] sm:$0xff]
  %v18 = vld [vmem:[%s0 + $0x20] sm:$0xff]
  %v19 = vld [vmem:[%s0 + $0x28] sm:$0xff]
  %v20 = vld [vmem:[%s0 + $0x30] sm:$0xff]
  %v21 = vld [vmem:[%s0 + $0x38] sm:$0xff]
  %v22 = vld [vmem:[%s0 + $0x40] sm:$0xff]
  %v23 = vld [vmem:[%s0 + $0x48] sm:$0xff]
  %v24 = vld [vmem:[%s0 + $0x50] sm:$0xff]
  %v25 = vld [vmem:[%s0 + $0x58] sm:$0xff]
  %v26 = vld [vmem:[%s0 + $0x60] sm:$0xff]
  %v27 = vld [vmem:[%s0 + $0x68] sm:$0xff]
  %v28 = vld [vmem:[%s0 + $0x70] sm:$0xff]
  %v29 = vld [vmem:[%s0 + $0x78] sm:$0xff]
  %v30 = vld [vmem:[%s1] sm:$0xf]
  %v32 = vlaneseq
  %v33 = vshrl.u32 %v32, 7
  %v34 = vsub.s32 0, %v33
  %v35 = vrot.slane %v30, %v34
  %v36 = vlaneseq
  %v37 = vshrl.u32 %v36, 7
  %v38 = vsub.s32 1, %v37
  %v39 = vrot.slane %v30, %v38
  %v40 = vlaneseq
  %v41 = vshrl.u32 %v40, 7
  %v42 = vsub.s32 2, %v41
  %v43 = vrot.slane %v30, %v42
  %v44 = vlaneseq
  %v45 = vshrl.u32 %v44, 7
  %v46 = vsub.s32 3, %v45
  %v47 = vrot.slane %v30, %v46
  %v52 = vmul.f32 %v14, %v35
  %v53 = vmul.f32 %v15, %v39
  %v54 = vmul.f32 %v16, %v43
  %v55 = vmul.f32 %v17, %v47
  %v56 = vmul.f32 %v18, %v35
  %v57 = vmul.f32 %v19, %v39
  %v58 = vmul.f32 %v20, %v43
  %v59 = vmul.f32 %v21, %v47
  %v60 = vmul.f32 %v22, %v35
  %v61 = vmul.f32 %v23, %v39
  %v62 = vmul.f32 %v24, %v43
  %v63 = vmul.f32 %v25, %v47
  %v64 = vmul.f32 %v26, %v35
  %v65 = vmul.f32 %v27, %v39
  %v66 = vmul.f32 %v28, %v43
  %v67 = vmul.f32 %v29, %v47
  %v68 = vld [vmem:[%s2] sm:$0xf]
  %v70 = vlaneseq
  %v71 = vshrl.u32 %v70, 7
  %v72 = vsub.s32 0, %v71
  %v73 = vrot.slane %v68, %v72
  %v74 = vlaneseq
  %v75 = vshrl.u32 %v74, 7
  %v76 = vsub.s32 1, %v75
  %v77 = vrot.slane %v68, %v76
  %v78 = vlaneseq
  %v79 = vshrl.u32 %v78, 7
  %v80 = vsub.s32 2, %v79
  %v81 = vrot.slane %v68, %v80
  %v82 = vlaneseq
  %v83 = vshrl.u32 %v82, 7
  %v84 = vsub.s32 3, %v83
  %v85 = vrot.slane %v68, %v84
  %v90 = vadd.f32 %v52, %v73
  %v91 = vadd.f32 %v53, %v77
  %v92 = vadd.f32 %v54, %v81
  %v93 = vadd.f32 %v55, %v85
  %v94 = vadd.f32 %v56, %v73
  %v95 = vadd.f32 %v57, %v77
  %v96 = vadd.f32 %v58, %v81
  %v97 = vadd.f32 %v59, %v85
  %v98 = vadd.f32 %v60, %v73
  %v99 = vadd.f32 %v61, %v77
  %v100 = vadd.f32 %v62, %v81
  %v101 = vadd.f32 %v63, %v85
  %v102 = vadd.f32 %v64, %v73
  %v103 = vadd.f32 %v65, %v77
  %v104 = vadd.f32 %v66, %v81
  %v105 = vadd.f32 %v67, %v85
  %v106 = vpack.c.bf16 %v94, %v90
  %v107 = vpack.c.bf16 %v95, %v91
  %v108 = vpack.c.bf16 %v96, %v92
  %v109 = vpack.c.bf16 %v97, %v93
  %v110 = vpack.c.bf16 %v102, %v98
  %v111 = vpack.c.bf16 %v103, %v99
  %v112 = vpack.c.bf16 %v104, %v100
  %v113 = vpack.c.bf16 %v105, %v101
  %v122 = vunpack.c.l.b16 %v106
  %v123 = vunpack.c.l.b16 %v107
  %v124 = vunpack.c.l.b16 %v108
  %v125 = vunpack.c.l.b16 %v109
  %v126 = vunpack.c.h.b16 %v106
  %v127 = vunpack.c.h.b16 %v107
  %v128 = vunpack.c.h.b16 %v108
  %v129 = vunpack.c.h.b16 %v109
  %v130 = vunpack.c.l.b16 %v110
  %v131 = vunpack.c.l.b16 %v111
  %v132 = vunpack.c.l.b16 %v112
  %v133 = vunpack.c.l.b16 %v113
  %v134 = vunpack.c.h.b16 %v110
  %v135 = vunpack.c.h.b16 %v111
  %v136 = vunpack.c.h.b16 %v112
  %v137 = vunpack.c.h.b16 %v113
  %v138 = vpack.c.b16 %v123, %v122
  %v139 = vpack.c.b16 %v125, %v124
  %v140 = vpack.c.b16 %v127, %v126
  %v141 = vpack.c.b16 %v129, %v128
  %v142 = vpack.c.b16 %v131, %v130
  %v143 = vpack.c.b16 %v133, %v132
  %v144 = vpack.c.b16 %v135, %v134
  %v145 = vpack.c.b16 %v137, %v136
  %154 = vst [vmem:[%s3] sm:$0xff] %v138
  %155 = vst [vmem:[%s3 + $0x8] sm:$0xff] %v139
  %156 = vst [vmem:[%s3 + $0x10] sm:$0xff] %v140
  %157 = vst [vmem:[%s3 + $0x18] sm:$0xff] %v141
  %158 = vst [vmem:[%s3 + $0x20] sm:$0xff] %v142
  %159 = vst [vmem:[%s3 + $0x28] sm:$0xff] %v143
  %160 = vst [vmem:[%s3 + $0x30] sm:$0xff] %v144
  %161 = vst [vmem:[%s3 + $0x38] sm:$0xff] %v145
  // Predicated region
  $region14: #{dcgan_forward.24} parent=0 // pred_check
    _
  $region15: #{dcgan_forward.24} parent=0 // pred_check_branch
    %163 = sbr.rel (0) target = $region17
  $region16: #{dcgan_forward.24} parent=0 // pred_region
    _
  $region17: #{dcgan_forward.24} parent=0 // pred_fallthru
    _
  // Predicated region
  $region18: #{dcgan_forward.24} parent=0 // pred_check
    _
  $region19: #{dcgan_forward.24} parent=0 // pred_check_branch
    %165 = sbr.rel (0) target = $region21
  $region20: #{dcgan_forward.24} parent=0 // pred_region
    _
  $region21: #{dcgan_forward.24} parent=0 // pred_fallthru
    _

// kernel: dcgan_forward.25
$region0: #{dcgan_forward.25}
  #allocation0 [shape = 'u32[]', space=smem, size = 0x4, offset = 0x4, fixed_abs, tag = 'smem constant byte address 0x4 - core index']
  #allocation1 [shape = 'u32[144,128]{1,0:T(1,128)}', space=vmem, size = 0x12000, scoped, tag = 'internal scratch']
  #allocation2 [shape = 'f32[16,128]{1,0:T(8,128)}', space=vmem, size = 0x2000, scoped, tag = 'scratch operand']
  %s0 = inlined_call_operand.vmem [shape: bf16[16,8192], index: 0, kind: input, shape index: {}]
  %s1 = inlined_call_operand.vmem [shape: bf16[8192,128], index: 1, kind: input, shape index: {}]
  %s2 = inlined_call_operand.vmem [shape: f32[1,128], index: 2, kind: input, shape index: {}]
  %s3 = inlined_call_operand.vmem [shape: f32[16,128], index: 3, kind: output, shape index: {}]
  %s4 = sld [smem:[#allocation0]]
  $region76: #{dcgan_forward.25} parent=0
    _
  %s6 = ssub.s32 1, %s4
  %s7 = scalar_select 0, %s6, %s4
  $region1: #{dcgan_forward.25} parent=0
    #allocation3 [shape = 'u8[32768]{0}', space=vmem, size = 0x8000, scoped, tag = 'input window, operand 0']
    loop: start=0, step=1, limit=18
    $region2: #{dcgan_forward.25} parent=1 // loop_pre_header
      _
    $region3: #{dcgan_forward.25} parent=1 // loop_header
      %s9 = sphi 0, %s13
      %p10 = scmp.ge.s32.totalorder %s9, 18
      %s16 = sphi 0, %s35
      %s17 = sphi 0, %s31
      %s18 = sphi 0, %s27
      %s19 = sphi 0, %s16
      %s20 = sphi 0, %s17
      %s21 = sphi 0, %s18
      %s22 = sphi 0, %s19
      %s23 = sphi 0, %s20
      %s24 = sphi 0, %s21
      %s40 = sphi 0, %s42
      %s43 = sphi 0, %s40
      %s44 = sphi 0, %s43
      %s60 = sphi 0, %s44
      %s68 = sphi 0, %s70
      %s71 = sphi 0, %s68
      %s72 = sphi 0, %s71
      %s88 = sphi 0, %s72
      %s94 = sphi 0, %s96
      %s97 = sphi 0, %s94
      %s98 = sphi 0, %s97
      %s114 = sphi 0, %s98
      %s122 = sphi 0, %s124
      %s125 = sphi 0, %s122
      %s126 = sphi 0, %s125
      %s142 = sphi 0, %s126
    $region4: #{dcgan_forward.25} parent=1 // loop_header_branch
      %12 = sbr.rel (%p10) target = $region8
    $region5: #{dcgan_forward.25} parent=1 // loop_body
      %s14 = ssub.s32 %s9, 1
      %s15 = ssub.s32 %s9, 2
      %s25 = sadd.s32 1, %s18
      %p26 = scmp.ge.s32.totalorder %s25, 16
      %s27 = scalar_select %p26, 0, %s25
      %s28 = sadd.s32 1, %s17
      %s29 = scalar_select %p26, %s28, %s17
      %p30 = scmp.ge.s32.totalorder %s29, 1
      %s31 = scalar_select %p30, 0, %s29
      %s32 = sadd.s32 1, %s16
      %s33 = scalar_select %p30, %s32, %s16
      %p34 = scmp.ge.s32.totalorder %s33, 1
      %s35 = scalar_select %p34, 0, %s33
      %s36 = ssub.s32 %s16, %s35
      %s37 = ssub.s32 %s18, %s27
      %s38 = sor.u32 %s36, %s37
      %p39 = scmp.eq.s32.totalorder %s38, 0
      %s41 = sadd.s32 %s40, 1
      %s42 = scalar_select %p39, %s40, %s41
      %p45 = pneg %p39
      %p46 = scmp.eq.s32.totalorder %s9, 15
      %p47 = por %p45, %p46
      %p48 = scmp.ne.s32.totalorder %s40, %s43
      %p49 = scmp.eq.s32.totalorder %s9, 0
      %p50 = por %p48, %p49
      %p51 = scmp.ne.s32.totalorder %s40, %s43
      %p52 = scmp.eq.s32.totalorder %s14, 15
      %p53 = por %p51, %p52
      %p54 = scmp.ne.s32.totalorder %s43, %s44
      %p55 = scmp.eq.s32.totalorder %s14, 0
      %p56 = por %p54, %p55
      %p57 = scmp.ne.s32.totalorder %s43, %s44
      %p58 = scmp.eq.s32.totalorder %s15, 15
      %p59 = por %p57, %p58
      %p61 = scmp.ne.s32.totalorder %s44, %s60
      %p62 = scmp.eq.s32.totalorder %s15, 0
      %p63 = por %p61, %p62
      %s64 = ssub.s32 %s18, %s27
      %s65 = ssub.s32 %s17, %s31
      %s66 = sor.u32 %s64, %s65
      %p67 = scmp.eq.s32.totalorder %s66, 0
      %s69 = sadd.s32 %s68, 1
      %s70 = scalar_select %p67, %s68, %s69
      %p73 = pneg %p67
      %p74 = scmp.eq.s32.totalorder %s9, 15
      %p75 = por %p73, %p74
      %p76 = scmp.ne.s32.totalorder %s68, %s71
      %p77 = scmp.eq.s32.totalorder %s9, 0
      %p78 = por %p76, %p77
      %p79 = scmp.ne.s32.totalorder %s68, %s71
      %p80 = scmp.eq.s32.totalorder %s14, 15
      %p81 = por %p79, %p80
      %p82 = scmp.ne.s32.totalorder %s71, %s72
      %p83 = scmp.eq.s32.totalorder %s14, 0
      %p84 = por %p82, %p83
      %p85 = scmp.ne.s32.totalorder %s71, %s72
      %p86 = scmp.eq.s32.totalorder %s15, 15
      %p87 = por %p85, %p86
      %p89 = scmp.ne.s32.totalorder %s72, %s88
      %p90 = scmp.eq.s32.totalorder %s15, 0
      %p91 = por %p89, %p90
      %s92 = ssub.s32 %s17, %s31
      %p93 = scmp.eq.s32.totalorder %s92, 0
      %s95 = sadd.s32 %s94, 1
      %s96 = scalar_select %p93, %s94, %s95
      %p99 = pneg %p93
      %p100 = scmp.eq.s32.totalorder %s9, 15
      %p101 = por %p99, %p100
      %p102 = scmp.ne.s32.totalorder %s94, %s97
      %p103 = scmp.eq.s32.totalorder %s9, 0
      %p104 = por %p102, %p103
      %p105 = scmp.ne.s32.totalorder %s94, %s97
      %p106 = scmp.eq.s32.totalorder %s14, 15
      %p107 = por %p105, %p106
      %p108 = scmp.ne.s32.totalorder %s97, %s98
      %p109 = scmp.eq.s32.totalorder %s14, 0
      %p110 = por %p108, %p109
      %p111 = scmp.ne.s32.totalorder %s97, %s98
      %p112 = scmp.eq.s32.totalorder %s15, 15
      %p113 = por %p111, %p112
      %p115 = scmp.ne.s32.totalorder %s98, %s114
      %p116 = scmp.eq.s32.totalorder %s15, 0
      %p117 = por %p115, %p116
      %s118 = ssub.s32 %s16, %s35
      %s119 = ssub.s32 %s17, %s31
      %s120 = sor.u32 %s118, %s119
      %p121 = scmp.eq.s32.totalorder %s120, 0
      %s123 = sadd.s32 %s122, 1
      %s124 = scalar_select %p121, %s122, %s123
      %p127 = pneg %p121
      %p128 = scmp.eq.s32.totalorder %s9, 15
      %p129 = por %p127, %p128
      %p130 = scmp.ne.s32.totalorder %s122, %s125
      %p131 = scmp.eq.s32.totalorder %s9, 0
      %p132 = por %p130, %p131
      %p133 = scmp.ne.s32.totalorder %s122, %s125
      %p134 = scmp.eq.s32.totalorder %s14, 15
      %p135 = por %p133, %p134
      %p136 = scmp.ne.s32.totalorder %s125, %s126
      %p137 = scmp.eq.s32.totalorder %s14, 0
      %p138 = por %p136, %p137
      %p139 = scmp.ne.s32.totalorder %s125, %s126
      %p140 = scmp.eq.s32.totalorder %s15, 15
      %p141 = por %p139, %p140
      %p143 = scmp.ne.s32.totalorder %s126, %s142
      %p144 = scmp.eq.s32.totalorder %s15, 0
      %p145 = por %p143, %p144
      %p146 = scmp.le.s32.totalorder 1, %s9
      %p147 = scmp.lt.s32.totalorder %s9, 17
      %p148 = pnand %p146, %p147
      %p149 = pneg %p148
      // Predicated region
      $region9: #{dcgan_forward.25} parent=5 // pred_check
        _
      $region10: #{dcgan_forward.25} parent=5 // pred_check_branch
        %151 = sbr.rel (%p148) target = $region12
      $region11: #{dcgan_forward.25} parent=5 // pred_region
        %s152 = ssub.s32 %s9, 1
        // Predicated region
        $region13: #{dcgan_forward.25} parent=11 // pred_check
          %p153 = pneg %p110
        $region14: #{dcgan_forward.25} parent=11 // pred_check_branch
          %155 = sbr.rel (%p153) target = $region16
        $region15: #{dcgan_forward.25} parent=11 // pred_region
          %p156 = scmp.lt.s32.totalorder %s20, 0
          %s157 = scalar_select %p156, %s20, 0
          %s158 = scalar_lea.vmem %s2, %s157
        $region16: #{dcgan_forward.25} parent=11 // pred_fallthru
          _
      $region12: #{dcgan_forward.25} parent=5 // pred_fallthru
        _
      %p159 = scmp.lt.s32.totalorder %s9, 16
      // Predicated region
      $region17: #{dcgan_forward.25} parent=5 // pred_check
        %p160 = pneg %p159
      $region18: #{dcgan_forward.25} parent=5 // pred_check_branch
        %162 = sbr.rel (%p160) target = $region20
      $region19: #{dcgan_forward.25} parent=5 // pred_region
        // Predicated region
        $region21: #{dcgan_forward.25} parent=19 // pred_check
          %p163 = pneg %p50
        $region22: #{dcgan_forward.25} parent=19 // pred_check_branch
          %165 = sbr.rel (%p163) target = $region24
        $region23: #{dcgan_forward.25} parent=19 // pred_region
          %s166 = sand.u32 %s40, 1
          %s167 = sand.u32 %s40, 1
          %s168 = smul.addr %s167, 32
          %s169 = scalar_lea.vmem [#allocation3], %s168
          %s170 = smul.u32 2, %s16
          %s171 = smul.u32 4, %s18
          %s172 = smul.addr %s170, 64
          %s173 = sadd.s32 %s171, %s172
          %s174 = smul.addr %s173, 4
          %s175 = scalar_lea.vmem %s0, %s174
          // Predicated region
          $region25: #{dcgan_forward.25} parent=23 // pred_check
            _
          $region26: #{dcgan_forward.25} parent=23 // pred_check_branch
            %177 = sbr.rel (0) target = $region28
          $region27: #{dcgan_forward.25} parent=23 // pred_region
            // Predicated region
            $region29: #{dcgan_forward.25} parent=27 // pred_check
              _
            $region30: #{dcgan_forward.25} parent=27 // pred_check_branch
              %179 = sbr.rel (0) target = $region32
            $region31: #{dcgan_forward.25} parent=27 // pred_region
              loop: start=0, step=1, limit=1
              $region33: #{dcgan_forward.25} parent=31 // loop_pre_header
                _
              $region34: #{dcgan_forward.25} parent=31 // loop_header
                %s181 = sphi 0, %s185
                %p182 = scmp.ge.s32.totalorder %s181, 1
                %s186 = sphi %s175, %s175
                %s187 = sphi %s169, %s169
              $region35: #{dcgan_forward.25} parent=31 // loop_header_branch
                %184 = sbr.rel (%p182) target = $region39
              $region36: #{dcgan_forward.25} parent=31 // loop_body
                %v188 = vld [vmem:[%s186] sm:$0xff]
                %189 = vst [vmem:[%s187] sm:$0xff] %v188
                %v190 = vld [vmem:[%s186 + $0x8] sm:$0xff]
                %191 = vst [vmem:[%s187 + $0x8] sm:$0xff] %v190
                %v192 = vld [vmem:[%s186 + $0x100] sm:$0xff]
                %193 = vst [vmem:[%s187 + $0x10] sm:$0xff] %v192
                %v194 = vld [vmem:[%s186 + $0x108] sm:$0xff]
                %195 = vst [vmem:[%s187 + $0x18] sm:$0xff] %v194
              $region37: #{dcgan_forward.25} parent=31 // loop_footer
                %s185 = sadd.s32 1, %s181
              $region38: #{dcgan_forward.25} parent=31 // loop_footer_branch
                %180 = sbr.rel target = $region34
              $region39: #{dcgan_forward.25} parent=31 // loop_exit
                _
            $region32: #{dcgan_forward.25} parent=27 // pred_fallthru
              _
            // Predicated region
            $region40: #{dcgan_forward.25} parent=27 // pred_check
              _
            $region41: #{dcgan_forward.25} parent=27 // pred_check_branch
              %197 = sbr.rel target = $region43
            $region42: #{dcgan_forward.25} parent=27 // pred_region
              _
            $region43: #{dcgan_forward.25} parent=27 // pred_fallthru
              _
          $region28: #{dcgan_forward.25} parent=23 // pred_fallthru
            _
          %198 = vnop
        $region24: #{dcgan_forward.25} parent=19 // pred_fallthru
          _
        // Predicated region
        $region44: #{dcgan_forward.25} parent=19 // pred_check
          %p199 = pneg %p78
        $region45: #{dcgan_forward.25} parent=19 // pred_check_branch
          %201 = sbr.rel (%p199) target = $region47
        $region46: #{dcgan_forward.25} parent=19 // pred_region
          %s202 = smul.u32 64, %s18
          %p203 = scmp.lt.s32.totalorder %s202, 1023
          %s204 = scalar_select %p203, %s202, 1023
          %p205 = scmp.lt.s32.totalorder %s17, 0
          %s206 = scalar_select %p205, %s17, 0
          %s207 = sadd.s32 %s206, %s204
          %s208 = smul.addr %s207, 4
          %s209 = scalar_lea.vmem %s1, %s208
          %s210 = smul.u32 64, %s18
        $region47: #{dcgan_forward.25} parent=19 // pred_fallthru
          _
      $region20: #{dcgan_forward.25} parent=5 // pred_fallthru
        _
      %p211 = scmp.le.s32.totalorder 1, %s9
      %p212 = scmp.lt.s32.totalorder %s9, 17
      %p213 = pnand %p211, %p212
      %p214 = pneg %p213
      // Predicated region
      $region48: #{dcgan_forward.25} parent=5 // pred_check
        _
      $region49: #{dcgan_forward.25} parent=5 // pred_check_branch
        %216 = sbr.rel (%p213) target = $region51
      $region50: #{dcgan_forward.25} parent=5 // pred_region
        %s217 = ssub.s32 %s9, 1
        %s218 = sand.u32 %s43, 1
        %s219 = sand.u32 %s43, 1
        %s220 = smul.addr %s219, 32
        %s221 = scalar_lea.vmem [#allocation3], %s220
        // Predicated region
        $region52: #{dcgan_forward.25} parent=50 // pred_check
          %p222 = pneg %p56
        $region53: #{dcgan_forward.25} parent=50 // pred_check_branch
          %224 = sbr.rel (%p222) target = $region55
        $region54: #{dcgan_forward.25} parent=50 // pred_region
          _
        $region55: #{dcgan_forward.25} parent=50 // pred_fallthru
          _
        %s225 = sand.u32 %s43, 1
        %s226 = sand.u32 %s43, 1
        %s227 = smul.addr %s226, 32
        %s228 = scalar_lea.vmem [#allocation3], %s227
        %p229 = pneg %p56
        %p230 = pneg %p53
        %s231 = smul.u32 64, %s21
        %p232 = scmp.lt.s32.totalorder %s231, 1023
        %s233 = scalar_select %p232, %s231, 1023
        %p234 = scmp.lt.s32.totalorder %s20, 0
        %s235 = scalar_select %p234, %s20, 0
        %s236 = sadd.s32 %s235, %s233
        %s237 = smul.addr %s236, 4
        %s238 = scalar_lea.vmem %s1, %s237
        %p239 = pneg %p84
        %p240 = pneg %p81
        %p241 = scmp.lt.s32.totalorder %s20, 0
        %s242 = scalar_select %p241, %s20, 0
        %s243 = scalar_lea.vmem %s2, %s242
        %p244 = pneg %p110
        %p245 = pneg %p107
        %p246 = pneg %p138
        %p247 = pneg %p135
        %s248 = smul.u32 2, %s19
        %p249 = scmp.lt.s32.totalorder %s248, 1
        %s250 = scalar_select %p249, %s248, 1
        %p251 = scmp.lt.s32.totalorder %s20, 0
        %s252 = scalar_select %p251, %s20, 0
        %s253 = sadd.s32 %s252, %s250
        %s254 = smul.addr %s253, 8
        %s255 = scalar_lea.vmem %s3, %s254
        %s256 = smul.u32 2, %s19
        %s257 = smul.u32 4, %s21
        %s258 = smul.u32 64, %s21
        %p259 = scmp.lt.s32.totalorder %s258, 1023
        %s260 = scalar_select %p259, %s258, 1023
        %p261 = scmp.lt.s32.totalorder %s20, 0
        %s262 = scalar_select %p261, %s20, 0
        %s263 = sadd.s32 %s262, %s260
        %s264 = smul.addr %s263, 4
        %s265 = scalar_lea.vmem %s1, %s264
        %s266 = smul.u32 64, %s21
        %p267 = scmp.lt.s32.totalorder %s20, 0
        %s268 = scalar_select %p267, %s20, 0
        %s269 = scalar_lea.vmem %s2, %s268
        %s270 = smul.u32 2, %s19
        %p271 = scmp.lt.s32.totalorder %s270, 1
        %s272 = scalar_select %p271, %s270, 1
        %p273 = scmp.lt.s32.totalorder %s20, 0
        %s274 = scalar_select %p273, %s20, 0
        %s275 = sadd.s32 %s274, %s272
        %s276 = smul.addr %s275, 8
        %s277 = scalar_lea.vmem %s3, %s276
        %s278 = smul.u32 2, %s19
        %v280 = vld [vmem:[%s221] sm:$0xff]
        %v281 = vld [vmem:[%s221 + $0x8] sm:$0xff]
        %v282 = vld [vmem:[%s221 + $0x10] sm:$0xff]
        %v283 = vld [vmem:[%s221 + $0x18] sm:$0xff]
        %v284 = vld [vmem:[%s265] sm:$0xf]
        %v285 = vld [vmem:[%s265 + $0x4] sm:$0xf]
        %v286 = vld [vmem:[%s265 + $0x8] sm:$0xf]
        %v287 = vld [vmem:[%s265 + $0xc] sm:$0xf]
        %v288 = vld [vmem:[%s265 + $0x10] sm:$0xf]
        %v289 = vld [vmem:[%s265 + $0x14] sm:$0xf]
        %v290 = vld [vmem:[%s265 + $0x18] sm:$0xf]
        %v291 = vld [vmem:[%s265 + $0x1c] sm:$0xf]
        %v292 = vld [vmem:[%s265 + $0x20] sm:$0xf]
        %v293 = vld [vmem:[%s265 + $0x24] sm:$0xf]
        %v294 = vld [vmem:[%s265 + $0x28] sm:$0xf]
        %v295 = vld [vmem:[%s265 + $0x2c] sm:$0xf]
        %v296 = vld [vmem:[%s265 + $0x30] sm:$0xf]
        %v297 = vld [vmem:[%s265 + $0x34] sm:$0xf]
        %v298 = vld [vmem:[%s265 + $0x38] sm:$0xf]
        %v299 = vld [vmem:[%s265 + $0x3c] sm:$0xf]
        %v300 = vld [vmem:[%s265 + $0x40] sm:$0xf]
        %v301 = vld [vmem:[%s265 + $0x44] sm:$0xf]
        %v302 = vld [vmem:[%s265 + $0x48] sm:$0xf]
        %v303 = vld [vmem:[%s265 + $0x4c] sm:$0xf]
        %v304 = vld [vmem:[%s265 + $0x50] sm:$0xf]
        %v305 = vld [vmem:[%s265 + $0x54] sm:$0xf]
        %v306 = vld [vmem:[%s265 + $0x58] sm:$0xf]
        %v307 = vld [vmem:[%s265 + $0x5c] sm:$0xf]
        %v308 = vld [vmem:[%s265 + $0x60] sm:$0xf]
        %v309 = vld [vmem:[%s265 + $0x64] sm:$0xf]
        %v310 = vld [vmem:[%s265 + $0x68] sm:$0xf]
        %v311 = vld [vmem:[%s265 + $0x6c] sm:$0xf]
        %v312 = vld [vmem:[%s265 + $0x70] sm:$0xf]
        %v313 = vld [vmem:[%s265 + $0x74] sm:$0xf]
        %v314 = vld [vmem:[%s265 + $0x78] sm:$0xf]
        %v315 = vld [vmem:[%s265 + $0x7c] sm:$0xf]
        %v316 = vld [vmem:[%s265 + $0x80] sm:$0xf]
        %v317 = vld [vmem:[%s265 + $0x84] sm:$0xf]
        %v318 = vld [vmem:[%s265 + $0x88] sm:$0xf]
        %v319 = vld [vmem:[%s265 + $0x8c] sm:$0xf]
        %v320 = vld [vmem:[%s265 + $0x90] sm:$0xf]
        %v321 = vld [vmem:[%s265 + $0x94] sm:$0xf]
        %v322 = vld [vmem:[%s265 + $0x98] sm:$0xf]
        %v323 = vld [vmem:[%s265 + $0x9c] sm:$0xf]
        %v324 = vld [vmem:[%s265 + $0xa0] sm:$0xf]
        %v325 = vld [vmem:[%s265 + $0xa4] sm:$0xf]
        %v326 = vld [vmem:[%s265 + $0xa8] sm:$0xf]
        %v327 = vld [vmem:[%s265 + $0xac] sm:$0xf]
        %v328 = vld [vmem:[%s265 + $0xb0] sm:$0xf]
        %v329 = vld [vmem:[%s265 + $0xb4] sm:$0xf]
        %v330 = vld [vmem:[%s265 + $0xb8] sm:$0xf]
        %v331 = vld [vmem:[%s265 + $0xbc] sm:$0xf]
        %v332 = vld [vmem:[%s265 + $0xc0] sm:$0xf]
        %v333 = vld [vmem:[%s265 + $0xc4] sm:$0xf]
        %v334 = vld [vmem:[%s265 + $0xc8] sm:$0xf]
        %v335 = vld [vmem:[%s265 + $0xcc] sm:$0xf]
        %v336 = vld [vmem:[%s265 + $0xd0] sm:$0xf]
        %v337 = vld [vmem:[%s265 + $0xd4] sm:$0xf]
        %v338 = vld [vmem:[%s265 + $0xd8] sm:$0xf]
        %v339 = vld [vmem:[%s265 + $0xdc] sm:$0xf]
        %v340 = vld [vmem:[%s265 + $0xe0] sm:$0xf]
        %v341 = vld [vmem:[%s265 + $0xe4] sm:$0xf]
        %v342 = vld [vmem:[%s265 + $0xe8] sm:$0xf]
        %v343 = vld [vmem:[%s265 + $0xec] sm:$0xf]
        %v344 = vld [vmem:[%s265 + $0xf0] sm:$0xf]
        %v345 = vld [vmem:[%s265 + $0xf4] sm:$0xf]
        %v346 = vld [vmem:[%s265 + $0xf8] sm:$0xf]
        %v347 = vld [vmem:[%s265 + $0xfc] sm:$0xf]
        %v352 = vunpack.c.l.b16 %v280
        %v353 = vunpack.c.h.b16 %v280
        %v354 = vunpack.c.l.b16 %v281
        %v355 = vunpack.c.h.b16 %v281
        %v356 = vunpack.c.l.b16 %v282
        %v357 = vunpack.c.h.b16 %v282
        %v358 = vunpack.c.l.b16 %v283
        %v359 = vunpack.c.h.b16 %v283
        %v360 = vpack.c.b16 %v356, %v352
        %v361 = vpack.c.b16 %v357, %v353
        %v362 = vpack.c.b16 %v358, %v354
        %v363 = vpack.c.b16 %v359, %v355
        %v432 = vunpack.c.l.b16 %v284
        %v433 = vunpack.c.l.b16 %v285
        %v434 = vunpack.c.l.b16 %v286
        %v435 = vunpack.c.l.b16 %v287
        %v436 = vunpack.c.l.b16 %v288
        %v437 = vunpack.c.l.b16 %v289
        %v438 = vunpack.c.l.b16 %v290
        %v439 = vunpack.c.l.b16 %v291
        %v440 = vunpack.c.l.b16 %v292
        %v441 = vunpack.c.l.b16 %v293
        %v442 = vunpack.c.l.b16 %v294
        %v443 = vunpack.c.l.b16 %v295
        %v444 = vunpack.c.l.b16 %v296
        %v445 = vunpack.c.l.b16 %v297
        %v446 = vunpack.c.l.b16 %v298
        %v447 = vunpack.c.l.b16 %v299
        %v448 = vunpack.c.l.b16 %v300
        %v449 = vunpack.c.l.b16 %v301
        %v450 = vunpack.c.l.b16 %v302
        %v451 = vunpack.c.l.b16 %v303
        %v452 = vunpack.c.l.b16 %v304
        %v453 = vunpack.c.l.b16 %v305
        %v454 = vunpack.c.l.b16 %v306
        %v455 = vunpack.c.l.b16 %v307
        %v456 = vunpack.c.l.b16 %v308
        %v457 = vunpack.c.l.b16 %v309
        %v458 = vunpack.c.l.b16 %v310
        %v459 = vunpack.c.l.b16 %v311
        %v460 = vunpack.c.l.b16 %v312
        %v461 = vunpack.c.l.b16 %v313
        %v462 = vunpack.c.l.b16 %v314
        %v463 = vunpack.c.l.b16 %v315
        %v464 = vunpack.c.l.b16 %v316
        %v465 = vunpack.c.l.b16 %v317
        %v466 = vunpack.c.l.b16 %v318
        %v467 = vunpack.c.l.b16 %v319
        %v468 = vunpack.c.l.b16 %v320
        %v469 = vunpack.c.l.b16 %v321
        %v470 = vunpack.c.l.b16 %v322
        %v471 = vunpack.c.l.b16 %v323
        %v472 = vunpack.c.l.b16 %v324
        %v473 = vunpack.c.l.b16 %v325
        %v474 = vunpack.c.l.b16 %v326
        %v475 = vunpack.c.l.b16 %v327
        %v476 = vunpack.c.l.b16 %v328
        %v477 = vunpack.c.l.b16 %v329
        %v478 = vunpack.c.l.b16 %v330
        %v479 = vunpack.c.l.b16 %v331
        %v480 = vunpack.c.l.b16 %v332
        %v481 = vunpack.c.l.b16 %v333
        %v482 = vunpack.c.l.b16 %v334
        %v483 = vunpack.c.l.b16 %v335
        %v484 = vunpack.c.l.b16 %v336
        %v485 = vunpack.c.l.b16 %v337
        %v486 = vunpack.c.l.b16 %v338
        %v487 = vunpack.c.l.b16 %v339
        %v488 = vunpack.c.l.b16 %v340
        %v489 = vunpack.c.l.b16 %v341
        %v490 = vunpack.c.l.b16 %v342
        %v491 = vunpack.c.l.b16 %v343
        %v492 = vunpack.c.l.b16 %v344
        %v493 = vunpack.c.l.b16 %v345
        %v494 = vunpack.c.l.b16 %v346
        %v495 = vunpack.c.l.b16 %v347
        %v496 = vpack.c.b16 %v433, %v432
        %v497 = vpack.c.b16 %v435, %v434
        %v498 = vpack.c.b16 %v437, %v436
        %v499 = vpack.c.b16 %v439, %v438
        %v500 = vpack.c.b16 %v441, %v440
        %v501 = vpack.c.b16 %v443, %v442
        %v502 = vpack.c.b16 %v445, %v444
        %v503 = vpack.c.b16 %v447, %v446
        %v504 = vpack.c.b16 %v449, %v448
        %v505 = vpack.c.b16 %v451, %v450
        %v506 = vpack.c.b16 %v453, %v452
        %v507 = vpack.c.b16 %v455, %v454
        %v508 = vpack.c.b16 %v457, %v456
        %v509 = vpack.c.b16 %v459, %v458
        %v510 = vpack.c.b16 %v461, %v460
        %v511 = vpack.c.b16 %v463, %v462
        %v512 = vpack.c.b16 %v465, %v464
        %v513 = vpack.c.b16 %v467, %v466
        %v514 = vpack.c.b16 %v469, %v468
        %v515 = vpack.c.b16 %v471, %v470
        %v516 = vpack.c.b16 %v473, %v472
        %v517 = vpack.c.b16 %v475, %v474
        %v518 = vpack.c.b16 %v477, %v476
        %v519 = vpack.c.b16 %v479, %v478
        %v520 = vpack.c.b16 %v481, %v480
        %v521 = vpack.c.b16 %v483, %v482
        %v522 = vpack.c.b16 %v485, %v484
        %v523 = vpack.c.b16 %v487, %v486
        %v524 = vpack.c.b16 %v489, %v488
        %v525 = vpack.c.b16 %v491, %v490
        %v526 = vpack.c.b16 %v493, %v492
        %v527 = vpack.c.b16 %v495, %v494
        %560 = vmatprep.subr.bf16.mxu0 0
        %561 = vmatpush1.bf16.msra.mxu0 %v496
        %562 = vmatprep.subr.bf16.mxu0 0
        %563 = vmatpush1.bf16.msra.mxu0 %v497
        %564 = vmatprep.subr.bf16.mxu0 0
        %565 = vmatpush1.bf16.msra.mxu0 %v498
        %566 = vmatprep.subr.bf16.mxu0 0
        %567 = vmatpush1.bf16.msra.mxu0 %v499
        %568 = vmatprep.subr.bf16.mxu0 0
        %569 = vmatpush1.bf16.msra.mxu0 %v500
        %570 = vmatprep.subr.bf16.mxu0 0
        %571 = vmatpush1.bf16.msra.mxu0 %v501
        %572 = vmatprep.subr.bf16.mxu0 0
        %573 = vmatpush1.bf16.msra.mxu0 %v502
        %574 = vmatprep.subr.bf16.mxu0 0
        %575 = vmatpush1.bf16.msra.mxu0 %v503
        %576 = vmatprep.subr.bf16.mxu0 0
        %577 = vmatpush1.bf16.msra.mxu0 %v504
        %578 = vmatprep.subr.bf16.mxu0 0
        %579 = vmatpush1.bf16.msra.mxu0 %v505
        %580 = vmatprep.subr.bf16.mxu0 0
        %581 = vmatpush1.bf16.msra.mxu0 %v506
        %582 = vmatprep.subr.bf16.mxu0 0
        %583 = vmatpush1.bf16.msra.mxu0 %v507
        %584 = vmatprep.subr.bf16.mxu0 0
        %585 = vmatpush1.bf16.msra.mxu0 %v508
        %586 = vmatprep.subr.bf16.mxu0 0
        %587 = vmatpush1.bf16.msra.mxu0 %v509
        %588 = vmatprep.subr.bf16.mxu0 0
        %589 = vmatpush1.bf16.msra.mxu0 %v510
        %590 = vmatprep.subr.bf16.mxu0 0
        %591 = vmatpush1.bf16.msra.mxu0 %v511
        %592 = vmatprep.mubr.bf16.mxu0 %v361
        %593 = vmatmul.mubr.bf16.gmra.mrb[0].mxu0 %v360
        %v594 = vpop.f32.mrb[0].mxu0
        %v595 = vadd.f32 0.0, %v594
        %v596 = vpop.f32.mrb[0].mxu0
        %v597 = vpop.f32.mrb[0].mxu0
        %v598 = vadd.f32 0.0, %v597
        %v599 = vpop.f32.mrb[0].mxu0
        %600 = vdwg.mxu0
        %601 = vmatprep.subr.bf16.mxu0 0
        %602 = vmatpush1.bf16.msra.mxu0 %v512
        %603 = vmatprep.subr.bf16.mxu0 0
        %604 = vmatpush1.bf16.msra.mxu0 %v513
        %605 = vmatprep.subr.bf16.mxu0 0
        %606 = vmatpush1.bf16.msra.mxu0 %v514
        %607 = vmatprep.subr.bf16.mxu0 0
        %608 = vmatpush1.bf16.msra.mxu0 %v515
        %609 = vmatprep.subr.bf16.mxu0 0
        %610 = vmatpush1.bf16.msra.mxu0 %v516
        %611 = vmatprep.subr.bf16.mxu0 0
        %612 = vmatpush1.bf16.msra.mxu0 %v517
        %613 = vmatprep.subr.bf16.mxu0 0
        %614 = vmatpush1.bf16.msra.mxu0 %v518
        %615 = vmatprep.subr.bf16.mxu0 0
        %616 = vmatpush1.bf16.msra.mxu0 %v519
        %617 = vmatprep.subr.bf16.mxu0 0
        %618 = vmatpush1.bf16.msra.mxu0 %v520
        %619 = vmatprep.subr.bf16.mxu0 0
        %620 = vmatpush1.bf16.msra.mxu0 %v521
        %621 = vmatprep.subr.bf16.mxu0 0
        %622 = vmatpush1.bf16.msra.mxu0 %v522
        %623 = vmatprep.subr.bf16.mxu0 0
        %624 = vmatpush1.bf16.msra.mxu0 %v523
        %625 = vmatprep.subr.bf16.mxu0 0
        %626 = vmatpush1.bf16.msra.mxu0 %v524
        %627 = vmatprep.subr.bf16.mxu0 0
        %628 = vmatpush1.bf16.msra.mxu0 %v525
        %629 = vmatprep.subr.bf16.mxu0 0
        %630 = vmatpush1.bf16.msra.mxu0 %v526
        %631 = vmatprep.subr.bf16.mxu0 0
        %632 = vmatpush1.bf16.msra.mxu0 %v527
        %633 = vmatprep.mubr.bf16.mxu0 %v363
        %634 = vmatmul.mubr.bf16.gmra.mrb[0].mxu0 %v362
        %v635 = vpop.f32.mrb[0].mxu0
        %v636 = vadd.f32 %v595, %v635
        %v637 = vpop.f32.mrb[0].mxu0
        %v638 = vpop.f32.mrb[0].mxu0
        %v639 = vadd.f32 %v598, %v638
        %v640 = vpop.f32.mrb[0].mxu0
        %641 = vdwg.mxu0
        %p642 = scmp.eq.s32.totalorder %s21, 0
        // Predicated region
        $region56: #{dcgan_forward.25} parent=50 // pred_check
          %p643 = pneg %p642
        $region57: #{dcgan_forward.25} parent=50 // pred_check_branch
          %645 = sbr.rel (%p643) target = $region59
        $region58: #{dcgan_forward.25} parent=50 // pred_region
          %646 = vst [vmem:[#allocation2] sm:$0xff] 0.0
          %647 = vst [vmem:[#allocation2 + $0x8] sm:$0xff] 0.0
        $region59: #{dcgan_forward.25} parent=50 // pred_fallthru
          _
        %v648 = vld [vmem:[#allocation2] sm:$0xff]
        %v649 = vld [vmem:[#allocation2 + $0x8] sm:$0xff]
        %v650 = vadd.f32 %v648, %v636
        %v651 = vadd.f32 %v649, %v639
        %652 = vst [vmem:[#allocation2] sm:$0xff] %v650
        %653 = vst [vmem:[#allocation2 + $0x8] sm:$0xff] %v651
        %p654 = scmp.eq.s32.totalorder %s21, 15
        // Predicated region
        $region60: #{dcgan_forward.25} parent=50 // pred_check
          %p655 = pneg %p654
        $region61: #{dcgan_forward.25} parent=50 // pred_check_branch
          %657 = sbr.rel (%p655) target = $region63
        $region62: #{dcgan_forward.25} parent=50 // pred_region
          %v658 = vld [vmem:[#allocation2] sm:$0xff]
          %v659 = vld [vmem:[#allocation2 + $0x8] sm:$0xff]
          %v660 = vld [vmem:[%s269] sm:$0x1]
          %v662 = vlaneseq
          %v663 = vshrl.u32 %v662, 7
          %v664 = vsub.s32 0, %v663
          %v665 = vrot.slane %v660, %v664
          %v667 = vadd.f32 %v658, %v665
          %v668 = vadd.f32 %v659, %v665
          %669 = vst [vmem:[%s277] sm:$0xff] %v667
          %670 = vst [vmem:[%s277 + $0x8] sm:$0xff] %v668
        $region63: #{dcgan_forward.25} parent=50 // pred_fallthru
          _
        %s671 = smul.u32 2, %s19
        %p672 = scmp.lt.s32.totalorder %s671, 1
        %s673 = scalar_select %p672, %s671, 1
        %p674 = scmp.lt.s32.totalorder %s20, 0
        %s675 = scalar_select %p674, %s20, 0
        %s676 = sadd.s32 %s675, %s673
        %s677 = smul.addr %s676, 8
        %s678 = scalar_lea.vmem %s3, %s677
        // Predicated region
        $region64: #{dcgan_forward.25} parent=50 // pred_check
          %p679 = pneg %p135
        $region65: #{dcgan_forward.25} parent=50 // pred_check_branch
          %681 = sbr.rel (%p679) target = $region67
        $region66: #{dcgan_forward.25} parent=50 // pred_region
          %s682 = smul.u32 2, %s19
        $region67: #{dcgan_forward.25} parent=50 // pred_fallthru
          _
        // Predicated region
        $region68: #{dcgan_forward.25} parent=50 // pred_check
          %p683 = pneg %p135
        $region69: #{dcgan_forward.25} parent=50 // pred_check_branch
          %685 = sbr.rel (%p683) target = $region71
        $region70: #{dcgan_forward.25} parent=50 // pred_region
          %s686 = smul.u32 2, %s19
          %p687 = scmp.lt.s32.totalorder %s686, 1
          %s688 = scalar_select %p687, %s686, 1
          %p689 = scmp.lt.s32.totalorder %s20, 0
          %s690 = scalar_select %p689, %s20, 0
          %s691 = sadd.s32 %s690, %s688
          %s692 = smul.addr %s691, 8
          %s693 = scalar_lea.vmem %s3, %s692
        $region71: #{dcgan_forward.25} parent=50 // pred_fallthru
          _
      $region51: #{dcgan_forward.25} parent=5 // pred_fallthru
        _
      %p694 = scmp.le.s32.totalorder 2, %s9
      // Predicated region
      $region72: #{dcgan_forward.25} parent=5 // pred_check
        %p695 = pneg %p694
      $region73: #{dcgan_forward.25} parent=5 // pred_check_branch
        %697 = sbr.rel (%p695) target = $region75
      $region74: #{dcgan_forward.25} parent=5 // pred_region
        %s698 = ssub.s32 %s9, 2
      $region75: #{dcgan_forward.25} parent=5 // pred_fallthru
        _
    $region6: #{dcgan_forward.25} parent=1 // loop_footer
      %s13 = sadd.s32 1, %s9
    $region7: #{dcgan_forward.25} parent=1 // loop_footer_branch
      %8 = sbr.rel target = $region3
    $region8: #{dcgan_forward.25} parent=1 // loop_exit
      _

</llo_original>
